<compile_context>
chip_gen: v7x
topology: tpu7x:2x2x1
jax: 0.10.0
libtpu: 0.0.40
codegen_flags: <defaults>
</compile_context>

<pallas_src>
import jax
import jax.numpy as jnp
from jax.experimental import pallas as pl
from jax.experimental.pallas import tpu as pltpu

# ----------------------------- configuration --------------------------------
BATCH = 2
N_RES = 8          # number of nodes (residues)
NODE_DIM = 32
PAIR_DIM = 16
HEADS = 4
DIM_HEAD = 8       # HEADS * DIM_HEAD == attention hidden width
FF_MULT = 4
PAIR_FF_MULT = 2
DEPTH = 2
HIDDEN = HEADS * DIM_HEAD                      # 32

# Vector parameters: one field per row, padded to 128 lanes.
_VEC_PAD = 128
_NODE_VEC_FIELDS = ("ln1_g", "ln1_b", "lnp_g", "lnp_b", "bo",
                    "ln2_g", "ln2_b", "b1", "b2")
_PAIR_VEC_FIELDS = ("lnn_g", "lnn_b", "ba", "bbp", "bop",
                    "lnp_g", "lnp_b", "bp1", "bp2")
_NV = {k: i for i, k in enumerate(_NODE_VEC_FIELDS)}
_PV = {k: i for i, k in enumerate(_PAIR_VEC_FIELDS)}


# ------------------------------ small helpers --------------------------------
def _layernorm(v, g, b, eps=1e-5):
    # f32 elementwise math (v5e has no bf16 VPU/EUP).
    mu = jnp.mean(v, axis=-1, keepdims=True)
    var = jnp.mean((v - mu) ** 2, axis=-1, keepdims=True)
    return (v - mu) * jax.lax.rsqrt(var + eps) * g + b


def _row(vec, idx, size):
    # One packed vector field: row `idx`, lanes [0:size]  -> (1, size), f32.
    return vec[idx:idx + 1, 0:size]


def _dot(a_bf16, w_bf16):
    # bf16 operands -> MXU, f32 accumulation.
    return jnp.dot(a_bf16, w_bf16, preferred_element_type=jnp.float32)


# --------------------------- fused whole-net kernel ---------------------------
def graph_transformer_kernel(node_ref, pair_ref, mask_ref, mask2d_ref,
                             wq_ref, wk_ref, wvo_ref, wb_ref, w1_ref, w2_ref,
                             wa_ref, wbp_ref, wop_ref, wp1_ref, wp2_ref,
                             nvec_ref, pvec_ref,
                             node_out_ref, pair_out_ref):
    B, N, D, DP, H, HD = BATCH, N_RES, NODE_DIM, PAIR_DIM, HEADS, DIM_HEAD
    BN = B * N
    bf16 = jnp.bfloat16

    x = node_ref[...]                         # (B*N, D)      f32
    p2d = pair_ref[...]                       # (B*N*N, DP)   f32 (dp minor)
    m2d = mask2d_ref[...]                     # (B*N*N, DP)   f32
    m = mask_ref[...]                         # (B, N, N)     f32
    # NOTE: fully-masked rows give a uniform softmax (mean of V), matching the
    # previous kernel's behavior for missing-mask semantics.
    neg = jnp.where(m > 0.5, 0.0, -1e9)
    # Folded (head, batch) batch dim z = h*B + b; hoisted out of the layer loop.
    neg_z = jnp.concatenate([neg] * H, axis=0)            # (H*B, N, N)
    scale = 1.0 / (HD ** 0.5)

    # Static layer loop (DEPTH=2): fully unrolled, every weight indexed with a
    # compile-time constant; node/pair state just live in VMEM/vregs throughout.
    for l in range(DEPTH):
        nv = nvec_ref[l]                      # (9, 128) f32, one field per row
        pv = pvec_ref[l]
        wq_l, wk_l, wvo_l = wq_ref[l], wk_ref[l], wvo_ref[l]   # (H, D, .) bf16

        # ------------------- node update: pair-biased MHA ---------------------
        xn = _layernorm(x, _row(nv, _NV["ln1_g"], D), _row(nv, _NV["ln1_b"], D))
        xn_b = xn.astype(bf16)                # cast once, reused by 3*H matmuls
        pn = _layernorm(p2d, _row(nv, _NV["lnp_g"], DP), _row(nv, _NV["lnp_b"], DP))
        bias = _dot(pn.astype(bf16), wb_ref[l])            # (B*N*N, H)

        q_h, k_h, vo_h, b_h = [], [], [], []
        for h in range(H):                    # static; leading-axis weight index
            q_h.append(_dot(xn_b, wq_l[h]))                # (B*N, HD)
            k_h.append(_dot(xn_b, wk_l[h]))                # (B*N, HD)
            vo_h.append(_dot(xn_b, wvo_l[h]))              # (B*N, D) fused V@Wo
            b_h.append(bias[:, h:h + 1].reshape(B, N, N))
        q3 = jnp.stack(q_h).reshape(H * B, N, HD)          # z = h*B + b
        k3 = jnp.stack(k_h).reshape(H * B, N, HD)
        vo3 = jnp.stack(vo_h).reshape(H * B, N, D)
        bias3 = jnp.stack(b_h).reshape(H * B, N, N)

        logits = jnp.einsum('zqd,zkd->zqk',
                            q3.astype(bf16), k3.astype(bf16),
                            preferred_element_type=jnp.float32) * scale
        logits = logits + bias3 + neg_z
        logits = logits - jnp.max(logits, axis=-1, keepdims=True)
        e = jnp.exp(logits)
        attn = e / jnp.sum(e, axis=-1, keepdims=True)      # exact softmax
        o = jnp.einsum('zqk,zke->zqe',
                       attn.astype(bf16), vo3.astype(bf16),
                       preferred_element_type=jnp.float32)  # (H*B, N, D)
        # sum over heads of attn @ (V Wo)  ==  concat(heads) @ Wo
        x = x + o.reshape(H, BN, D).sum(axis=0) + _row(nv, _NV["bo"], D)

        # ----------------------------- node FFN --------------------------------
        x2 = _layernorm(x, _row(nv, _NV["ln2_g"], D), _row(nv, _NV["ln2_b"], D))
        h1 = jnp.maximum(_dot(x2.astype(bf16), w1_ref[l])
                         + _row(nv, _NV["b1"], FF_MULT * D), 0.0)
        x = x + _dot(h1.astype(bf16), w2_ref[l]) + _row(nv, _NV["b2"], D)

        # -------------------- pair update: outer product -----------------------
        xn2 = _layernorm(x, _row(pv, _PV["lnn_g"], D), _row(pv, _PV["lnn_b"], D))
        xn2_b = xn2.astype(bf16)
        a_vec = _dot(xn2_b, wa_ref[l]) + _row(pv, _PV["ba"], DP)     # (B*N, DP)
        b_vec = _dot(xn2_b, wbp_ref[l]) + _row(pv, _PV["bbp"], DP)   # (B*N, DP)
        outer = jnp.concatenate(
            [(a_vec[b * N:(b + 1) * N, None, :]
              * b_vec[None, b * N:(b + 1) * N, :]).reshape(N * N, DP)
             for b in range(B)], axis=0)                             # (B*N*N, DP)
        upd = _dot(outer.astype(bf16), wop_ref[l]) + _row(pv, _PV["bop"], DP)
        p2d = p2d + upd * m2d

        # ----------------------------- pair FFN ---------------------------------
        pn2 = _layernorm(p2d, _row(pv, _PV["lnp_g"], DP), _row(pv, _PV["lnp_b"], DP))
        hp = jnp.maximum(_dot(pn2.astype(bf16), wp1_ref[l])
                         + _row(pv, _PV["bp1"], PAIR_FF_MULT * DP), 0.0)
        p2d = p2d + _dot(hp.astype(bf16), wp2_ref[l]) + _row(pv, _PV["bp2"], DP)

    node_out_ref[...] = x
    pair_out_ref[...] = p2d


# --------------------------------- packing ------------------------------------
def pack_layer_params(layer_params):
    """Stack per-layer weights over DEPTH; heads on a leading axis; bf16 matrices."""
    hd = DIM_HEAD
    bf = lambda w: w.astype(jnp.bfloat16)

    def pad_row(v):
        v = v.reshape(-1).astype(jnp.float32)
        return jnp.pad(v, (0, _VEC_PAD - v.shape[0]))

    cols = {k: [] for k in ("wq", "wk", "wvo", "wb", "w1", "w2",
                            "wa", "wbp", "wop", "wp1", "wp2", "nvec", "pvec")}
    for lp in layer_params:
        nd, pr = lp["node"], lp["pair"]
        cols["wq"].append(jnp.stack(
            [bf(nd["wq"][:, h * hd:(h + 1) * hd]) for h in range(HEADS)]))
        cols["wk"].append(jnp.stack(
            [bf(nd["wk"][:, h * hd:(h + 1) * hd]) for h in range(HEADS)]))
        # Fuse per-head V and output projections:  Wvo_h = Wv_h @ Wo_h  (d, d).
        # (f32 fusion then bf16 cast: mathematically identical to the reference,
        #  bf16 rounding differs slightly from concat(heads) @ Wo.)
        cols["wvo"].append(jnp.stack(
            [bf(nd["wv"][:, h * hd:(h + 1) * hd]
                @ nd["wo"][h * hd:(h + 1) * hd, :]) for h in range(HEADS)]))
        cols["wb"].append(bf(nd["wb"]))
        cols["w1"].append(bf(nd["w1"]))
        cols["w2"].append(bf(nd["w2"]))
        cols["wa"].append(bf(pr["wa"]))
        cols["wbp"].append(bf(pr["wbp"]))
        cols["wop"].append(bf(pr["wop"]))
        cols["wp1"].append(bf(pr["wp1"]))
        cols["wp2"].append(bf(pr["wp2"]))
        cols["nvec"].append(jnp.stack([pad_row(nd[k]) for k in _NODE_VEC_FIELDS]))
        cols["pvec"].append(jnp.stack([pad_row(pr[k]) for k in _PAIR_VEC_FIELDS]))
    order = ("wq", "wk", "wvo", "wb", "w1", "w2",
             "wa", "wbp", "wop", "wp1", "wp2", "nvec", "pvec")
    return tuple(jnp.stack(cols[k], axis=0) for k in order)


# --------------------------------- wrapper -------------------------------------
def graph_transformer_forward(node_feats, pair_feats, layer_params, pair_mask=None):
    """GraphTransformer.forward for use_ipa=False, share_weights=False.

    Returns (node_feats, pair_feats, rigids, aux_loss) with rigids/aux_loss None.
    """
    assert node_feats.ndim == 3 and pair_feats.ndim == 4
    b, n, d = node_feats.shape
    dp = pair_feats.shape[-1]
    assert (b, n, d, dp) == (BATCH, N_RES, NODE_DIM, PAIR_DIM)
    assert len(layer_params) == DEPTH
    if pair_mask is None:
        pair_mask = jnp.ones((b, n, n), jnp.float32)
    pair_mask = pair_mask.astype(jnp.float32)

    packed = pack_layer_params(layer_params)

    # Layout plumbing (done once, outside the kernel): fold batch into matmul
    # rows; keep pair dp-minor for the dp contractions / layernorms so the
    # kernel needs no pair relayouts at all.
    node_in = node_feats.reshape(b * n, d)
    pair_in = pair_feats.reshape(b * n * n, dp)
    mask2d = jnp.repeat(pair_mask.reshape(b * n * n, 1), dp, axis=1)

    node_out, pair_out = pl.pallas_call(
        graph_transformer_kernel,
        out_shape=(jax.ShapeDtypeStruct((b * n, d), jnp.float32),
                   jax.ShapeDtypeStruct((b * n * n, dp), jnp.float32)),
        compiler_params=pltpu.CompilerParams(vmem_limit_bytes=32 * 1024 * 1024),
    )(node_in, pair_in, pair_mask, mask2d, *packed)

    # TODO(synk): rigids / aux_loss path only active when use_ipa / share_weights.
    return node_out.reshape(b, n, d), pair_out.reshape(b, n, n, dp), None, None


# ------------------------------ parameter init --------------------------------
def _lin(key, fan_in, fan_out):
    return (jax.random.normal(key, (fan_in, fan_out), jnp.float32)
            * (1.0 / jnp.sqrt(fan_in)))


def init_layer_params(key):
    ks = jax.random.split(key, 16)
    d, dp, hid = NODE_DIM, PAIR_DIM, HIDDEN
    node = {
        "ln1_g": jnp.ones((1, d), jnp.float32), "ln1_b": jnp.zeros((1, d), jnp.float32),
        "lnp_g": jnp.ones((1, dp), jnp.float32), "lnp_b": jnp.zeros((1, dp), jnp.float32),
        "wq": _lin(ks[0], d, hid), "wk": _lin(ks[1], d, hid), "wv": _lin(ks[2], d, hid),
        "wb": _lin(ks[3], dp, HEADS),
        "wo": _lin(ks[4], hid, d), "bo": jnp.zeros((1, d), jnp.float32),
        "ln2_g": jnp.ones((1, d), jnp.float32), "ln2_b": jnp.zeros((1, d), jnp.float32),
        "w1": _lin(ks[5], d, FF_MULT * d), "b1": jnp.zeros((1, FF_MULT * d), jnp.float32),
        "w2": _lin(ks[6], FF_MULT * d, d), "b2": jnp.zeros((1, d), jnp.float32),
    }
    pair = {
        "lnn_g": jnp.ones((1, d), jnp.float32), "lnn_b": jnp.zeros((1, d), jnp.float32),
        "wa": _lin(ks[7], d, dp), "ba": jnp.zeros((1, dp), jnp.float32),
        "wbp": _lin(ks[8], d, dp), "bbp": jnp.zeros((1, dp), jnp.float32),
        "wop": _lin(ks[9], dp, dp), "bop": jnp.zeros((1, dp), jnp.float32),
        "lnp_g": jnp.ones((1, dp), jnp.float32), "lnp_b": jnp.zeros((1, dp), jnp.float32),
        "wp1": _lin(ks[10], dp, PAIR_FF_MULT * dp),
        "bp1": jnp.zeros((1, PAIR_FF_MULT * dp), jnp.float32),
        "wp2": _lin(ks[11], PAIR_FF_MULT * dp, dp),
        "bp2": jnp.zeros((1, dp), jnp.float32),
    }
    return {"node": node, "pair": pair}


# ---------------------------------- main --------------------------------------
if __name__ == "__main__":
    key = jax.random.PRNGKey(0)
    k_node, k_pair, *k_layers = jax.random.split(key, 2 + DEPTH)

    node_feats = jax.random.normal(k_node, (BATCH, N_RES, NODE_DIM), jnp.float32)
    pair_feats = jax.random.normal(k_pair, (BATCH, N_RES, N_RES, PAIR_DIM), jnp.float32)
    pair_mask = jnp.ones((BATCH, N_RES, N_RES), jnp.float32)

    layer_params = [init_layer_params(k) for k in k_layers]

    node_out, pair_out, rigids, aux_loss = graph_transformer_forward(
        node_feats, pair_feats, layer_params, pair_mask)

    jax.block_until_ready(node_out)
    jax.block_until_ready(pair_out)

    assert node_out.shape == (BATCH, N_RES, NODE_DIM)
    assert pair_out.shape == (BATCH, N_RES, N_RES, PAIR_DIM)
    assert bool(jnp.all(jnp.isfinite(node_out)))
    assert bool(jnp.all(jnp.isfinite(pair_out)))

    print("KERNEL_OK")
</pallas_src>

<mosaic_0001>
module attributes {stable_mosaic.version = 11 : i64} {
  func.func @graph_transformer_kernel(%arg0: memref<16x32xf32, #tpu.memory_space<vmem>>, %arg1: memref<128x16xf32, #tpu.memory_space<vmem>>, %arg2: memref<2x8x8xf32, #tpu.memory_space<vmem>>, %arg3: memref<128x16xf32, #tpu.memory_space<vmem>>, %arg4: memref<2x4x32x8xbf16, #tpu.memory_space<vmem>>, %arg5: memref<2x4x32x8xbf16, #tpu.memory_space<vmem>>, %arg6: memref<2x4x32x32xbf16, #tpu.memory_space<vmem>>, %arg7: memref<2x16x4xbf16, #tpu.memory_space<vmem>>, %arg8: memref<2x32x128xbf16, #tpu.memory_space<vmem>>, %arg9: memref<2x128x32xbf16, #tpu.memory_space<vmem>>, %arg10: memref<2x32x16xbf16, #tpu.memory_space<vmem>>, %arg11: memref<2x32x16xbf16, #tpu.memory_space<vmem>>, %arg12: memref<2x16x16xbf16, #tpu.memory_space<vmem>>, %arg13: memref<2x16x32xbf16, #tpu.memory_space<vmem>>, %arg14: memref<2x32x16xbf16, #tpu.memory_space<vmem>>, %arg15: memref<2x9x128xf32, #tpu.memory_space<vmem>>, %arg16: memref<2x9x128xf32, #tpu.memory_space<vmem>>, %arg17: memref<16x32xf32, #tpu.memory_space<vmem>>, %arg18: memref<128x16xf32, #tpu.memory_space<vmem>>) attributes {dimension_semantics = [], scalar_prefetch = 0 : i64, scratch_operands = 0 : i64, tpu.core_type = #tpu.core_type<tc>} {
    %c0 = arith.constant 0 : index
    %c0_0 = arith.constant 0 : index
    %0 = vector.load %arg0[%c0, %c0_0] : memref<16x32xf32, #tpu.memory_space<vmem>>, vector<16x32xf32>
    %c0_1 = arith.constant 0 : index
    %c0_2 = arith.constant 0 : index
    %1 = vector.load %arg1[%c0_1, %c0_2] : memref<128x16xf32, #tpu.memory_space<vmem>>, vector<128x16xf32>
    %c0_3 = arith.constant 0 : index
    %c0_4 = arith.constant 0 : index
    %2 = vector.load %arg3[%c0_3, %c0_4] : memref<128x16xf32, #tpu.memory_space<vmem>>, vector<128x16xf32>
    %c0_5 = arith.constant 0 : index
    %c0_6 = arith.constant 0 : index
    %c0_7 = arith.constant 0 : index
    %3 = vector.load %arg2[%c0_5, %c0_6, %c0_7] : memref<2x8x8xf32, #tpu.memory_space<vmem>>, vector<2x8x8xf32>
    %cst = arith.constant 5.000000e-01 : f32
    %4 = vector.broadcast %cst : f32 to vector<2x8x8xf32>
    %5 = arith.cmpf ogt, %3, %4 : vector<2x8x8xf32>
    %cst_8 = arith.constant 0.000000e+00 : f32
    %cst_9 = arith.constant -1.000000e+09 : f32
    %6 = vector.broadcast %cst_8 : f32 to vector<2x8x8xf32>
    %7 = vector.broadcast %cst_9 : f32 to vector<2x8x8xf32>
    %8 = arith.select %5, %6, %7 : vector<2x8x8xi1>, vector<2x8x8xf32>
    %9 = tpu.concatenate %8, %8, %8, %8 in 0 : vector<2x8x8xf32>, vector<2x8x8xf32>, vector<2x8x8xf32>, vector<2x8x8xf32> -> vector<8x8x8xf32>
    %c0_10 = arith.constant 0 : index
    %c0_11 = arith.constant 0 : index
    %c0_12 = arith.constant 0 : index
    %10 = vector.load %arg15[%c0_10, %c0_11, %c0_12] : memref<2x9x128xf32, #tpu.memory_space<vmem>>, vector<1x9x128xf32>
    %11 = vector.shape_cast %10 : vector<1x9x128xf32> to vector<9x128xf32>
    %c0_13 = arith.constant 0 : index
    %c0_14 = arith.constant 0 : index
    %c0_15 = arith.constant 0 : index
    %12 = vector.load %arg16[%c0_13, %c0_14, %c0_15] : memref<2x9x128xf32, #tpu.memory_space<vmem>>, vector<1x9x128xf32>
    %13 = vector.shape_cast %12 : vector<1x9x128xf32> to vector<9x128xf32>
    %c0_16 = arith.constant 0 : index
    %c0_17 = arith.constant 0 : index
    %c0_18 = arith.constant 0 : index
    %c0_19 = arith.constant 0 : index
    %14 = vector.load %arg4[%c0_16, %c0_17, %c0_18, %c0_19] : memref<2x4x32x8xbf16, #tpu.memory_space<vmem>>, vector<1x4x32x8xbf16>
    %15 = vector.shape_cast %14 : vector<1x4x32x8xbf16> to vector<4x32x8xbf16>
    %c0_20 = arith.constant 0 : index
    %c0_21 = arith.constant 0 : index
    %c0_22 = arith.constant 0 : index
    %c0_23 = arith.constant 0 : index
    %16 = vector.load %arg5[%c0_20, %c0_21, %c0_22, %c0_23] : memref<2x4x32x8xbf16, #tpu.memory_space<vmem>>, vector<1x4x32x8xbf16>
    %17 = vector.shape_cast %16 : vector<1x4x32x8xbf16> to vector<4x32x8xbf16>
    %c0_24 = arith.constant 0 : index
    %c0_25 = arith.constant 0 : index
    %c0_26 = arith.constant 0 : index
    %c0_27 = arith.constant 0 : index
    %18 = vector.load %arg6[%c0_24, %c0_25, %c0_26, %c0_27] : memref<2x4x32x32xbf16, #tpu.memory_space<vmem>>, vector<1x4x32x32xbf16>
    %19 = vector.shape_cast %18 : vector<1x4x32x32xbf16> to vector<4x32x32xbf16>
    %20 = vector.extract_strided_slice %11 {offsets = [0, 0], sizes = [1, 32], strides = [1, 1]} : vector<9x128xf32> to vector<1x32xf32>
    %21 = vector.extract_strided_slice %11 {offsets = [1, 0], sizes = [1, 32], strides = [1, 1]} : vector<9x128xf32> to vector<1x32xf32>
    %cst_28 = arith.constant dense<0.000000e+00> : vector<16xf32>
    %22 = vector.multi_reduction <add>, %0, %cst_28 [1] : vector<16x32xf32> to vector<16xf32>
    %23 = vector.shape_cast %22 : vector<16xf32> to vector<16x1xf32>
    %cst_29 = arith.constant 3.200000e+01 : f32
    %24 = vector.broadcast %cst_29 : f32 to vector<16x1xf32>
    %25 = arith.divf %23, %24 : vector<16x1xf32>
    %26 = vector.broadcast %25 : vector<16x1xf32> to vector<16x32xf32>
    %27 = arith.subf %0, %26 : vector<16x32xf32>
    %28 = arith.mulf %27, %27 : vector<16x32xf32>
    %cst_30 = arith.constant dense<0.000000e+00> : vector<16xf32>
    %29 = vector.multi_reduction <add>, %28, %cst_30 [1] : vector<16x32xf32> to vector<16xf32>
    %30 = vector.shape_cast %29 : vector<16xf32> to vector<16x1xf32>
    %cst_31 = arith.constant 3.200000e+01 : f32
    %31 = vector.broadcast %cst_31 : f32 to vector<16x1xf32>
    %32 = arith.divf %30, %31 : vector<16x1xf32>
    %33 = vector.broadcast %25 : vector<16x1xf32> to vector<16x32xf32>
    %34 = arith.subf %0, %33 : vector<16x32xf32>
    %cst_32 = arith.constant 9.99999974E-6 : f32
    %35 = vector.broadcast %cst_32 : f32 to vector<16x1xf32>
    %36 = arith.addf %32, %35 : vector<16x1xf32>
    %37 = math.rsqrt %36 : vector<16x1xf32>
    %38 = vector.broadcast %37 : vector<16x1xf32> to vector<16x32xf32>
    %39 = arith.mulf %34, %38 : vector<16x32xf32>
    %40 = vector.broadcast %20 : vector<1x32xf32> to vector<16x32xf32>
    %41 = arith.mulf %39, %40 : vector<16x32xf32>
    %42 = vector.broadcast %21 : vector<1x32xf32> to vector<16x32xf32>
    %43 = arith.addf %41, %42 : vector<16x32xf32>
    %44 = arith.truncf %43 : vector<16x32xf32> to vector<16x32xbf16>
    %45 = vector.extract_strided_slice %11 {offsets = [2, 0], sizes = [1, 16], strides = [1, 1]} : vector<9x128xf32> to vector<1x16xf32>
    %46 = vector.extract_strided_slice %11 {offsets = [3, 0], sizes = [1, 16], strides = [1, 1]} : vector<9x128xf32> to vector<1x16xf32>
    %cst_33 = arith.constant dense<0.000000e+00> : vector<128xf32>
    %47 = vector.multi_reduction <add>, %1, %cst_33 [1] : vector<128x16xf32> to vector<128xf32>
    %48 = vector.shape_cast %47 : vector<128xf32> to vector<128x1xf32>
    %cst_34 = arith.constant 1.600000e+01 : f32
    %49 = vector.broadcast %cst_34 : f32 to vector<128x1xf32>
    %50 = arith.divf %48, %49 : vector<128x1xf32>
    %51 = vector.broadcast %50 : vector<128x1xf32> to vector<128x16xf32>
    %52 = arith.subf %1, %51 : vector<128x16xf32>
    %53 = arith.mulf %52, %52 : vector<128x16xf32>
    %cst_35 = arith.constant dense<0.000000e+00> : vector<128xf32>
    %54 = vector.multi_reduction <add>, %53, %cst_35 [1] : vector<128x16xf32> to vector<128xf32>
    %55 = vector.shape_cast %54 : vector<128xf32> to vector<128x1xf32>
    %cst_36 = arith.constant 1.600000e+01 : f32
    %56 = vector.broadcast %cst_36 : f32 to vector<128x1xf32>
    %57 = arith.divf %55, %56 : vector<128x1xf32>
    %58 = vector.broadcast %50 : vector<128x1xf32> to vector<128x16xf32>
    %59 = arith.subf %1, %58 : vector<128x16xf32>
    %cst_37 = arith.constant 9.99999974E-6 : f32
    %60 = vector.broadcast %cst_37 : f32 to vector<128x1xf32>
    %61 = arith.addf %57, %60 : vector<128x1xf32>
    %62 = math.rsqrt %61 : vector<128x1xf32>
    %63 = vector.broadcast %62 : vector<128x1xf32> to vector<128x16xf32>
    %64 = arith.mulf %59, %63 : vector<128x16xf32>
    %65 = vector.broadcast %45 : vector<1x16xf32> to vector<128x16xf32>
    %66 = arith.mulf %64, %65 : vector<128x16xf32>
    %67 = vector.broadcast %46 : vector<1x16xf32> to vector<128x16xf32>
    %68 = arith.addf %66, %67 : vector<128x16xf32>
    %69 = arith.truncf %68 : vector<128x16xf32> to vector<128x16xbf16>
    %c0_38 = arith.constant 0 : index
    %c0_39 = arith.constant 0 : index
    %c0_40 = arith.constant 0 : index
    %70 = vector.load %arg7[%c0_38, %c0_39, %c0_40] : memref<2x16x4xbf16, #tpu.memory_space<vmem>>, vector<1x16x4xbf16>
    %71 = vector.shape_cast %70 : vector<1x16x4xbf16> to vector<16x4xbf16>
    %cst_41 = arith.constant dense<0.000000e+00> : vector<128x4xf32>
    %72 = tpu.matmul %69, %71, %cst_41 {dimension_numbers = #tpu.dot_dimension_numbers<[1], [0], [0], [1], [0, 0, 1, 1], [], []>} : vector<128x16xbf16>, vector<16x4xbf16>, vector<128x4xf32> -> vector<128x4xf32>
    %73 = vector.extract_strided_slice %15 {offsets = [0, 0, 0], sizes = [1, 32, 8], strides = [1, 1, 1]} : vector<4x32x8xbf16> to vector<1x32x8xbf16>
    %74 = vector.shape_cast %73 : vector<1x32x8xbf16> to vector<32x8xbf16>
    %cst_42 = arith.constant dense<0.000000e+00> : vector<16x8xf32>
    %75 = tpu.matmul %44, %74, %cst_42 {dimension_numbers = #tpu.dot_dimension_numbers<[1], [0], [0], [1], [0, 0, 1, 1], [], []>} : vector<16x32xbf16>, vector<32x8xbf16>, vector<16x8xf32> -> vector<16x8xf32>
    %76 = vector.extract_strided_slice %17 {offsets = [0, 0, 0], sizes = [1, 32, 8], strides = [1, 1, 1]} : vector<4x32x8xbf16> to vector<1x32x8xbf16>
    %77 = vector.shape_cast %76 : vector<1x32x8xbf16> to vector<32x8xbf16>
    %cst_43 = arith.constant dense<0.000000e+00> : vector<16x8xf32>
    %78 = tpu.matmul %44, %77, %cst_43 {dimension_numbers = #tpu.dot_dimension_numbers<[1], [0], [0], [1], [0, 0, 1, 1], [], []>} : vector<16x32xbf16>, vector<32x8xbf16>, vector<16x8xf32> -> vector<16x8xf32>
    %79 = vector.extract_strided_slice %19 {offsets = [0, 0, 0], sizes = [1, 32, 32], strides = [1, 1, 1]} : vector<4x32x32xbf16> to vector<1x32x32xbf16>
    %80 = vector.shape_cast %79 : vector<1x32x32xbf16> to vector<32x32xbf16>
    %cst_44 = arith.constant dense<0.000000e+00> : vector<16x32xf32>
    %81 = tpu.matmul %44, %80, %cst_44 {dimension_numbers = #tpu.dot_dimension_numbers<[1], [0], [0], [1], [0, 0, 1, 1], [], []>} : vector<16x32xbf16>, vector<32x32xbf16>, vector<16x32xf32> -> vector<16x32xf32>
    %82 = vector.extract_strided_slice %72 {offsets = [0, 0], sizes = [128, 1], strides = [1, 1]} : vector<128x4xf32> to vector<128x1xf32>
    %83 = vector.shape_cast %82 : vector<128x1xf32> to vector<2x8x8xf32>
    %84 = vector.extract_strided_slice %15 {offsets = [1, 0, 0], sizes = [1, 32, 8], strides = [1, 1, 1]} : vector<4x32x8xbf16> to vector<1x32x8xbf16>
    %85 = vector.shape_cast %84 : vector<1x32x8xbf16> to vector<32x8xbf16>
    %cst_45 = arith.constant dense<0.000000e+00> : vector<16x8xf32>
    %86 = tpu.matmul %44, %85, %cst_45 {dimension_numbers = #tpu.dot_dimension_numbers<[1], [0], [0], [1], [0, 0, 1, 1], [], []>} : vector<16x32xbf16>, vector<32x8xbf16>, vector<16x8xf32> -> vector<16x8xf32>
    %87 = vector.extract_strided_slice %17 {offsets = [1, 0, 0], sizes = [1, 32, 8], strides = [1, 1, 1]} : vector<4x32x8xbf16> to vector<1x32x8xbf16>
    %88 = vector.shape_cast %87 : vector<1x32x8xbf16> to vector<32x8xbf16>
    %cst_46 = arith.constant dense<0.000000e+00> : vector<16x8xf32>
    %89 = tpu.matmul %44, %88, %cst_46 {dimension_numbers = #tpu.dot_dimension_numbers<[1], [0], [0], [1], [0, 0, 1, 1], [], []>} : vector<16x32xbf16>, vector<32x8xbf16>, vector<16x8xf32> -> vector<16x8xf32>
    %90 = vector.extract_strided_slice %19 {offsets = [1, 0, 0], sizes = [1, 32, 32], strides = [1, 1, 1]} : vector<4x32x32xbf16> to vector<1x32x32xbf16>
    %91 = vector.shape_cast %90 : vector<1x32x32xbf16> to vector<32x32xbf16>
    %cst_47 = arith.constant dense<0.000000e+00> : vector<16x32xf32>
    %92 = tpu.matmul %44, %91, %cst_47 {dimension_numbers = #tpu.dot_dimension_numbers<[1], [0], [0], [1], [0, 0, 1, 1], [], []>} : vector<16x32xbf16>, vector<32x32xbf16>, vector<16x32xf32> -> vector<16x32xf32>
    %93 = vector.extract_strided_slice %72 {offsets = [0, 1], sizes = [128, 1], strides = [1, 1]} : vector<128x4xf32> to vector<128x1xf32>
    %94 = vector.shape_cast %93 : vector<128x1xf32> to vector<2x8x8xf32>
    %95 = vector.extract_strided_slice %15 {offsets = [2, 0, 0], sizes = [1, 32, 8], strides = [1, 1, 1]} : vector<4x32x8xbf16> to vector<1x32x8xbf16>
    %96 = vector.shape_cast %95 : vector<1x32x8xbf16> to vector<32x8xbf16>
    %cst_48 = arith.constant dense<0.000000e+00> : vector<16x8xf32>
    %97 = tpu.matmul %44, %96, %cst_48 {dimension_numbers = #tpu.dot_dimension_numbers<[1], [0], [0], [1], [0, 0, 1, 1], [], []>} : vector<16x32xbf16>, vector<32x8xbf16>, vector<16x8xf32> -> vector<16x8xf32>
    %98 = vector.extract_strided_slice %17 {offsets = [2, 0, 0], sizes = [1, 32, 8], strides = [1, 1, 1]} : vector<4x32x8xbf16> to vector<1x32x8xbf16>
    %99 = vector.shape_cast %98 : vector<1x32x8xbf16> to vector<32x8xbf16>
    %cst_49 = arith.constant dense<0.000000e+00> : vector<16x8xf32>
    %100 = tpu.matmul %44, %99, %cst_49 {dimension_numbers = #tpu.dot_dimension_numbers<[1], [0], [0], [1], [0, 0, 1, 1], [], []>} : vector<16x32xbf16>, vector<32x8xbf16>, vector<16x8xf32> -> vector<16x8xf32>
    %101 = vector.extract_strided_slice %19 {offsets = [2, 0, 0], sizes = [1, 32, 32], strides = [1, 1, 1]} : vector<4x32x32xbf16> to vector<1x32x32xbf16>
    %102 = vector.shape_cast %101 : vector<1x32x32xbf16> to vector<32x32xbf16>
    %cst_50 = arith.constant dense<0.000000e+00> : vector<16x32xf32>
    %103 = tpu.matmul %44, %102, %cst_50 {dimension_numbers = #tpu.dot_dimension_numbers<[1], [0], [0], [1], [0, 0, 1, 1], [], []>} : vector<16x32xbf16>, vector<32x32xbf16>, vector<16x32xf32> -> vector<16x32xf32>
    %104 = vector.extract_strided_slice %72 {offsets = [0, 2], sizes = [128, 1], strides = [1, 1]} : vector<128x4xf32> to vector<128x1xf32>
    %105 = vector.shape_cast %104 : vector<128x1xf32> to vector<2x8x8xf32>
    %106 = vector.extract_strided_slice %15 {offsets = [3, 0, 0], sizes = [1, 32, 8], strides = [1, 1, 1]} : vector<4x32x8xbf16> to vector<1x32x8xbf16>
    %107 = vector.shape_cast %106 : vector<1x32x8xbf16> to vector<32x8xbf16>
    %cst_51 = arith.constant dense<0.000000e+00> : vector<16x8xf32>
    %108 = tpu.matmul %44, %107, %cst_51 {dimension_numbers = #tpu.dot_dimension_numbers<[1], [0], [0], [1], [0, 0, 1, 1], [], []>} : vector<16x32xbf16>, vector<32x8xbf16>, vector<16x8xf32> -> vector<16x8xf32>
    %109 = vector.extract_strided_slice %17 {offsets = [3, 0, 0], sizes = [1, 32, 8], strides = [1, 1, 1]} : vector<4x32x8xbf16> to vector<1x32x8xbf16>
    %110 = vector.shape_cast %109 : vector<1x32x8xbf16> to vector<32x8xbf16>
    %cst_52 = arith.constant dense<0.000000e+00> : vector<16x8xf32>
    %111 = tpu.matmul %44, %110, %cst_52 {dimension_numbers = #tpu.dot_dimension_numbers<[1], [0], [0], [1], [0, 0, 1, 1], [], []>} : vector<16x32xbf16>, vector<32x8xbf16>, vector<16x8xf32> -> vector<16x8xf32>
    %112 = vector.extract_strided_slice %19 {offsets = [3, 0, 0], sizes = [1, 32, 32], strides = [1, 1, 1]} : vector<4x32x32xbf16> to vector<1x32x32xbf16>
    %113 = vector.shape_cast %112 : vector<1x32x32xbf16> to vector<32x32xbf16>
    %cst_53 = arith.constant dense<0.000000e+00> : vector<16x32xf32>
    %114 = tpu.matmul %44, %113, %cst_53 {dimension_numbers = #tpu.dot_dimension_numbers<[1], [0], [0], [1], [0, 0, 1, 1], [], []>} : vector<16x32xbf16>, vector<32x32xbf16>, vector<16x32xf32> -> vector<16x32xf32>
    %115 = vector.extract_strided_slice %72 {offsets = [0, 3], sizes = [128, 1], strides = [1, 1]} : vector<128x4xf32> to vector<128x1xf32>
    %116 = vector.shape_cast %115 : vector<128x1xf32> to vector<2x8x8xf32>
    %117 = vector.shape_cast %75 : vector<16x8xf32> to vector<1x16x8xf32>
    %118 = vector.shape_cast %86 : vector<16x8xf32> to vector<1x16x8xf32>
    %119 = vector.shape_cast %97 : vector<16x8xf32> to vector<1x16x8xf32>
    %120 = vector.shape_cast %108 : vector<16x8xf32> to vector<1x16x8xf32>
    %121 = tpu.concatenate %117, %118, %119, %120 in 0 : vector<1x16x8xf32>, vector<1x16x8xf32>, vector<1x16x8xf32>, vector<1x16x8xf32> -> vector<4x16x8xf32>
    %122 = vector.shape_cast %121 : vector<4x16x8xf32> to vector<8x8x8xf32>
    %123 = vector.shape_cast %78 : vector<16x8xf32> to vector<1x16x8xf32>
    %124 = vector.shape_cast %89 : vector<16x8xf32> to vector<1x16x8xf32>
    %125 = vector.shape_cast %100 : vector<16x8xf32> to vector<1x16x8xf32>
    %126 = vector.shape_cast %111 : vector<16x8xf32> to vector<1x16x8xf32>
    %127 = tpu.concatenate %123, %124, %125, %126 in 0 : vector<1x16x8xf32>, vector<1x16x8xf32>, vector<1x16x8xf32>, vector<1x16x8xf32> -> vector<4x16x8xf32>
    %128 = vector.shape_cast %127 : vector<4x16x8xf32> to vector<8x8x8xf32>
    %129 = vector.shape_cast %81 : vector<16x32xf32> to vector<1x16x32xf32>
    %130 = vector.shape_cast %92 : vector<16x32xf32> to vector<1x16x32xf32>
    %131 = vector.shape_cast %103 : vector<16x32xf32> to vector<1x16x32xf32>
    %132 = vector.shape_cast %114 : vector<16x32xf32> to vector<1x16x32xf32>
    %133 = tpu.concatenate %129, %130, %131, %132 in 0 : vector<1x16x32xf32>, vector<1x16x32xf32>, vector<1x16x32xf32>, vector<1x16x32xf32> -> vector<4x16x32xf32>
    %134 = vector.shape_cast %133 : vector<4x16x32xf32> to vector<8x8x32xf32>
    %135 = vector.shape_cast %83 : vector<2x8x8xf32> to vector<1x2x8x8xf32>
    %136 = vector.shape_cast %94 : vector<2x8x8xf32> to vector<1x2x8x8xf32>
    %137 = vector.shape_cast %105 : vector<2x8x8xf32> to vector<1x2x8x8xf32>
    %138 = vector.shape_cast %116 : vector<2x8x8xf32> to vector<1x2x8x8xf32>
    %139 = tpu.concatenate %135, %136, %137, %138 in 0 : vector<1x2x8x8xf32>, vector<1x2x8x8xf32>, vector<1x2x8x8xf32>, vector<1x2x8x8xf32> -> vector<4x2x8x8xf32>
    %140 = vector.shape_cast %139 : vector<4x2x8x8xf32> to vector<8x8x8xf32>
    %141 = arith.truncf %122 : vector<8x8x8xf32> to vector<8x8x8xbf16>
    %142 = arith.truncf %128 : vector<8x8x8xf32> to vector<8x8x8xbf16>
    "tpu.trace_start"() <{level = 10 : i32, message = "zqd,zkd->zqk"}> : () -> ()
    %cst_54 = arith.constant dense<0.000000e+00> : vector<8x8x8xf32>
    %143 = tpu.matmul %141, %142, %cst_54 {dimension_numbers = #tpu.dot_dimension_numbers<[2], [2], [1], [1], [0, 0, 0, 1, 1, 1], [0], [0]>} : vector<8x8x8xbf16>, vector<8x8x8xbf16>, vector<8x8x8xf32> -> vector<8x8x8xf32>
    "tpu.trace_stop"() : () -> ()
    %cst_55 = arith.constant 0.353553385 : f32
    %144 = vector.broadcast %cst_55 : f32 to vector<8x8x8xf32>
    %145 = arith.mulf %143, %144 : vector<8x8x8xf32>
    %146 = arith.addf %145, %140 : vector<8x8x8xf32>
    %147 = arith.addf %146, %9 : vector<8x8x8xf32>
    %cst_56 = arith.constant dense<0xFF800000> : vector<8x8xf32>
    %148 = vector.multi_reduction <maximumf>, %147, %cst_56 [2] : vector<8x8x8xf32> to vector<8x8xf32>
    %149 = vector.shape_cast %148 : vector<8x8xf32> to vector<8x8x1xf32>
    %150 = vector.broadcast %149 : vector<8x8x1xf32> to vector<8x8x8xf32>
    %151 = arith.subf %147, %150 : vector<8x8x8xf32>
    %152 = math.exp %151 : vector<8x8x8xf32>
    %cst_57 = arith.constant dense<0.000000e+00> : vector<8x8xf32>
    %153 = vector.multi_reduction <add>, %152, %cst_57 [2] : vector<8x8x8xf32> to vector<8x8xf32>
    %154 = vector.shape_cast %153 : vector<8x8xf32> to vector<8x8x1xf32>
    %155 = vector.broadcast %154 : vector<8x8x1xf32> to vector<8x8x8xf32>
    %156 = arith.divf %152, %155 : vector<8x8x8xf32>
    %157 = arith.truncf %156 : vector<8x8x8xf32> to vector<8x8x8xbf16>
    %158 = arith.truncf %134 : vector<8x8x32xf32> to vector<8x8x32xbf16>
    "tpu.trace_start"() <{level = 10 : i32, message = "zqk,zke->zqe"}> : () -> ()
    %cst_58 = arith.constant dense<0.000000e+00> : vector<8x8x32xf32>
    %159 = tpu.matmul %157, %158, %cst_58 {dimension_numbers = #tpu.dot_dimension_numbers<[2], [1], [1], [2], [0, 0, 0, 1, 1, 2], [0], [0]>} : vector<8x8x8xbf16>, vector<8x8x32xbf16>, vector<8x8x32xf32> -> vector<8x8x32xf32>
    "tpu.trace_stop"() : () -> ()
    %160 = vector.shape_cast %159 : vector<8x8x32xf32> to vector<4x16x32xf32>
    %cst_59 = arith.constant dense<0.000000e+00> : vector<16x32xf32>
    %161 = vector.multi_reduction <add>, %160, %cst_59 [0] : vector<4x16x32xf32> to vector<16x32xf32>
    %162 = arith.addf %0, %161 : vector<16x32xf32>
    %163 = vector.extract_strided_slice %11 {offsets = [4, 0], sizes = [1, 32], strides = [1, 1]} : vector<9x128xf32> to vector<1x32xf32>
    %164 = vector.broadcast %163 : vector<1x32xf32> to vector<16x32xf32>
    %165 = arith.addf %162, %164 : vector<16x32xf32>
    %166 = vector.extract_strided_slice %11 {offsets = [5, 0], sizes = [1, 32], strides = [1, 1]} : vector<9x128xf32> to vector<1x32xf32>
    %167 = vector.extract_strided_slice %11 {offsets = [6, 0], sizes = [1, 32], strides = [1, 1]} : vector<9x128xf32> to vector<1x32xf32>
    %cst_60 = arith.constant dense<0.000000e+00> : vector<16xf32>
    %168 = vector.multi_reduction <add>, %165, %cst_60 [1] : vector<16x32xf32> to vector<16xf32>
    %169 = vector.shape_cast %168 : vector<16xf32> to vector<16x1xf32>
    %cst_61 = arith.constant 3.200000e+01 : f32
    %170 = vector.broadcast %cst_61 : f32 to vector<16x1xf32>
    %171 = arith.divf %169, %170 : vector<16x1xf32>
    %172 = vector.broadcast %171 : vector<16x1xf32> to vector<16x32xf32>
    %173 = arith.subf %165, %172 : vector<16x32xf32>
    %174 = arith.mulf %173, %173 : vector<16x32xf32>
    %cst_62 = arith.constant dense<0.000000e+00> : vector<16xf32>
    %175 = vector.multi_reduction <add>, %174, %cst_62 [1] : vector<16x32xf32> to vector<16xf32>
    %176 = vector.shape_cast %175 : vector<16xf32> to vector<16x1xf32>
    %cst_63 = arith.constant 3.200000e+01 : f32
    %177 = vector.broadcast %cst_63 : f32 to vector<16x1xf32>
    %178 = arith.divf %176, %177 : vector<16x1xf32>
    %179 = vector.broadcast %171 : vector<16x1xf32> to vector<16x32xf32>
    %180 = arith.subf %165, %179 : vector<16x32xf32>
    %cst_64 = arith.constant 9.99999974E-6 : f32
    %181 = vector.broadcast %cst_64 : f32 to vector<16x1xf32>
    %182 = arith.addf %178, %181 : vector<16x1xf32>
    %183 = math.rsqrt %182 : vector<16x1xf32>
    %184 = vector.broadcast %183 : vector<16x1xf32> to vector<16x32xf32>
    %185 = arith.mulf %180, %184 : vector<16x32xf32>
    %186 = vector.broadcast %166 : vector<1x32xf32> to vector<16x32xf32>
    %187 = arith.mulf %185, %186 : vector<16x32xf32>
    %188 = vector.broadcast %167 : vector<1x32xf32> to vector<16x32xf32>
    %189 = arith.addf %187, %188 : vector<16x32xf32>
    %190 = arith.truncf %189 : vector<16x32xf32> to vector<16x32xbf16>
    %c0_65 = arith.constant 0 : index
    %c0_66 = arith.constant 0 : index
    %c0_67 = arith.constant 0 : index
    %191 = vector.load %arg8[%c0_65, %c0_66, %c0_67] : memref<2x32x128xbf16, #tpu.memory_space<vmem>>, vector<1x32x128xbf16>
    %192 = vector.shape_cast %191 : vector<1x32x128xbf16> to vector<32x128xbf16>
    %cst_68 = arith.constant dense<0.000000e+00> : vector<16x128xf32>
    %193 = tpu.matmul %190, %192, %cst_68 {dimension_numbers = #tpu.dot_dimension_numbers<[1], [0], [0], [1], [0, 0, 1, 1], [], []>} : vector<16x32xbf16>, vector<32x128xbf16>, vector<16x128xf32> -> vector<16x128xf32>
    %194 = vector.extract_strided_slice %11 {offsets = [7, 0], sizes = [1, 128], strides = [1, 1]} : vector<9x128xf32> to vector<1x128xf32>
    %195 = vector.broadcast %194 : vector<1x128xf32> to vector<16x128xf32>
    %196 = arith.addf %193, %195 : vector<16x128xf32>
    %cst_69 = arith.constant 0.000000e+00 : f32
    %197 = vector.broadcast %cst_69 : f32 to vector<16x128xf32>
    %198 = arith.maximumf %196, %197 : vector<16x128xf32>
    %199 = arith.truncf %198 : vector<16x128xf32> to vector<16x128xbf16>
    %c0_70 = arith.constant 0 : index
    %c0_71 = arith.constant 0 : index
    %c0_72 = arith.constant 0 : index
    %200 = vector.load %arg9[%c0_70, %c0_71, %c0_72] : memref<2x128x32xbf16, #tpu.memory_space<vmem>>, vector<1x128x32xbf16>
    %201 = vector.shape_cast %200 : vector<1x128x32xbf16> to vector<128x32xbf16>
    %cst_73 = arith.constant dense<0.000000e+00> : vector<16x32xf32>
    %202 = tpu.matmul %199, %201, %cst_73 {dimension_numbers = #tpu.dot_dimension_numbers<[1], [0], [0], [1], [0, 0, 1, 1], [], []>} : vector<16x128xbf16>, vector<128x32xbf16>, vector<16x32xf32> -> vector<16x32xf32>
    %203 = arith.addf %165, %202 : vector<16x32xf32>
    %204 = vector.extract_strided_slice %11 {offsets = [8, 0], sizes = [1, 32], strides = [1, 1]} : vector<9x128xf32> to vector<1x32xf32>
    %205 = vector.broadcast %204 : vector<1x32xf32> to vector<16x32xf32>
    %206 = arith.addf %203, %205 : vector<16x32xf32>
    %207 = vector.extract_strided_slice %13 {offsets = [0, 0], sizes = [1, 32], strides = [1, 1]} : vector<9x128xf32> to vector<1x32xf32>
    %208 = vector.extract_strided_slice %13 {offsets = [1, 0], sizes = [1, 32], strides = [1, 1]} : vector<9x128xf32> to vector<1x32xf32>
    %cst_74 = arith.constant dense<0.000000e+00> : vector<16xf32>
    %209 = vector.multi_reduction <add>, %206, %cst_74 [1] : vector<16x32xf32> to vector<16xf32>
    %210 = vector.shape_cast %209 : vector<16xf32> to vector<16x1xf32>
    %cst_75 = arith.constant 3.200000e+01 : f32
    %211 = vector.broadcast %cst_75 : f32 to vector<16x1xf32>
    %212 = arith.divf %210, %211 : vector<16x1xf32>
    %213 = vector.broadcast %212 : vector<16x1xf32> to vector<16x32xf32>
    %214 = arith.subf %206, %213 : vector<16x32xf32>
    %215 = arith.mulf %214, %214 : vector<16x32xf32>
    %cst_76 = arith.constant dense<0.000000e+00> : vector<16xf32>
    %216 = vector.multi_reduction <add>, %215, %cst_76 [1] : vector<16x32xf32> to vector<16xf32>
    %217 = vector.shape_cast %216 : vector<16xf32> to vector<16x1xf32>
    %cst_77 = arith.constant 3.200000e+01 : f32
    %218 = vector.broadcast %cst_77 : f32 to vector<16x1xf32>
    %219 = arith.divf %217, %218 : vector<16x1xf32>
    %220 = vector.broadcast %212 : vector<16x1xf32> to vector<16x32xf32>
    %221 = arith.subf %206, %220 : vector<16x32xf32>
    %cst_78 = arith.constant 9.99999974E-6 : f32
    %222 = vector.broadcast %cst_78 : f32 to vector<16x1xf32>
    %223 = arith.addf %219, %222 : vector<16x1xf32>
    %224 = math.rsqrt %223 : vector<16x1xf32>
    %225 = vector.broadcast %224 : vector<16x1xf32> to vector<16x32xf32>
    %226 = arith.mulf %221, %225 : vector<16x32xf32>
    %227 = vector.broadcast %207 : vector<1x32xf32> to vector<16x32xf32>
    %228 = arith.mulf %226, %227 : vector<16x32xf32>
    %229 = vector.broadcast %208 : vector<1x32xf32> to vector<16x32xf32>
    %230 = arith.addf %228, %229 : vector<16x32xf32>
    %231 = arith.truncf %230 : vector<16x32xf32> to vector<16x32xbf16>
    %c0_79 = arith.constant 0 : index
    %c0_80 = arith.constant 0 : index
    %c0_81 = arith.constant 0 : index
    %232 = vector.load %arg10[%c0_79, %c0_80, %c0_81] : memref<2x32x16xbf16, #tpu.memory_space<vmem>>, vector<1x32x16xbf16>
    %233 = vector.shape_cast %232 : vector<1x32x16xbf16> to vector<32x16xbf16>
    %cst_82 = arith.constant dense<0.000000e+00> : vector<16x16xf32>
    %234 = tpu.matmul %231, %233, %cst_82 {dimension_numbers = #tpu.dot_dimension_numbers<[1], [0], [0], [1], [0, 0, 1, 1], [], []>} : vector<16x32xbf16>, vector<32x16xbf16>, vector<16x16xf32> -> vector<16x16xf32>
    %235 = vector.extract_strided_slice %13 {offsets = [2, 0], sizes = [1, 16], strides = [1, 1]} : vector<9x128xf32> to vector<1x16xf32>
    %236 = vector.broadcast %235 : vector<1x16xf32> to vector<16x16xf32>
    %237 = arith.addf %234, %236 : vector<16x16xf32>
    %c0_83 = arith.constant 0 : index
    %c0_84 = arith.constant 0 : index
    %c0_85 = arith.constant 0 : index
    %238 = vector.load %arg11[%c0_83, %c0_84, %c0_85] : memref<2x32x16xbf16, #tpu.memory_space<vmem>>, vector<1x32x16xbf16>
    %239 = vector.shape_cast %238 : vector<1x32x16xbf16> to vector<32x16xbf16>
    %cst_86 = arith.constant dense<0.000000e+00> : vector<16x16xf32>
    %240 = tpu.matmul %231, %239, %cst_86 {dimension_numbers = #tpu.dot_dimension_numbers<[1], [0], [0], [1], [0, 0, 1, 1], [], []>} : vector<16x32xbf16>, vector<32x16xbf16>, vector<16x16xf32> -> vector<16x16xf32>
    %241 = vector.extract_strided_slice %13 {offsets = [3, 0], sizes = [1, 16], strides = [1, 1]} : vector<9x128xf32> to vector<1x16xf32>
    %242 = vector.broadcast %241 : vector<1x16xf32> to vector<16x16xf32>
    %243 = arith.addf %240, %242 : vector<16x16xf32>
    %244 = vector.extract_strided_slice %237 {offsets = [0, 0], sizes = [8, 16], strides = [1, 1]} : vector<16x16xf32> to vector<8x16xf32>
    %245 = vector.shape_cast %244 : vector<8x16xf32> to vector<8x1x16xf32>
    %246 = vector.extract_strided_slice %243 {offsets = [0, 0], sizes = [8, 16], strides = [1, 1]} : vector<16x16xf32> to vector<8x16xf32>
    %247 = vector.shape_cast %246 : vector<8x16xf32> to vector<1x8x16xf32>
    %248 = vector.broadcast %245 : vector<8x1x16xf32> to vector<8x8x16xf32>
    %249 = vector.broadcast %247 : vector<1x8x16xf32> to vector<8x8x16xf32>
    %250 = arith.mulf %248, %249 : vector<8x8x16xf32>
    %251 = vector.shape_cast %250 : vector<8x8x16xf32> to vector<64x16xf32>
    %252 = vector.extract_strided_slice %237 {offsets = [8, 0], sizes = [8, 16], strides = [1, 1]} : vector<16x16xf32> to vector<8x16xf32>
    %253 = vector.shape_cast %252 : vector<8x16xf32> to vector<8x1x16xf32>
    %254 = vector.extract_strided_slice %243 {offsets = [8, 0], sizes = [8, 16], strides = [1, 1]} : vector<16x16xf32> to vector<8x16xf32>
    %255 = vector.shape_cast %254 : vector<8x16xf32> to vector<1x8x16xf32>
    %256 = vector.broadcast %253 : vector<8x1x16xf32> to vector<8x8x16xf32>
    %257 = vector.broadcast %255 : vector<1x8x16xf32> to vector<8x8x16xf32>
    %258 = arith.mulf %256, %257 : vector<8x8x16xf32>
    %259 = vector.shape_cast %258 : vector<8x8x16xf32> to vector<64x16xf32>
    %260 = tpu.concatenate %251, %259 in 0 : vector<64x16xf32>, vector<64x16xf32> -> vector<128x16xf32>
    %261 = arith.truncf %260 : vector<128x16xf32> to vector<128x16xbf16>
    %c0_87 = arith.constant 0 : index
    %c0_88 = arith.constant 0 : index
    %c0_89 = arith.constant 0 : index
    %262 = vector.load %arg12[%c0_87, %c0_88, %c0_89] : memref<2x16x16xbf16, #tpu.memory_space<vmem>>, vector<1x16x16xbf16>
    %263 = vector.shape_cast %262 : vector<1x16x16xbf16> to vector<16x16xbf16>
    %cst_90 = arith.constant dense<0.000000e+00> : vector<128x16xf32>
    %264 = tpu.matmul %261, %263, %cst_90 {dimension_numbers = #tpu.dot_dimension_numbers<[1], [0], [0], [1], [0, 0, 1, 1], [], []>} : vector<128x16xbf16>, vector<16x16xbf16>, vector<128x16xf32> -> vector<128x16xf32>
    %265 = vector.extract_strided_slice %13 {offsets = [4, 0], sizes = [1, 16], strides = [1, 1]} : vector<9x128xf32> to vector<1x16xf32>
    %266 = vector.broadcast %265 : vector<1x16xf32> to vector<128x16xf32>
    %267 = arith.addf %264, %266 : vector<128x16xf32>
    %268 = arith.mulf %267, %2 : vector<128x16xf32>
    %269 = arith.addf %1, %268 : vector<128x16xf32>
    %270 = vector.extract_strided_slice %13 {offsets = [5, 0], sizes = [1, 16], strides = [1, 1]} : vector<9x128xf32> to vector<1x16xf32>
    %271 = vector.extract_strided_slice %13 {offsets = [6, 0], sizes = [1, 16], strides = [1, 1]} : vector<9x128xf32> to vector<1x16xf32>
    %cst_91 = arith.constant dense<0.000000e+00> : vector<128xf32>
    %272 = vector.multi_reduction <add>, %269, %cst_91 [1] : vector<128x16xf32> to vector<128xf32>
    %273 = vector.shape_cast %272 : vector<128xf32> to vector<128x1xf32>
    %cst_92 = arith.constant 1.600000e+01 : f32
    %274 = vector.broadcast %cst_92 : f32 to vector<128x1xf32>
    %275 = arith.divf %273, %274 : vector<128x1xf32>
    %276 = vector.broadcast %275 : vector<128x1xf32> to vector<128x16xf32>
    %277 = arith.subf %269, %276 : vector<128x16xf32>
    %278 = arith.mulf %277, %277 : vector<128x16xf32>
    %cst_93 = arith.constant dense<0.000000e+00> : vector<128xf32>
    %279 = vector.multi_reduction <add>, %278, %cst_93 [1] : vector<128x16xf32> to vector<128xf32>
    %280 = vector.shape_cast %279 : vector<128xf32> to vector<128x1xf32>
    %cst_94 = arith.constant 1.600000e+01 : f32
    %281 = vector.broadcast %cst_94 : f32 to vector<128x1xf32>
    %282 = arith.divf %280, %281 : vector<128x1xf32>
    %283 = vector.broadcast %275 : vector<128x1xf32> to vector<128x16xf32>
    %284 = arith.subf %269, %283 : vector<128x16xf32>
    %cst_95 = arith.constant 9.99999974E-6 : f32
    %285 = vector.broadcast %cst_95 : f32 to vector<128x1xf32>
    %286 = arith.addf %282, %285 : vector<128x1xf32>
    %287 = math.rsqrt %286 : vector<128x1xf32>
    %288 = vector.broadcast %287 : vector<128x1xf32> to vector<128x16xf32>
    %289 = arith.mulf %284, %288 : vector<128x16xf32>
    %290 = vector.broadcast %270 : vector<1x16xf32> to vector<128x16xf32>
    %291 = arith.mulf %289, %290 : vector<128x16xf32>
    %292 = vector.broadcast %271 : vector<1x16xf32> to vector<128x16xf32>
    %293 = arith.addf %291, %292 : vector<128x16xf32>
    %294 = arith.truncf %293 : vector<128x16xf32> to vector<128x16xbf16>
    %c0_96 = arith.constant 0 : index
    %c0_97 = arith.constant 0 : index
    %c0_98 = arith.constant 0 : index
    %295 = vector.load %arg13[%c0_96, %c0_97, %c0_98] : memref<2x16x32xbf16, #tpu.memory_space<vmem>>, vector<1x16x32xbf16>
    %296 = vector.shape_cast %295 : vector<1x16x32xbf16> to vector<16x32xbf16>
    %cst_99 = arith.constant dense<0.000000e+00> : vector<128x32xf32>
    %297 = tpu.matmul %294, %296, %cst_99 {dimension_numbers = #tpu.dot_dimension_numbers<[1], [0], [0], [1], [0, 0, 1, 1], [], []>} : vector<128x16xbf16>, vector<16x32xbf16>, vector<128x32xf32> -> vector<128x32xf32>
    %298 = vector.extract_strided_slice %13 {offsets = [7, 0], sizes = [1, 32], strides = [1, 1]} : vector<9x128xf32> to vector<1x32xf32>
    %299 = vector.broadcast %298 : vector<1x32xf32> to vector<128x32xf32>
    %300 = arith.addf %297, %299 : vector<128x32xf32>
    %cst_100 = arith.constant 0.000000e+00 : f32
    %301 = vector.broadcast %cst_100 : f32 to vector<128x32xf32>
    %302 = arith.maximumf %300, %301 : vector<128x32xf32>
    %303 = arith.truncf %302 : vector<128x32xf32> to vector<128x32xbf16>
    %c0_101 = arith.constant 0 : index
    %c0_102 = arith.constant 0 : index
    %c0_103 = arith.constant 0 : index
    %304 = vector.load %arg14[%c0_101, %c0_102, %c0_103] : memref<2x32x16xbf16, #tpu.memory_space<vmem>>, vector<1x32x16xbf16>
    %305 = vector.shape_cast %304 : vector<1x32x16xbf16> to vector<32x16xbf16>
    %cst_104 = arith.constant dense<0.000000e+00> : vector<128x16xf32>
    %306 = tpu.matmul %303, %305, %cst_104 {dimension_numbers = #tpu.dot_dimension_numbers<[1], [0], [0], [1], [0, 0, 1, 1], [], []>} : vector<128x32xbf16>, vector<32x16xbf16>, vector<128x16xf32> -> vector<128x16xf32>
    %307 = arith.addf %269, %306 : vector<128x16xf32>
    %308 = vector.extract_strided_slice %13 {offsets = [8, 0], sizes = [1, 16], strides = [1, 1]} : vector<9x128xf32> to vector<1x16xf32>
    %309 = vector.broadcast %308 : vector<1x16xf32> to vector<128x16xf32>
    %310 = arith.addf %307, %309 : vector<128x16xf32>
    %c1 = arith.constant 1 : index
    %c0_105 = arith.constant 0 : index
    %c0_106 = arith.constant 0 : index
    %311 = vector.load %arg15[%c1, %c0_105, %c0_106] : memref<2x9x128xf32, #tpu.memory_space<vmem>>, vector<1x9x128xf32>
    %312 = vector.shape_cast %311 : vector<1x9x128xf32> to vector<9x128xf32>
    %c1_107 = arith.constant 1 : index
    %c0_108 = arith.constant 0 : index
    %c0_109 = arith.constant 0 : index
    %313 = vector.load %arg16[%c1_107, %c0_108, %c0_109] : memref<2x9x128xf32, #tpu.memory_space<vmem>>, vector<1x9x128xf32>
    %314 = vector.shape_cast %313 : vector<1x9x128xf32> to vector<9x128xf32>
    %c1_110 = arith.constant 1 : index
    %c0_111 = arith.constant 0 : index
    %c0_112 = arith.constant 0 : index
    %c0_113 = arith.constant 0 : index
    %315 = vector.load %arg4[%c1_110, %c0_111, %c0_112, %c0_113] : memref<2x4x32x8xbf16, #tpu.memory_space<vmem>>, vector<1x4x32x8xbf16>
    %316 = vector.shape_cast %315 : vector<1x4x32x8xbf16> to vector<4x32x8xbf16>
    %c1_114 = arith.constant 1 : index
    %c0_115 = arith.constant 0 : index
    %c0_116 = arith.constant 0 : index
    %c0_117 = arith.constant 0 : index
    %317 = vector.load %arg5[%c1_114, %c0_115, %c0_116, %c0_117] : memref<2x4x32x8xbf16, #tpu.memory_space<vmem>>, vector<1x4x32x8xbf16>
    %318 = vector.shape_cast %317 : vector<1x4x32x8xbf16> to vector<4x32x8xbf16>
    %c1_118 = arith.constant 1 : index
    %c0_119 = arith.constant 0 : index
    %c0_120 = arith.constant 0 : index
    %c0_121 = arith.constant 0 : index
    %319 = vector.load %arg6[%c1_118, %c0_119, %c0_120, %c0_121] : memref<2x4x32x32xbf16, #tpu.memory_space<vmem>>, vector<1x4x32x32xbf16>
    %320 = vector.shape_cast %319 : vector<1x4x32x32xbf16> to vector<4x32x32xbf16>
    %321 = vector.extract_strided_slice %312 {offsets = [0, 0], sizes = [1, 32], strides = [1, 1]} : vector<9x128xf32> to vector<1x32xf32>
    %322 = vector.extract_strided_slice %312 {offsets = [1, 0], sizes = [1, 32], strides = [1, 1]} : vector<9x128xf32> to vector<1x32xf32>
    %cst_122 = arith.constant dense<0.000000e+00> : vector<16xf32>
    %323 = vector.multi_reduction <add>, %206, %cst_122 [1] : vector<16x32xf32> to vector<16xf32>
    %324 = vector.shape_cast %323 : vector<16xf32> to vector<16x1xf32>
    %cst_123 = arith.constant 3.200000e+01 : f32
    %325 = vector.broadcast %cst_123 : f32 to vector<16x1xf32>
    %326 = arith.divf %324, %325 : vector<16x1xf32>
    %327 = vector.broadcast %326 : vector<16x1xf32> to vector<16x32xf32>
    %328 = arith.subf %206, %327 : vector<16x32xf32>
    %329 = arith.mulf %328, %328 : vector<16x32xf32>
    %cst_124 = arith.constant dense<0.000000e+00> : vector<16xf32>
    %330 = vector.multi_reduction <add>, %329, %cst_124 [1] : vector<16x32xf32> to vector<16xf32>
    %331 = vector.shape_cast %330 : vector<16xf32> to vector<16x1xf32>
    %cst_125 = arith.constant 3.200000e+01 : f32
    %332 = vector.broadcast %cst_125 : f32 to vector<16x1xf32>
    %333 = arith.divf %331, %332 : vector<16x1xf32>
    %334 = vector.broadcast %326 : vector<16x1xf32> to vector<16x32xf32>
    %335 = arith.subf %206, %334 : vector<16x32xf32>
    %cst_126 = arith.constant 9.99999974E-6 : f32
    %336 = vector.broadcast %cst_126 : f32 to vector<16x1xf32>
    %337 = arith.addf %333, %336 : vector<16x1xf32>
    %338 = math.rsqrt %337 : vector<16x1xf32>
    %339 = vector.broadcast %338 : vector<16x1xf32> to vector<16x32xf32>
    %340 = arith.mulf %335, %339 : vector<16x32xf32>
    %341 = vector.broadcast %321 : vector<1x32xf32> to vector<16x32xf32>
    %342 = arith.mulf %340, %341 : vector<16x32xf32>
    %343 = vector.broadcast %322 : vector<1x32xf32> to vector<16x32xf32>
    %344 = arith.addf %342, %343 : vector<16x32xf32>
    %345 = arith.truncf %344 : vector<16x32xf32> to vector<16x32xbf16>
    %346 = vector.extract_strided_slice %312 {offsets = [2, 0], sizes = [1, 16], strides = [1, 1]} : vector<9x128xf32> to vector<1x16xf32>
    %347 = vector.extract_strided_slice %312 {offsets = [3, 0], sizes = [1, 16], strides = [1, 1]} : vector<9x128xf32> to vector<1x16xf32>
    %cst_127 = arith.constant dense<0.000000e+00> : vector<128xf32>
    %348 = vector.multi_reduction <add>, %310, %cst_127 [1] : vector<128x16xf32> to vector<128xf32>
    %349 = vector.shape_cast %348 : vector<128xf32> to vector<128x1xf32>
    %cst_128 = arith.constant 1.600000e+01 : f32
    %350 = vector.broadcast %cst_128 : f32 to vector<128x1xf32>
    %351 = arith.divf %349, %350 : vector<128x1xf32>
    %352 = vector.broadcast %351 : vector<128x1xf32> to vector<128x16xf32>
    %353 = arith.subf %310, %352 : vector<128x16xf32>
    %354 = arith.mulf %353, %353 : vector<128x16xf32>
    %cst_129 = arith.constant dense<0.000000e+00> : vector<128xf32>
    %355 = vector.multi_reduction <add>, %354, %cst_129 [1] : vector<128x16xf32> to vector<128xf32>
    %356 = vector.shape_cast %355 : vector<128xf32> to vector<128x1xf32>
    %cst_130 = arith.constant 1.600000e+01 : f32
    %357 = vector.broadcast %cst_130 : f32 to vector<128x1xf32>
    %358 = arith.divf %356, %357 : vector<128x1xf32>
    %359 = vector.broadcast %351 : vector<128x1xf32> to vector<128x16xf32>
    %360 = arith.subf %310, %359 : vector<128x16xf32>
    %cst_131 = arith.constant 9.99999974E-6 : f32
    %361 = vector.broadcast %cst_131 : f32 to vector<128x1xf32>
    %362 = arith.addf %358, %361 : vector<128x1xf32>
    %363 = math.rsqrt %362 : vector<128x1xf32>
    %364 = vector.broadcast %363 : vector<128x1xf32> to vector<128x16xf32>
    %365 = arith.mulf %360, %364 : vector<128x16xf32>
    %366 = vector.broadcast %346 : vector<1x16xf32> to vector<128x16xf32>
    %367 = arith.mulf %365, %366 : vector<128x16xf32>
    %368 = vector.broadcast %347 : vector<1x16xf32> to vector<128x16xf32>
    %369 = arith.addf %367, %368 : vector<128x16xf32>
    %370 = arith.truncf %369 : vector<128x16xf32> to vector<128x16xbf16>
    %c1_132 = arith.constant 1 : index
    %c0_133 = arith.constant 0 : index
    %c0_134 = arith.constant 0 : index
    %371 = vector.load %arg7[%c1_132, %c0_133, %c0_134] : memref<2x16x4xbf16, #tpu.memory_space<vmem>>, vector<1x16x4xbf16>
    %372 = vector.shape_cast %371 : vector<1x16x4xbf16> to vector<16x4xbf16>
    %cst_135 = arith.constant dense<0.000000e+00> : vector<128x4xf32>
    %373 = tpu.matmul %370, %372, %cst_135 {dimension_numbers = #tpu.dot_dimension_numbers<[1], [0], [0], [1], [0, 0, 1, 1], [], []>} : vector<128x16xbf16>, vector<16x4xbf16>, vector<128x4xf32> -> vector<128x4xf32>
    %374 = vector.extract_strided_slice %316 {offsets = [0, 0, 0], sizes = [1, 32, 8], strides = [1, 1, 1]} : vector<4x32x8xbf16> to vector<1x32x8xbf16>
    %375 = vector.shape_cast %374 : vector<1x32x8xbf16> to vector<32x8xbf16>
    %cst_136 = arith.constant dense<0.000000e+00> : vector<16x8xf32>
    %376 = tpu.matmul %345, %375, %cst_136 {dimension_numbers = #tpu.dot_dimension_numbers<[1], [0], [0], [1], [0, 0, 1, 1], [], []>} : vector<16x32xbf16>, vector<32x8xbf16>, vector<16x8xf32> -> vector<16x8xf32>
    %377 = vector.extract_strided_slice %318 {offsets = [0, 0, 0], sizes = [1, 32, 8], strides = [1, 1, 1]} : vector<4x32x8xbf16> to vector<1x32x8xbf16>
    %378 = vector.shape_cast %377 : vector<1x32x8xbf16> to vector<32x8xbf16>
    %cst_137 = arith.constant dense<0.000000e+00> : vector<16x8xf32>
    %379 = tpu.matmul %345, %378, %cst_137 {dimension_numbers = #tpu.dot_dimension_numbers<[1], [0], [0], [1], [0, 0, 1, 1], [], []>} : vector<16x32xbf16>, vector<32x8xbf16>, vector<16x8xf32> -> vector<16x8xf32>
    %380 = vector.extract_strided_slice %320 {offsets = [0, 0, 0], sizes = [1, 32, 32], strides = [1, 1, 1]} : vector<4x32x32xbf16> to vector<1x32x32xbf16>
    %381 = vector.shape_cast %380 : vector<1x32x32xbf16> to vector<32x32xbf16>
    %cst_138 = arith.constant dense<0.000000e+00> : vector<16x32xf32>
    %382 = tpu.matmul %345, %381, %cst_138 {dimension_numbers = #tpu.dot_dimension_numbers<[1], [0], [0], [1], [0, 0, 1, 1], [], []>} : vector<16x32xbf16>, vector<32x32xbf16>, vector<16x32xf32> -> vector<16x32xf32>
    %383 = vector.extract_strided_slice %373 {offsets = [0, 0], sizes = [128, 1], strides = [1, 1]} : vector<128x4xf32> to vector<128x1xf32>
    %384 = vector.shape_cast %383 : vector<128x1xf32> to vector<2x8x8xf32>
    %385 = vector.extract_strided_slice %316 {offsets = [1, 0, 0], sizes = [1, 32, 8], strides = [1, 1, 1]} : vector<4x32x8xbf16> to vector<1x32x8xbf16>
    %386 = vector.shape_cast %385 : vector<1x32x8xbf16> to vector<32x8xbf16>
    %cst_139 = arith.constant dense<0.000000e+00> : vector<16x8xf32>
    %387 = tpu.matmul %345, %386, %cst_139 {dimension_numbers = #tpu.dot_dimension_numbers<[1], [0], [0], [1], [0, 0, 1, 1], [], []>} : vector<16x32xbf16>, vector<32x8xbf16>, vector<16x8xf32> -> vector<16x8xf32>
    %388 = vector.extract_strided_slice %318 {offsets = [1, 0, 0], sizes = [1, 32, 8], strides = [1, 1, 1]} : vector<4x32x8xbf16> to vector<1x32x8xbf16>
    %389 = vector.shape_cast %388 : vector<1x32x8xbf16> to vector<32x8xbf16>
    %cst_140 = arith.constant dense<0.000000e+00> : vector<16x8xf32>
    %390 = tpu.matmul %345, %389, %cst_140 {dimension_numbers = #tpu.dot_dimension_numbers<[1], [0], [0], [1], [0, 0, 1, 1], [], []>} : vector<16x32xbf16>, vector<32x8xbf16>, vector<16x8xf32> -> vector<16x8xf32>
    %391 = vector.extract_strided_slice %320 {offsets = [1, 0, 0], sizes = [1, 32, 32], strides = [1, 1, 1]} : vector<4x32x32xbf16> to vector<1x32x32xbf16>
    %392 = vector.shape_cast %391 : vector<1x32x32xbf16> to vector<32x32xbf16>
    %cst_141 = arith.constant dense<0.000000e+00> : vector<16x32xf32>
    %393 = tpu.matmul %345, %392, %cst_141 {dimension_numbers = #tpu.dot_dimension_numbers<[1], [0], [0], [1], [0, 0, 1, 1], [], []>} : vector<16x32xbf16>, vector<32x32xbf16>, vector<16x32xf32> -> vector<16x32xf32>
    %394 = vector.extract_strided_slice %373 {offsets = [0, 1], sizes = [128, 1], strides = [1, 1]} : vector<128x4xf32> to vector<128x1xf32>
    %395 = vector.shape_cast %394 : vector<128x1xf32> to vector<2x8x8xf32>
    %396 = vector.extract_strided_slice %316 {offsets = [2, 0, 0], sizes = [1, 32, 8], strides = [1, 1, 1]} : vector<4x32x8xbf16> to vector<1x32x8xbf16>
    %397 = vector.shape_cast %396 : vector<1x32x8xbf16> to vector<32x8xbf16>
    %cst_142 = arith.constant dense<0.000000e+00> : vector<16x8xf32>
    %398 = tpu.matmul %345, %397, %cst_142 {dimension_numbers = #tpu.dot_dimension_numbers<[1], [0], [0], [1], [0, 0, 1, 1], [], []>} : vector<16x32xbf16>, vector<32x8xbf16>, vector<16x8xf32> -> vector<16x8xf32>
    %399 = vector.extract_strided_slice %318 {offsets = [2, 0, 0], sizes = [1, 32, 8], strides = [1, 1, 1]} : vector<4x32x8xbf16> to vector<1x32x8xbf16>
    %400 = vector.shape_cast %399 : vector<1x32x8xbf16> to vector<32x8xbf16>
    %cst_143 = arith.constant dense<0.000000e+00> : vector<16x8xf32>
    %401 = tpu.matmul %345, %400, %cst_143 {dimension_numbers = #tpu.dot_dimension_numbers<[1], [0], [0], [1], [0, 0, 1, 1], [], []>} : vector<16x32xbf16>, vector<32x8xbf16>, vector<16x8xf32> -> vector<16x8xf32>
    %402 = vector.extract_strided_slice %320 {offsets = [2, 0, 0], sizes = [1, 32, 32], strides = [1, 1, 1]} : vector<4x32x32xbf16> to vector<1x32x32xbf16>
    %403 = vector.shape_cast %402 : vector<1x32x32xbf16> to vector<32x32xbf16>
    %cst_144 = arith.constant dense<0.000000e+00> : vector<16x32xf32>
    %404 = tpu.matmul %345, %403, %cst_144 {dimension_numbers = #tpu.dot_dimension_numbers<[1], [0], [0], [1], [0, 0, 1, 1], [], []>} : vector<16x32xbf16>, vector<32x32xbf16>, vector<16x32xf32> -> vector<16x32xf32>
    %405 = vector.extract_strided_slice %373 {offsets = [0, 2], sizes = [128, 1], strides = [1, 1]} : vector<128x4xf32> to vector<128x1xf32>
    %406 = vector.shape_cast %405 : vector<128x1xf32> to vector<2x8x8xf32>
    %407 = vector.extract_strided_slice %316 {offsets = [3, 0, 0], sizes = [1, 32, 8], strides = [1, 1, 1]} : vector<4x32x8xbf16> to vector<1x32x8xbf16>
    %408 = vector.shape_cast %407 : vector<1x32x8xbf16> to vector<32x8xbf16>
    %cst_145 = arith.constant dense<0.000000e+00> : vector<16x8xf32>
    %409 = tpu.matmul %345, %408, %cst_145 {dimension_numbers = #tpu.dot_dimension_numbers<[1], [0], [0], [1], [0, 0, 1, 1], [], []>} : vector<16x32xbf16>, vector<32x8xbf16>, vector<16x8xf32> -> vector<16x8xf32>
    %410 = vector.extract_strided_slice %318 {offsets = [3, 0, 0], sizes = [1, 32, 8], strides = [1, 1, 1]} : vector<4x32x8xbf16> to vector<1x32x8xbf16>
    %411 = vector.shape_cast %410 : vector<1x32x8xbf16> to vector<32x8xbf16>
    %cst_146 = arith.constant dense<0.000000e+00> : vector<16x8xf32>
    %412 = tpu.matmul %345, %411, %cst_146 {dimension_numbers = #tpu.dot_dimension_numbers<[1], [0], [0], [1], [0, 0, 1, 1], [], []>} : vector<16x32xbf16>, vector<32x8xbf16>, vector<16x8xf32> -> vector<16x8xf32>
    %413 = vector.extract_strided_slice %320 {offsets = [3, 0, 0], sizes = [1, 32, 32], strides = [1, 1, 1]} : vector<4x32x32xbf16> to vector<1x32x32xbf16>
    %414 = vector.shape_cast %413 : vector<1x32x32xbf16> to vector<32x32xbf16>
    %cst_147 = arith.constant dense<0.000000e+00> : vector<16x32xf32>
    %415 = tpu.matmul %345, %414, %cst_147 {dimension_numbers = #tpu.dot_dimension_numbers<[1], [0], [0], [1], [0, 0, 1, 1], [], []>} : vector<16x32xbf16>, vector<32x32xbf16>, vector<16x32xf32> -> vector<16x32xf32>
    %416 = vector.extract_strided_slice %373 {offsets = [0, 3], sizes = [128, 1], strides = [1, 1]} : vector<128x4xf32> to vector<128x1xf32>
    %417 = vector.shape_cast %416 : vector<128x1xf32> to vector<2x8x8xf32>
    %418 = vector.shape_cast %376 : vector<16x8xf32> to vector<1x16x8xf32>
    %419 = vector.shape_cast %387 : vector<16x8xf32> to vector<1x16x8xf32>
    %420 = vector.shape_cast %398 : vector<16x8xf32> to vector<1x16x8xf32>
    %421 = vector.shape_cast %409 : vector<16x8xf32> to vector<1x16x8xf32>
    %422 = tpu.concatenate %418, %419, %420, %421 in 0 : vector<1x16x8xf32>, vector<1x16x8xf32>, vector<1x16x8xf32>, vector<1x16x8xf32> -> vector<4x16x8xf32>
    %423 = vector.shape_cast %422 : vector<4x16x8xf32> to vector<8x8x8xf32>
    %424 = vector.shape_cast %379 : vector<16x8xf32> to vector<1x16x8xf32>
    %425 = vector.shape_cast %390 : vector<16x8xf32> to vector<1x16x8xf32>
    %426 = vector.shape_cast %401 : vector<16x8xf32> to vector<1x16x8xf32>
    %427 = vector.shape_cast %412 : vector<16x8xf32> to vector<1x16x8xf32>
    %428 = tpu.concatenate %424, %425, %426, %427 in 0 : vector<1x16x8xf32>, vector<1x16x8xf32>, vector<1x16x8xf32>, vector<1x16x8xf32> -> vector<4x16x8xf32>
    %429 = vector.shape_cast %428 : vector<4x16x8xf32> to vector<8x8x8xf32>
    %430 = vector.shape_cast %382 : vector<16x32xf32> to vector<1x16x32xf32>
    %431 = vector.shape_cast %393 : vector<16x32xf32> to vector<1x16x32xf32>
    %432 = vector.shape_cast %404 : vector<16x32xf32> to vector<1x16x32xf32>
    %433 = vector.shape_cast %415 : vector<16x32xf32> to vector<1x16x32xf32>
    %434 = tpu.concatenate %430, %431, %432, %433 in 0 : vector<1x16x32xf32>, vector<1x16x32xf32>, vector<1x16x32xf32>, vector<1x16x32xf32> -> vector<4x16x32xf32>
    %435 = vector.shape_cast %434 : vector<4x16x32xf32> to vector<8x8x32xf32>
    %436 = vector.shape_cast %384 : vector<2x8x8xf32> to vector<1x2x8x8xf32>
    %437 = vector.shape_cast %395 : vector<2x8x8xf32> to vector<1x2x8x8xf32>
    %438 = vector.shape_cast %406 : vector<2x8x8xf32> to vector<1x2x8x8xf32>
    %439 = vector.shape_cast %417 : vector<2x8x8xf32> to vector<1x2x8x8xf32>
    %440 = tpu.concatenate %436, %437, %438, %439 in 0 : vector<1x2x8x8xf32>, vector<1x2x8x8xf32>, vector<1x2x8x8xf32>, vector<1x2x8x8xf32> -> vector<4x2x8x8xf32>
    %441 = vector.shape_cast %440 : vector<4x2x8x8xf32> to vector<8x8x8xf32>
    %442 = arith.truncf %423 : vector<8x8x8xf32> to vector<8x8x8xbf16>
    %443 = arith.truncf %429 : vector<8x8x8xf32> to vector<8x8x8xbf16>
    "tpu.trace_start"() <{level = 10 : i32, message = "zqd,zkd->zqk"}> : () -> ()
    %cst_148 = arith.constant dense<0.000000e+00> : vector<8x8x8xf32>
    %444 = tpu.matmul %442, %443, %cst_148 {dimension_numbers = #tpu.dot_dimension_numbers<[2], [2], [1], [1], [0, 0, 0, 1, 1, 1], [0], [0]>} : vector<8x8x8xbf16>, vector<8x8x8xbf16>, vector<8x8x8xf32> -> vector<8x8x8xf32>
    "tpu.trace_stop"() : () -> ()
    %cst_149 = arith.constant 0.353553385 : f32
    %445 = vector.broadcast %cst_149 : f32 to vector<8x8x8xf32>
    %446 = arith.mulf %444, %445 : vector<8x8x8xf32>
    %447 = arith.addf %446, %441 : vector<8x8x8xf32>
    %448 = arith.addf %447, %9 : vector<8x8x8xf32>
    %cst_150 = arith.constant dense<0xFF800000> : vector<8x8xf32>
    %449 = vector.multi_reduction <maximumf>, %448, %cst_150 [2] : vector<8x8x8xf32> to vector<8x8xf32>
    %450 = vector.shape_cast %449 : vector<8x8xf32> to vector<8x8x1xf32>
    %451 = vector.broadcast %450 : vector<8x8x1xf32> to vector<8x8x8xf32>
    %452 = arith.subf %448, %451 : vector<8x8x8xf32>
    %453 = math.exp %452 : vector<8x8x8xf32>
    %cst_151 = arith.constant dense<0.000000e+00> : vector<8x8xf32>
    %454 = vector.multi_reduction <add>, %453, %cst_151 [2] : vector<8x8x8xf32> to vector<8x8xf32>
    %455 = vector.shape_cast %454 : vector<8x8xf32> to vector<8x8x1xf32>
    %456 = vector.broadcast %455 : vector<8x8x1xf32> to vector<8x8x8xf32>
    %457 = arith.divf %453, %456 : vector<8x8x8xf32>
    %458 = arith.truncf %457 : vector<8x8x8xf32> to vector<8x8x8xbf16>
    %459 = arith.truncf %435 : vector<8x8x32xf32> to vector<8x8x32xbf16>
    "tpu.trace_start"() <{level = 10 : i32, message = "zqk,zke->zqe"}> : () -> ()
    %cst_152 = arith.constant dense<0.000000e+00> : vector<8x8x32xf32>
    %460 = tpu.matmul %458, %459, %cst_152 {dimension_numbers = #tpu.dot_dimension_numbers<[2], [1], [1], [2], [0, 0, 0, 1, 1, 2], [0], [0]>} : vector<8x8x8xbf16>, vector<8x8x32xbf16>, vector<8x8x32xf32> -> vector<8x8x32xf32>
    "tpu.trace_stop"() : () -> ()
    %461 = vector.shape_cast %460 : vector<8x8x32xf32> to vector<4x16x32xf32>
    %cst_153 = arith.constant dense<0.000000e+00> : vector<16x32xf32>
    %462 = vector.multi_reduction <add>, %461, %cst_153 [0] : vector<4x16x32xf32> to vector<16x32xf32>
    %463 = arith.addf %206, %462 : vector<16x32xf32>
    %464 = vector.extract_strided_slice %312 {offsets = [4, 0], sizes = [1, 32], strides = [1, 1]} : vector<9x128xf32> to vector<1x32xf32>
    %465 = vector.broadcast %464 : vector<1x32xf32> to vector<16x32xf32>
    %466 = arith.addf %463, %465 : vector<16x32xf32>
    %467 = vector.extract_strided_slice %312 {offsets = [5, 0], sizes = [1, 32], strides = [1, 1]} : vector<9x128xf32> to vector<1x32xf32>
    %468 = vector.extract_strided_slice %312 {offsets = [6, 0], sizes = [1, 32], strides = [1, 1]} : vector<9x128xf32> to vector<1x32xf32>
    %cst_154 = arith.constant dense<0.000000e+00> : vector<16xf32>
    %469 = vector.multi_reduction <add>, %466, %cst_154 [1] : vector<16x32xf32> to vector<16xf32>
    %470 = vector.shape_cast %469 : vector<16xf32> to vector<16x1xf32>
    %cst_155 = arith.constant 3.200000e+01 : f32
    %471 = vector.broadcast %cst_155 : f32 to vector<16x1xf32>
    %472 = arith.divf %470, %471 : vector<16x1xf32>
    %473 = vector.broadcast %472 : vector<16x1xf32> to vector<16x32xf32>
    %474 = arith.subf %466, %473 : vector<16x32xf32>
    %475 = arith.mulf %474, %474 : vector<16x32xf32>
    %cst_156 = arith.constant dense<0.000000e+00> : vector<16xf32>
    %476 = vector.multi_reduction <add>, %475, %cst_156 [1] : vector<16x32xf32> to vector<16xf32>
    %477 = vector.shape_cast %476 : vector<16xf32> to vector<16x1xf32>
    %cst_157 = arith.constant 3.200000e+01 : f32
    %478 = vector.broadcast %cst_157 : f32 to vector<16x1xf32>
    %479 = arith.divf %477, %478 : vector<16x1xf32>
    %480 = vector.broadcast %472 : vector<16x1xf32> to vector<16x32xf32>
    %481 = arith.subf %466, %480 : vector<16x32xf32>
    %cst_158 = arith.constant 9.99999974E-6 : f32
    %482 = vector.broadcast %cst_158 : f32 to vector<16x1xf32>
    %483 = arith.addf %479, %482 : vector<16x1xf32>
    %484 = math.rsqrt %483 : vector<16x1xf32>
    %485 = vector.broadcast %484 : vector<16x1xf32> to vector<16x32xf32>
    %486 = arith.mulf %481, %485 : vector<16x32xf32>
    %487 = vector.broadcast %467 : vector<1x32xf32> to vector<16x32xf32>
    %488 = arith.mulf %486, %487 : vector<16x32xf32>
    %489 = vector.broadcast %468 : vector<1x32xf32> to vector<16x32xf32>
    %490 = arith.addf %488, %489 : vector<16x32xf32>
    %491 = arith.truncf %490 : vector<16x32xf32> to vector<16x32xbf16>
    %c1_159 = arith.constant 1 : index
    %c0_160 = arith.constant 0 : index
    %c0_161 = arith.constant 0 : index
    %492 = vector.load %arg8[%c1_159, %c0_160, %c0_161] : memref<2x32x128xbf16, #tpu.memory_space<vmem>>, vector<1x32x128xbf16>
    %493 = vector.shape_cast %492 : vector<1x32x128xbf16> to vector<32x128xbf16>
    %cst_162 = arith.constant dense<0.000000e+00> : vector<16x128xf32>
    %494 = tpu.matmul %491, %493, %cst_162 {dimension_numbers = #tpu.dot_dimension_numbers<[1], [0], [0], [1], [0, 0, 1, 1], [], []>} : vector<16x32xbf16>, vector<32x128xbf16>, vector<16x128xf32> -> vector<16x128xf32>
    %495 = vector.extract_strided_slice %312 {offsets = [7, 0], sizes = [1, 128], strides = [1, 1]} : vector<9x128xf32> to vector<1x128xf32>
    %496 = vector.broadcast %495 : vector<1x128xf32> to vector<16x128xf32>
    %497 = arith.addf %494, %496 : vector<16x128xf32>
    %cst_163 = arith.constant 0.000000e+00 : f32
    %498 = vector.broadcast %cst_163 : f32 to vector<16x128xf32>
    %499 = arith.maximumf %497, %498 : vector<16x128xf32>
    %500 = arith.truncf %499 : vector<16x128xf32> to vector<16x128xbf16>
    %c1_164 = arith.constant 1 : index
    %c0_165 = arith.constant 0 : index
    %c0_166 = arith.constant 0 : index
    %501 = vector.load %arg9[%c1_164, %c0_165, %c0_166] : memref<2x128x32xbf16, #tpu.memory_space<vmem>>, vector<1x128x32xbf16>
    %502 = vector.shape_cast %501 : vector<1x128x32xbf16> to vector<128x32xbf16>
    %cst_167 = arith.constant dense<0.000000e+00> : vector<16x32xf32>
    %503 = tpu.matmul %500, %502, %cst_167 {dimension_numbers = #tpu.dot_dimension_numbers<[1], [0], [0], [1], [0, 0, 1, 1], [], []>} : vector<16x128xbf16>, vector<128x32xbf16>, vector<16x32xf32> -> vector<16x32xf32>
    %504 = arith.addf %466, %503 : vector<16x32xf32>
    %505 = vector.extract_strided_slice %312 {offsets = [8, 0], sizes = [1, 32], strides = [1, 1]} : vector<9x128xf32> to vector<1x32xf32>
    %506 = vector.broadcast %505 : vector<1x32xf32> to vector<16x32xf32>
    %507 = arith.addf %504, %506 : vector<16x32xf32>
    %508 = vector.extract_strided_slice %314 {offsets = [0, 0], sizes = [1, 32], strides = [1, 1]} : vector<9x128xf32> to vector<1x32xf32>
    %509 = vector.extract_strided_slice %314 {offsets = [1, 0], sizes = [1, 32], strides = [1, 1]} : vector<9x128xf32> to vector<1x32xf32>
    %cst_168 = arith.constant dense<0.000000e+00> : vector<16xf32>
    %510 = vector.multi_reduction <add>, %507, %cst_168 [1] : vector<16x32xf32> to vector<16xf32>
    %511 = vector.shape_cast %510 : vector<16xf32> to vector<16x1xf32>
    %cst_169 = arith.constant 3.200000e+01 : f32
    %512 = vector.broadcast %cst_169 : f32 to vector<16x1xf32>
    %513 = arith.divf %511, %512 : vector<16x1xf32>
    %514 = vector.broadcast %513 : vector<16x1xf32> to vector<16x32xf32>
    %515 = arith.subf %507, %514 : vector<16x32xf32>
    %516 = arith.mulf %515, %515 : vector<16x32xf32>
    %cst_170 = arith.constant dense<0.000000e+00> : vector<16xf32>
    %517 = vector.multi_reduction <add>, %516, %cst_170 [1] : vector<16x32xf32> to vector<16xf32>
    %518 = vector.shape_cast %517 : vector<16xf32> to vector<16x1xf32>
    %cst_171 = arith.constant 3.200000e+01 : f32
    %519 = vector.broadcast %cst_171 : f32 to vector<16x1xf32>
    %520 = arith.divf %518, %519 : vector<16x1xf32>
    %521 = vector.broadcast %513 : vector<16x1xf32> to vector<16x32xf32>
    %522 = arith.subf %507, %521 : vector<16x32xf32>
    %cst_172 = arith.constant 9.99999974E-6 : f32
    %523 = vector.broadcast %cst_172 : f32 to vector<16x1xf32>
    %524 = arith.addf %520, %523 : vector<16x1xf32>
    %525 = math.rsqrt %524 : vector<16x1xf32>
    %526 = vector.broadcast %525 : vector<16x1xf32> to vector<16x32xf32>
    %527 = arith.mulf %522, %526 : vector<16x32xf32>
    %528 = vector.broadcast %508 : vector<1x32xf32> to vector<16x32xf32>
    %529 = arith.mulf %527, %528 : vector<16x32xf32>
    %530 = vector.broadcast %509 : vector<1x32xf32> to vector<16x32xf32>
    %531 = arith.addf %529, %530 : vector<16x32xf32>
    %532 = arith.truncf %531 : vector<16x32xf32> to vector<16x32xbf16>
    %c1_173 = arith.constant 1 : index
    %c0_174 = arith.constant 0 : index
    %c0_175 = arith.constant 0 : index
    %533 = vector.load %arg10[%c1_173, %c0_174, %c0_175] : memref<2x32x16xbf16, #tpu.memory_space<vmem>>, vector<1x32x16xbf16>
    %534 = vector.shape_cast %533 : vector<1x32x16xbf16> to vector<32x16xbf16>
    %cst_176 = arith.constant dense<0.000000e+00> : vector<16x16xf32>
    %535 = tpu.matmul %532, %534, %cst_176 {dimension_numbers = #tpu.dot_dimension_numbers<[1], [0], [0], [1], [0, 0, 1, 1], [], []>} : vector<16x32xbf16>, vector<32x16xbf16>, vector<16x16xf32> -> vector<16x16xf32>
    %536 = vector.extract_strided_slice %314 {offsets = [2, 0], sizes = [1, 16], strides = [1, 1]} : vector<9x128xf32> to vector<1x16xf32>
    %537 = vector.broadcast %536 : vector<1x16xf32> to vector<16x16xf32>
    %538 = arith.addf %535, %537 : vector<16x16xf32>
    %c1_177 = arith.constant 1 : index
    %c0_178 = arith.constant 0 : index
    %c0_179 = arith.constant 0 : index
    %539 = vector.load %arg11[%c1_177, %c0_178, %c0_179] : memref<2x32x16xbf16, #tpu.memory_space<vmem>>, vector<1x32x16xbf16>
    %540 = vector.shape_cast %539 : vector<1x32x16xbf16> to vector<32x16xbf16>
    %cst_180 = arith.constant dense<0.000000e+00> : vector<16x16xf32>
    %541 = tpu.matmul %532, %540, %cst_180 {dimension_numbers = #tpu.dot_dimension_numbers<[1], [0], [0], [1], [0, 0, 1, 1], [], []>} : vector<16x32xbf16>, vector<32x16xbf16>, vector<16x16xf32> -> vector<16x16xf32>
    %542 = vector.extract_strided_slice %314 {offsets = [3, 0], sizes = [1, 16], strides = [1, 1]} : vector<9x128xf32> to vector<1x16xf32>
    %543 = vector.broadcast %542 : vector<1x16xf32> to vector<16x16xf32>
    %544 = arith.addf %541, %543 : vector<16x16xf32>
    %545 = vector.extract_strided_slice %538 {offsets = [0, 0], sizes = [8, 16], strides = [1, 1]} : vector<16x16xf32> to vector<8x16xf32>
    %546 = vector.shape_cast %545 : vector<8x16xf32> to vector<8x1x16xf32>
    %547 = vector.extract_strided_slice %544 {offsets = [0, 0], sizes = [8, 16], strides = [1, 1]} : vector<16x16xf32> to vector<8x16xf32>
    %548 = vector.shape_cast %547 : vector<8x16xf32> to vector<1x8x16xf32>
    %549 = vector.broadcast %546 : vector<8x1x16xf32> to vector<8x8x16xf32>
    %550 = vector.broadcast %548 : vector<1x8x16xf32> to vector<8x8x16xf32>
    %551 = arith.mulf %549, %550 : vector<8x8x16xf32>
    %552 = vector.shape_cast %551 : vector<8x8x16xf32> to vector<64x16xf32>
    %553 = vector.extract_strided_slice %538 {offsets = [8, 0], sizes = [8, 16], strides = [1, 1]} : vector<16x16xf32> to vector<8x16xf32>
    %554 = vector.shape_cast %553 : vector<8x16xf32> to vector<8x1x16xf32>
    %555 = vector.extract_strided_slice %544 {offsets = [8, 0], sizes = [8, 16], strides = [1, 1]} : vector<16x16xf32> to vector<8x16xf32>
    %556 = vector.shape_cast %555 : vector<8x16xf32> to vector<1x8x16xf32>
    %557 = vector.broadcast %554 : vector<8x1x16xf32> to vector<8x8x16xf32>
    %558 = vector.broadcast %556 : vector<1x8x16xf32> to vector<8x8x16xf32>
    %559 = arith.mulf %557, %558 : vector<8x8x16xf32>
    %560 = vector.shape_cast %559 : vector<8x8x16xf32> to vector<64x16xf32>
    %561 = tpu.concatenate %552, %560 in 0 : vector<64x16xf32>, vector<64x16xf32> -> vector<128x16xf32>
    %562 = arith.truncf %561 : vector<128x16xf32> to vector<128x16xbf16>
    %c1_181 = arith.constant 1 : index
    %c0_182 = arith.constant 0 : index
    %c0_183 = arith.constant 0 : index
    %563 = vector.load %arg12[%c1_181, %c0_182, %c0_183] : memref<2x16x16xbf16, #tpu.memory_space<vmem>>, vector<1x16x16xbf16>
    %564 = vector.shape_cast %563 : vector<1x16x16xbf16> to vector<16x16xbf16>
    %cst_184 = arith.constant dense<0.000000e+00> : vector<128x16xf32>
    %565 = tpu.matmul %562, %564, %cst_184 {dimension_numbers = #tpu.dot_dimension_numbers<[1], [0], [0], [1], [0, 0, 1, 1], [], []>} : vector<128x16xbf16>, vector<16x16xbf16>, vector<128x16xf32> -> vector<128x16xf32>
    %566 = vector.extract_strided_slice %314 {offsets = [4, 0], sizes = [1, 16], strides = [1, 1]} : vector<9x128xf32> to vector<1x16xf32>
    %567 = vector.broadcast %566 : vector<1x16xf32> to vector<128x16xf32>
    %568 = arith.addf %565, %567 : vector<128x16xf32>
    %569 = arith.mulf %568, %2 : vector<128x16xf32>
    %570 = arith.addf %310, %569 : vector<128x16xf32>
    %571 = vector.extract_strided_slice %314 {offsets = [5, 0], sizes = [1, 16], strides = [1, 1]} : vector<9x128xf32> to vector<1x16xf32>
    %572 = vector.extract_strided_slice %314 {offsets = [6, 0], sizes = [1, 16], strides = [1, 1]} : vector<9x128xf32> to vector<1x16xf32>
    %cst_185 = arith.constant dense<0.000000e+00> : vector<128xf32>
    %573 = vector.multi_reduction <add>, %570, %cst_185 [1] : vector<128x16xf32> to vector<128xf32>
    %574 = vector.shape_cast %573 : vector<128xf32> to vector<128x1xf32>
    %cst_186 = arith.constant 1.600000e+01 : f32
    %575 = vector.broadcast %cst_186 : f32 to vector<128x1xf32>
    %576 = arith.divf %574, %575 : vector<128x1xf32>
    %577 = vector.broadcast %576 : vector<128x1xf32> to vector<128x16xf32>
    %578 = arith.subf %570, %577 : vector<128x16xf32>
    %579 = arith.mulf %578, %578 : vector<128x16xf32>
    %cst_187 = arith.constant dense<0.000000e+00> : vector<128xf32>
    %580 = vector.multi_reduction <add>, %579, %cst_187 [1] : vector<128x16xf32> to vector<128xf32>
    %581 = vector.shape_cast %580 : vector<128xf32> to vector<128x1xf32>
    %cst_188 = arith.constant 1.600000e+01 : f32
    %582 = vector.broadcast %cst_188 : f32 to vector<128x1xf32>
    %583 = arith.divf %581, %582 : vector<128x1xf32>
    %584 = vector.broadcast %576 : vector<128x1xf32> to vector<128x16xf32>
    %585 = arith.subf %570, %584 : vector<128x16xf32>
    %cst_189 = arith.constant 9.99999974E-6 : f32
    %586 = vector.broadcast %cst_189 : f32 to vector<128x1xf32>
    %587 = arith.addf %583, %586 : vector<128x1xf32>
    %588 = math.rsqrt %587 : vector<128x1xf32>
    %589 = vector.broadcast %588 : vector<128x1xf32> to vector<128x16xf32>
    %590 = arith.mulf %585, %589 : vector<128x16xf32>
    %591 = vector.broadcast %571 : vector<1x16xf32> to vector<128x16xf32>
    %592 = arith.mulf %590, %591 : vector<128x16xf32>
    %593 = vector.broadcast %572 : vector<1x16xf32> to vector<128x16xf32>
    %594 = arith.addf %592, %593 : vector<128x16xf32>
    %595 = arith.truncf %594 : vector<128x16xf32> to vector<128x16xbf16>
    %c1_190 = arith.constant 1 : index
    %c0_191 = arith.constant 0 : index
    %c0_192 = arith.constant 0 : index
    %596 = vector.load %arg13[%c1_190, %c0_191, %c0_192] : memref<2x16x32xbf16, #tpu.memory_space<vmem>>, vector<1x16x32xbf16>
    %597 = vector.shape_cast %596 : vector<1x16x32xbf16> to vector<16x32xbf16>
    %cst_193 = arith.constant dense<0.000000e+00> : vector<128x32xf32>
    %598 = tpu.matmul %595, %597, %cst_193 {dimension_numbers = #tpu.dot_dimension_numbers<[1], [0], [0], [1], [0, 0, 1, 1], [], []>} : vector<128x16xbf16>, vector<16x32xbf16>, vector<128x32xf32> -> vector<128x32xf32>
    %599 = vector.extract_strided_slice %314 {offsets = [7, 0], sizes = [1, 32], strides = [1, 1]} : vector<9x128xf32> to vector<1x32xf32>
    %600 = vector.broadcast %599 : vector<1x32xf32> to vector<128x32xf32>
    %601 = arith.addf %598, %600 : vector<128x32xf32>
    %cst_194 = arith.constant 0.000000e+00 : f32
    %602 = vector.broadcast %cst_194 : f32 to vector<128x32xf32>
    %603 = arith.maximumf %601, %602 : vector<128x32xf32>
    %604 = arith.truncf %603 : vector<128x32xf32> to vector<128x32xbf16>
    %c1_195 = arith.constant 1 : index
    %c0_196 = arith.constant 0 : index
    %c0_197 = arith.constant 0 : index
    %605 = vector.load %arg14[%c1_195, %c0_196, %c0_197] : memref<2x32x16xbf16, #tpu.memory_space<vmem>>, vector<1x32x16xbf16>
    %606 = vector.shape_cast %605 : vector<1x32x16xbf16> to vector<32x16xbf16>
    %cst_198 = arith.constant dense<0.000000e+00> : vector<128x16xf32>
    %607 = tpu.matmul %604, %606, %cst_198 {dimension_numbers = #tpu.dot_dimension_numbers<[1], [0], [0], [1], [0, 0, 1, 1], [], []>} : vector<128x32xbf16>, vector<32x16xbf16>, vector<128x16xf32> -> vector<128x16xf32>
    %608 = arith.addf %570, %607 : vector<128x16xf32>
    %609 = vector.extract_strided_slice %314 {offsets = [8, 0], sizes = [1, 16], strides = [1, 1]} : vector<9x128xf32> to vector<1x16xf32>
    %610 = vector.broadcast %609 : vector<1x16xf32> to vector<128x16xf32>
    %611 = arith.addf %608, %610 : vector<128x16xf32>
    %c0_199 = arith.constant 0 : index
    %c0_200 = arith.constant 0 : index
    %612 = vector.load %arg17[%c0_199, %c0_200] : memref<16x32xf32, #tpu.memory_space<vmem>>, vector<16x32xf32>
    tpu.vector_store %arg17[%c0_199, %c0_200], %507 {strides = array<i32>} : memref<16x32xf32, #tpu.memory_space<vmem>>, vector<16x32xf32>,
    %c0_201 = arith.constant 0 : index
    %c0_202 = arith.constant 0 : index
    %613 = vector.load %arg18[%c0_201, %c0_202] : memref<128x16xf32, #tpu.memory_space<vmem>>, vector<128x16xf32>
    tpu.vector_store %arg18[%c0_201, %c0_202], %611 {strides = array<i32>} : memref<128x16xf32, #tpu.memory_space<vmem>>, vector<128x16xf32>,
    return
  }
}

</mosaic_0001>

<llo_original>
// kernel: tpu_custom_call.1
$region0: #{tpu_custom_call.1}
  #allocation0 [shape = 'u32[]', space=smem, size = 0x4, offset = 0x4, fixed_abs, tag = 'smem constant byte address 0x4 - core index']
  #allocation1 [shape = 'u32[144,128]{1,0:T(1,128)}', space=vmem, size = 0x12000, scoped, tag = 'internal scratch']
  %s0 = inlined_call_operand.vmem [shape: f32[16,32], index: 0, kind: input, shape index: {}]
  %s1 = inlined_call_operand.vmem [shape: f32[128,16], index: 1, kind: input, shape index: {}]
  %s2 = inlined_call_operand.vmem [shape: f32[2,8,8], index: 2, kind: input, shape index: {}]
  %s3 = inlined_call_operand.vmem [shape: f32[128,16], index: 3, kind: input, shape index: {}]
  %s4 = inlined_call_operand.vmem [shape: bf16[2,4,32,8], index: 4, kind: input, shape index: {}]
  %s5 = inlined_call_operand.vmem [shape: bf16[2,4,32,8], index: 5, kind: input, shape index: {}]
  %s6 = inlined_call_operand.vmem [shape: bf16[2,4,32,32], index: 6, kind: input, shape index: {}]
  %s7 = inlined_call_operand.vmem [shape: bf16[2,16,4], index: 7, kind: input, shape index: {}]
  %s8 = inlined_call_operand.vmem [shape: bf16[2,32,128], index: 8, kind: input, shape index: {}]
  %s9 = inlined_call_operand.vmem [shape: bf16[2,128,32], index: 9, kind: input, shape index: {}]
  %s10 = inlined_call_operand.vmem [shape: bf16[2,32,16], index: 10, kind: input, shape index: {}]
  %s11 = inlined_call_operand.vmem [shape: bf16[2,32,16], index: 11, kind: input, shape index: {}]
  %s12 = inlined_call_operand.vmem [shape: bf16[2,16,16], index: 12, kind: input, shape index: {}]
  %s13 = inlined_call_operand.vmem [shape: bf16[2,16,32], index: 13, kind: input, shape index: {}]
  %s14 = inlined_call_operand.vmem [shape: bf16[2,32,16], index: 14, kind: input, shape index: {}]
  %s15 = inlined_call_operand.vmem [shape: f32[2,9,128], index: 15, kind: input, shape index: {}]
  %s16 = inlined_call_operand.vmem [shape: f32[2,9,128], index: 16, kind: input, shape index: {}]
  %s17 = inlined_call_operand.hbm [shape: f32[16,32], index: 17, kind: output, shape index: {0}]
  %s18 = inlined_call_operand.vmem [shape: f32[128,16], index: 18, kind: output, shape index: {1}]
  %19 = xla_tuple %s17, %s18
  %s20 = sld [smem:[#allocation0]]
  $region86: #{tpu_custom_call.1} parent=0
    _
  %s22 = ssub.s32 1, %s20
  %s23 = scalar_select 0, %s22, %s20
  $region1: #{tpu_custom_call.1} parent=0
    #allocation2 [shape = 'u8[8192]{0}', space=vmem, size = 0x2000, scoped, tag = 'output window, operand 0, single buffered']
    #allocation3 [shape = 's32[1]{0}', space=sflag, size = 0x4, scoped, tag = 'scoped memory for tpu_custom_call.1']
    %24 = vsyncpa [#allocation3], 0
    // Predicated region
    $region2: #{tpu_custom_call.1} parent=1 // pred_check
      _
    $region3: #{tpu_custom_call.1} parent=1 // pred_check_branch
      %26 = sbr.rel (0) target = $region5
    $region4: #{tpu_custom_call.1} parent=1 // pred_region
      _
    $region5: #{tpu_custom_call.1} parent=1 // pred_fallthru
      _
    // Predicated region
    $region6: #{tpu_custom_call.1} parent=1 // pred_check
      _
    $region7: #{tpu_custom_call.1} parent=1 // pred_check_branch
      %28 = sbr.rel (0) target = $region9
    $region8: #{tpu_custom_call.1} parent=1 // pred_region
      _
    $region9: #{tpu_custom_call.1} parent=1 // pred_fallthru
      _
    // Predicated region
    $region10: #{tpu_custom_call.1} parent=1 // pred_check
      _
    $region11: #{tpu_custom_call.1} parent=1 // pred_check_branch
      %30 = sbr.rel (0) target = $region13
    $region12: #{tpu_custom_call.1} parent=1 // pred_region
      _
    $region13: #{tpu_custom_call.1} parent=1 // pred_fallthru
      _
    // Predicated region
    $region14: #{tpu_custom_call.1} parent=1 // pred_check
      _
    $region15: #{tpu_custom_call.1} parent=1 // pred_check_branch
      %32 = sbr.rel (0) target = $region17
    $region16: #{tpu_custom_call.1} parent=1 // pred_region
      _
    $region17: #{tpu_custom_call.1} parent=1 // pred_fallthru
      _
    // Predicated region
    $region18: #{tpu_custom_call.1} parent=1 // pred_check
      _
    $region19: #{tpu_custom_call.1} parent=1 // pred_check_branch
      %34 = sbr.rel (0) target = $region21
    $region20: #{tpu_custom_call.1} parent=1 // pred_region
      _
    $region21: #{tpu_custom_call.1} parent=1 // pred_fallthru
      _
    // Predicated region
    $region22: #{tpu_custom_call.1} parent=1 // pred_check
      _
    $region23: #{tpu_custom_call.1} parent=1 // pred_check_branch
      %36 = sbr.rel (0) target = $region25
    $region24: #{tpu_custom_call.1} parent=1 // pred_region
      _
    $region25: #{tpu_custom_call.1} parent=1 // pred_fallthru
      _
    // Predicated region
    $region26: #{tpu_custom_call.1} parent=1 // pred_check
      _
    $region27: #{tpu_custom_call.1} parent=1 // pred_check_branch
      %38 = sbr.rel (0) target = $region29
    $region28: #{tpu_custom_call.1} parent=1 // pred_region
      _
    $region29: #{tpu_custom_call.1} parent=1 // pred_fallthru
      _
    // Predicated region
    $region30: #{tpu_custom_call.1} parent=1 // pred_check
      _
    $region31: #{tpu_custom_call.1} parent=1 // pred_check_branch
      %40 = sbr.rel (0) target = $region33
    $region32: #{tpu_custom_call.1} parent=1 // pred_region
      _
    $region33: #{tpu_custom_call.1} parent=1 // pred_fallthru
      _
    // Predicated region
    $region34: #{tpu_custom_call.1} parent=1 // pred_check
      _
    $region35: #{tpu_custom_call.1} parent=1 // pred_check_branch
      %42 = sbr.rel (0) target = $region37
    $region36: #{tpu_custom_call.1} parent=1 // pred_region
      _
    $region37: #{tpu_custom_call.1} parent=1 // pred_fallthru
      _
    // Predicated region
    $region38: #{tpu_custom_call.1} parent=1 // pred_check
      _
    $region39: #{tpu_custom_call.1} parent=1 // pred_check_branch
      %44 = sbr.rel (0) target = $region41
    $region40: #{tpu_custom_call.1} parent=1 // pred_region
      _
    $region41: #{tpu_custom_call.1} parent=1 // pred_fallthru
      _
    // Predicated region
    $region42: #{tpu_custom_call.1} parent=1 // pred_check
      _
    $region43: #{tpu_custom_call.1} parent=1 // pred_check_branch
      %46 = sbr.rel (0) target = $region45
    $region44: #{tpu_custom_call.1} parent=1 // pred_region
      _
    $region45: #{tpu_custom_call.1} parent=1 // pred_fallthru
      _
    // Predicated region
    $region46: #{tpu_custom_call.1} parent=1 // pred_check
      _
    $region47: #{tpu_custom_call.1} parent=1 // pred_check_branch
      %48 = sbr.rel (0) target = $region49
    $region48: #{tpu_custom_call.1} parent=1 // pred_region
      _
    $region49: #{tpu_custom_call.1} parent=1 // pred_fallthru
      _
    // Predicated region
    $region50: #{tpu_custom_call.1} parent=1 // pred_check
      _
    $region51: #{tpu_custom_call.1} parent=1 // pred_check_branch
      %50 = sbr.rel (0) target = $region53
    $region52: #{tpu_custom_call.1} parent=1 // pred_region
      _
    $region53: #{tpu_custom_call.1} parent=1 // pred_fallthru
      _
    // Predicated region
    $region54: #{tpu_custom_call.1} parent=1 // pred_check
      _
    $region55: #{tpu_custom_call.1} parent=1 // pred_check_branch
      %52 = sbr.rel (0) target = $region57
    $region56: #{tpu_custom_call.1} parent=1 // pred_region
      _
    $region57: #{tpu_custom_call.1} parent=1 // pred_fallthru
      _
    // Predicated region
    $region58: #{tpu_custom_call.1} parent=1 // pred_check
      _
    $region59: #{tpu_custom_call.1} parent=1 // pred_check_branch
      %54 = sbr.rel (0) target = $region61
    $region60: #{tpu_custom_call.1} parent=1 // pred_region
      _
    $region61: #{tpu_custom_call.1} parent=1 // pred_fallthru
      _
    // Predicated region
    $region62: #{tpu_custom_call.1} parent=1 // pred_check
      _
    $region63: #{tpu_custom_call.1} parent=1 // pred_check_branch
      %56 = sbr.rel (0) target = $region65
    $region64: #{tpu_custom_call.1} parent=1 // pred_region
      _
    $region65: #{tpu_custom_call.1} parent=1 // pred_fallthru
      _
    // Predicated region
    $region66: #{tpu_custom_call.1} parent=1 // pred_check
      _
    $region67: #{tpu_custom_call.1} parent=1 // pred_check_branch
      %58 = sbr.rel (0) target = $region69
    $region68: #{tpu_custom_call.1} parent=1 // pred_region
      _
    $region69: #{tpu_custom_call.1} parent=1 // pred_fallthru
      _
    %v60 = vld [vmem:[%s0] sm:$0xff]
    %v61 = vld [vmem:[%s0 + $0x8] sm:$0xff]
    %v62 = vld [vmem:[%s1] sm:$0xff]
    %v63 = vld [vmem:[%s1 + $0x8] sm:$0xff]
    %v64 = vld [vmem:[%s1 + $0x10] sm:$0xff]
    %v65 = vld [vmem:[%s1 + $0x18] sm:$0xff]
    %v66 = vld [vmem:[%s1 + $0x20] sm:$0xff]
    %v67 = vld [vmem:[%s1 + $0x28] sm:$0xff]
    %v68 = vld [vmem:[%s1 + $0x30] sm:$0xff]
    %v69 = vld [vmem:[%s1 + $0x38] sm:$0xff]
    %v70 = vld [vmem:[%s1 + $0x40] sm:$0xff]
    %v71 = vld [vmem:[%s1 + $0x48] sm:$0xff]
    %v72 = vld [vmem:[%s1 + $0x50] sm:$0xff]
    %v73 = vld [vmem:[%s1 + $0x58] sm:$0xff]
    %v74 = vld [vmem:[%s1 + $0x60] sm:$0xff]
    %v75 = vld [vmem:[%s1 + $0x68] sm:$0xff]
    %v76 = vld [vmem:[%s1 + $0x70] sm:$0xff]
    %v77 = vld [vmem:[%s1 + $0x78] sm:$0xff]
    %v78 = vld [vmem:[%s3] sm:$0xff]
    %v79 = vld [vmem:[%s3 + $0x8] sm:$0xff]
    %v80 = vld [vmem:[%s3 + $0x10] sm:$0xff]
    %v81 = vld [vmem:[%s3 + $0x18] sm:$0xff]
    %v82 = vld [vmem:[%s3 + $0x20] sm:$0xff]
    %v83 = vld [vmem:[%s3 + $0x28] sm:$0xff]
    %v84 = vld [vmem:[%s3 + $0x30] sm:$0xff]
    %v85 = vld [vmem:[%s3 + $0x38] sm:$0xff]
    %v86 = vld [vmem:[%s3 + $0x40] sm:$0xff]
    %v87 = vld [vmem:[%s3 + $0x48] sm:$0xff]
    %v88 = vld [vmem:[%s3 + $0x50] sm:$0xff]
    %v89 = vld [vmem:[%s3 + $0x58] sm:$0xff]
    %v90 = vld [vmem:[%s3 + $0x60] sm:$0xff]
    %v91 = vld [vmem:[%s3 + $0x68] sm:$0xff]
    %v92 = vld [vmem:[%s3 + $0x70] sm:$0xff]
    %v93 = vld [vmem:[%s3 + $0x78] sm:$0xff]
    %v94 = vld [vmem:[%s2] sm:$0xff]
    %v95 = vld [vmem:[%s2 + $0x8] sm:$0xff]
    %vm96 = vcmp.gt.f32.partialorder %v94, 0.5
    %vm97 = vcmp.gt.f32.partialorder %v95, 0.5
    %v98 = vsel %vm96, 0.0, -1e+09
    %v99 = vsel %vm97, 0.0, -1e+09
    %v100 = vld [vmem:[%s15] sm:$0xff]
    %v101 = vld [vmem:[%s15 + $0x8] sm:$0x1]
    %v102 = vld [vmem:[%s16] sm:$0xff]
    %v103 = vld [vmem:[%s16 + $0x8] sm:$0x1]
    %v104 = vld [vmem:[%s4] sm:$0xf]
    %v105 = vld [vmem:[%s4 + $0x4] sm:$0xf]
    %v106 = vld [vmem:[%s4 + $0x8] sm:$0xf]
    %v107 = vld [vmem:[%s4 + $0xc] sm:$0xf]
    %v108 = vld [vmem:[%s4 + $0x10] sm:$0xf]
    %v109 = vld [vmem:[%s4 + $0x14] sm:$0xf]
    %v110 = vld [vmem:[%s4 + $0x18] sm:$0xf]
    %v111 = vld [vmem:[%s4 + $0x1c] sm:$0xf]
    %v112 = vld [vmem:[%s4 + $0x20] sm:$0xf]
    %v113 = vld [vmem:[%s4 + $0x24] sm:$0xf]
    %v114 = vld [vmem:[%s4 + $0x28] sm:$0xf]
    %v115 = vld [vmem:[%s4 + $0x2c] sm:$0xf]
    %v116 = vld [vmem:[%s4 + $0x30] sm:$0xf]
    %v117 = vld [vmem:[%s4 + $0x34] sm:$0xf]
    %v118 = vld [vmem:[%s4 + $0x38] sm:$0xf]
    %v119 = vld [vmem:[%s4 + $0x3c] sm:$0xf]
    %v120 = vld [vmem:[%s5] sm:$0xf]
    %v121 = vld [vmem:[%s5 + $0x4] sm:$0xf]
    %v122 = vld [vmem:[%s5 + $0x8] sm:$0xf]
    %v123 = vld [vmem:[%s5 + $0xc] sm:$0xf]
    %v124 = vld [vmem:[%s5 + $0x10] sm:$0xf]
    %v125 = vld [vmem:[%s5 + $0x14] sm:$0xf]
    %v126 = vld [vmem:[%s5 + $0x18] sm:$0xf]
    %v127 = vld [vmem:[%s5 + $0x1c] sm:$0xf]
    %v128 = vld [vmem:[%s5 + $0x20] sm:$0xf]
    %v129 = vld [vmem:[%s5 + $0x24] sm:$0xf]
    %v130 = vld [vmem:[%s5 + $0x28] sm:$0xf]
    %v131 = vld [vmem:[%s5 + $0x2c] sm:$0xf]
    %v132 = vld [vmem:[%s5 + $0x30] sm:$0xf]
    %v133 = vld [vmem:[%s5 + $0x34] sm:$0xf]
    %v134 = vld [vmem:[%s5 + $0x38] sm:$0xf]
    %v135 = vld [vmem:[%s5 + $0x3c] sm:$0xf]
    %v136 = vld [vmem:[%s6] sm:$0xf]
    %v137 = vld [vmem:[%s6 + $0x4] sm:$0xf]
    %v138 = vld [vmem:[%s6 + $0x8] sm:$0xf]
    %v139 = vld [vmem:[%s6 + $0xc] sm:$0xf]
    %v140 = vld [vmem:[%s6 + $0x10] sm:$0xf]
    %v141 = vld [vmem:[%s6 + $0x14] sm:$0xf]
    %v142 = vld [vmem:[%s6 + $0x18] sm:$0xf]
    %v143 = vld [vmem:[%s6 + $0x1c] sm:$0xf]
    %v144 = vld [vmem:[%s6 + $0x20] sm:$0xf]
    %v145 = vld [vmem:[%s6 + $0x24] sm:$0xf]
    %v146 = vld [vmem:[%s6 + $0x28] sm:$0xf]
    %v147 = vld [vmem:[%s6 + $0x2c] sm:$0xf]
    %v148 = vld [vmem:[%s6 + $0x30] sm:$0xf]
    %v149 = vld [vmem:[%s6 + $0x34] sm:$0xf]
    %v150 = vld [vmem:[%s6 + $0x38] sm:$0xf]
    %v151 = vld [vmem:[%s6 + $0x3c] sm:$0xf]
    %vm152 = vcmask 261120
    %v153 = vsel %vm152, %v60, 0.0
    %154 = vadd.xlane.f32.xlu0 %v153
    %v155 = vpop.xlane.xlu0 %154
    %v156 = vsel %vm152, %v61, 0.0
    %157 = vadd.xlane.f32.xlu0 %v156
    %v158 = vpop.xlane.xlu0 %157
    %v159 = vrcp.pop 32.0
    %v160 = vmul.f32 %v155, %v159
    %v161 = vmul.f32 %v158, %v159
    %v162 = vsub.f32 %v60, %v160
    %v163 = vsub.f32 %v61, %v161
    %v164 = vmul.f32 %v162, %v162
    %v165 = vmul.f32 %v163, %v163
    %v166 = vsel %vm152, %v164, 0.0
    %167 = vadd.xlane.f32.xlu0 %v166
    %v168 = vpop.xlane.xlu0 %167
    %v169 = vsel %vm152, %v165, 0.0
    %170 = vadd.xlane.f32.xlu0 %v169
    %v171 = vpop.xlane.xlu0 %170
    %v172 = vmul.f32 %v168, %v159
    %v173 = vmul.f32 %v171, %v159
    %v174 = vadd.f32 %v172, 1e-05
    %v175 = vadd.f32 %v173, 1e-05
    %v176 = vrsqrt.pop %v174
    %v177 = vrsqrt.pop %v175
    %v178 = vmul.f32 %v162, %v176
    %v179 = vmul.f32 %v163, %v177
    %v180 = vlaneseq
    %v181 = vshrl.u32 %v180, 7
    %v182 = vsub.s32 0, %v181
    %v183 = vrot.slane %v100, %v182
    %v184 = vmul.f32 %v178, %v183
    %v185 = vmul.f32 %v179, %v183
    %v186 = vlaneseq
    %v187 = vshrl.u32 %v186, 7
    %v188 = vsub.s32 1, %v187
    %v189 = vrot.slane %v100, %v188
    %v190 = vadd.f32 %v184, %v189
    %v191 = vadd.f32 %v185, %v189
    %v192 = vpack.c.bf16 %v191, %v190
    %vm193 = vcmask 130048
    %v194 = vsel %vm193, %v62, 0.0
    %195 = vadd.xlane.f32.xlu0 %v194
    %v196 = vpop.xlane.xlu0 %195
    %v197 = vsel %vm193, %v63, 0.0
    %198 = vadd.xlane.f32.xlu0 %v197
    %v199 = vpop.xlane.xlu0 %198
    %v200 = vsel %vm193, %v64, 0.0
    %201 = vadd.xlane.f32.xlu0 %v200
    %v202 = vpop.xlane.xlu0 %201
    %v203 = vsel %vm193, %v65, 0.0
    %204 = vadd.xlane.f32.xlu0 %v203
    %v205 = vpop.xlane.xlu0 %204
    %v206 = vsel %vm193, %v66, 0.0
    %207 = vadd.xlane.f32.xlu0 %v206
    %v208 = vpop.xlane.xlu0 %207
    %v209 = vsel %vm193, %v67, 0.0
    %210 = vadd.xlane.f32.xlu0 %v209
    %v211 = vpop.xlane.xlu0 %210
    %v212 = vsel %vm193, %v68, 0.0
    %213 = vadd.xlane.f32.xlu0 %v212
    %v214 = vpop.xlane.xlu0 %213
    %v215 = vsel %vm193, %v69, 0.0
    %216 = vadd.xlane.f32.xlu0 %v215
    %v217 = vpop.xlane.xlu0 %216
    %v218 = vsel %vm193, %v70, 0.0
    %219 = vadd.xlane.f32.xlu0 %v218
    %v220 = vpop.xlane.xlu0 %219
    %v221 = vsel %vm193, %v71, 0.0
    %222 = vadd.xlane.f32.xlu0 %v221
    %v223 = vpop.xlane.xlu0 %222
    %v224 = vsel %vm193, %v72, 0.0
    %225 = vadd.xlane.f32.xlu0 %v224
    %v226 = vpop.xlane.xlu0 %225
    %v227 = vsel %vm193, %v73, 0.0
    %228 = vadd.xlane.f32.xlu0 %v227
    %v229 = vpop.xlane.xlu0 %228
    %v230 = vsel %vm193, %v74, 0.0
    %231 = vadd.xlane.f32.xlu0 %v230
    %v232 = vpop.xlane.xlu0 %231
    %v233 = vsel %vm193, %v75, 0.0
    %234 = vadd.xlane.f32.xlu0 %v233
    %v235 = vpop.xlane.xlu0 %234
    %v236 = vsel %vm193, %v76, 0.0
    %237 = vadd.xlane.f32.xlu0 %v236
    %v238 = vpop.xlane.xlu0 %237
    %v239 = vsel %vm193, %v77, 0.0
    %240 = vadd.xlane.f32.xlu0 %v239
    %v241 = vpop.xlane.xlu0 %240
    %v242 = vrcp.pop 16.0
    %v243 = vmul.f32 %v196, %v242
    %v244 = vmul.f32 %v199, %v242
    %v245 = vmul.f32 %v202, %v242
    %v246 = vmul.f32 %v205, %v242
    %v247 = vmul.f32 %v208, %v242
    %v248 = vmul.f32 %v211, %v242
    %v249 = vmul.f32 %v214, %v242
    %v250 = vmul.f32 %v217, %v242
    %v251 = vmul.f32 %v220, %v242
    %v252 = vmul.f32 %v223, %v242
    %v253 = vmul.f32 %v226, %v242
    %v254 = vmul.f32 %v229, %v242
    %v255 = vmul.f32 %v232, %v242
    %v256 = vmul.f32 %v235, %v242
    %v257 = vmul.f32 %v238, %v242
    %v258 = vmul.f32 %v241, %v242
    %v259 = vsub.f32 %v62, %v243
    %v260 = vsub.f32 %v63, %v244
    %v261 = vsub.f32 %v64, %v245
    %v262 = vsub.f32 %v65, %v246
    %v263 = vsub.f32 %v66, %v247
    %v264 = vsub.f32 %v67, %v248
    %v265 = vsub.f32 %v68, %v249
    %v266 = vsub.f32 %v69, %v250
    %v267 = vsub.f32 %v70, %v251
    %v268 = vsub.f32 %v71, %v252
    %v269 = vsub.f32 %v72, %v253
    %v270 = vsub.f32 %v73, %v254
    %v271 = vsub.f32 %v74, %v255
    %v272 = vsub.f32 %v75, %v256
    %v273 = vsub.f32 %v76, %v257
    %v274 = vsub.f32 %v77, %v258
    %v275 = vmul.f32 %v259, %v259
    %v276 = vmul.f32 %v260, %v260
    %v277 = vmul.f32 %v261, %v261
    %v278 = vmul.f32 %v262, %v262
    %v279 = vmul.f32 %v263, %v263
    %v280 = vmul.f32 %v264, %v264
    %v281 = vmul.f32 %v265, %v265
    %v282 = vmul.f32 %v266, %v266
    %v283 = vmul.f32 %v267, %v267
    %v284 = vmul.f32 %v268, %v268
    %v285 = vmul.f32 %v269, %v269
    %v286 = vmul.f32 %v270, %v270
    %v287 = vmul.f32 %v271, %v271
    %v288 = vmul.f32 %v272, %v272
    %v289 = vmul.f32 %v273, %v273
    %v290 = vmul.f32 %v274, %v274
    %v291 = vsel %vm193, %v275, 0.0
    %292 = vadd.xlane.f32.xlu0 %v291
    %v293 = vpop.xlane.xlu0 %292
    %v294 = vsel %vm193, %v276, 0.0
    %295 = vadd.xlane.f32.xlu0 %v294
    %v296 = vpop.xlane.xlu0 %295
    %v297 = vsel %vm193, %v277, 0.0
    %298 = vadd.xlane.f32.xlu0 %v297
    %v299 = vpop.xlane.xlu0 %298
    %v300 = vsel %vm193, %v278, 0.0
    %301 = vadd.xlane.f32.xlu0 %v300
    %v302 = vpop.xlane.xlu0 %301
    %v303 = vsel %vm193, %v279, 0.0
    %304 = vadd.xlane.f32.xlu0 %v303
    %v305 = vpop.xlane.xlu0 %304
    %v306 = vsel %vm193, %v280, 0.0
    %307 = vadd.xlane.f32.xlu0 %v306
    %v308 = vpop.xlane.xlu0 %307
    %v309 = vsel %vm193, %v281, 0.0
    %310 = vadd.xlane.f32.xlu0 %v309
    %v311 = vpop.xlane.xlu0 %310
    %v312 = vsel %vm193, %v282, 0.0
    %313 = vadd.xlane.f32.xlu0 %v312
    %v314 = vpop.xlane.xlu0 %313
    %v315 = vsel %vm193, %v283, 0.0
    %316 = vadd.xlane.f32.xlu0 %v315
    %v317 = vpop.xlane.xlu0 %316
    %v318 = vsel %vm193, %v284, 0.0
    %319 = vadd.xlane.f32.xlu0 %v318
    %v320 = vpop.xlane.xlu0 %319
    %v321 = vsel %vm193, %v285, 0.0
    %322 = vadd.xlane.f32.xlu0 %v321
    %v323 = vpop.xlane.xlu0 %322
    %v324 = vsel %vm193, %v286, 0.0
    %325 = vadd.xlane.f32.xlu0 %v324
    %v326 = vpop.xlane.xlu0 %325
    %v327 = vsel %vm193, %v287, 0.0
    %328 = vadd.xlane.f32.xlu0 %v327
    %v329 = vpop.xlane.xlu0 %328
    %v330 = vsel %vm193, %v288, 0.0
    %331 = vadd.xlane.f32.xlu0 %v330
    %v332 = vpop.xlane.xlu0 %331
    %v333 = vsel %vm193, %v289, 0.0
    %334 = vadd.xlane.f32.xlu0 %v333
    %v335 = vpop.xlane.xlu0 %334
    %v336 = vsel %vm193, %v290, 0.0
    %337 = vadd.xlane.f32.xlu0 %v336
    %v338 = vpop.xlane.xlu0 %337
    %v339 = vmul.f32 %v293, %v242
    %v340 = vmul.f32 %v296, %v242
    %v341 = vmul.f32 %v299, %v242
    %v342 = vmul.f32 %v302, %v242
    %v343 = vmul.f32 %v305, %v242
    %v344 = vmul.f32 %v308, %v242
    %v345 = vmul.f32 %v311, %v242
    %v346 = vmul.f32 %v314, %v242
    %v347 = vmul.f32 %v317, %v242
    %v348 = vmul.f32 %v320, %v242
    %v349 = vmul.f32 %v323, %v242
    %v350 = vmul.f32 %v326, %v242
    %v351 = vmul.f32 %v329, %v242
    %v352 = vmul.f32 %v332, %v242
    %v353 = vmul.f32 %v335, %v242
    %v354 = vmul.f32 %v338, %v242
    %v355 = vadd.f32 %v339, 1e-05
    %v356 = vadd.f32 %v340, 1e-05
    %v357 = vadd.f32 %v341, 1e-05
    %v358 = vadd.f32 %v342, 1e-05
    %v359 = vadd.f32 %v343, 1e-05
    %v360 = vadd.f32 %v344, 1e-05
    %v361 = vadd.f32 %v345, 1e-05
    %v362 = vadd.f32 %v346, 1e-05
    %v363 = vadd.f32 %v347, 1e-05
    %v364 = vadd.f32 %v348, 1e-05
    %v365 = vadd.f32 %v349, 1e-05
    %v366 = vadd.f32 %v350, 1e-05
    %v367 = vadd.f32 %v351, 1e-05
    %v368 = vadd.f32 %v352, 1e-05
    %v369 = vadd.f32 %v353, 1e-05
    %v370 = vadd.f32 %v354, 1e-05
    %v371 = vrsqrt.pop %v355
    %v372 = vrsqrt.pop %v356
    %v373 = vrsqrt.pop %v357
    %v374 = vrsqrt.pop %v358
    %v375 = vrsqrt.pop %v359
    %v376 = vrsqrt.pop %v360
    %v377 = vrsqrt.pop %v361
    %v378 = vrsqrt.pop %v362
    %v379 = vrsqrt.pop %v363
    %v380 = vrsqrt.pop %v364
    %v381 = vrsqrt.pop %v365
    %v382 = vrsqrt.pop %v366
    %v383 = vrsqrt.pop %v367
    %v384 = vrsqrt.pop %v368
    %v385 = vrsqrt.pop %v369
    %v386 = vrsqrt.pop %v370
    %v387 = vmul.f32 %v259, %v371
    %v388 = vmul.f32 %v260, %v372
    %v389 = vmul.f32 %v261, %v373
    %v390 = vmul.f32 %v262, %v374
    %v391 = vmul.f32 %v263, %v375
    %v392 = vmul.f32 %v264, %v376
    %v393 = vmul.f32 %v265, %v377
    %v394 = vmul.f32 %v266, %v378
    %v395 = vmul.f32 %v267, %v379
    %v396 = vmul.f32 %v268, %v380
    %v397 = vmul.f32 %v269, %v381
    %v398 = vmul.f32 %v270, %v382
    %v399 = vmul.f32 %v271, %v383
    %v400 = vmul.f32 %v272, %v384
    %v401 = vmul.f32 %v273, %v385
    %v402 = vmul.f32 %v274, %v386
    %v403 = vlaneseq
    %v404 = vshrl.u32 %v403, 7
    %v405 = vsub.s32 2, %v404
    %v406 = vrot.slane %v100, %v405
    %v407 = vmul.f32 %v387, %v406
    %v408 = vmul.f32 %v388, %v406
    %v409 = vmul.f32 %v389, %v406
    %v410 = vmul.f32 %v390, %v406
    %v411 = vmul.f32 %v391, %v406
    %v412 = vmul.f32 %v392, %v406
    %v413 = vmul.f32 %v393, %v406
    %v414 = vmul.f32 %v394, %v406
    %v415 = vmul.f32 %v395, %v406
    %v416 = vmul.f32 %v396, %v406
    %v417 = vmul.f32 %v397, %v406
    %v418 = vmul.f32 %v398, %v406
    %v419 = vmul.f32 %v399, %v406
    %v420 = vmul.f32 %v400, %v406
    %v421 = vmul.f32 %v401, %v406
    %v422 = vmul.f32 %v402, %v406
    %v423 = vlaneseq
    %v424 = vshrl.u32 %v423, 7
    %v425 = vsub.s32 3, %v424
    %v426 = vrot.slane %v100, %v425
    %v427 = vadd.f32 %v407, %v426
    %v428 = vadd.f32 %v408, %v426
    %v429 = vadd.f32 %v409, %v426
    %v430 = vadd.f32 %v410, %v426
    %v431 = vadd.f32 %v411, %v426
    %v432 = vadd.f32 %v412, %v426
    %v433 = vadd.f32 %v413, %v426
    %v434 = vadd.f32 %v414, %v426
    %v435 = vadd.f32 %v415, %v426
    %v436 = vadd.f32 %v416, %v426
    %v437 = vadd.f32 %v417, %v426
    %v438 = vadd.f32 %v418, %v426
    %v439 = vadd.f32 %v419, %v426
    %v440 = vadd.f32 %v420, %v426
    %v441 = vadd.f32 %v421, %v426
    %v442 = vadd.f32 %v422, %v426
    %v443 = vpack.c.bf16 %v428, %v427
    %v444 = vpack.c.bf16 %v430, %v429
    %v445 = vpack.c.bf16 %v432, %v431
    %v446 = vpack.c.bf16 %v434, %v433
    %v447 = vpack.c.bf16 %v436, %v435
    %v448 = vpack.c.bf16 %v438, %v437
    %v449 = vpack.c.bf16 %v440, %v439
    %v450 = vpack.c.bf16 %v442, %v441
    %v451 = vld [vmem:[%s7] sm:$0xf]
    %v452 = vld [vmem:[%s7 + $0x4] sm:$0xf]
    %v455 = vunpack.c.l.b16 %v451
    %v456 = vunpack.c.l.b16 %v452
    %v457 = vpack.c.b16 %v456, %v455
    %v460 = vsel %vm193, %v443, 0
    %v463 = vsel %vm193, %v444, 0
    %v466 = vsel %vm193, %v445, 0
    %v469 = vsel %vm193, %v446, 0
    %v472 = vsel %vm193, %v447, 0
    %v475 = vsel %vm193, %v448, 0
    %v478 = vsel %vm193, %v449, 0
    %v481 = vsel %vm193, %v450, 0
    %483 = vmatprep.subr.bf16.mxu0 0
    %484 = vmatpush1.bf16.msra.mxu0 %v457
    %485 = vmatprep.subr.bf16.mxu0 0
    %486 = vmatpush1.bf16.msra.mxu0 0
    %487 = vmatprep.subr.bf16.mxu0 0
    %488 = vmatpush1.bf16.msra.mxu0 0
    %489 = vmatprep.subr.bf16.mxu0 0
    %490 = vmatpush1.bf16.msra.mxu0 0
    %491 = vmatprep.subr.bf16.mxu0 0
    %492 = vmatpush1.bf16.msra.mxu0 0
    %493 = vmatprep.subr.bf16.mxu0 0
    %494 = vmatpush1.bf16.msra.mxu0 0
    %495 = vmatprep.subr.bf16.mxu0 0
    %496 = vmatpush1.bf16.msra.mxu0 0
    %497 = vmatprep.subr.bf16.mxu0 0
    %498 = vmatpush1.bf16.msra.mxu0 0
    %499 = vmatprep.subr.bf16.mxu0 0
    %500 = vmatpush1.bf16.msra.mxu0 0
    %501 = vmatprep.subr.bf16.mxu0 0
    %502 = vmatpush1.bf16.msra.mxu0 0
    %503 = vmatprep.subr.bf16.mxu0 0
    %504 = vmatpush1.bf16.msra.mxu0 0
    %505 = vmatprep.subr.bf16.mxu0 0
    %506 = vmatpush1.bf16.msra.mxu0 0
    %507 = vmatprep.subr.bf16.mxu0 0
    %508 = vmatpush1.bf16.msra.mxu0 0
    %509 = vmatprep.subr.bf16.mxu0 0
    %510 = vmatpush1.bf16.msra.mxu0 0
    %511 = vmatprep.subr.bf16.mxu0 0
    %512 = vmatpush1.bf16.msra.mxu0 0
    %513 = vmatprep.subr.bf16.mxu0 0
    %514 = vmatpush1.bf16.msra.mxu0 0
    %515 = vmatprep.mubr.bf16.mxu0 0
    %516 = vmatmul.mubr.bf16.gmra.mrb[0].mxu0 %v460
    %v517 = vpop.f32.mrb[0].mxu0
    %v518 = vadd.f32 0.0, %v517
    %v519 = vpop.f32.mrb[0].mxu0
    %v520 = vpop.f32.mrb[0].mxu0
    %v521 = vadd.f32 0.0, %v520
    %v522 = vpop.f32.mrb[0].mxu0
    %523 = vmatprep.mubr.bf16.mxu0 0
    %524 = vmatmul.mubr.bf16.gmra.mrb[0].mxu0 %v463
    %v525 = vpop.f32.mrb[0].mxu0
    %v526 = vadd.f32 0.0, %v525
    %v527 = vpop.f32.mrb[0].mxu0
    %v528 = vpop.f32.mrb[0].mxu0
    %v529 = vadd.f32 0.0, %v528
    %v530 = vpop.f32.mrb[0].mxu0
    %531 = vmatprep.mubr.bf16.mxu0 0
    %532 = vmatmul.mubr.bf16.gmra.mrb[0].mxu0 %v466
    %v533 = vpop.f32.mrb[0].mxu0
    %v534 = vadd.f32 0.0, %v533
    %v535 = vpop.f32.mrb[0].mxu0
    %v536 = vpop.f32.mrb[0].mxu0
    %v537 = vadd.f32 0.0, %v536
    %v538 = vpop.f32.mrb[0].mxu0
    %539 = vmatprep.mubr.bf16.mxu0 0
    %540 = vmatmul.mubr.bf16.gmra.mrb[0].mxu0 %v469
    %v541 = vpop.f32.mrb[0].mxu0
    %v542 = vadd.f32 0.0, %v541
    %v543 = vpop.f32.mrb[0].mxu0
    %v544 = vpop.f32.mrb[0].mxu0
    %v545 = vadd.f32 0.0, %v544
    %v546 = vpop.f32.mrb[0].mxu0
    %547 = vmatprep.mubr.bf16.mxu0 0
    %548 = vmatmul.mubr.bf16.gmra.mrb[0].mxu0 %v472
    %v549 = vpop.f32.mrb[0].mxu0
    %v550 = vadd.f32 0.0, %v549
    %v551 = vpop.f32.mrb[0].mxu0
    %v552 = vpop.f32.mrb[0].mxu0
    %v553 = vadd.f32 0.0, %v552
    %v554 = vpop.f32.mrb[0].mxu0
    %555 = vmatprep.mubr.bf16.mxu0 0
    %556 = vmatmul.mubr.bf16.gmra.mrb[0].mxu0 %v475
    %v557 = vpop.f32.mrb[0].mxu0
    %v558 = vadd.f32 0.0, %v557
    %v559 = vpop.f32.mrb[0].mxu0
    %v560 = vpop.f32.mrb[0].mxu0
    %v561 = vadd.f32 0.0, %v560
    %v562 = vpop.f32.mrb[0].mxu0
    %563 = vmatprep.mubr.bf16.mxu0 0
    %564 = vmatmul.mubr.bf16.gmra.mrb[0].mxu0 %v478
    %v565 = vpop.f32.mrb[0].mxu0
    %v566 = vadd.f32 0.0, %v565
    %v567 = vpop.f32.mrb[0].mxu0
    %v568 = vpop.f32.mrb[0].mxu0
    %v569 = vadd.f32 0.0, %v568
    %v570 = vpop.f32.mrb[0].mxu0
    %571 = vmatprep.mubr.bf16.mxu0 0
    %572 = vmatmul.mubr.bf16.gmra.mrb[0].mxu0 %v481
    %v573 = vpop.f32.mrb[0].mxu0
    %v574 = vadd.f32 0.0, %v573
    %v575 = vpop.f32.mrb[0].mxu0
    %v576 = vpop.f32.mrb[0].mxu0
    %v577 = vadd.f32 0.0, %v576
    %v578 = vpop.f32.mrb[0].mxu0
    %579 = vdwg.mxu0
    %v584 = vunpack.c.l.b16 %v104
    %v585 = vunpack.c.l.b16 %v105
    %v586 = vunpack.c.l.b16 %v106
    %v587 = vunpack.c.l.b16 %v107
    %v588 = vpack.c.b16 %v585, %v584
    %v589 = vpack.c.b16 %v587, %v586
    %v593 = vsel %vm152, %v192, 0
    %595 = vmatprep.subr.bf16.mxu0 0
    %596 = vmatpush1.bf16.msra.mxu0 %v588
    %597 = vmatprep.subr.bf16.mxu0 0
    %598 = vmatpush1.bf16.msra.mxu0 %v589
    %599 = vmatprep.subr.bf16.mxu0 0
    %600 = vmatpush1.bf16.msra.mxu0 0
    %601 = vmatprep.subr.bf16.mxu0 0
    %602 = vmatpush1.bf16.msra.mxu0 0
    %603 = vmatprep.subr.bf16.mxu0 0
    %604 = vmatpush1.bf16.msra.mxu0 0
    %605 = vmatprep.subr.bf16.mxu0 0
    %606 = vmatpush1.bf16.msra.mxu0 0
    %607 = vmatprep.subr.bf16.mxu0 0
    %608 = vmatpush1.bf16.msra.mxu0 0
    %609 = vmatprep.subr.bf16.mxu0 0
    %610 = vmatpush1.bf16.msra.mxu0 0
    %611 = vmatprep.subr.bf16.mxu0 0
    %612 = vmatpush1.bf16.msra.mxu0 0
    %613 = vmatprep.subr.bf16.mxu0 0
    %614 = vmatpush1.bf16.msra.mxu0 0
    %615 = vmatprep.subr.bf16.mxu0 0
    %616 = vmatpush1.bf16.msra.mxu0 0
    %617 = vmatprep.subr.bf16.mxu0 0
    %618 = vmatpush1.bf16.msra.mxu0 0
    %619 = vmatprep.subr.bf16.mxu0 0
    %620 = vmatpush1.bf16.msra.mxu0 0
    %621 = vmatprep.subr.bf16.mxu0 0
    %622 = vmatpush1.bf16.msra.mxu0 0
    %623 = vmatprep.subr.bf16.mxu0 0
    %624 = vmatpush1.bf16.msra.mxu0 0
    %625 = vmatprep.subr.bf16.mxu0 0
    %626 = vmatpush1.bf16.msra.mxu0 0
    %627 = vmatprep.mubr.bf16.mxu0 0
    %628 = vmatmul.mubr.bf16.gmra.mrb[0].mxu0 %v593
    %v629 = vpop.f32.mrb[0].mxu0
    %v630 = vadd.f32 0.0, %v629
    %v631 = vpop.f32.mrb[0].mxu0
    %v632 = vpop.f32.mrb[0].mxu0
    %v633 = vadd.f32 0.0, %v632
    %v634 = vpop.f32.mrb[0].mxu0
    %635 = vdwg.mxu0
    %v640 = vunpack.c.l.b16 %v120
    %v641 = vunpack.c.l.b16 %v121
    %v642 = vunpack.c.l.b16 %v122
    %v643 = vunpack.c.l.b16 %v123
    %v644 = vpack.c.b16 %v641, %v640
    %v645 = vpack.c.b16 %v643, %v642
    %648 = vmatprep.subr.bf16.mxu0 0
    %649 = vmatpush1.bf16.msra.mxu0 %v644
    %650 = vmatprep.subr.bf16.mxu0 0
    %651 = vmatpush1.bf16.msra.mxu0 %v645
    %652 = vmatprep.subr.bf16.mxu0 0
    %653 = vmatpush1.bf16.msra.mxu0 0
    %654 = vmatprep.subr.bf16.mxu0 0
    %655 = vmatpush1.bf16.msra.mxu0 0
    %656 = vmatprep.subr.bf16.mxu0 0
    %657 = vmatpush1.bf16.msra.mxu0 0
    %658 = vmatprep.subr.bf16.mxu0 0
    %659 = vmatpush1.bf16.msra.mxu0 0
    %660 = vmatprep.subr.bf16.mxu0 0
    %661 = vmatpush1.bf16.msra.mxu0 0
    %662 = vmatprep.subr.bf16.mxu0 0
    %663 = vmatpush1.bf16.msra.mxu0 0
    %664 = vmatprep.subr.bf16.mxu0 0
    %665 = vmatpush1.bf16.msra.mxu0 0
    %666 = vmatprep.subr.bf16.mxu0 0
    %667 = vmatpush1.bf16.msra.mxu0 0
    %668 = vmatprep.subr.bf16.mxu0 0
    %669 = vmatpush1.bf16.msra.mxu0 0
    %670 = vmatprep.subr.bf16.mxu0 0
    %671 = vmatpush1.bf16.msra.mxu0 0
    %672 = vmatprep.subr.bf16.mxu0 0
    %673 = vmatpush1.bf16.msra.mxu0 0
    %674 = vmatprep.subr.bf16.mxu0 0
    %675 = vmatpush1.bf16.msra.mxu0 0
    %676 = vmatprep.subr.bf16.mxu0 0
    %677 = vmatpush1.bf16.msra.mxu0 0
    %678 = vmatprep.subr.bf16.mxu0 0
    %679 = vmatpush1.bf16.msra.mxu0 0
    %680 = vmatprep.mubr.bf16.mxu0 0
    %681 = vmatmul.mubr.bf16.gmra.mrb[0].mxu0 %v593
    %v682 = vpop.f32.mrb[0].mxu0
    %v683 = vadd.f32 0.0, %v682
    %v684 = vpop.f32.mrb[0].mxu0
    %v685 = vpop.f32.mrb[0].mxu0
    %v686 = vadd.f32 0.0, %v685
    %v687 = vpop.f32.mrb[0].mxu0
    %688 = vdwg.mxu0
    %v693 = vunpack.c.l.b16 %v136
    %v694 = vunpack.c.l.b16 %v137
    %v695 = vunpack.c.l.b16 %v138
    %v696 = vunpack.c.l.b16 %v139
    %v697 = vpack.c.b16 %v694, %v693
    %v698 = vpack.c.b16 %v696, %v695
    %701 = vmatprep.subr.bf16.mxu0 0
    %702 = vmatpush1.bf16.msra.mxu0 %v697
    %703 = vmatprep.subr.bf16.mxu0 0
    %704 = vmatpush1.bf16.msra.mxu0 %v698
    %705 = vmatprep.subr.bf16.mxu0 0
    %706 = vmatpush1.bf16.msra.mxu0 0
    %707 = vmatprep.subr.bf16.mxu0 0
    %708 = vmatpush1.bf16.msra.mxu0 0
    %709 = vmatprep.subr.bf16.mxu0 0
    %710 = vmatpush1.bf16.msra.mxu0 0
    %711 = vmatprep.subr.bf16.mxu0 0
    %712 = vmatpush1.bf16.msra.mxu0 0
    %713 = vmatprep.subr.bf16.mxu0 0
    %714 = vmatpush1.bf16.msra.mxu0 0
    %715 = vmatprep.subr.bf16.mxu0 0
    %716 = vmatpush1.bf16.msra.mxu0 0
    %717 = vmatprep.subr.bf16.mxu0 0
    %718 = vmatpush1.bf16.msra.mxu0 0
    %719 = vmatprep.subr.bf16.mxu0 0
    %720 = vmatpush1.bf16.msra.mxu0 0
    %721 = vmatprep.subr.bf16.mxu0 0
    %722 = vmatpush1.bf16.msra.mxu0 0
    %723 = vmatprep.subr.bf16.mxu0 0
    %724 = vmatpush1.bf16.msra.mxu0 0
    %725 = vmatprep.subr.bf16.mxu0 0
    %726 = vmatpush1.bf16.msra.mxu0 0
    %727 = vmatprep.subr.bf16.mxu0 0
    %728 = vmatpush1.bf16.msra.mxu0 0
    %729 = vmatprep.subr.bf16.mxu0 0
    %730 = vmatpush1.bf16.msra.mxu0 0
    %731 = vmatprep.subr.bf16.mxu0 0
    %732 = vmatpush1.bf16.msra.mxu0 0
    %733 = vmatprep.mubr.bf16.mxu0 0
    %734 = vmatmul.mubr.bf16.gmra.mrb[0].mxu0 %v593
    %v735 = vpop.f32.mrb[0].mxu0
    %v736 = vadd.f32 0.0, %v735
    %v737 = vpop.f32.mrb[0].mxu0
    %v738 = vpop.f32.mrb[0].mxu0
    %v739 = vadd.f32 0.0, %v738
    %v740 = vpop.f32.mrb[0].mxu0
    %741 = vdwg.mxu0
    %v746 = vunpack.c.l.b16 %v108
    %v747 = vunpack.c.l.b16 %v109
    %v748 = vunpack.c.l.b16 %v110
    %v749 = vunpack.c.l.b16 %v111
    %v750 = vpack.c.b16 %v747, %v746
    %v751 = vpack.c.b16 %v749, %v748
    %754 = vmatprep.subr.bf16.mxu0 0
    %755 = vmatpush1.bf16.msra.mxu0 %v750
    %756 = vmatprep.subr.bf16.mxu0 0
    %757 = vmatpush1.bf16.msra.mxu0 %v751
    %758 = vmatprep.subr.bf16.mxu0 0
    %759 = vmatpush1.bf16.msra.mxu0 0
    %760 = vmatprep.subr.bf16.mxu0 0
    %761 = vmatpush1.bf16.msra.mxu0 0
    %762 = vmatprep.subr.bf16.mxu0 0
    %763 = vmatpush1.bf16.msra.mxu0 0
    %764 = vmatprep.subr.bf16.mxu0 0
    %765 = vmatpush1.bf16.msra.mxu0 0
    %766 = vmatprep.subr.bf16.mxu0 0
    %767 = vmatpush1.bf16.msra.mxu0 0
    %768 = vmatprep.subr.bf16.mxu0 0
    %769 = vmatpush1.bf16.msra.mxu0 0
    %770 = vmatprep.subr.bf16.mxu0 0
    %771 = vmatpush1.bf16.msra.mxu0 0
    %772 = vmatprep.subr.bf16.mxu0 0
    %773 = vmatpush1.bf16.msra.mxu0 0
    %774 = vmatprep.subr.bf16.mxu0 0
    %775 = vmatpush1.bf16.msra.mxu0 0
    %776 = vmatprep.subr.bf16.mxu0 0
    %777 = vmatpush1.bf16.msra.mxu0 0
    %778 = vmatprep.subr.bf16.mxu0 0
    %779 = vmatpush1.bf16.msra.mxu0 0
    %780 = vmatprep.subr.bf16.mxu0 0
    %781 = vmatpush1.bf16.msra.mxu0 0
    %782 = vmatprep.subr.bf16.mxu0 0
    %783 = vmatpush1.bf16.msra.mxu0 0
    %784 = vmatprep.subr.bf16.mxu0 0
    %785 = vmatpush1.bf16.msra.mxu0 0
    %786 = vmatprep.mubr.bf16.mxu0 0
    %787 = vmatmul.mubr.bf16.gmra.mrb[0].mxu0 %v593
    %v788 = vpop.f32.mrb[0].mxu0
    %v789 = vadd.f32 0.0, %v788
    %v790 = vpop.f32.mrb[0].mxu0
    %v791 = vpop.f32.mrb[0].mxu0
    %v792 = vadd.f32 0.0, %v791
    %v793 = vpop.f32.mrb[0].mxu0
    %794 = vdwg.mxu0
    %v799 = vunpack.c.l.b16 %v124
    %v800 = vunpack.c.l.b16 %v125
    %v801 = vunpack.c.l.b16 %v126
    %v802 = vunpack.c.l.b16 %v127
    %v803 = vpack.c.b16 %v800, %v799
    %v804 = vpack.c.b16 %v802, %v801
    %807 = vmatprep.subr.bf16.mxu0 0
    %808 = vmatpush1.bf16.msra.mxu0 %v803
    %809 = vmatprep.subr.bf16.mxu0 0
    %810 = vmatpush1.bf16.msra.mxu0 %v804
    %811 = vmatprep.subr.bf16.mxu0 0
    %812 = vmatpush1.bf16.msra.mxu0 0
    %813 = vmatprep.subr.bf16.mxu0 0
    %814 = vmatpush1.bf16.msra.mxu0 0
    %815 = vmatprep.subr.bf16.mxu0 0
    %816 = vmatpush1.bf16.msra.mxu0 0
    %817 = vmatprep.subr.bf16.mxu0 0
    %818 = vmatpush1.bf16.msra.mxu0 0
    %819 = vmatprep.subr.bf16.mxu0 0
    %820 = vmatpush1.bf16.msra.mxu0 0
    %821 = vmatprep.subr.bf16.mxu0 0
    %822 = vmatpush1.bf16.msra.mxu0 0
    %823 = vmatprep.subr.bf16.mxu0 0
    %824 = vmatpush1.bf16.msra.mxu0 0
    %825 = vmatprep.subr.bf16.mxu0 0
    %826 = vmatpush1.bf16.msra.mxu0 0
    %827 = vmatprep.subr.bf16.mxu0 0
    %828 = vmatpush1.bf16.msra.mxu0 0
    %829 = vmatprep.subr.bf16.mxu0 0
    %830 = vmatpush1.bf16.msra.mxu0 0
    %831 = vmatprep.subr.bf16.mxu0 0
    %832 = vmatpush1.bf16.msra.mxu0 0
    %833 = vmatprep.subr.bf16.mxu0 0
    %834 = vmatpush1.bf16.msra.mxu0 0
    %835 = vmatprep.subr.bf16.mxu0 0
    %836 = vmatpush1.bf16.msra.mxu0 0
    %837 = vmatprep.subr.bf16.mxu0 0
    %838 = vmatpush1.bf16.msra.mxu0 0
    %839 = vmatprep.mubr.bf16.mxu0 0
    %840 = vmatmul.mubr.bf16.gmra.mrb[0].mxu0 %v593
    %v841 = vpop.f32.mrb[0].mxu0
    %v842 = vadd.f32 0.0, %v841
    %v843 = vpop.f32.mrb[0].mxu0
    %v844 = vpop.f32.mrb[0].mxu0
    %v845 = vadd.f32 0.0, %v844
    %v846 = vpop.f32.mrb[0].mxu0
    %847 = vdwg.mxu0
    %v852 = vunpack.c.l.b16 %v140
    %v853 = vunpack.c.l.b16 %v141
    %v854 = vunpack.c.l.b16 %v142
    %v855 = vunpack.c.l.b16 %v143
    %v856 = vpack.c.b16 %v853, %v852
    %v857 = vpack.c.b16 %v855, %v854
    %860 = vmatprep.subr.bf16.mxu0 0
    %861 = vmatpush1.bf16.msra.mxu0 %v856
    %862 = vmatprep.subr.bf16.mxu0 0
    %863 = vmatpush1.bf16.msra.mxu0 %v857
    %864 = vmatprep.subr.bf16.mxu0 0
    %865 = vmatpush1.bf16.msra.mxu0 0
    %866 = vmatprep.subr.bf16.mxu0 0
    %867 = vmatpush1.bf16.msra.mxu0 0
    %868 = vmatprep.subr.bf16.mxu0 0
    %869 = vmatpush1.bf16.msra.mxu0 0
    %870 = vmatprep.subr.bf16.mxu0 0
    %871 = vmatpush1.bf16.msra.mxu0 0
    %872 = vmatprep.subr.bf16.mxu0 0
    %873 = vmatpush1.bf16.msra.mxu0 0
    %874 = vmatprep.subr.bf16.mxu0 0
    %875 = vmatpush1.bf16.msra.mxu0 0
    %876 = vmatprep.subr.bf16.mxu0 0
    %877 = vmatpush1.bf16.msra.mxu0 0
    %878 = vmatprep.subr.bf16.mxu0 0
    %879 = vmatpush1.bf16.msra.mxu0 0
    %880 = vmatprep.subr.bf16.mxu0 0
    %881 = vmatpush1.bf16.msra.mxu0 0
    %882 = vmatprep.subr.bf16.mxu0 0
    %883 = vmatpush1.bf16.msra.mxu0 0
    %884 = vmatprep.subr.bf16.mxu0 0
    %885 = vmatpush1.bf16.msra.mxu0 0
    %886 = vmatprep.subr.bf16.mxu0 0
    %887 = vmatpush1.bf16.msra.mxu0 0
    %888 = vmatprep.subr.bf16.mxu0 0
    %889 = vmatpush1.bf16.msra.mxu0 0
    %890 = vmatprep.subr.bf16.mxu0 0
    %891 = vmatpush1.bf16.msra.mxu0 0
    %892 = vmatprep.mubr.bf16.mxu0 0
    %893 = vmatmul.mubr.bf16.gmra.mrb[0].mxu0 %v593
    %v894 = vpop.f32.mrb[0].mxu0
    %v895 = vadd.f32 0.0, %v894
    %v896 = vpop.f32.mrb[0].mxu0
    %v897 = vpop.f32.mrb[0].mxu0
    %v898 = vadd.f32 0.0, %v897
    %v899 = vpop.f32.mrb[0].mxu0
    %900 = vdwg.mxu0
    %v905 = vunpack.c.l.b16 %v112
    %v906 = vunpack.c.l.b16 %v113
    %v907 = vunpack.c.l.b16 %v114
    %v908 = vunpack.c.l.b16 %v115
    %v909 = vpack.c.b16 %v906, %v905
    %v910 = vpack.c.b16 %v908, %v907
    %913 = vmatprep.subr.bf16.mxu0 0
    %914 = vmatpush1.bf16.msra.mxu0 %v909
    %915 = vmatprep.subr.bf16.mxu0 0
    %916 = vmatpush1.bf16.msra.mxu0 %v910
    %917 = vmatprep.subr.bf16.mxu0 0
    %918 = vmatpush1.bf16.msra.mxu0 0
    %919 = vmatprep.subr.bf16.mxu0 0
    %920 = vmatpush1.bf16.msra.mxu0 0
    %921 = vmatprep.subr.bf16.mxu0 0
    %922 = vmatpush1.bf16.msra.mxu0 0
    %923 = vmatprep.subr.bf16.mxu0 0
    %924 = vmatpush1.bf16.msra.mxu0 0
    %925 = vmatprep.subr.bf16.mxu0 0
    %926 = vmatpush1.bf16.msra.mxu0 0
    %927 = vmatprep.subr.bf16.mxu0 0
    %928 = vmatpush1.bf16.msra.mxu0 0
    %929 = vmatprep.subr.bf16.mxu0 0
    %930 = vmatpush1.bf16.msra.mxu0 0
    %931 = vmatprep.subr.bf16.mxu0 0
    %932 = vmatpush1.bf16.msra.mxu0 0
    %933 = vmatprep.subr.bf16.mxu0 0
    %934 = vmatpush1.bf16.msra.mxu0 0
    %935 = vmatprep.subr.bf16.mxu0 0
    %936 = vmatpush1.bf16.msra.mxu0 0
    %937 = vmatprep.subr.bf16.mxu0 0
    %938 = vmatpush1.bf16.msra.mxu0 0
    %939 = vmatprep.subr.bf16.mxu0 0
    %940 = vmatpush1.bf16.msra.mxu0 0
    %941 = vmatprep.subr.bf16.mxu0 0
    %942 = vmatpush1.bf16.msra.mxu0 0
    %943 = vmatprep.subr.bf16.mxu0 0
    %944 = vmatpush1.bf16.msra.mxu0 0
    %945 = vmatprep.mubr.bf16.mxu0 0
    %946 = vmatmul.mubr.bf16.gmra.mrb[0].mxu0 %v593
    %v947 = vpop.f32.mrb[0].mxu0
    %v948 = vadd.f32 0.0, %v947
    %v949 = vpop.f32.mrb[0].mxu0
    %v950 = vpop.f32.mrb[0].mxu0
    %v951 = vadd.f32 0.0, %v950
    %v952 = vpop.f32.mrb[0].mxu0
    %953 = vdwg.mxu0
    %v958 = vunpack.c.l.b16 %v128
    %v959 = vunpack.c.l.b16 %v129
    %v960 = vunpack.c.l.b16 %v130
    %v961 = vunpack.c.l.b16 %v131
    %v962 = vpack.c.b16 %v959, %v958
    %v963 = vpack.c.b16 %v961, %v960
    %966 = vmatprep.subr.bf16.mxu0 0
    %967 = vmatpush1.bf16.msra.mxu0 %v962
    %968 = vmatprep.subr.bf16.mxu0 0
    %969 = vmatpush1.bf16.msra.mxu0 %v963
    %970 = vmatprep.subr.bf16.mxu0 0
    %971 = vmatpush1.bf16.msra.mxu0 0
    %972 = vmatprep.subr.bf16.mxu0 0
    %973 = vmatpush1.bf16.msra.mxu0 0
    %974 = vmatprep.subr.bf16.mxu0 0
    %975 = vmatpush1.bf16.msra.mxu0 0
    %976 = vmatprep.subr.bf16.mxu0 0
    %977 = vmatpush1.bf16.msra.mxu0 0
    %978 = vmatprep.subr.bf16.mxu0 0
    %979 = vmatpush1.bf16.msra.mxu0 0
    %980 = vmatprep.subr.bf16.mxu0 0
    %981 = vmatpush1.bf16.msra.mxu0 0
    %982 = vmatprep.subr.bf16.mxu0 0
    %983 = vmatpush1.bf16.msra.mxu0 0
    %984 = vmatprep.subr.bf16.mxu0 0
    %985 = vmatpush1.bf16.msra.mxu0 0
    %986 = vmatprep.subr.bf16.mxu0 0
    %987 = vmatpush1.bf16.msra.mxu0 0
    %988 = vmatprep.subr.bf16.mxu0 0
    %989 = vmatpush1.bf16.msra.mxu0 0
    %990 = vmatprep.subr.bf16.mxu0 0
    %991 = vmatpush1.bf16.msra.mxu0 0
    %992 = vmatprep.subr.bf16.mxu0 0
    %993 = vmatpush1.bf16.msra.mxu0 0
    %994 = vmatprep.subr.bf16.mxu0 0
    %995 = vmatpush1.bf16.msra.mxu0 0
    %996 = vmatprep.subr.bf16.mxu0 0
    %997 = vmatpush1.bf16.msra.mxu0 0
    %998 = vmatprep.mubr.bf16.mxu0 0
    %999 = vmatmul.mubr.bf16.gmra.mrb[0].mxu0 %v593
    %v1000 = vpop.f32.mrb[0].mxu0
    %v1001 = vadd.f32 0.0, %v1000
    %v1002 = vpop.f32.mrb[0].mxu0
    %v1003 = vpop.f32.mrb[0].mxu0
    %v1004 = vadd.f32 0.0, %v1003
    %v1005 = vpop.f32.mrb[0].mxu0
    %1006 = vdwg.mxu0
    %v1011 = vunpack.c.l.b16 %v144
    %v1012 = vunpack.c.l.b16 %v145
    %v1013 = vunpack.c.l.b16 %v146
    %v1014 = vunpack.c.l.b16 %v147
    %v1015 = vpack.c.b16 %v1012, %v1011
    %v1016 = vpack.c.b16 %v1014, %v1013
    %1019 = vmatprep.subr.bf16.mxu0 0
    %1020 = vmatpush1.bf16.msra.mxu0 %v1015
    %1021 = vmatprep.subr.bf16.mxu0 0
    %1022 = vmatpush1.bf16.msra.mxu0 %v1016
    %1023 = vmatprep.subr.bf16.mxu0 0
    %1024 = vmatpush1.bf16.msra.mxu0 0
    %1025 = vmatprep.subr.bf16.mxu0 0
    %1026 = vmatpush1.bf16.msra.mxu0 0
    %1027 = vmatprep.subr.bf16.mxu0 0
    %1028 = vmatpush1.bf16.msra.mxu0 0
    %1029 = vmatprep.subr.bf16.mxu0 0
    %1030 = vmatpush1.bf16.msra.mxu0 0
    %1031 = vmatprep.subr.bf16.mxu0 0
    %1032 = vmatpush1.bf16.msra.mxu0 0
    %1033 = vmatprep.subr.bf16.mxu0 0
    %1034 = vmatpush1.bf16.msra.mxu0 0
    %1035 = vmatprep.subr.bf16.mxu0 0
    %1036 = vmatpush1.bf16.msra.mxu0 0
    %1037 = vmatprep.subr.bf16.mxu0 0
    %1038 = vmatpush1.bf16.msra.mxu0 0
    %1039 = vmatprep.subr.bf16.mxu0 0
    %1040 = vmatpush1.bf16.msra.mxu0 0
    %1041 = vmatprep.subr.bf16.mxu0 0
    %1042 = vmatpush1.bf16.msra.mxu0 0
    %1043 = vmatprep.subr.bf16.mxu0 0
    %1044 = vmatpush1.bf16.msra.mxu0 0
    %1045 = vmatprep.subr.bf16.mxu0 0
    %1046 = vmatpush1.bf16.msra.mxu0 0
    %1047 = vmatprep.subr.bf16.mxu0 0
    %1048 = vmatpush1.bf16.msra.mxu0 0
    %1049 = vmatprep.subr.bf16.mxu0 0
    %1050 = vmatpush1.bf16.msra.mxu0 0
    %1051 = vmatprep.mubr.bf16.mxu0 0
    %1052 = vmatmul.mubr.bf16.gmra.mrb[0].mxu0 %v593
    %v1053 = vpop.f32.mrb[0].mxu0
    %v1054 = vadd.f32 0.0, %v1053
    %v1055 = vpop.f32.mrb[0].mxu0
    %v1056 = vpop.f32.mrb[0].mxu0
    %v1057 = vadd.f32 0.0, %v1056
    %v1058 = vpop.f32.mrb[0].mxu0
    %1059 = vdwg.mxu0
    %v1064 = vunpack.c.l.b16 %v116
    %v1065 = vunpack.c.l.b16 %v117
    %v1066 = vunpack.c.l.b16 %v118
    %v1067 = vunpack.c.l.b16 %v119
    %v1068 = vpack.c.b16 %v1065, %v1064
    %v1069 = vpack.c.b16 %v1067, %v1066
    %1072 = vmatprep.subr.bf16.mxu0 0
    %1073 = vmatpush1.bf16.msra.mxu0 %v1068
    %1074 = vmatprep.subr.bf16.mxu0 0
    %1075 = vmatpush1.bf16.msra.mxu0 %v1069
    %1076 = vmatprep.subr.bf16.mxu0 0
    %1077 = vmatpush1.bf16.msra.mxu0 0
    %1078 = vmatprep.subr.bf16.mxu0 0
    %1079 = vmatpush1.bf16.msra.mxu0 0
    %1080 = vmatprep.subr.bf16.mxu0 0
    %1081 = vmatpush1.bf16.msra.mxu0 0
    %1082 = vmatprep.subr.bf16.mxu0 0
    %1083 = vmatpush1.bf16.msra.mxu0 0
    %1084 = vmatprep.subr.bf16.mxu0 0
    %1085 = vmatpush1.bf16.msra.mxu0 0
    %1086 = vmatprep.subr.bf16.mxu0 0
    %1087 = vmatpush1.bf16.msra.mxu0 0
    %1088 = vmatprep.subr.bf16.mxu0 0
    %1089 = vmatpush1.bf16.msra.mxu0 0
    %1090 = vmatprep.subr.bf16.mxu0 0
    %1091 = vmatpush1.bf16.msra.mxu0 0
    %1092 = vmatprep.subr.bf16.mxu0 0
    %1093 = vmatpush1.bf16.msra.mxu0 0
    %1094 = vmatprep.subr.bf16.mxu0 0
    %1095 = vmatpush1.bf16.msra.mxu0 0
    %1096 = vmatprep.subr.bf16.mxu0 0
    %1097 = vmatpush1.bf16.msra.mxu0 0
    %1098 = vmatprep.subr.bf16.mxu0 0
    %1099 = vmatpush1.bf16.msra.mxu0 0
    %1100 = vmatprep.subr.bf16.mxu0 0
    %1101 = vmatpush1.bf16.msra.mxu0 0
    %1102 = vmatprep.subr.bf16.mxu0 0
    %1103 = vmatpush1.bf16.msra.mxu0 0
    %1104 = vmatprep.mubr.bf16.mxu0 0
    %1105 = vmatmul.mubr.bf16.gmra.mrb[0].mxu0 %v593
    %v1106 = vpop.f32.mrb[0].mxu0
    %v1107 = vadd.f32 0.0, %v1106
    %v1108 = vpop.f32.mrb[0].mxu0
    %v1109 = vpop.f32.mrb[0].mxu0
    %v1110 = vadd.f32 0.0, %v1109
    %v1111 = vpop.f32.mrb[0].mxu0
    %1112 = vdwg.mxu0
    %v1117 = vunpack.c.l.b16 %v132
    %v1118 = vunpack.c.l.b16 %v133
    %v1119 = vunpack.c.l.b16 %v134
    %v1120 = vunpack.c.l.b16 %v135
    %v1121 = vpack.c.b16 %v1118, %v1117
    %v1122 = vpack.c.b16 %v1120, %v1119
    %1125 = vmatprep.subr.bf16.mxu0 0
    %1126 = vmatpush1.bf16.msra.mxu0 %v1121
    %1127 = vmatprep.subr.bf16.mxu0 0
    %1128 = vmatpush1.bf16.msra.mxu0 %v1122
    %1129 = vmatprep.subr.bf16.mxu0 0
    %1130 = vmatpush1.bf16.msra.mxu0 0
    %1131 = vmatprep.subr.bf16.mxu0 0
    %1132 = vmatpush1.bf16.msra.mxu0 0
    %1133 = vmatprep.subr.bf16.mxu0 0
    %1134 = vmatpush1.bf16.msra.mxu0 0
    %1135 = vmatprep.subr.bf16.mxu0 0
    %1136 = vmatpush1.bf16.msra.mxu0 0
    %1137 = vmatprep.subr.bf16.mxu0 0
    %1138 = vmatpush1.bf16.msra.mxu0 0
    %1139 = vmatprep.subr.bf16.mxu0 0
    %1140 = vmatpush1.bf16.msra.mxu0 0
    %1141 = vmatprep.subr.bf16.mxu0 0
    %1142 = vmatpush1.bf16.msra.mxu0 0
    %1143 = vmatprep.subr.bf16.mxu0 0
    %1144 = vmatpush1.bf16.msra.mxu0 0
    %1145 = vmatprep.subr.bf16.mxu0 0
    %1146 = vmatpush1.bf16.msra.mxu0 0
    %1147 = vmatprep.subr.bf16.mxu0 0
    %1148 = vmatpush1.bf16.msra.mxu0 0
    %1149 = vmatprep.subr.bf16.mxu0 0
    %1150 = vmatpush1.bf16.msra.mxu0 0
    %1151 = vmatprep.subr.bf16.mxu0 0
    %1152 = vmatpush1.bf16.msra.mxu0 0
    %1153 = vmatprep.subr.bf16.mxu0 0
    %1154 = vmatpush1.bf16.msra.mxu0 0
    %1155 = vmatprep.subr.bf16.mxu0 0
    %1156 = vmatpush1.bf16.msra.mxu0 0
    %1157 = vmatprep.mubr.bf16.mxu0 0
    %1158 = vmatmul.mubr.bf16.gmra.mrb[0].mxu0 %v593
    %v1159 = vpop.f32.mrb[0].mxu0
    %v1160 = vadd.f32 0.0, %v1159
    %v1161 = vpop.f32.mrb[0].mxu0
    %v1162 = vpop.f32.mrb[0].mxu0
    %v1163 = vadd.f32 0.0, %v1162
    %v1164 = vpop.f32.mrb[0].mxu0
    %1165 = vdwg.mxu0
    %v1170 = vunpack.c.l.b16 %v148
    %v1171 = vunpack.c.l.b16 %v149
    %v1172 = vunpack.c.l.b16 %v150
    %v1173 = vunpack.c.l.b16 %v151
    %v1174 = vpack.c.b16 %v1171, %v1170
    %v1175 = vpack.c.b16 %v1173, %v1172
    %1178 = vmatprep.subr.bf16.mxu0 0
    %1179 = vmatpush1.bf16.msra.mxu0 %v1174
    %1180 = vmatprep.subr.bf16.mxu0 0
    %1181 = vmatpush1.bf16.msra.mxu0 %v1175
    %1182 = vmatprep.subr.bf16.mxu0 0
    %1183 = vmatpush1.bf16.msra.mxu0 0
    %1184 = vmatprep.subr.bf16.mxu0 0
    %1185 = vmatpush1.bf16.msra.mxu0 0
    %1186 = vmatprep.subr.bf16.mxu0 0
    %1187 = vmatpush1.bf16.msra.mxu0 0
    %1188 = vmatprep.subr.bf16.mxu0 0
    %1189 = vmatpush1.bf16.msra.mxu0 0
    %1190 = vmatprep.subr.bf16.mxu0 0
    %1191 = vmatpush1.bf16.msra.mxu0 0
    %1192 = vmatprep.subr.bf16.mxu0 0
    %1193 = vmatpush1.bf16.msra.mxu0 0
    %1194 = vmatprep.subr.bf16.mxu0 0
    %1195 = vmatpush1.bf16.msra.mxu0 0
    %1196 = vmatprep.subr.bf16.mxu0 0
    %1197 = vmatpush1.bf16.msra.mxu0 0
    %1198 = vmatprep.subr.bf16.mxu0 0
    %1199 = vmatpush1.bf16.msra.mxu0 0
    %1200 = vmatprep.subr.bf16.mxu0 0
    %1201 = vmatpush1.bf16.msra.mxu0 0
    %1202 = vmatprep.subr.bf16.mxu0 0
    %1203 = vmatpush1.bf16.msra.mxu0 0
    %1204 = vmatprep.subr.bf16.mxu0 0
    %1205 = vmatpush1.bf16.msra.mxu0 0
    %1206 = vmatprep.subr.bf16.mxu0 0
    %1207 = vmatpush1.bf16.msra.mxu0 0
    %1208 = vmatprep.subr.bf16.mxu0 0
    %1209 = vmatpush1.bf16.msra.mxu0 0
    %1210 = vmatprep.mubr.bf16.mxu0 0
    %1211 = vmatmul.mubr.bf16.gmra.mrb[0].mxu0 %v593
    %v1212 = vpop.f32.mrb[0].mxu0
    %v1213 = vadd.f32 0.0, %v1212
    %v1214 = vpop.f32.mrb[0].mxu0
    %v1215 = vpop.f32.mrb[0].mxu0
    %v1216 = vadd.f32 0.0, %v1215
    %v1217 = vpop.f32.mrb[0].mxu0
    %1218 = vdwg.mxu0
    %1235 = vrot.lane.b32.xlu0 %v518, 127
    %v1236 = vpop.permute.xlu0 %1235
    %1237 = vrot.lane.b32.xlu0 %v521, 127
    %v1238 = vpop.permute.xlu0 %1237
    %1239 = vrot.lane.b32.xlu0 %v526, 127
    %v1240 = vpop.permute.xlu0 %1239
    %1241 = vrot.lane.b32.xlu0 %v529, 127
    %v1242 = vpop.permute.xlu0 %1241
    %1243 = vrot.lane.b32.xlu0 %v534, 127
    %v1244 = vpop.permute.xlu0 %1243
    %1245 = vrot.lane.b32.xlu0 %v537, 127
    %v1246 = vpop.permute.xlu0 %1245
    %1247 = vrot.lane.b32.xlu0 %v542, 127
    %v1248 = vpop.permute.xlu0 %1247
    %1249 = vrot.lane.b32.xlu0 %v545, 127
    %v1250 = vpop.permute.xlu0 %1249
    %1251 = vrot.lane.b32.xlu0 %v550, 127
    %v1252 = vpop.permute.xlu0 %1251
    %1253 = vrot.lane.b32.xlu0 %v553, 127
    %v1254 = vpop.permute.xlu0 %1253
    %1255 = vrot.lane.b32.xlu0 %v558, 127
    %v1256 = vpop.permute.xlu0 %1255
    %1257 = vrot.lane.b32.xlu0 %v561, 127
    %v1258 = vpop.permute.xlu0 %1257
    %1259 = vrot.lane.b32.xlu0 %v566, 127
    %v1260 = vpop.permute.xlu0 %1259
    %1261 = vrot.lane.b32.xlu0 %v569, 127
    %v1262 = vpop.permute.xlu0 %1261
    %1263 = vrot.lane.b32.xlu0 %v574, 127
    %v1264 = vpop.permute.xlu0 %1263
    %1265 = vrot.lane.b32.xlu0 %v577, 127
    %v1266 = vpop.permute.xlu0 %1265
    %1267 = vrot.lane.b32.xlu0 %v518, 126
    %v1268 = vpop.permute.xlu0 %1267
    %1269 = vrot.lane.b32.xlu0 %v521, 126
    %v1270 = vpop.permute.xlu0 %1269
    %1271 = vrot.lane.b32.xlu0 %v526, 126
    %v1272 = vpop.permute.xlu0 %1271
    %1273 = vrot.lane.b32.xlu0 %v529, 126
    %v1274 = vpop.permute.xlu0 %1273
    %1275 = vrot.lane.b32.xlu0 %v534, 126
    %v1276 = vpop.permute.xlu0 %1275
    %1277 = vrot.lane.b32.xlu0 %v537, 126
    %v1278 = vpop.permute.xlu0 %1277
    %1279 = vrot.lane.b32.xlu0 %v542, 126
    %v1280 = vpop.permute.xlu0 %1279
    %1281 = vrot.lane.b32.xlu0 %v545, 126
    %v1282 = vpop.permute.xlu0 %1281
    %1283 = vrot.lane.b32.xlu0 %v550, 126
    %v1284 = vpop.permute.xlu0 %1283
    %1285 = vrot.lane.b32.xlu0 %v553, 126
    %v1286 = vpop.permute.xlu0 %1285
    %1287 = vrot.lane.b32.xlu0 %v558, 126
    %v1288 = vpop.permute.xlu0 %1287
    %1289 = vrot.lane.b32.xlu0 %v561, 126
    %v1290 = vpop.permute.xlu0 %1289
    %1291 = vrot.lane.b32.xlu0 %v566, 126
    %v1292 = vpop.permute.xlu0 %1291
    %1293 = vrot.lane.b32.xlu0 %v569, 126
    %v1294 = vpop.permute.xlu0 %1293
    %1295 = vrot.lane.b32.xlu0 %v574, 126
    %v1296 = vpop.permute.xlu0 %1295
    %1297 = vrot.lane.b32.xlu0 %v577, 126
    %v1298 = vpop.permute.xlu0 %1297
    %1299 = vrot.lane.b32.xlu0 %v518, 125
    %v1300 = vpop.permute.xlu0 %1299
    %1301 = vrot.lane.b32.xlu0 %v521, 125
    %v1302 = vpop.permute.xlu0 %1301
    %1303 = vrot.lane.b32.xlu0 %v526, 125
    %v1304 = vpop.permute.xlu0 %1303
    %1305 = vrot.lane.b32.xlu0 %v529, 125
    %v1306 = vpop.permute.xlu0 %1305
    %1307 = vrot.lane.b32.xlu0 %v534, 125
    %v1308 = vpop.permute.xlu0 %1307
    %1309 = vrot.lane.b32.xlu0 %v537, 125
    %v1310 = vpop.permute.xlu0 %1309
    %1311 = vrot.lane.b32.xlu0 %v542, 125
    %v1312 = vpop.permute.xlu0 %1311
    %1313 = vrot.lane.b32.xlu0 %v545, 125
    %v1314 = vpop.permute.xlu0 %1313
    %1315 = vrot.lane.b32.xlu0 %v550, 125
    %v1316 = vpop.permute.xlu0 %1315
    %1317 = vrot.lane.b32.xlu0 %v553, 125
    %v1318 = vpop.permute.xlu0 %1317
    %1319 = vrot.lane.b32.xlu0 %v558, 125
    %v1320 = vpop.permute.xlu0 %1319
    %1321 = vrot.lane.b32.xlu0 %v561, 125
    %v1322 = vpop.permute.xlu0 %1321
    %1323 = vrot.lane.b32.xlu0 %v566, 125
    %v1324 = vpop.permute.xlu0 %1323
    %1325 = vrot.lane.b32.xlu0 %v569, 125
    %v1326 = vpop.permute.xlu0 %1325
    %1327 = vrot.lane.b32.xlu0 %v574, 125
    %v1328 = vpop.permute.xlu0 %1327
    %1329 = vrot.lane.b32.xlu0 %v577, 125
    %v1330 = vpop.permute.xlu0 %1329
    %v1331 = vpack.c.bf16 %v630, %v630
    %v1332 = vpack.c.bf16 %v633, %v633
    %v1333 = vpack.c.bf16 %v789, %v789
    %v1334 = vpack.c.bf16 %v792, %v792
    %v1335 = vpack.c.bf16 %v948, %v948
    %v1336 = vpack.c.bf16 %v951, %v951
    %v1337 = vpack.c.bf16 %v1107, %v1107
    %v1338 = vpack.c.bf16 %v1110, %v1110
    %v1339 = vpack.c.bf16 %v683, %v683
    %v1340 = vpack.c.bf16 %v686, %v686
    %v1341 = vpack.c.bf16 %v842, %v842
    %v1342 = vpack.c.bf16 %v845, %v845
    %v1343 = vpack.c.bf16 %v1001, %v1001
    %v1344 = vpack.c.bf16 %v1004, %v1004
    %v1345 = vpack.c.bf16 %v1160, %v1160
    %v1346 = vpack.c.bf16 %v1163, %v1163
    %vm1347 = vcmask 64512
    %v1349 = vsel %vm1347, %v1331, 0
    %v1352 = vsel %vm1347, %v1339, 0
    %1354 = vmatprep.subr.bf16.mxu0 0
    %1355 = vmatpush1.bf16.xpose.msra.mxu0 %v1352
    %1356 = vmatprep.subr.bf16.mxu0 0
    %1357 = vmatpush1.bf16.xpose.msra.mxu0 0
    %1358 = vmatprep.subr.bf16.mxu0 0
    %1359 = vmatpush1.bf16.xpose.msra.mxu0 0
    %1360 = vmatprep.subr.bf16.mxu0 0
    %1361 = vmatpush1.bf16.xpose.msra.mxu0 0
    %1362 = vmatprep.subr.bf16.mxu0 0
    %1363 = vmatpush1.bf16.xpose.msra.mxu0 0
    %1364 = vmatprep.subr.bf16.mxu0 0
    %1365 = vmatpush1.bf16.xpose.msra.mxu0 0
    %1366 = vmatprep.subr.bf16.mxu0 0
    %1367 = vmatpush1.bf16.xpose.msra.mxu0 0
    %1368 = vmatprep.subr.bf16.mxu0 0
    %1369 = vmatpush1.bf16.xpose.msra.mxu0 0
    %1370 = vmatprep.subr.bf16.mxu0 0
    %1371 = vmatpush1.bf16.xpose.msra.mxu0 0
    %1372 = vmatprep.subr.bf16.mxu0 0
    %1373 = vmatpush1.bf16.xpose.msra.mxu0 0
    %1374 = vmatprep.subr.bf16.mxu0 0
    %1375 = vmatpush1.bf16.xpose.msra.mxu0 0
    %1376 = vmatprep.subr.bf16.mxu0 0
    %1377 = vmatpush1.bf16.xpose.msra.mxu0 0
    %1378 = vmatprep.subr.bf16.mxu0 0
    %1379 = vmatpush1.bf16.xpose.msra.mxu0 0
    %1380 = vmatprep.subr.bf16.mxu0 0
    %1381 = vmatpush1.bf16.xpose.msra.mxu0 0
    %1382 = vmatprep.subr.bf16.mxu0 0
    %1383 = vmatpush1.bf16.xpose.msra.mxu0 0
    %1384 = vmatprep.subr.bf16.mxu0 0
    %1385 = vmatpush1.bf16.xpose.msra.mxu0 0
    %1386 = vmatprep.mubr.bf16.mxu0 0
    %1387 = vmatmul.mubr.bf16.gmra.mrb[0].mxu0 %v1349
    %v1388 = vpop.f32.mrb[0].mxu0
    %v1389 = vadd.f32 0.0, %v1388
    %v1390 = vpop.f32.mrb[0].mxu0
    %v1391 = vpop.f32.mrb[0].mxu0
    %v1392 = vpop.f32.mrb[0].mxu0
    %1393 = vdwg.mxu0
    %v1395 = vsel %vm1347, %v1332, 0
    %v1398 = vsel %vm1347, %v1340, 0
    %1400 = vmatprep.subr.bf16.mxu0 0
    %1401 = vmatpush1.bf16.xpose.msra.mxu0 %v1398
    %1402 = vmatprep.subr.bf16.mxu0 0
    %1403 = vmatpush1.bf16.xpose.msra.mxu0 0
    %1404 = vmatprep.subr.bf16.mxu0 0
    %1405 = vmatpush1.bf16.xpose.msra.mxu0 0
    %1406 = vmatprep.subr.bf16.mxu0 0
    %1407 = vmatpush1.bf16.xpose.msra.mxu0 0
    %1408 = vmatprep.subr.bf16.mxu0 0
    %1409 = vmatpush1.bf16.xpose.msra.mxu0 0
    %1410 = vmatprep.subr.bf16.mxu0 0
    %1411 = vmatpush1.bf16.xpose.msra.mxu0 0
    %1412 = vmatprep.subr.bf16.mxu0 0
    %1413 = vmatpush1.bf16.xpose.msra.mxu0 0
    %1414 = vmatprep.subr.bf16.mxu0 0
    %1415 = vmatpush1.bf16.xpose.msra.mxu0 0
    %1416 = vmatprep.subr.bf16.mxu0 0
    %1417 = vmatpush1.bf16.xpose.msra.mxu0 0
    %1418 = vmatprep.subr.bf16.mxu0 0
    %1419 = vmatpush1.bf16.xpose.msra.mxu0 0
    %1420 = vmatprep.subr.bf16.mxu0 0
    %1421 = vmatpush1.bf16.xpose.msra.mxu0 0
    %1422 = vmatprep.subr.bf16.mxu0 0
    %1423 = vmatpush1.bf16.xpose.msra.mxu0 0
    %1424 = vmatprep.subr.bf16.mxu0 0
    %1425 = vmatpush1.bf16.xpose.msra.mxu0 0
    %1426 = vmatprep.subr.bf16.mxu0 0
    %1427 = vmatpush1.bf16.xpose.msra.mxu0 0
    %1428 = vmatprep.subr.bf16.mxu0 0
    %1429 = vmatpush1.bf16.xpose.msra.mxu0 0
    %1430 = vmatprep.subr.bf16.mxu0 0
    %1431 = vmatpush1.bf16.xpose.msra.mxu0 0
    %1432 = vmatprep.mubr.bf16.mxu0 0
    %1433 = vmatmul.mubr.bf16.gmra.mrb[0].mxu0 %v1395
    %v1434 = vpop.f32.mrb[0].mxu0
    %v1435 = vadd.f32 0.0, %v1434
    %v1436 = vpop.f32.mrb[0].mxu0
    %v1437 = vpop.f32.mrb[0].mxu0
    %v1438 = vpop.f32.mrb[0].mxu0
    %1439 = vdwg.mxu0
    %v1441 = vsel %vm1347, %v1333, 0
    %v1444 = vsel %vm1347, %v1341, 0
    %1446 = vmatprep.subr.bf16.mxu0 0
    %1447 = vmatpush1.bf16.xpose.msra.mxu0 %v1444
    %1448 = vmatprep.subr.bf16.mxu0 0
    %1449 = vmatpush1.bf16.xpose.msra.mxu0 0
    %1450 = vmatprep.subr.bf16.mxu0 0
    %1451 = vmatpush1.bf16.xpose.msra.mxu0 0
    %1452 = vmatprep.subr.bf16.mxu0 0
    %1453 = vmatpush1.bf16.xpose.msra.mxu0 0
    %1454 = vmatprep.subr.bf16.mxu0 0
    %1455 = vmatpush1.bf16.xpose.msra.mxu0 0
    %1456 = vmatprep.subr.bf16.mxu0 0
    %1457 = vmatpush1.bf16.xpose.msra.mxu0 0
    %1458 = vmatprep.subr.bf16.mxu0 0
    %1459 = vmatpush1.bf16.xpose.msra.mxu0 0
    %1460 = vmatprep.subr.bf16.mxu0 0
    %1461 = vmatpush1.bf16.xpose.msra.mxu0 0
    %1462 = vmatprep.subr.bf16.mxu0 0
    %1463 = vmatpush1.bf16.xpose.msra.mxu0 0
    %1464 = vmatprep.subr.bf16.mxu0 0
    %1465 = vmatpush1.bf16.xpose.msra.mxu0 0
    %1466 = vmatprep.subr.bf16.mxu0 0
    %1467 = vmatpush1.bf16.xpose.msra.mxu0 0
    %1468 = vmatprep.subr.bf16.mxu0 0
    %1469 = vmatpush1.bf16.xpose.msra.mxu0 0
    %1470 = vmatprep.subr.bf16.mxu0 0
    %1471 = vmatpush1.bf16.xpose.msra.mxu0 0
    %1472 = vmatprep.subr.bf16.mxu0 0
    %1473 = vmatpush1.bf16.xpose.msra.mxu0 0
    %1474 = vmatprep.subr.bf16.mxu0 0
    %1475 = vmatpush1.bf16.xpose.msra.mxu0 0
    %1476 = vmatprep.subr.bf16.mxu0 0
    %1477 = vmatpush1.bf16.xpose.msra.mxu0 0
    %1478 = vmatprep.mubr.bf16.mxu0 0
    %1479 = vmatmul.mubr.bf16.gmra.mrb[0].mxu0 %v1441
    %v1480 = vpop.f32.mrb[0].mxu0
    %v1481 = vadd.f32 0.0, %v1480
    %v1482 = vpop.f32.mrb[0].mxu0
    %v1483 = vpop.f32.mrb[0].mxu0
    %v1484 = vpop.f32.mrb[0].mxu0
    %1485 = vdwg.mxu0
    %v1487 = vsel %vm1347, %v1334, 0
    %v1490 = vsel %vm1347, %v1342, 0
    %1492 = vmatprep.subr.bf16.mxu0 0
    %1493 = vmatpush1.bf16.xpose.msra.mxu0 %v1490
    %1494 = vmatprep.subr.bf16.mxu0 0
    %1495 = vmatpush1.bf16.xpose.msra.mxu0 0
    %1496 = vmatprep.subr.bf16.mxu0 0
    %1497 = vmatpush1.bf16.xpose.msra.mxu0 0
    %1498 = vmatprep.subr.bf16.mxu0 0
    %1499 = vmatpush1.bf16.xpose.msra.mxu0 0
    %1500 = vmatprep.subr.bf16.mxu0 0
    %1501 = vmatpush1.bf16.xpose.msra.mxu0 0
    %1502 = vmatprep.subr.bf16.mxu0 0
    %1503 = vmatpush1.bf16.xpose.msra.mxu0 0
    %1504 = vmatprep.subr.bf16.mxu0 0
    %1505 = vmatpush1.bf16.xpose.msra.mxu0 0
    %1506 = vmatprep.subr.bf16.mxu0 0
    %1507 = vmatpush1.bf16.xpose.msra.mxu0 0
    %1508 = vmatprep.subr.bf16.mxu0 0
    %1509 = vmatpush1.bf16.xpose.msra.mxu0 0
    %1510 = vmatprep.subr.bf16.mxu0 0
    %1511 = vmatpush1.bf16.xpose.msra.mxu0 0
    %1512 = vmatprep.subr.bf16.mxu0 0
    %1513 = vmatpush1.bf16.xpose.msra.mxu0 0
    %1514 = vmatprep.subr.bf16.mxu0 0
    %1515 = vmatpush1.bf16.xpose.msra.mxu0 0
    %1516 = vmatprep.subr.bf16.mxu0 0
    %1517 = vmatpush1.bf16.xpose.msra.mxu0 0
    %1518 = vmatprep.subr.bf16.mxu0 0
    %1519 = vmatpush1.bf16.xpose.msra.mxu0 0
    %1520 = vmatprep.subr.bf16.mxu0 0
    %1521 = vmatpush1.bf16.xpose.msra.mxu0 0
    %1522 = vmatprep.subr.bf16.mxu0 0
    %1523 = vmatpush1.bf16.xpose.msra.mxu0 0
    %1524 = vmatprep.mubr.bf16.mxu0 0
    %1525 = vmatmul.mubr.bf16.gmra.mrb[0].mxu0 %v1487
    %v1526 = vpop.f32.mrb[0].mxu0
    %v1527 = vadd.f32 0.0, %v1526
    %v1528 = vpop.f32.mrb[0].mxu0
    %v1529 = vpop.f32.mrb[0].mxu0
    %v1530 = vpop.f32.mrb[0].mxu0
    %1531 = vdwg.mxu0
    %v1533 = vsel %vm1347, %v1335, 0
    %v1536 = vsel %vm1347, %v1343, 0
    %1538 = vmatprep.subr.bf16.mxu0 0
    %1539 = vmatpush1.bf16.xpose.msra.mxu0 %v1536
    %1540 = vmatprep.subr.bf16.mxu0 0
    %1541 = vmatpush1.bf16.xpose.msra.mxu0 0
    %1542 = vmatprep.subr.bf16.mxu0 0
    %1543 = vmatpush1.bf16.xpose.msra.mxu0 0
    %1544 = vmatprep.subr.bf16.mxu0 0
    %1545 = vmatpush1.bf16.xpose.msra.mxu0 0
    %1546 = vmatprep.subr.bf16.mxu0 0
    %1547 = vmatpush1.bf16.xpose.msra.mxu0 0
    %1548 = vmatprep.subr.bf16.mxu0 0
    %1549 = vmatpush1.bf16.xpose.msra.mxu0 0
    %1550 = vmatprep.subr.bf16.mxu0 0
    %1551 = vmatpush1.bf16.xpose.msra.mxu0 0
    %1552 = vmatprep.subr.bf16.mxu0 0
    %1553 = vmatpush1.bf16.xpose.msra.mxu0 0
    %1554 = vmatprep.subr.bf16.mxu0 0
    %1555 = vmatpush1.bf16.xpose.msra.mxu0 0
    %1556 = vmatprep.subr.bf16.mxu0 0
    %1557 = vmatpush1.bf16.xpose.msra.mxu0 0
    %1558 = vmatprep.subr.bf16.mxu0 0
    %1559 = vmatpush1.bf16.xpose.msra.mxu0 0
    %1560 = vmatprep.subr.bf16.mxu0 0
    %1561 = vmatpush1.bf16.xpose.msra.mxu0 0
    %1562 = vmatprep.subr.bf16.mxu0 0
    %1563 = vmatpush1.bf16.xpose.msra.mxu0 0
    %1564 = vmatprep.subr.bf16.mxu0 0
    %1565 = vmatpush1.bf16.xpose.msra.mxu0 0
    %1566 = vmatprep.subr.bf16.mxu0 0
    %1567 = vmatpush1.bf16.xpose.msra.mxu0 0
    %1568 = vmatprep.subr.bf16.mxu0 0
    %1569 = vmatpush1.bf16.xpose.msra.mxu0 0
    %1570 = vmatprep.mubr.bf16.mxu0 0
    %1571 = vmatmul.mubr.bf16.gmra.mrb[0].mxu0 %v1533
    %v1572 = vpop.f32.mrb[0].mxu0
    %v1573 = vadd.f32 0.0, %v1572
    %v1574 = vpop.f32.mrb[0].mxu0
    %v1575 = vpop.f32.mrb[0].mxu0
    %v1576 = vpop.f32.mrb[0].mxu0
    %1577 = vdwg.mxu0
    %v1579 = vsel %vm1347, %v1336, 0
    %v1582 = vsel %vm1347, %v1344, 0
    %1584 = vmatprep.subr.bf16.mxu0 0
    %1585 = vmatpush1.bf16.xpose.msra.mxu0 %v1582
    %1586 = vmatprep.subr.bf16.mxu0 0
    %1587 = vmatpush1.bf16.xpose.msra.mxu0 0
    %1588 = vmatprep.subr.bf16.mxu0 0
    %1589 = vmatpush1.bf16.xpose.msra.mxu0 0
    %1590 = vmatprep.subr.bf16.mxu0 0
    %1591 = vmatpush1.bf16.xpose.msra.mxu0 0
    %1592 = vmatprep.subr.bf16.mxu0 0
    %1593 = vmatpush1.bf16.xpose.msra.mxu0 0
    %1594 = vmatprep.subr.bf16.mxu0 0
    %1595 = vmatpush1.bf16.xpose.msra.mxu0 0
    %1596 = vmatprep.subr.bf16.mxu0 0
    %1597 = vmatpush1.bf16.xpose.msra.mxu0 0
    %1598 = vmatprep.subr.bf16.mxu0 0
    %1599 = vmatpush1.bf16.xpose.msra.mxu0 0
    %1600 = vmatprep.subr.bf16.mxu0 0
    %1601 = vmatpush1.bf16.xpose.msra.mxu0 0
    %1602 = vmatprep.subr.bf16.mxu0 0
    %1603 = vmatpush1.bf16.xpose.msra.mxu0 0
    %1604 = vmatprep.subr.bf16.mxu0 0
    %1605 = vmatpush1.bf16.xpose.msra.mxu0 0
    %1606 = vmatprep.subr.bf16.mxu0 0
    %1607 = vmatpush1.bf16.xpose.msra.mxu0 0
    %1608 = vmatprep.subr.bf16.mxu0 0
    %1609 = vmatpush1.bf16.xpose.msra.mxu0 0
    %1610 = vmatprep.subr.bf16.mxu0 0
    %1611 = vmatpush1.bf16.xpose.msra.mxu0 0
    %1612 = vmatprep.subr.bf16.mxu0 0
    %1613 = vmatpush1.bf16.xpose.msra.mxu0 0
    %1614 = vmatprep.subr.bf16.mxu0 0
    %1615 = vmatpush1.bf16.xpose.msra.mxu0 0
    %1616 = vmatprep.mubr.bf16.mxu0 0
    %1617 = vmatmul.mubr.bf16.gmra.mrb[0].mxu0 %v1579
    %v1618 = vpop.f32.mrb[0].mxu0
    %v1619 = vadd.f32 0.0, %v1618
    %v1620 = vpop.f32.mrb[0].mxu0
    %v1621 = vpop.f32.mrb[0].mxu0
    %v1622 = vpop.f32.mrb[0].mxu0
    %1623 = vdwg.mxu0
    %v1625 = vsel %vm1347, %v1337, 0
    %v1628 = vsel %vm1347, %v1345, 0
    %1630 = vmatprep.subr.bf16.mxu0 0
    %1631 = vmatpush1.bf16.xpose.msra.mxu0 %v1628
    %1632 = vmatprep.subr.bf16.mxu0 0
    %1633 = vmatpush1.bf16.xpose.msra.mxu0 0
    %1634 = vmatprep.subr.bf16.mxu0 0
    %1635 = vmatpush1.bf16.xpose.msra.mxu0 0
    %1636 = vmatprep.subr.bf16.mxu0 0
    %1637 = vmatpush1.bf16.xpose.msra.mxu0 0
    %1638 = vmatprep.subr.bf16.mxu0 0
    %1639 = vmatpush1.bf16.xpose.msra.mxu0 0
    %1640 = vmatprep.subr.bf16.mxu0 0
    %1641 = vmatpush1.bf16.xpose.msra.mxu0 0
    %1642 = vmatprep.subr.bf16.mxu0 0
    %1643 = vmatpush1.bf16.xpose.msra.mxu0 0
    %1644 = vmatprep.subr.bf16.mxu0 0
    %1645 = vmatpush1.bf16.xpose.msra.mxu0 0
    %1646 = vmatprep.subr.bf16.mxu0 0
    %1647 = vmatpush1.bf16.xpose.msra.mxu0 0
    %1648 = vmatprep.subr.bf16.mxu0 0
    %1649 = vmatpush1.bf16.xpose.msra.mxu0 0
    %1650 = vmatprep.subr.bf16.mxu0 0
    %1651 = vmatpush1.bf16.xpose.msra.mxu0 0
    %1652 = vmatprep.subr.bf16.mxu0 0
    %1653 = vmatpush1.bf16.xpose.msra.mxu0 0
    %1654 = vmatprep.subr.bf16.mxu0 0
    %1655 = vmatpush1.bf16.xpose.msra.mxu0 0
    %1656 = vmatprep.subr.bf16.mxu0 0
    %1657 = vmatpush1.bf16.xpose.msra.mxu0 0
    %1658 = vmatprep.subr.bf16.mxu0 0
    %1659 = vmatpush1.bf16.xpose.msra.mxu0 0
    %1660 = vmatprep.subr.bf16.mxu0 0
    %1661 = vmatpush1.bf16.xpose.msra.mxu0 0
    %1662 = vmatprep.mubr.bf16.mxu0 0
    %1663 = vmatmul.mubr.bf16.gmra.mrb[0].mxu0 %v1625
    %v1664 = vpop.f32.mrb[0].mxu0
    %v1665 = vadd.f32 0.0, %v1664
    %v1666 = vpop.f32.mrb[0].mxu0
    %v1667 = vpop.f32.mrb[0].mxu0
    %v1668 = vpop.f32.mrb[0].mxu0
    %1669 = vdwg.mxu0
    %v1671 = vsel %vm1347, %v1338, 0
    %v1674 = vsel %vm1347, %v1346, 0
    %1676 = vmatprep.subr.bf16.mxu0 0
    %1677 = vmatpush1.bf16.xpose.msra.mxu0 %v1674
    %1678 = vmatprep.subr.bf16.mxu0 0
    %1679 = vmatpush1.bf16.xpose.msra.mxu0 0
    %1680 = vmatprep.subr.bf16.mxu0 0
    %1681 = vmatpush1.bf16.xpose.msra.mxu0 0
    %1682 = vmatprep.subr.bf16.mxu0 0
    %1683 = vmatpush1.bf16.xpose.msra.mxu0 0
    %1684 = vmatprep.subr.bf16.mxu0 0
    %1685 = vmatpush1.bf16.xpose.msra.mxu0 0
    %1686 = vmatprep.subr.bf16.mxu0 0
    %1687 = vmatpush1.bf16.xpose.msra.mxu0 0
    %1688 = vmatprep.subr.bf16.mxu0 0
    %1689 = vmatpush1.bf16.xpose.msra.mxu0 0
    %1690 = vmatprep.subr.bf16.mxu0 0
    %1691 = vmatpush1.bf16.xpose.msra.mxu0 0
    %1692 = vmatprep.subr.bf16.mxu0 0
    %1693 = vmatpush1.bf16.xpose.msra.mxu0 0
    %1694 = vmatprep.subr.bf16.mxu0 0
    %1695 = vmatpush1.bf16.xpose.msra.mxu0 0
    %1696 = vmatprep.subr.bf16.mxu0 0
    %1697 = vmatpush1.bf16.xpose.msra.mxu0 0
    %1698 = vmatprep.subr.bf16.mxu0 0
    %1699 = vmatpush1.bf16.xpose.msra.mxu0 0
    %1700 = vmatprep.subr.bf16.mxu0 0
    %1701 = vmatpush1.bf16.xpose.msra.mxu0 0
    %1702 = vmatprep.subr.bf16.mxu0 0
    %1703 = vmatpush1.bf16.xpose.msra.mxu0 0
    %1704 = vmatprep.subr.bf16.mxu0 0
    %1705 = vmatpush1.bf16.xpose.msra.mxu0 0
    %1706 = vmatprep.subr.bf16.mxu0 0
    %1707 = vmatpush1.bf16.xpose.msra.mxu0 0
    %1708 = vmatprep.mubr.bf16.mxu0 0
    %1709 = vmatmul.mubr.bf16.gmra.mrb[0].mxu0 %v1671
    %v1710 = vpop.f32.mrb[0].mxu0
    %v1711 = vadd.f32 0.0, %v1710
    %v1712 = vpop.f32.mrb[0].mxu0
    %v1713 = vpop.f32.mrb[0].mxu0
    %v1714 = vpop.f32.mrb[0].mxu0
    %1715 = vdwg.mxu0
    %v1716 = vmul.f32 %v1389, 0.35355338
    %v1717 = vmul.f32 %v1435, 0.35355338
    %v1718 = vmul.f32 %v1481, 0.35355338
    %v1719 = vmul.f32 %v1527, 0.35355338
    %v1720 = vmul.f32 %v1573, 0.35355338
    %v1721 = vmul.f32 %v1619, 0.35355338
    %v1722 = vmul.f32 %v1665, 0.35355338
    %v1723 = vmul.f32 %v1711, 0.35355338
    %1724 = vset.pattern.permute.xlu0 0
    %1725 = vperm.xlu0 %1724, %v518
    %v1726 = vpop.permute.xlu0 %1725
    %1727 = vset.pattern.permute.xlu0 0
    %1728 = vperm.xlu0 %1727, %v521
    %v1729 = vpop.permute.xlu0 %1728
    %1730 = vset.pattern.permute.xlu0 0
    %1731 = vperm.xlu0 %1730, %v526
    %v1732 = vpop.permute.xlu0 %1731
    %1733 = vset.pattern.permute.xlu0 0
    %1734 = vperm.xlu0 %1733, %v529
    %v1735 = vpop.permute.xlu0 %1734
    %1736 = vset.pattern.permute.xlu0 0
    %1737 = vperm.xlu0 %1736, %v534
    %v1738 = vpop.permute.xlu0 %1737
    %1739 = vset.pattern.permute.xlu0 0
    %1740 = vperm.xlu0 %1739, %v537
    %v1741 = vpop.permute.xlu0 %1740
    %1742 = vset.pattern.permute.xlu0 0
    %1743 = vperm.xlu0 %1742, %v542
    %v1744 = vpop.permute.xlu0 %1743
    %1745 = vset.pattern.permute.xlu0 0
    %1746 = vperm.xlu0 %1745, %v545
    %v1747 = vpop.permute.xlu0 %1746
    %1748 = vset.pattern.permute.xlu0 0
    %1749 = vperm.xlu0 %1748, %v550
    %v1750 = vpop.permute.xlu0 %1749
    %1751 = vset.pattern.permute.xlu0 0
    %1752 = vperm.xlu0 %1751, %v553
    %v1753 = vpop.permute.xlu0 %1752
    %1754 = vset.pattern.permute.xlu0 0
    %1755 = vperm.xlu0 %1754, %v558
    %v1756 = vpop.permute.xlu0 %1755
    %1757 = vset.pattern.permute.xlu0 0
    %1758 = vperm.xlu0 %1757, %v561
    %v1759 = vpop.permute.xlu0 %1758
    %1760 = vset.pattern.permute.xlu0 0
    %1761 = vperm.xlu0 %1760, %v566
    %v1762 = vpop.permute.xlu0 %1761
    %1763 = vset.pattern.permute.xlu0 0
    %1764 = vperm.xlu0 %1763, %v569
    %v1765 = vpop.permute.xlu0 %1764
    %1766 = vset.pattern.permute.xlu0 0
    %1767 = vperm.xlu0 %1766, %v574
    %v1768 = vpop.permute.xlu0 %1767
    %1769 = vset.pattern.permute.xlu0 0
    %1770 = vperm.xlu0 %1769, %v577
    %v1771 = vpop.permute.xlu0 %1770
    %1772 = vset.pattern.permute.xlu0 0
    %1773 = vperm.xlu0 %1772, %v1236
    %v1774 = vpop.permute.xlu0 %1773
    %1775 = vset.pattern.permute.xlu0 0
    %1776 = vperm.xlu0 %1775, %v1238
    %v1777 = vpop.permute.xlu0 %1776
    %1778 = vset.pattern.permute.xlu0 0
    %1779 = vperm.xlu0 %1778, %v1240
    %v1780 = vpop.permute.xlu0 %1779
    %1781 = vset.pattern.permute.xlu0 0
    %1782 = vperm.xlu0 %1781, %v1242
    %v1783 = vpop.permute.xlu0 %1782
    %1784 = vset.pattern.permute.xlu0 0
    %1785 = vperm.xlu0 %1784, %v1244
    %v1786 = vpop.permute.xlu0 %1785
    %1787 = vset.pattern.permute.xlu0 0
    %1788 = vperm.xlu0 %1787, %v1246
    %v1789 = vpop.permute.xlu0 %1788
    %1790 = vset.pattern.permute.xlu0 0
    %1791 = vperm.xlu0 %1790, %v1248
    %v1792 = vpop.permute.xlu0 %1791
    %1793 = vset.pattern.permute.xlu0 0
    %1794 = vperm.xlu0 %1793, %v1250
    %v1795 = vpop.permute.xlu0 %1794
    %1796 = vset.pattern.permute.xlu0 0
    %1797 = vperm.xlu0 %1796, %v1252
    %v1798 = vpop.permute.xlu0 %1797
    %1799 = vset.pattern.permute.xlu0 0
    %1800 = vperm.xlu0 %1799, %v1254
    %v1801 = vpop.permute.xlu0 %1800
    %1802 = vset.pattern.permute.xlu0 0
    %1803 = vperm.xlu0 %1802, %v1256
    %v1804 = vpop.permute.xlu0 %1803
    %1805 = vset.pattern.permute.xlu0 0
    %1806 = vperm.xlu0 %1805, %v1258
    %v1807 = vpop.permute.xlu0 %1806
    %1808 = vset.pattern.permute.xlu0 0
    %1809 = vperm.xlu0 %1808, %v1260
    %v1810 = vpop.permute.xlu0 %1809
    %1811 = vset.pattern.permute.xlu0 0
    %1812 = vperm.xlu0 %1811, %v1262
    %v1813 = vpop.permute.xlu0 %1812
    %1814 = vset.pattern.permute.xlu0 0
    %1815 = vperm.xlu0 %1814, %v1264
    %v1816 = vpop.permute.xlu0 %1815
    %1817 = vset.pattern.permute.xlu0 0
    %1818 = vperm.xlu0 %1817, %v1266
    %v1819 = vpop.permute.xlu0 %1818
    %1820 = vset.pattern.permute.xlu0 0
    %1821 = vperm.xlu0 %1820, %v1268
    %v1822 = vpop.permute.xlu0 %1821
    %1823 = vset.pattern.permute.xlu0 0
    %1824 = vperm.xlu0 %1823, %v1270
    %v1825 = vpop.permute.xlu0 %1824
    %1826 = vset.pattern.permute.xlu0 0
    %1827 = vperm.xlu0 %1826, %v1272
    %v1828 = vpop.permute.xlu0 %1827
    %1829 = vset.pattern.permute.xlu0 0
    %1830 = vperm.xlu0 %1829, %v1274
    %v1831 = vpop.permute.xlu0 %1830
    %1832 = vset.pattern.permute.xlu0 0
    %1833 = vperm.xlu0 %1832, %v1276
    %v1834 = vpop.permute.xlu0 %1833
    %1835 = vset.pattern.permute.xlu0 0
    %1836 = vperm.xlu0 %1835, %v1278
    %v1837 = vpop.permute.xlu0 %1836
    %1838 = vset.pattern.permute.xlu0 0
    %1839 = vperm.xlu0 %1838, %v1280
    %v1840 = vpop.permute.xlu0 %1839
    %1841 = vset.pattern.permute.xlu0 0
    %1842 = vperm.xlu0 %1841, %v1282
    %v1843 = vpop.permute.xlu0 %1842
    %1844 = vset.pattern.permute.xlu0 0
    %1845 = vperm.xlu0 %1844, %v1284
    %v1846 = vpop.permute.xlu0 %1845
    %1847 = vset.pattern.permute.xlu0 0
    %1848 = vperm.xlu0 %1847, %v1286
    %v1849 = vpop.permute.xlu0 %1848
    %1850 = vset.pattern.permute.xlu0 0
    %1851 = vperm.xlu0 %1850, %v1288
    %v1852 = vpop.permute.xlu0 %1851
    %1853 = vset.pattern.permute.xlu0 0
    %1854 = vperm.xlu0 %1853, %v1290
    %v1855 = vpop.permute.xlu0 %1854
    %1856 = vset.pattern.permute.xlu0 0
    %1857 = vperm.xlu0 %1856, %v1292
    %v1858 = vpop.permute.xlu0 %1857
    %1859 = vset.pattern.permute.xlu0 0
    %1860 = vperm.xlu0 %1859, %v1294
    %v1861 = vpop.permute.xlu0 %1860
    %1862 = vset.pattern.permute.xlu0 0
    %1863 = vperm.xlu0 %1862, %v1296
    %v1864 = vpop.permute.xlu0 %1863
    %1865 = vset.pattern.permute.xlu0 0
    %1866 = vperm.xlu0 %1865, %v1298
    %v1867 = vpop.permute.xlu0 %1866
    %1868 = vset.pattern.permute.xlu0 0
    %1869 = vperm.xlu0 %1868, %v1300
    %v1870 = vpop.permute.xlu0 %1869
    %1871 = vset.pattern.permute.xlu0 0
    %1872 = vperm.xlu0 %1871, %v1302
    %v1873 = vpop.permute.xlu0 %1872
    %1874 = vset.pattern.permute.xlu0 0
    %1875 = vperm.xlu0 %1874, %v1304
    %v1876 = vpop.permute.xlu0 %1875
    %1877 = vset.pattern.permute.xlu0 0
    %1878 = vperm.xlu0 %1877, %v1306
    %v1879 = vpop.permute.xlu0 %1878
    %1880 = vset.pattern.permute.xlu0 0
    %1881 = vperm.xlu0 %1880, %v1308
    %v1882 = vpop.permute.xlu0 %1881
    %1883 = vset.pattern.permute.xlu0 0
    %1884 = vperm.xlu0 %1883, %v1310
    %v1885 = vpop.permute.xlu0 %1884
    %1886 = vset.pattern.permute.xlu0 0
    %1887 = vperm.xlu0 %1886, %v1312
    %v1888 = vpop.permute.xlu0 %1887
    %1889 = vset.pattern.permute.xlu0 0
    %1890 = vperm.xlu0 %1889, %v1314
    %v1891 = vpop.permute.xlu0 %1890
    %1892 = vset.pattern.permute.xlu0 0
    %1893 = vperm.xlu0 %1892, %v1316
    %v1894 = vpop.permute.xlu0 %1893
    %1895 = vset.pattern.permute.xlu0 0
    %1896 = vperm.xlu0 %1895, %v1318
    %v1897 = vpop.permute.xlu0 %1896
    %1898 = vset.pattern.permute.xlu0 0
    %1899 = vperm.xlu0 %1898, %v1320
    %v1900 = vpop.permute.xlu0 %1899
    %1901 = vset.pattern.permute.xlu0 0
    %1902 = vperm.xlu0 %1901, %v1322
    %v1903 = vpop.permute.xlu0 %1902
    %1904 = vset.pattern.permute.xlu0 0
    %1905 = vperm.xlu0 %1904, %v1324
    %v1906 = vpop.permute.xlu0 %1905
    %1907 = vset.pattern.permute.xlu0 0
    %1908 = vperm.xlu0 %1907, %v1326
    %v1909 = vpop.permute.xlu0 %1908
    %1910 = vset.pattern.permute.xlu0 0
    %1911 = vperm.xlu0 %1910, %v1328
    %v1912 = vpop.permute.xlu0 %1911
    %1913 = vset.pattern.permute.xlu0 0
    %1914 = vperm.xlu0 %1913, %v1330
    %v1915 = vpop.permute.xlu0 %1914
    %v1916 = vlaneseq
    %v1917 = vand.u32 %v1916, 127
    %v1918 = vlaneseq
    %v1919 = vshrl.u32 %v1918, 7
    %v1920 = vsub.s32 %v1917, %v1919
    %v1921 = vrot.slane %v1726, %v1920
    %v1922 = vlaneseq
    %v1923 = vshrl.u32 %v1922, 7
    %v1924 = vsub.s32 %v1917, %v1923
    %v1925 = vrot.slane %v1729, %v1924
    %v1926 = vlaneseq
    %v1927 = vshrl.u32 %v1926, 7
    %v1928 = vsub.s32 %v1917, %v1927
    %v1929 = vrot.slane %v1732, %v1928
    %v1930 = vlaneseq
    %v1931 = vshrl.u32 %v1930, 7
    %v1932 = vsub.s32 %v1917, %v1931
    %v1933 = vrot.slane %v1735, %v1932
    %v1934 = vlaneseq
    %v1935 = vshrl.u32 %v1934, 7
    %v1936 = vsub.s32 %v1917, %v1935
    %v1937 = vrot.slane %v1738, %v1936
    %v1938 = vlaneseq
    %v1939 = vshrl.u32 %v1938, 7
    %v1940 = vsub.s32 %v1917, %v1939
    %v1941 = vrot.slane %v1741, %v1940
    %v1942 = vlaneseq
    %v1943 = vshrl.u32 %v1942, 7
    %v1944 = vsub.s32 %v1917, %v1943
    %v1945 = vrot.slane %v1744, %v1944
    %v1946 = vlaneseq
    %v1947 = vshrl.u32 %v1946, 7
    %v1948 = vsub.s32 %v1917, %v1947
    %v1949 = vrot.slane %v1747, %v1948
    %v1950 = vlaneseq
    %v1951 = vshrl.u32 %v1950, 7
    %v1952 = vsub.s32 %v1917, %v1951
    %v1953 = vrot.slane %v1750, %v1952
    %v1954 = vlaneseq
    %v1955 = vshrl.u32 %v1954, 7
    %v1956 = vsub.s32 %v1917, %v1955
    %v1957 = vrot.slane %v1753, %v1956
    %v1958 = vlaneseq
    %v1959 = vshrl.u32 %v1958, 7
    %v1960 = vsub.s32 %v1917, %v1959
    %v1961 = vrot.slane %v1756, %v1960
    %v1962 = vlaneseq
    %v1963 = vshrl.u32 %v1962, 7
    %v1964 = vsub.s32 %v1917, %v1963
    %v1965 = vrot.slane %v1759, %v1964
    %v1966 = vlaneseq
    %v1967 = vshrl.u32 %v1966, 7
    %v1968 = vsub.s32 %v1917, %v1967
    %v1969 = vrot.slane %v1762, %v1968
    %v1970 = vlaneseq
    %v1971 = vshrl.u32 %v1970, 7
    %v1972 = vsub.s32 %v1917, %v1971
    %v1973 = vrot.slane %v1765, %v1972
    %v1974 = vlaneseq
    %v1975 = vshrl.u32 %v1974, 7
    %v1976 = vsub.s32 %v1917, %v1975
    %v1977 = vrot.slane %v1768, %v1976
    %v1978 = vlaneseq
    %v1979 = vshrl.u32 %v1978, 7
    %v1980 = vsub.s32 %v1917, %v1979
    %v1981 = vrot.slane %v1771, %v1980
    %v1982 = vlaneseq
    %v1983 = vshrl.u32 %v1982, 7
    %v1984 = vsub.s32 %v1917, %v1983
    %v1985 = vrot.slane %v1774, %v1984
    %v1986 = vlaneseq
    %v1987 = vshrl.u32 %v1986, 7
    %v1988 = vsub.s32 %v1917, %v1987
    %v1989 = vrot.slane %v1777, %v1988
    %v1990 = vlaneseq
    %v1991 = vshrl.u32 %v1990, 7
    %v1992 = vsub.s32 %v1917, %v1991
    %v1993 = vrot.slane %v1780, %v1992
    %v1994 = vlaneseq
    %v1995 = vshrl.u32 %v1994, 7
    %v1996 = vsub.s32 %v1917, %v1995
    %v1997 = vrot.slane %v1783, %v1996
    %v1998 = vlaneseq
    %v1999 = vshrl.u32 %v1998, 7
    %v2000 = vsub.s32 %v1917, %v1999
    %v2001 = vrot.slane %v1786, %v2000
    %v2002 = vlaneseq
    %v2003 = vshrl.u32 %v2002, 7
    %v2004 = vsub.s32 %v1917, %v2003
    %v2005 = vrot.slane %v1789, %v2004
    %v2006 = vlaneseq
    %v2007 = vshrl.u32 %v2006, 7
    %v2008 = vsub.s32 %v1917, %v2007
    %v2009 = vrot.slane %v1792, %v2008
    %v2010 = vlaneseq
    %v2011 = vshrl.u32 %v2010, 7
    %v2012 = vsub.s32 %v1917, %v2011
    %v2013 = vrot.slane %v1795, %v2012
    %v2014 = vlaneseq
    %v2015 = vshrl.u32 %v2014, 7
    %v2016 = vsub.s32 %v1917, %v2015
    %v2017 = vrot.slane %v1798, %v2016
    %v2018 = vlaneseq
    %v2019 = vshrl.u32 %v2018, 7
    %v2020 = vsub.s32 %v1917, %v2019
    %v2021 = vrot.slane %v1801, %v2020
    %v2022 = vlaneseq
    %v2023 = vshrl.u32 %v2022, 7
    %v2024 = vsub.s32 %v1917, %v2023
    %v2025 = vrot.slane %v1804, %v2024
    %v2026 = vlaneseq
    %v2027 = vshrl.u32 %v2026, 7
    %v2028 = vsub.s32 %v1917, %v2027
    %v2029 = vrot.slane %v1807, %v2028
    %v2030 = vlaneseq
    %v2031 = vshrl.u32 %v2030, 7
    %v2032 = vsub.s32 %v1917, %v2031
    %v2033 = vrot.slane %v1810, %v2032
    %v2034 = vlaneseq
    %v2035 = vshrl.u32 %v2034, 7
    %v2036 = vsub.s32 %v1917, %v2035
    %v2037 = vrot.slane %v1813, %v2036
    %v2038 = vlaneseq
    %v2039 = vshrl.u32 %v2038, 7
    %v2040 = vsub.s32 %v1917, %v2039
    %v2041 = vrot.slane %v1816, %v2040
    %v2042 = vlaneseq
    %v2043 = vshrl.u32 %v2042, 7
    %v2044 = vsub.s32 %v1917, %v2043
    %v2045 = vrot.slane %v1819, %v2044
    %v2046 = vlaneseq
    %v2047 = vshrl.u32 %v2046, 7
    %v2048 = vsub.s32 %v1917, %v2047
    %v2049 = vrot.slane %v1822, %v2048
    %v2050 = vlaneseq
    %v2051 = vshrl.u32 %v2050, 7
    %v2052 = vsub.s32 %v1917, %v2051
    %v2053 = vrot.slane %v1825, %v2052
    %v2054 = vlaneseq
    %v2055 = vshrl.u32 %v2054, 7
    %v2056 = vsub.s32 %v1917, %v2055
    %v2057 = vrot.slane %v1828, %v2056
    %v2058 = vlaneseq
    %v2059 = vshrl.u32 %v2058, 7
    %v2060 = vsub.s32 %v1917, %v2059
    %v2061 = vrot.slane %v1831, %v2060
    %v2062 = vlaneseq
    %v2063 = vshrl.u32 %v2062, 7
    %v2064 = vsub.s32 %v1917, %v2063
    %v2065 = vrot.slane %v1834, %v2064
    %v2066 = vlaneseq
    %v2067 = vshrl.u32 %v2066, 7
    %v2068 = vsub.s32 %v1917, %v2067
    %v2069 = vrot.slane %v1837, %v2068
    %v2070 = vlaneseq
    %v2071 = vshrl.u32 %v2070, 7
    %v2072 = vsub.s32 %v1917, %v2071
    %v2073 = vrot.slane %v1840, %v2072
    %v2074 = vlaneseq
    %v2075 = vshrl.u32 %v2074, 7
    %v2076 = vsub.s32 %v1917, %v2075
    %v2077 = vrot.slane %v1843, %v2076
    %v2078 = vlaneseq
    %v2079 = vshrl.u32 %v2078, 7
    %v2080 = vsub.s32 %v1917, %v2079
    %v2081 = vrot.slane %v1846, %v2080
    %v2082 = vlaneseq
    %v2083 = vshrl.u32 %v2082, 7
    %v2084 = vsub.s32 %v1917, %v2083
    %v2085 = vrot.slane %v1849, %v2084
    %v2086 = vlaneseq
    %v2087 = vshrl.u32 %v2086, 7
    %v2088 = vsub.s32 %v1917, %v2087
    %v2089 = vrot.slane %v1852, %v2088
    %v2090 = vlaneseq
    %v2091 = vshrl.u32 %v2090, 7
    %v2092 = vsub.s32 %v1917, %v2091
    %v2093 = vrot.slane %v1855, %v2092
    %v2094 = vlaneseq
    %v2095 = vshrl.u32 %v2094, 7
    %v2096 = vsub.s32 %v1917, %v2095
    %v2097 = vrot.slane %v1858, %v2096
    %v2098 = vlaneseq
    %v2099 = vshrl.u32 %v2098, 7
    %v2100 = vsub.s32 %v1917, %v2099
    %v2101 = vrot.slane %v1861, %v2100
    %v2102 = vlaneseq
    %v2103 = vshrl.u32 %v2102, 7
    %v2104 = vsub.s32 %v1917, %v2103
    %v2105 = vrot.slane %v1864, %v2104
    %v2106 = vlaneseq
    %v2107 = vshrl.u32 %v2106, 7
    %v2108 = vsub.s32 %v1917, %v2107
    %v2109 = vrot.slane %v1867, %v2108
    %v2110 = vlaneseq
    %v2111 = vshrl.u32 %v2110, 7
    %v2112 = vsub.s32 %v1917, %v2111
    %v2113 = vrot.slane %v1870, %v2112
    %v2114 = vlaneseq
    %v2115 = vshrl.u32 %v2114, 7
    %v2116 = vsub.s32 %v1917, %v2115
    %v2117 = vrot.slane %v1873, %v2116
    %v2118 = vlaneseq
    %v2119 = vshrl.u32 %v2118, 7
    %v2120 = vsub.s32 %v1917, %v2119
    %v2121 = vrot.slane %v1876, %v2120
    %v2122 = vlaneseq
    %v2123 = vshrl.u32 %v2122, 7
    %v2124 = vsub.s32 %v1917, %v2123
    %v2125 = vrot.slane %v1879, %v2124
    %v2126 = vlaneseq
    %v2127 = vshrl.u32 %v2126, 7
    %v2128 = vsub.s32 %v1917, %v2127
    %v2129 = vrot.slane %v1882, %v2128
    %v2130 = vlaneseq
    %v2131 = vshrl.u32 %v2130, 7
    %v2132 = vsub.s32 %v1917, %v2131
    %v2133 = vrot.slane %v1885, %v2132
    %v2134 = vlaneseq
    %v2135 = vshrl.u32 %v2134, 7
    %v2136 = vsub.s32 %v1917, %v2135
    %v2137 = vrot.slane %v1888, %v2136
    %v2138 = vlaneseq
    %v2139 = vshrl.u32 %v2138, 7
    %v2140 = vsub.s32 %v1917, %v2139
    %v2141 = vrot.slane %v1891, %v2140
    %v2142 = vlaneseq
    %v2143 = vshrl.u32 %v2142, 7
    %v2144 = vsub.s32 %v1917, %v2143
    %v2145 = vrot.slane %v1894, %v2144
    %v2146 = vlaneseq
    %v2147 = vshrl.u32 %v2146, 7
    %v2148 = vsub.s32 %v1917, %v2147
    %v2149 = vrot.slane %v1897, %v2148
    %v2150 = vlaneseq
    %v2151 = vshrl.u32 %v2150, 7
    %v2152 = vsub.s32 %v1917, %v2151
    %v2153 = vrot.slane %v1900, %v2152
    %v2154 = vlaneseq
    %v2155 = vshrl.u32 %v2154, 7
    %v2156 = vsub.s32 %v1917, %v2155
    %v2157 = vrot.slane %v1903, %v2156
    %v2158 = vlaneseq
    %v2159 = vshrl.u32 %v2158, 7
    %v2160 = vsub.s32 %v1917, %v2159
    %v2161 = vrot.slane %v1906, %v2160
    %v2162 = vlaneseq
    %v2163 = vshrl.u32 %v2162, 7
    %v2164 = vsub.s32 %v1917, %v2163
    %v2165 = vrot.slane %v1909, %v2164
    %v2166 = vlaneseq
    %v2167 = vshrl.u32 %v2166, 7
    %v2168 = vsub.s32 %v1917, %v2167
    %v2169 = vrot.slane %v1912, %v2168
    %v2170 = vlaneseq
    %v2171 = vshrl.u32 %v2170, 7
    %v2172 = vsub.s32 %v1917, %v2171
    %v2173 = vrot.slane %v1915, %v2172
    %vm2174 = vcmask 1041409
    %v2175 = vsel %vm2174, %v1925, %v1921
    %vm2176 = vcmask 1042434
    %v2177 = vsel %vm2176, %v1929, %v2175
    %vm2178 = vcmask 1043459
    %v2179 = vsel %vm2178, %v1933, %v2177
    %vm2180 = vcmask 1044484
    %v2181 = vsel %vm2180, %v1937, %v2179
    %vm2182 = vcmask 1045509
    %v2183 = vsel %vm2182, %v1941, %v2181
    %vm2184 = vcmask 1046534
    %v2185 = vsel %vm2184, %v1945, %v2183
    %vm2186 = vcmask 1047559
    %v2187 = vsel %vm2186, %v1949, %v2185
    %v2188 = vsel %vm2174, %v1957, %v1953
    %v2189 = vsel %vm2176, %v1961, %v2188
    %v2190 = vsel %vm2178, %v1965, %v2189
    %v2191 = vsel %vm2180, %v1969, %v2190
    %v2192 = vsel %vm2182, %v1973, %v2191
    %v2193 = vsel %vm2184, %v1977, %v2192
    %v2194 = vsel %vm2186, %v1981, %v2193
    %v2195 = vsel %vm2174, %v1989, %v1985
    %v2196 = vsel %vm2176, %v1993, %v2195
    %v2197 = vsel %vm2178, %v1997, %v2196
    %v2198 = vsel %vm2180, %v2001, %v2197
    %v2199 = vsel %vm2182, %v2005, %v2198
    %v2200 = vsel %vm2184, %v2009, %v2199
    %v2201 = vsel %vm2186, %v2013, %v2200
    %v2202 = vsel %vm2174, %v2021, %v2017
    %v2203 = vsel %vm2176, %v2025, %v2202
    %v2204 = vsel %vm2178, %v2029, %v2203
    %v2205 = vsel %vm2180, %v2033, %v2204
    %v2206 = vsel %vm2182, %v2037, %v2205
    %v2207 = vsel %vm2184, %v2041, %v2206
    %v2208 = vsel %vm2186, %v2045, %v2207
    %v2209 = vsel %vm2174, %v2053, %v2049
    %v2210 = vsel %vm2176, %v2057, %v2209
    %v2211 = vsel %vm2178, %v2061, %v2210
    %v2212 = vsel %vm2180, %v2065, %v2211
    %v2213 = vsel %vm2182, %v2069, %v2212
    %v2214 = vsel %vm2184, %v2073, %v2213
    %v2215 = vsel %vm2186, %v2077, %v2214
    %v2216 = vsel %vm2174, %v2085, %v2081
    %v2217 = vsel %vm2176, %v2089, %v2216
    %v2218 = vsel %vm2178, %v2093, %v2217
    %v2219 = vsel %vm2180, %v2097, %v2218
    %v2220 = vsel %vm2182, %v2101, %v2219
    %v2221 = vsel %vm2184, %v2105, %v2220
    %v2222 = vsel %vm2186, %v2109, %v2221
    %v2223 = vsel %vm2174, %v2117, %v2113
    %v2224 = vsel %vm2176, %v2121, %v2223
    %v2225 = vsel %vm2178, %v2125, %v2224
    %v2226 = vsel %vm2180, %v2129, %v2225
    %v2227 = vsel %vm2182, %v2133, %v2226
    %v2228 = vsel %vm2184, %v2137, %v2227
    %v2229 = vsel %vm2186, %v2141, %v2228
    %v2230 = vsel %vm2174, %v2149, %v2145
    %v2231 = vsel %vm2176, %v2153, %v2230
    %v2232 = vsel %vm2178, %v2157, %v2231
    %v2233 = vsel %vm2180, %v2161, %v2232
    %v2234 = vsel %vm2182, %v2165, %v2233
    %v2235 = vsel %vm2184, %v2169, %v2234
    %v2236 = vsel %vm2186, %v2173, %v2235
    %v2245 = vadd.f32 %v1716, %v2187
    %v2246 = vadd.f32 %v1717, %v2194
    %v2247 = vadd.f32 %v1718, %v2201
    %v2248 = vadd.f32 %v1719, %v2208
    %v2249 = vadd.f32 %v1720, %v2215
    %v2250 = vadd.f32 %v1721, %v2222
    %v2251 = vadd.f32 %v1722, %v2229
    %v2252 = vadd.f32 %v1723, %v2236
    %v2253 = vadd.f32 %v2245, %v98
    %v2254 = vadd.f32 %v2246, %v99
    %v2255 = vadd.f32 %v2247, %v98
    %v2256 = vadd.f32 %v2248, %v99
    %v2257 = vadd.f32 %v2249, %v98
    %v2258 = vadd.f32 %v2250, %v99
    %v2259 = vadd.f32 %v2251, %v98
    %v2260 = vadd.f32 %v2252, %v99
    %v2261 = vsel %vm1347, %v2253, -inf
    %2262 = vmax.xlane.f32.xlu0 %v2261
    %v2263 = vpop.xlane.xlu0 %2262
    %v2264 = vsel %vm1347, %v2254, -inf
    %2265 = vmax.xlane.f32.xlu0 %v2264
    %v2266 = vpop.xlane.xlu0 %2265
    %v2267 = vsel %vm1347, %v2255, -inf
    %2268 = vmax.xlane.f32.xlu0 %v2267
    %v2269 = vpop.xlane.xlu0 %2268
    %v2270 = vsel %vm1347, %v2256, -inf
    %2271 = vmax.xlane.f32.xlu0 %v2270
    %v2272 = vpop.xlane.xlu0 %2271
    %v2273 = vsel %vm1347, %v2257, -inf
    %2274 = vmax.xlane.f32.xlu0 %v2273
    %v2275 = vpop.xlane.xlu0 %2274
    %v2276 = vsel %vm1347, %v2258, -inf
    %2277 = vmax.xlane.f32.xlu0 %v2276
    %v2278 = vpop.xlane.xlu0 %2277
    %v2279 = vsel %vm1347, %v2259, -inf
    %2280 = vmax.xlane.f32.xlu0 %v2279
    %v2281 = vpop.xlane.xlu0 %2280
    %v2282 = vsel %vm1347, %v2260, -inf
    %2283 = vmax.xlane.f32.xlu0 %v2282
    %v2284 = vpop.xlane.xlu0 %2283
    %v2285 = vsub.f32 %v2253, %v2263
    %v2286 = vsub.f32 %v2254, %v2266
    %v2287 = vsub.f32 %v2255, %v2269
    %v2288 = vsub.f32 %v2256, %v2272
    %v2289 = vsub.f32 %v2257, %v2275
    %v2290 = vsub.f32 %v2258, %v2278
    %v2291 = vsub.f32 %v2259, %v2281
    %v2292 = vsub.f32 %v2260, %v2284
    %v2293 = vmul.f32 %v2285, 1.442695
    %v2294 = vpow.pop %v2293
    %v2295 = vmul.f32 %v2286, 1.442695
    %v2296 = vpow.pop %v2295
    %v2297 = vmul.f32 %v2287, 1.442695
    %v2298 = vpow.pop %v2297
    %v2299 = vmul.f32 %v2288, 1.442695
    %v2300 = vpow.pop %v2299
    %v2301 = vmul.f32 %v2289, 1.442695
    %v2302 = vpow.pop %v2301
    %v2303 = vmul.f32 %v2290, 1.442695
    %v2304 = vpow.pop %v2303
    %v2305 = vmul.f32 %v2291, 1.442695
    %v2306 = vpow.pop %v2305
    %v2307 = vmul.f32 %v2292, 1.442695
    %v2308 = vpow.pop %v2307
    %v2309 = vsel %vm1347, %v2294, 0.0
    %2310 = vadd.xlane.f32.xlu0 %v2309
    %v2311 = vpop.xlane.xlu0 %2310
    %v2312 = vsel %vm1347, %v2296, 0.0
    %2313 = vadd.xlane.f32.xlu0 %v2312
    %v2314 = vpop.xlane.xlu0 %2313
    %v2315 = vsel %vm1347, %v2298, 0.0
    %2316 = vadd.xlane.f32.xlu0 %v2315
    %v2317 = vpop.xlane.xlu0 %2316
    %v2318 = vsel %vm1347, %v2300, 0.0
    %2319 = vadd.xlane.f32.xlu0 %v2318
    %v2320 = vpop.xlane.xlu0 %2319
    %v2321 = vsel %vm1347, %v2302, 0.0
    %2322 = vadd.xlane.f32.xlu0 %v2321
    %v2323 = vpop.xlane.xlu0 %2322
    %v2324 = vsel %vm1347, %v2304, 0.0
    %2325 = vadd.xlane.f32.xlu0 %v2324
    %v2326 = vpop.xlane.xlu0 %2325
    %v2327 = vsel %vm1347, %v2306, 0.0
    %2328 = vadd.xlane.f32.xlu0 %v2327
    %v2329 = vpop.xlane.xlu0 %2328
    %v2330 = vsel %vm1347, %v2308, 0.0
    %2331 = vadd.xlane.f32.xlu0 %v2330
    %v2332 = vpop.xlane.xlu0 %2331
    %v2333 = vrcp.pop %v2311
    %v2334 = vmul.f32 %v2294, %v2333
    %v2335 = vrcp.pop %v2314
    %v2336 = vmul.f32 %v2296, %v2335
    %v2337 = vrcp.pop %v2317
    %v2338 = vmul.f32 %v2298, %v2337
    %v2339 = vrcp.pop %v2320
    %v2340 = vmul.f32 %v2300, %v2339
    %v2341 = vrcp.pop %v2323
    %v2342 = vmul.f32 %v2302, %v2341
    %v2343 = vrcp.pop %v2326
    %v2344 = vmul.f32 %v2304, %v2343
    %v2345 = vrcp.pop %v2329
    %v2346 = vmul.f32 %v2306, %v2345
    %v2347 = vrcp.pop %v2332
    %v2348 = vmul.f32 %v2308, %v2347
    %v2349 = vpack.c.bf16 %v2334, %v2334
    %v2350 = vpack.c.bf16 %v2336, %v2336
    %v2351 = vpack.c.bf16 %v2338, %v2338
    %v2352 = vpack.c.bf16 %v2340, %v2340
    %v2353 = vpack.c.bf16 %v2342, %v2342
    %v2354 = vpack.c.bf16 %v2344, %v2344
    %v2355 = vpack.c.bf16 %v2346, %v2346
    %v2356 = vpack.c.bf16 %v2348, %v2348
    %v2357 = vpack.c.bf16 %v736, %v736
    %v2358 = vpack.c.bf16 %v739, %v739
    %v2359 = vpack.c.bf16 %v895, %v895
    %v2360 = vpack.c.bf16 %v898, %v898
    %v2361 = vpack.c.bf16 %v1054, %v1054
    %v2362 = vpack.c.bf16 %v1057, %v1057
    %v2363 = vpack.c.bf16 %v1213, %v1213
    %v2364 = vpack.c.bf16 %v1216, %v1216
    %v2366 = vsel %vm1347, %v2349, 0
    %vm2368 = vcmask 1043456
    %v2370 = vsel %vm2368, %v2357, 0
    %2372 = vmatprep.subr.bf16.mxu0 0
    %2373 = vmatpush1.bf16.msra.mxu0 %v2370
    %2374 = vmatprep.subr.bf16.mxu0 0
    %2375 = vmatpush1.bf16.msra.mxu0 0
    %2376 = vmatprep.subr.bf16.mxu0 0
    %2377 = vmatpush1.bf16.msra.mxu0 0
    %2378 = vmatprep.subr.bf16.mxu0 0
    %2379 = vmatpush1.bf16.msra.mxu0 0
    %2380 = vmatprep.subr.bf16.mxu0 0
    %2381 = vmatpush1.bf16.msra.mxu0 0
    %2382 = vmatprep.subr.bf16.mxu0 0
    %2383 = vmatpush1.bf16.msra.mxu0 0
    %2384 = vmatprep.subr.bf16.mxu0 0
    %2385 = vmatpush1.bf16.msra.mxu0 0
    %2386 = vmatprep.subr.bf16.mxu0 0
    %2387 = vmatpush1.bf16.msra.mxu0 0
    %2388 = vmatprep.subr.bf16.mxu0 0
    %2389 = vmatpush1.bf16.msra.mxu0 0
    %2390 = vmatprep.subr.bf16.mxu0 0
    %2391 = vmatpush1.bf16.msra.mxu0 0
    %2392 = vmatprep.subr.bf16.mxu0 0
    %2393 = vmatpush1.bf16.msra.mxu0 0
    %2394 = vmatprep.subr.bf16.mxu0 0
    %2395 = vmatpush1.bf16.msra.mxu0 0
    %2396 = vmatprep.subr.bf16.mxu0 0
    %2397 = vmatpush1.bf16.msra.mxu0 0
    %2398 = vmatprep.subr.bf16.mxu0 0
    %2399 = vmatpush1.bf16.msra.mxu0 0
    %2400 = vmatprep.subr.bf16.mxu0 0
    %2401 = vmatpush1.bf16.msra.mxu0 0
    %2402 = vmatprep.subr.bf16.mxu0 0
    %2403 = vmatpush1.bf16.msra.mxu0 0
    %2404 = vmatprep.mubr.bf16.mxu0 0
    %2405 = vmatmul.mubr.bf16.gmra.mrb[0].mxu0 %v2366
    %v2406 = vpop.f32.mrb[0].mxu0
    %v2407 = vadd.f32 0.0, %v2406
    %v2408 = vpop.f32.mrb[0].mxu0
    %v2409 = vpop.f32.mrb[0].mxu0
    %v2410 = vpop.f32.mrb[0].mxu0
    %2411 = vdwg.mxu0
    %v2413 = vsel %vm1347, %v2350, 0
    %v2416 = vsel %vm2368, %v2358, 0
    %2418 = vmatprep.subr.bf16.mxu0 0
    %2419 = vmatpush1.bf16.msra.mxu0 %v2416
    %2420 = vmatprep.subr.bf16.mxu0 0
    %2421 = vmatpush1.bf16.msra.mxu0 0
    %2422 = vmatprep.subr.bf16.mxu0 0
    %2423 = vmatpush1.bf16.msra.mxu0 0
    %2424 = vmatprep.subr.bf16.mxu0 0
    %2425 = vmatpush1.bf16.msra.mxu0 0
    %2426 = vmatprep.subr.bf16.mxu0 0
    %2427 = vmatpush1.bf16.msra.mxu0 0
    %2428 = vmatprep.subr.bf16.mxu0 0
    %2429 = vmatpush1.bf16.msra.mxu0 0
    %2430 = vmatprep.subr.bf16.mxu0 0
    %2431 = vmatpush1.bf16.msra.mxu0 0
    %2432 = vmatprep.subr.bf16.mxu0 0
    %2433 = vmatpush1.bf16.msra.mxu0 0
    %2434 = vmatprep.subr.bf16.mxu0 0
    %2435 = vmatpush1.bf16.msra.mxu0 0
    %2436 = vmatprep.subr.bf16.mxu0 0
    %2437 = vmatpush1.bf16.msra.mxu0 0
    %2438 = vmatprep.subr.bf16.mxu0 0
    %2439 = vmatpush1.bf16.msra.mxu0 0
    %2440 = vmatprep.subr.bf16.mxu0 0
    %2441 = vmatpush1.bf16.msra.mxu0 0
    %2442 = vmatprep.subr.bf16.mxu0 0
    %2443 = vmatpush1.bf16.msra.mxu0 0
    %2444 = vmatprep.subr.bf16.mxu0 0
    %2445 = vmatpush1.bf16.msra.mxu0 0
    %2446 = vmatprep.subr.bf16.mxu0 0
    %2447 = vmatpush1.bf16.msra.mxu0 0
    %2448 = vmatprep.subr.bf16.mxu0 0
    %2449 = vmatpush1.bf16.msra.mxu0 0
    %2450 = vmatprep.mubr.bf16.mxu0 0
    %2451 = vmatmul.mubr.bf16.gmra.mrb[0].mxu0 %v2413
    %v2452 = vpop.f32.mrb[0].mxu0
    %v2453 = vadd.f32 0.0, %v2452
    %v2454 = vpop.f32.mrb[0].mxu0
    %v2455 = vpop.f32.mrb[0].mxu0
    %v2456 = vpop.f32.mrb[0].mxu0
    %2457 = vdwg.mxu0
    %v2459 = vsel %vm1347, %v2351, 0
    %v2462 = vsel %vm2368, %v2359, 0
    %2464 = vmatprep.subr.bf16.mxu0 0
    %2465 = vmatpush1.bf16.msra.mxu0 %v2462
    %2466 = vmatprep.subr.bf16.mxu0 0
    %2467 = vmatpush1.bf16.msra.mxu0 0
    %2468 = vmatprep.subr.bf16.mxu0 0
    %2469 = vmatpush1.bf16.msra.mxu0 0
    %2470 = vmatprep.subr.bf16.mxu0 0
    %2471 = vmatpush1.bf16.msra.mxu0 0
    %2472 = vmatprep.subr.bf16.mxu0 0
    %2473 = vmatpush1.bf16.msra.mxu0 0
    %2474 = vmatprep.subr.bf16.mxu0 0
    %2475 = vmatpush1.bf16.msra.mxu0 0
    %2476 = vmatprep.subr.bf16.mxu0 0
    %2477 = vmatpush1.bf16.msra.mxu0 0
    %2478 = vmatprep.subr.bf16.mxu0 0
    %2479 = vmatpush1.bf16.msra.mxu0 0
    %2480 = vmatprep.subr.bf16.mxu0 0
    %2481 = vmatpush1.bf16.msra.mxu0 0
    %2482 = vmatprep.subr.bf16.mxu0 0
    %2483 = vmatpush1.bf16.msra.mxu0 0
    %2484 = vmatprep.subr.bf16.mxu0 0
    %2485 = vmatpush1.bf16.msra.mxu0 0
    %2486 = vmatprep.subr.bf16.mxu0 0
    %2487 = vmatpush1.bf16.msra.mxu0 0
    %2488 = vmatprep.subr.bf16.mxu0 0
    %2489 = vmatpush1.bf16.msra.mxu0 0
    %2490 = vmatprep.subr.bf16.mxu0 0
    %2491 = vmatpush1.bf16.msra.mxu0 0
    %2492 = vmatprep.subr.bf16.mxu0 0
    %2493 = vmatpush1.bf16.msra.mxu0 0
    %2494 = vmatprep.subr.bf16.mxu0 0
    %2495 = vmatpush1.bf16.msra.mxu0 0
    %2496 = vmatprep.mubr.bf16.mxu0 0
    %2497 = vmatmul.mubr.bf16.gmra.mrb[0].mxu0 %v2459
    %v2498 = vpop.f32.mrb[0].mxu0
    %v2499 = vadd.f32 0.0, %v2498
    %v2500 = vpop.f32.mrb[0].mxu0
    %v2501 = vpop.f32.mrb[0].mxu0
    %v2502 = vpop.f32.mrb[0].mxu0
    %2503 = vdwg.mxu0
    %v2505 = vsel %vm1347, %v2352, 0
    %v2508 = vsel %vm2368, %v2360, 0
    %2510 = vmatprep.subr.bf16.mxu0 0
    %2511 = vmatpush1.bf16.msra.mxu0 %v2508
    %2512 = vmatprep.subr.bf16.mxu0 0
    %2513 = vmatpush1.bf16.msra.mxu0 0
    %2514 = vmatprep.subr.bf16.mxu0 0
    %2515 = vmatpush1.bf16.msra.mxu0 0
    %2516 = vmatprep.subr.bf16.mxu0 0
    %2517 = vmatpush1.bf16.msra.mxu0 0
    %2518 = vmatprep.subr.bf16.mxu0 0
    %2519 = vmatpush1.bf16.msra.mxu0 0
    %2520 = vmatprep.subr.bf16.mxu0 0
    %2521 = vmatpush1.bf16.msra.mxu0 0
    %2522 = vmatprep.subr.bf16.mxu0 0
    %2523 = vmatpush1.bf16.msra.mxu0 0
    %2524 = vmatprep.subr.bf16.mxu0 0
    %2525 = vmatpush1.bf16.msra.mxu0 0
    %2526 = vmatprep.subr.bf16.mxu0 0
    %2527 = vmatpush1.bf16.msra.mxu0 0
    %2528 = vmatprep.subr.bf16.mxu0 0
    %2529 = vmatpush1.bf16.msra.mxu0 0
    %2530 = vmatprep.subr.bf16.mxu0 0
    %2531 = vmatpush1.bf16.msra.mxu0 0
    %2532 = vmatprep.subr.bf16.mxu0 0
    %2533 = vmatpush1.bf16.msra.mxu0 0
    %2534 = vmatprep.subr.bf16.mxu0 0
    %2535 = vmatpush1.bf16.msra.mxu0 0
    %2536 = vmatprep.subr.bf16.mxu0 0
    %2537 = vmatpush1.bf16.msra.mxu0 0
    %2538 = vmatprep.subr.bf16.mxu0 0
    %2539 = vmatpush1.bf16.msra.mxu0 0
    %2540 = vmatprep.subr.bf16.mxu0 0
    %2541 = vmatpush1.bf16.msra.mxu0 0
    %2542 = vmatprep.mubr.bf16.mxu0 0
    %2543 = vmatmul.mubr.bf16.gmra.mrb[0].mxu0 %v2505
    %v2544 = vpop.f32.mrb[0].mxu0
    %v2545 = vadd.f32 0.0, %v2544
    %v2546 = vpop.f32.mrb[0].mxu0
    %v2547 = vpop.f32.mrb[0].mxu0
    %v2548 = vpop.f32.mrb[0].mxu0
    %2549 = vdwg.mxu0
    %v2551 = vsel %vm1347, %v2353, 0
    %v2554 = vsel %vm2368, %v2361, 0
    %2556 = vmatprep.subr.bf16.mxu0 0
    %2557 = vmatpush1.bf16.msra.mxu0 %v2554
    %2558 = vmatprep.subr.bf16.mxu0 0
    %2559 = vmatpush1.bf16.msra.mxu0 0
    %2560 = vmatprep.subr.bf16.mxu0 0
    %2561 = vmatpush1.bf16.msra.mxu0 0
    %2562 = vmatprep.subr.bf16.mxu0 0
    %2563 = vmatpush1.bf16.msra.mxu0 0
    %2564 = vmatprep.subr.bf16.mxu0 0
    %2565 = vmatpush1.bf16.msra.mxu0 0
    %2566 = vmatprep.subr.bf16.mxu0 0
    %2567 = vmatpush1.bf16.msra.mxu0 0
    %2568 = vmatprep.subr.bf16.mxu0 0
    %2569 = vmatpush1.bf16.msra.mxu0 0
    %2570 = vmatprep.subr.bf16.mxu0 0
    %2571 = vmatpush1.bf16.msra.mxu0 0
    %2572 = vmatprep.subr.bf16.mxu0 0
    %2573 = vmatpush1.bf16.msra.mxu0 0
    %2574 = vmatprep.subr.bf16.mxu0 0
    %2575 = vmatpush1.bf16.msra.mxu0 0
    %2576 = vmatprep.subr.bf16.mxu0 0
    %2577 = vmatpush1.bf16.msra.mxu0 0
    %2578 = vmatprep.subr.bf16.mxu0 0
    %2579 = vmatpush1.bf16.msra.mxu0 0
    %2580 = vmatprep.subr.bf16.mxu0 0
    %2581 = vmatpush1.bf16.msra.mxu0 0
    %2582 = vmatprep.subr.bf16.mxu0 0
    %2583 = vmatpush1.bf16.msra.mxu0 0
    %2584 = vmatprep.subr.bf16.mxu0 0
    %2585 = vmatpush1.bf16.msra.mxu0 0
    %2586 = vmatprep.subr.bf16.mxu0 0
    %2587 = vmatpush1.bf16.msra.mxu0 0
    %2588 = vmatprep.mubr.bf16.mxu0 0
    %2589 = vmatmul.mubr.bf16.gmra.mrb[0].mxu0 %v2551
    %v2590 = vpop.f32.mrb[0].mxu0
    %v2591 = vadd.f32 0.0, %v2590
    %v2592 = vpop.f32.mrb[0].mxu0
    %v2593 = vpop.f32.mrb[0].mxu0
    %v2594 = vpop.f32.mrb[0].mxu0
    %2595 = vdwg.mxu0
    %v2597 = vsel %vm1347, %v2354, 0
    %v2600 = vsel %vm2368, %v2362, 0
    %2602 = vmatprep.subr.bf16.mxu0 0
    %2603 = vmatpush1.bf16.msra.mxu0 %v2600
    %2604 = vmatprep.subr.bf16.mxu0 0
    %2605 = vmatpush1.bf16.msra.mxu0 0
    %2606 = vmatprep.subr.bf16.mxu0 0
    %2607 = vmatpush1.bf16.msra.mxu0 0
    %2608 = vmatprep.subr.bf16.mxu0 0
    %2609 = vmatpush1.bf16.msra.mxu0 0
    %2610 = vmatprep.subr.bf16.mxu0 0
    %2611 = vmatpush1.bf16.msra.mxu0 0
    %2612 = vmatprep.subr.bf16.mxu0 0
    %2613 = vmatpush1.bf16.msra.mxu0 0
    %2614 = vmatprep.subr.bf16.mxu0 0
    %2615 = vmatpush1.bf16.msra.mxu0 0
    %2616 = vmatprep.subr.bf16.mxu0 0
    %2617 = vmatpush1.bf16.msra.mxu0 0
    %2618 = vmatprep.subr.bf16.mxu0 0
    %2619 = vmatpush1.bf16.msra.mxu0 0
    %2620 = vmatprep.subr.bf16.mxu0 0
    %2621 = vmatpush1.bf16.msra.mxu0 0
    %2622 = vmatprep.subr.bf16.mxu0 0
    %2623 = vmatpush1.bf16.msra.mxu0 0
    %2624 = vmatprep.subr.bf16.mxu0 0
    %2625 = vmatpush1.bf16.msra.mxu0 0
    %2626 = vmatprep.subr.bf16.mxu0 0
    %2627 = vmatpush1.bf16.msra.mxu0 0
    %2628 = vmatprep.subr.bf16.mxu0 0
    %2629 = vmatpush1.bf16.msra.mxu0 0
    %2630 = vmatprep.subr.bf16.mxu0 0
    %2631 = vmatpush1.bf16.msra.mxu0 0
    %2632 = vmatprep.subr.bf16.mxu0 0
    %2633 = vmatpush1.bf16.msra.mxu0 0
    %2634 = vmatprep.mubr.bf16.mxu0 0
    %2635 = vmatmul.mubr.bf16.gmra.mrb[0].mxu0 %v2597
    %v2636 = vpop.f32.mrb[0].mxu0
    %v2637 = vadd.f32 0.0, %v2636
    %v2638 = vpop.f32.mrb[0].mxu0
    %v2639 = vpop.f32.mrb[0].mxu0
    %v2640 = vpop.f32.mrb[0].mxu0
    %2641 = vdwg.mxu0
    %v2643 = vsel %vm1347, %v2355, 0
    %v2646 = vsel %vm2368, %v2363, 0
    %2648 = vmatprep.subr.bf16.mxu0 0
    %2649 = vmatpush1.bf16.msra.mxu0 %v2646
    %2650 = vmatprep.subr.bf16.mxu0 0
    %2651 = vmatpush1.bf16.msra.mxu0 0
    %2652 = vmatprep.subr.bf16.mxu0 0
    %2653 = vmatpush1.bf16.msra.mxu0 0
    %2654 = vmatprep.subr.bf16.mxu0 0
    %2655 = vmatpush1.bf16.msra.mxu0 0
    %2656 = vmatprep.subr.bf16.mxu0 0
    %2657 = vmatpush1.bf16.msra.mxu0 0
    %2658 = vmatprep.subr.bf16.mxu0 0
    %2659 = vmatpush1.bf16.msra.mxu0 0
    %2660 = vmatprep.subr.bf16.mxu0 0
    %2661 = vmatpush1.bf16.msra.mxu0 0
    %2662 = vmatprep.subr.bf16.mxu0 0
    %2663 = vmatpush1.bf16.msra.mxu0 0
    %2664 = vmatprep.subr.bf16.mxu0 0
    %2665 = vmatpush1.bf16.msra.mxu0 0
    %2666 = vmatprep.subr.bf16.mxu0 0
    %2667 = vmatpush1.bf16.msra.mxu0 0
    %2668 = vmatprep.subr.bf16.mxu0 0
    %2669 = vmatpush1.bf16.msra.mxu0 0
    %2670 = vmatprep.subr.bf16.mxu0 0
    %2671 = vmatpush1.bf16.msra.mxu0 0
    %2672 = vmatprep.subr.bf16.mxu0 0
    %2673 = vmatpush1.bf16.msra.mxu0 0
    %2674 = vmatprep.subr.bf16.mxu0 0
    %2675 = vmatpush1.bf16.msra.mxu0 0
    %2676 = vmatprep.subr.bf16.mxu0 0
    %2677 = vmatpush1.bf16.msra.mxu0 0
    %2678 = vmatprep.subr.bf16.mxu0 0
    %2679 = vmatpush1.bf16.msra.mxu0 0
    %2680 = vmatprep.mubr.bf16.mxu0 0
    %2681 = vmatmul.mubr.bf16.gmra.mrb[0].mxu0 %v2643
    %v2682 = vpop.f32.mrb[0].mxu0
    %v2683 = vadd.f32 0.0, %v2682
    %v2684 = vpop.f32.mrb[0].mxu0
    %v2685 = vpop.f32.mrb[0].mxu0
    %v2686 = vpop.f32.mrb[0].mxu0
    %2687 = vdwg.mxu0
    %v2689 = vsel %vm1347, %v2356, 0
    %v2692 = vsel %vm2368, %v2364, 0
    %2694 = vmatprep.subr.bf16.mxu0 0
    %2695 = vmatpush1.bf16.msra.mxu0 %v2692
    %2696 = vmatprep.subr.bf16.mxu0 0
    %2697 = vmatpush1.bf16.msra.mxu0 0
    %2698 = vmatprep.subr.bf16.mxu0 0
    %2699 = vmatpush1.bf16.msra.mxu0 0
    %2700 = vmatprep.subr.bf16.mxu0 0
    %2701 = vmatpush1.bf16.msra.mxu0 0
    %2702 = vmatprep.subr.bf16.mxu0 0
    %2703 = vmatpush1.bf16.msra.mxu0 0
    %2704 = vmatprep.subr.bf16.mxu0 0
    %2705 = vmatpush1.bf16.msra.mxu0 0
    %2706 = vmatprep.subr.bf16.mxu0 0
    %2707 = vmatpush1.bf16.msra.mxu0 0
    %2708 = vmatprep.subr.bf16.mxu0 0
    %2709 = vmatpush1.bf16.msra.mxu0 0
    %2710 = vmatprep.subr.bf16.mxu0 0
    %2711 = vmatpush1.bf16.msra.mxu0 0
    %2712 = vmatprep.subr.bf16.mxu0 0
    %2713 = vmatpush1.bf16.msra.mxu0 0
    %2714 = vmatprep.subr.bf16.mxu0 0
    %2715 = vmatpush1.bf16.msra.mxu0 0
    %2716 = vmatprep.subr.bf16.mxu0 0
    %2717 = vmatpush1.bf16.msra.mxu0 0
    %2718 = vmatprep.subr.bf16.mxu0 0
    %2719 = vmatpush1.bf16.msra.mxu0 0
    %2720 = vmatprep.subr.bf16.mxu0 0
    %2721 = vmatpush1.bf16.msra.mxu0 0
    %2722 = vmatprep.subr.bf16.mxu0 0
    %2723 = vmatpush1.bf16.msra.mxu0 0
    %2724 = vmatprep.subr.bf16.mxu0 0
    %2725 = vmatpush1.bf16.msra.mxu0 0
    %2726 = vmatprep.mubr.bf16.mxu0 0
    %2727 = vmatmul.mubr.bf16.gmra.mrb[0].mxu0 %v2689
    %v2728 = vpop.f32.mrb[0].mxu0
    %v2729 = vadd.f32 0.0, %v2728
    %v2730 = vpop.f32.mrb[0].mxu0
    %v2731 = vpop.f32.mrb[0].mxu0
    %v2732 = vpop.f32.mrb[0].mxu0
    %2733 = vdwg.mxu0
    %v2734 = vsel %vm152, %v2407, 0.0
    %v2735 = vsel %vm152, %v2499, 0.0
    %v2736 = vadd.f32 %v2734, %v2735
    %v2737 = vsel %vm152, %v2591, 0.0
    %v2738 = vadd.f32 %v2736, %v2737
    %v2739 = vsel %vm152, %v2683, 0.0
    %v2740 = vadd.f32 %v2738, %v2739
    %v2741 = vsel %vm152, %v2453, 0.0
    %v2742 = vsel %vm152, %v2545, 0.0
    %v2743 = vadd.f32 %v2741, %v2742
    %v2744 = vsel %vm152, %v2637, 0.0
    %v2745 = vadd.f32 %v2743, %v2744
    %v2746 = vsel %vm152, %v2729, 0.0
    %v2747 = vadd.f32 %v2745, %v2746
    %v2748 = vadd.f32 %v60, %v2740
    %v2749 = vadd.f32 %v61, %v2747
    %v2750 = vlaneseq
    %v2751 = vshrl.u32 %v2750, 7
    %v2752 = vsub.s32 4, %v2751
    %v2753 = vrot.slane %v100, %v2752
    %v2754 = vadd.f32 %v2748, %v2753
    %v2755 = vadd.f32 %v2749, %v2753
    %v2756 = vsel %vm152, %v2754, 0.0
    %2757 = vadd.xlane.f32.xlu0 %v2756
    %v2758 = vpop.xlane.xlu0 %2757
    %v2759 = vsel %vm152, %v2755, 0.0
    %2760 = vadd.xlane.f32.xlu0 %v2759
    %v2761 = vpop.xlane.xlu0 %2760
    %v2762 = vmul.f32 %v2758, %v159
    %v2763 = vmul.f32 %v2761, %v159
    %v2764 = vsub.f32 %v2754, %v2762
    %v2765 = vsub.f32 %v2755, %v2763
    %v2766 = vmul.f32 %v2764, %v2764
    %v2767 = vmul.f32 %v2765, %v2765
    %v2768 = vsel %vm152, %v2766, 0.0
    %2769 = vadd.xlane.f32.xlu0 %v2768
    %v2770 = vpop.xlane.xlu0 %2769
    %v2771 = vsel %vm152, %v2767, 0.0
    %2772 = vadd.xlane.f32.xlu0 %v2771
    %v2773 = vpop.xlane.xlu0 %2772
    %v2774 = vmul.f32 %v2770, %v159
    %v2775 = vmul.f32 %v2773, %v159
    %v2776 = vadd.f32 %v2774, 1e-05
    %v2777 = vadd.f32 %v2775, 1e-05
    %v2778 = vrsqrt.pop %v2776
    %v2779 = vrsqrt.pop %v2777
    %v2780 = vmul.f32 %v2764, %v2778
    %v2781 = vmul.f32 %v2765, %v2779
    %v2782 = vlaneseq
    %v2783 = vshrl.u32 %v2782, 7
    %v2784 = vsub.s32 5, %v2783
    %v2785 = vrot.slane %v100, %v2784
    %v2786 = vmul.f32 %v2780, %v2785
    %v2787 = vmul.f32 %v2781, %v2785
    %v2788 = vlaneseq
    %v2789 = vshrl.u32 %v2788, 7
    %v2790 = vsub.s32 6, %v2789
    %v2791 = vrot.slane %v100, %v2790
    %v2792 = vadd.f32 %v2786, %v2791
    %v2793 = vadd.f32 %v2787, %v2791
    %v2794 = vpack.c.bf16 %v2793, %v2792
    %v2795 = vld [vmem:[%s8] sm:$0xf]
    %v2796 = vld [vmem:[%s8 + $0x4] sm:$0xf]
    %v2797 = vld [vmem:[%s8 + $0x8] sm:$0xf]
    %v2798 = vld [vmem:[%s8 + $0xc] sm:$0xf]
    %v2799 = vlaneseq
    %v2800 = vshrl.u32 %v2799, 7
    %v2801 = vsub.s32 7, %v2800
    %v2802 = vrot.slane %v100, %v2801
    %v2807 = vunpack.c.l.b16 %v2795
    %v2808 = vunpack.c.l.b16 %v2796
    %v2809 = vunpack.c.l.b16 %v2797
    %v2810 = vunpack.c.l.b16 %v2798
    %v2811 = vpack.c.b16 %v2808, %v2807
    %v2812 = vpack.c.b16 %v2810, %v2809
    %v2816 = vsel %vm152, %v2794, 0
    %2818 = vmatprep.subr.bf16.mxu0 0
    %2819 = vmatpush1.bf16.msra.mxu0 %v2811
    %2820 = vmatprep.subr.bf16.mxu0 0
    %2821 = vmatpush1.bf16.msra.mxu0 %v2812
    %2822 = vmatprep.subr.bf16.mxu0 0
    %2823 = vmatpush1.bf16.msra.mxu0 0
    %2824 = vmatprep.subr.bf16.mxu0 0
    %2825 = vmatpush1.bf16.msra.mxu0 0
    %2826 = vmatprep.subr.bf16.mxu0 0
    %2827 = vmatpush1.bf16.msra.mxu0 0
    %2828 = vmatprep.subr.bf16.mxu0 0
    %2829 = vmatpush1.bf16.msra.mxu0 0
    %2830 = vmatprep.subr.bf16.mxu0 0
    %2831 = vmatpush1.bf16.msra.mxu0 0
    %2832 = vmatprep.subr.bf16.mxu0 0
    %2833 = vmatpush1.bf16.msra.mxu0 0
    %2834 = vmatprep.subr.bf16.mxu0 0
    %2835 = vmatpush1.bf16.msra.mxu0 0
    %2836 = vmatprep.subr.bf16.mxu0 0
    %2837 = vmatpush1.bf16.msra.mxu0 0
    %2838 = vmatprep.subr.bf16.mxu0 0
    %2839 = vmatpush1.bf16.msra.mxu0 0
    %2840 = vmatprep.subr.bf16.mxu0 0
    %2841 = vmatpush1.bf16.msra.mxu0 0
    %2842 = vmatprep.subr.bf16.mxu0 0
    %2843 = vmatpush1.bf16.msra.mxu0 0
    %2844 = vmatprep.subr.bf16.mxu0 0
    %2845 = vmatpush1.bf16.msra.mxu0 0
    %2846 = vmatprep.subr.bf16.mxu0 0
    %2847 = vmatpush1.bf16.msra.mxu0 0
    %2848 = vmatprep.subr.bf16.mxu0 0
    %2849 = vmatpush1.bf16.msra.mxu0 0
    %2850 = vmatprep.mubr.bf16.mxu0 0
    %2851 = vmatmul.mubr.bf16.gmra.mrb[0].mxu0 %v2816
    %v2852 = vpop.f32.mrb[0].mxu0
    %v2853 = vadd.f32 %v2802, %v2852
    %v2854 = vpop.f32.mrb[0].mxu0
    %v2855 = vpop.f32.mrb[0].mxu0
    %v2856 = vadd.f32 %v2802, %v2855
    %v2857 = vpop.f32.mrb[0].mxu0
    %2858 = vdwg.mxu0
    %v2859 = vmax.f32 %v2853, 0.0
    %v2860 = vmax.f32 %v2856, 0.0
    %v2861 = vpack.c.bf16 %v2860, %v2859
    %v2862 = vld [vmem:[%s9] sm:$0xf]
    %v2863 = vld [vmem:[%s9 + $0x4] sm:$0xf]
    %v2864 = vld [vmem:[%s9 + $0x8] sm:$0xf]
    %v2865 = vld [vmem:[%s9 + $0xc] sm:$0xf]
    %v2866 = vld [vmem:[%s9 + $0x10] sm:$0xf]
    %v2867 = vld [vmem:[%s9 + $0x14] sm:$0xf]
    %v2868 = vld [vmem:[%s9 + $0x18] sm:$0xf]
    %v2869 = vld [vmem:[%s9 + $0x1c] sm:$0xf]
    %v2870 = vld [vmem:[%s9 + $0x20] sm:$0xf]
    %v2871 = vld [vmem:[%s9 + $0x24] sm:$0xf]
    %v2872 = vld [vmem:[%s9 + $0x28] sm:$0xf]
    %v2873 = vld [vmem:[%s9 + $0x2c] sm:$0xf]
    %v2874 = vld [vmem:[%s9 + $0x30] sm:$0xf]
    %v2875 = vld [vmem:[%s9 + $0x34] sm:$0xf]
    %v2876 = vld [vmem:[%s9 + $0x38] sm:$0xf]
    %v2877 = vld [vmem:[%s9 + $0x3c] sm:$0xf]
    %v2894 = vunpack.c.l.b16 %v2862
    %v2895 = vunpack.c.l.b16 %v2863
    %v2896 = vunpack.c.l.b16 %v2864
    %v2897 = vunpack.c.l.b16 %v2865
    %v2898 = vunpack.c.l.b16 %v2866
    %v2899 = vunpack.c.l.b16 %v2867
    %v2900 = vunpack.c.l.b16 %v2868
    %v2901 = vunpack.c.l.b16 %v2869
    %v2902 = vunpack.c.l.b16 %v2870
    %v2903 = vunpack.c.l.b16 %v2871
    %v2904 = vunpack.c.l.b16 %v2872
    %v2905 = vunpack.c.l.b16 %v2873
    %v2906 = vunpack.c.l.b16 %v2874
    %v2907 = vunpack.c.l.b16 %v2875
    %v2908 = vunpack.c.l.b16 %v2876
    %v2909 = vunpack.c.l.b16 %v2877
    %v2910 = vpack.c.b16 %v2895, %v2894
    %v2911 = vpack.c.b16 %v2897, %v2896
    %v2912 = vpack.c.b16 %v2899, %v2898
    %v2913 = vpack.c.b16 %v2901, %v2900
    %v2914 = vpack.c.b16 %v2903, %v2902
    %v2915 = vpack.c.b16 %v2905, %v2904
    %v2916 = vpack.c.b16 %v2907, %v2906
    %v2917 = vpack.c.b16 %v2909, %v2908
    %2926 = vmatprep.subr.bf16.mxu0 0
    %2927 = vmatpush1.bf16.msra.mxu0 %v2910
    %2928 = vmatprep.subr.bf16.mxu0 0
    %2929 = vmatpush1.bf16.msra.mxu0 %v2911
    %2930 = vmatprep.subr.bf16.mxu0 0
    %2931 = vmatpush1.bf16.msra.mxu0 %v2912
    %2932 = vmatprep.subr.bf16.mxu0 0
    %2933 = vmatpush1.bf16.msra.mxu0 %v2913
    %2934 = vmatprep.subr.bf16.mxu0 0
    %2935 = vmatpush1.bf16.msra.mxu0 %v2914
    %2936 = vmatprep.subr.bf16.mxu0 0
    %2937 = vmatpush1.bf16.msra.mxu0 %v2915
    %2938 = vmatprep.subr.bf16.mxu0 0
    %2939 = vmatpush1.bf16.msra.mxu0 %v2916
    %2940 = vmatprep.subr.bf16.mxu0 0
    %2941 = vmatpush1.bf16.msra.mxu0 %v2917
    %2942 = vmatprep.subr.bf16.mxu0 0
    %2943 = vmatpush1.bf16.msra.mxu0 0
    %2944 = vmatprep.subr.bf16.mxu0 0
    %2945 = vmatpush1.bf16.msra.mxu0 0
    %2946 = vmatprep.subr.bf16.mxu0 0
    %2947 = vmatpush1.bf16.msra.mxu0 0
    %2948 = vmatprep.subr.bf16.mxu0 0
    %2949 = vmatpush1.bf16.msra.mxu0 0
    %2950 = vmatprep.subr.bf16.mxu0 0
    %2951 = vmatpush1.bf16.msra.mxu0 0
    %2952 = vmatprep.subr.bf16.mxu0 0
    %2953 = vmatpush1.bf16.msra.mxu0 0
    %2954 = vmatprep.subr.bf16.mxu0 0
    %2955 = vmatpush1.bf16.msra.mxu0 0
    %2956 = vmatprep.subr.bf16.mxu0 0
    %2957 = vmatpush1.bf16.msra.mxu0 0
    %2958 = vmatprep.mubr.bf16.mxu0 0
    %2959 = vmatmul.mubr.bf16.gmra.mrb[0].mxu0 %v2861
    %v2960 = vpop.f32.mrb[0].mxu0
    %v2961 = vadd.f32 0.0, %v2960
    %v2962 = vpop.f32.mrb[0].mxu0
    %v2963 = vpop.f32.mrb[0].mxu0
    %v2964 = vadd.f32 0.0, %v2963
    %v2965 = vpop.f32.mrb[0].mxu0
    %2966 = vdwg.mxu0
    %v2967 = vadd.f32 %v2754, %v2961
    %v2968 = vadd.f32 %v2755, %v2964
    %v2969 = vlaneseq
    %v2970 = vshrl.u32 %v2969, 7
    %v2971 = vsub.s32 0, %v2970
    %v2972 = vrot.slane %v101, %v2971
    %v2973 = vadd.f32 %v2967, %v2972
    %v2974 = vadd.f32 %v2968, %v2972
    %v2975 = vsel %vm152, %v2973, 0.0
    %2976 = vadd.xlane.f32.xlu0 %v2975
    %v2977 = vpop.xlane.xlu0 %2976
    %v2978 = vsel %vm152, %v2974, 0.0
    %2979 = vadd.xlane.f32.xlu0 %v2978
    %v2980 = vpop.xlane.xlu0 %2979
    %v2981 = vmul.f32 %v2977, %v159
    %v2982 = vmul.f32 %v2980, %v159
    %v2983 = vsub.f32 %v2973, %v2981
    %v2984 = vsub.f32 %v2974, %v2982
    %v2985 = vmul.f32 %v2983, %v2983
    %v2986 = vmul.f32 %v2984, %v2984
    %v2987 = vsel %vm152, %v2985, 0.0
    %2988 = vadd.xlane.f32.xlu0 %v2987
    %v2989 = vpop.xlane.xlu0 %2988
    %v2990 = vsel %vm152, %v2986, 0.0
    %2991 = vadd.xlane.f32.xlu0 %v2990
    %v2992 = vpop.xlane.xlu0 %2991
    %v2993 = vmul.f32 %v2989, %v159
    %v2994 = vmul.f32 %v2992, %v159
    %v2995 = vadd.f32 %v2993, 1e-05
    %v2996 = vadd.f32 %v2994, 1e-05
    %v2997 = vrsqrt.pop %v2995
    %v2998 = vrsqrt.pop %v2996
    %v2999 = vmul.f32 %v2983, %v2997
    %v3000 = vmul.f32 %v2984, %v2998
    %v3001 = vlaneseq
    %v3002 = vshrl.u32 %v3001, 7
    %v3003 = vsub.s32 0, %v3002
    %v3004 = vrot.slane %v102, %v3003
    %v3005 = vmul.f32 %v2999, %v3004
    %v3006 = vmul.f32 %v3000, %v3004
    %v3007 = vlaneseq
    %v3008 = vshrl.u32 %v3007, 7
    %v3009 = vsub.s32 1, %v3008
    %v3010 = vrot.slane %v102, %v3009
    %v3011 = vadd.f32 %v3005, %v3010
    %v3012 = vadd.f32 %v3006, %v3010
    %v3013 = vpack.c.bf16 %v3012, %v3011
    %v3014 = vld [vmem:[%s10] sm:$0xf]
    %v3015 = vld [vmem:[%s10 + $0x4] sm:$0xf]
    %v3016 = vld [vmem:[%s10 + $0x8] sm:$0xf]
    %v3017 = vld [vmem:[%s10 + $0xc] sm:$0xf]
    %v3018 = vlaneseq
    %v3019 = vshrl.u32 %v3018, 7
    %v3020 = vsub.s32 2, %v3019
    %v3021 = vrot.slane %v102, %v3020
    %v3026 = vunpack.c.l.b16 %v3014
    %v3027 = vunpack.c.l.b16 %v3015
    %v3028 = vunpack.c.l.b16 %v3016
    %v3029 = vunpack.c.l.b16 %v3017
    %v3030 = vpack.c.b16 %v3027, %v3026
    %v3031 = vpack.c.b16 %v3029, %v3028
    %v3035 = vsel %vm152, %v3013, 0
    %3037 = vmatprep.subr.bf16.mxu0 0
    %3038 = vmatpush1.bf16.msra.mxu0 %v3030
    %3039 = vmatprep.subr.bf16.mxu0 0
    %3040 = vmatpush1.bf16.msra.mxu0 %v3031
    %3041 = vmatprep.subr.bf16.mxu0 0
    %3042 = vmatpush1.bf16.msra.mxu0 0
    %3043 = vmatprep.subr.bf16.mxu0 0
    %3044 = vmatpush1.bf16.msra.mxu0 0
    %3045 = vmatprep.subr.bf16.mxu0 0
    %3046 = vmatpush1.bf16.msra.mxu0 0
    %3047 = vmatprep.subr.bf16.mxu0 0
    %3048 = vmatpush1.bf16.msra.mxu0 0
    %3049 = vmatprep.subr.bf16.mxu0 0
    %3050 = vmatpush1.bf16.msra.mxu0 0
    %3051 = vmatprep.subr.bf16.mxu0 0
    %3052 = vmatpush1.bf16.msra.mxu0 0
    %3053 = vmatprep.subr.bf16.mxu0 0
    %3054 = vmatpush1.bf16.msra.mxu0 0
    %3055 = vmatprep.subr.bf16.mxu0 0
    %3056 = vmatpush1.bf16.msra.mxu0 0
    %3057 = vmatprep.subr.bf16.mxu0 0
    %3058 = vmatpush1.bf16.msra.mxu0 0
    %3059 = vmatprep.subr.bf16.mxu0 0
    %3060 = vmatpush1.bf16.msra.mxu0 0
    %3061 = vmatprep.subr.bf16.mxu0 0
    %3062 = vmatpush1.bf16.msra.mxu0 0
    %3063 = vmatprep.subr.bf16.mxu0 0
    %3064 = vmatpush1.bf16.msra.mxu0 0
    %3065 = vmatprep.subr.bf16.mxu0 0
    %3066 = vmatpush1.bf16.msra.mxu0 0
    %3067 = vmatprep.subr.bf16.mxu0 0
    %3068 = vmatpush1.bf16.msra.mxu0 0
    %3069 = vmatprep.mubr.bf16.mxu0 0
    %3070 = vmatmul.mubr.bf16.gmra.mrb[0].mxu0 %v3035
    %v3071 = vpop.f32.mrb[0].mxu0
    %v3072 = vadd.f32 %v3021, %v3071
    %v3073 = vpop.f32.mrb[0].mxu0
    %v3074 = vpop.f32.mrb[0].mxu0
    %v3075 = vadd.f32 %v3021, %v3074
    %v3076 = vpop.f32.mrb[0].mxu0
    %3077 = vdwg.mxu0
    %v3078 = vld [vmem:[%s11] sm:$0xf]
    %v3079 = vld [vmem:[%s11 + $0x4] sm:$0xf]
    %v3080 = vld [vmem:[%s11 + $0x8] sm:$0xf]
    %v3081 = vld [vmem:[%s11 + $0xc] sm:$0xf]
    %v3082 = vlaneseq
    %v3083 = vshrl.u32 %v3082, 7
    %v3084 = vsub.s32 3, %v3083
    %v3085 = vrot.slane %v102, %v3084
    %v3090 = vunpack.c.l.b16 %v3078
    %v3091 = vunpack.c.l.b16 %v3079
    %v3092 = vunpack.c.l.b16 %v3080
    %v3093 = vunpack.c.l.b16 %v3081
    %v3094 = vpack.c.b16 %v3091, %v3090
    %v3095 = vpack.c.b16 %v3093, %v3092
    %3098 = vmatprep.subr.bf16.mxu0 0
    %3099 = vmatpush1.bf16.msra.mxu0 %v3094
    %3100 = vmatprep.subr.bf16.mxu0 0
    %3101 = vmatpush1.bf16.msra.mxu0 %v3095
    %3102 = vmatprep.subr.bf16.mxu0 0
    %3103 = vmatpush1.bf16.msra.mxu0 0
    %3104 = vmatprep.subr.bf16.mxu0 0
    %3105 = vmatpush1.bf16.msra.mxu0 0
    %3106 = vmatprep.subr.bf16.mxu0 0
    %3107 = vmatpush1.bf16.msra.mxu0 0
    %3108 = vmatprep.subr.bf16.mxu0 0
    %3109 = vmatpush1.bf16.msra.mxu0 0
    %3110 = vmatprep.subr.bf16.mxu0 0
    %3111 = vmatpush1.bf16.msra.mxu0 0
    %3112 = vmatprep.subr.bf16.mxu0 0
    %3113 = vmatpush1.bf16.msra.mxu0 0
    %3114 = vmatprep.subr.bf16.mxu0 0
    %3115 = vmatpush1.bf16.msra.mxu0 0
    %3116 = vmatprep.subr.bf16.mxu0 0
    %3117 = vmatpush1.bf16.msra.mxu0 0
    %3118 = vmatprep.subr.bf16.mxu0 0
    %3119 = vmatpush1.bf16.msra.mxu0 0
    %3120 = vmatprep.subr.bf16.mxu0 0
    %3121 = vmatpush1.bf16.msra.mxu0 0
    %3122 = vmatprep.subr.bf16.mxu0 0
    %3123 = vmatpush1.bf16.msra.mxu0 0
    %3124 = vmatprep.subr.bf16.mxu0 0
    %3125 = vmatpush1.bf16.msra.mxu0 0
    %3126 = vmatprep.subr.bf16.mxu0 0
    %3127 = vmatpush1.bf16.msra.mxu0 0
    %3128 = vmatprep.subr.bf16.mxu0 0
    %3129 = vmatpush1.bf16.msra.mxu0 0
    %3130 = vmatprep.mubr.bf16.mxu0 0
    %3131 = vmatmul.mubr.bf16.gmra.mrb[0].mxu0 %v3035
    %v3132 = vpop.f32.mrb[0].mxu0
    %v3133 = vadd.f32 %v3085, %v3132
    %v3134 = vpop.f32.mrb[0].mxu0
    %v3135 = vpop.f32.mrb[0].mxu0
    %v3136 = vadd.f32 %v3085, %v3135
    %v3137 = vpop.f32.mrb[0].mxu0
    %3138 = vdwg.mxu0
    %v3140 = vcombine.high %v3072, %v3072
    %v3142 = vunpack.c.l.s4 1966171168
    %v3143 = vunpack.c.0.s8 %v3142
    %v3144 = vlaneseq
    %v3145 = vshrl.u32 %v3144, 7
    %v3146 = vsub.s32 %v3143, %v3145
    %v3147 = vrot.slane %v3072, %v3146
    %v3149 = vunpack.c.l.s4 1966171168
    %v3150 = vunpack.c.0.s8 %v3149
    %v3151 = vlaneseq
    %v3152 = vshrl.u32 %v3151, 7
    %v3153 = vsub.s32 %v3150, %v3152
    %v3154 = vrot.slane %v3140, %v3153
    %v3155 = vcombine.high %v3147, %v3147
    %v3156 = vcombine.high %v3154, %v3154
    %v3158 = vunpack.c.l.s4 1966171168
    %v3159 = vunpack.c.0.s8 %v3158
    %v3160 = vlaneseq
    %v3161 = vshrl.u32 %v3160, 7
    %v3162 = vsub.s32 %v3159, %v3161
    %v3163 = vrot.slane %v3147, %v3162
    %v3165 = vunpack.c.l.s4 1966171168
    %v3166 = vunpack.c.0.s8 %v3165
    %v3167 = vlaneseq
    %v3168 = vshrl.u32 %v3167, 7
    %v3169 = vsub.s32 %v3166, %v3168
    %v3170 = vrot.slane %v3154, %v3169
    %v3172 = vunpack.c.l.s4 1966171168
    %v3173 = vunpack.c.0.s8 %v3172
    %v3174 = vlaneseq
    %v3175 = vshrl.u32 %v3174, 7
    %v3176 = vsub.s32 %v3173, %v3175
    %v3177 = vrot.slane %v3155, %v3176
    %v3179 = vunpack.c.l.s4 1966171168
    %v3180 = vunpack.c.0.s8 %v3179
    %v3181 = vlaneseq
    %v3182 = vshrl.u32 %v3181, 7
    %v3183 = vsub.s32 %v3180, %v3182
    %v3184 = vrot.slane %v3156, %v3183
    %v3185 = vcombine.high %v3163, %v3163
    %v3186 = vcombine.high %v3170, %v3170
    %v3187 = vcombine.high %v3177, %v3177
    %v3188 = vcombine.high %v3184, %v3184
    %v3189 = vlaneseq
    %v3190 = vshrl.u32 %v3189, 7
    %v3191 = vsub.s32 0, %v3190
    %v3192 = vrot.slane %v3163, %v3191
    %v3193 = vlaneseq
    %v3194 = vshrl.u32 %v3193, 7
    %v3195 = vsub.s32 0, %v3194
    %v3196 = vrot.slane %v3177, %v3195
    %v3197 = vlaneseq
    %v3198 = vshrl.u32 %v3197, 7
    %v3199 = vsub.s32 0, %v3198
    %v3200 = vrot.slane %v3185, %v3199
    %v3201 = vlaneseq
    %v3202 = vshrl.u32 %v3201, 7
    %v3203 = vsub.s32 0, %v3202
    %v3204 = vrot.slane %v3187, %v3203
    %v3205 = vlaneseq
    %v3206 = vshrl.u32 %v3205, 7
    %v3207 = vsub.s32 0, %v3206
    %v3208 = vrot.slane %v3170, %v3207
    %v3209 = vlaneseq
    %v3210 = vshrl.u32 %v3209, 7
    %v3211 = vsub.s32 0, %v3210
    %v3212 = vrot.slane %v3184, %v3211
    %v3213 = vlaneseq
    %v3214 = vshrl.u32 %v3213, 7
    %v3215 = vsub.s32 0, %v3214
    %v3216 = vrot.slane %v3186, %v3215
    %v3217 = vlaneseq
    %v3218 = vshrl.u32 %v3217, 7
    %v3219 = vsub.s32 0, %v3218
    %v3220 = vrot.slane %v3188, %v3219
    %v3229 = vmul.f32 %v3192, %v3133
    %v3230 = vmul.f32 %v3196, %v3133
    %v3231 = vmul.f32 %v3200, %v3133
    %v3232 = vmul.f32 %v3204, %v3133
    %v3233 = vmul.f32 %v3208, %v3133
    %v3234 = vmul.f32 %v3212, %v3133
    %v3235 = vmul.f32 %v3216, %v3133
    %v3236 = vmul.f32 %v3220, %v3133
    %v3238 = vcombine.high %v3075, %v3075
    %v3240 = vunpack.c.l.s4 1966171168
    %v3241 = vunpack.c.0.s8 %v3240
    %v3242 = vlaneseq
    %v3243 = vshrl.u32 %v3242, 7
    %v3244 = vsub.s32 %v3241, %v3243
    %v3245 = vrot.slane %v3075, %v3244
    %v3247 = vunpack.c.l.s4 1966171168
    %v3248 = vunpack.c.0.s8 %v3247
    %v3249 = vlaneseq
    %v3250 = vshrl.u32 %v3249, 7
    %v3251 = vsub.s32 %v3248, %v3250
    %v3252 = vrot.slane %v3238, %v3251
    %v3253 = vcombine.high %v3245, %v3245
    %v3254 = vcombine.high %v3252, %v3252
    %v3256 = vunpack.c.l.s4 1966171168
    %v3257 = vunpack.c.0.s8 %v3256
    %v3258 = vlaneseq
    %v3259 = vshrl.u32 %v3258, 7
    %v3260 = vsub.s32 %v3257, %v3259
    %v3261 = vrot.slane %v3245, %v3260
    %v3263 = vunpack.c.l.s4 1966171168
    %v3264 = vunpack.c.0.s8 %v3263
    %v3265 = vlaneseq
    %v3266 = vshrl.u32 %v3265, 7
    %v3267 = vsub.s32 %v3264, %v3266
    %v3268 = vrot.slane %v3252, %v3267
    %v3270 = vunpack.c.l.s4 1966171168
    %v3271 = vunpack.c.0.s8 %v3270
    %v3272 = vlaneseq
    %v3273 = vshrl.u32 %v3272, 7
    %v3274 = vsub.s32 %v3271, %v3273
    %v3275 = vrot.slane %v3253, %v3274
    %v3277 = vunpack.c.l.s4 1966171168
    %v3278 = vunpack.c.0.s8 %v3277
    %v3279 = vlaneseq
    %v3280 = vshrl.u32 %v3279, 7
    %v3281 = vsub.s32 %v3278, %v3280
    %v3282 = vrot.slane %v3254, %v3281
    %v3283 = vcombine.high %v3261, %v3261
    %v3284 = vcombine.high %v3268, %v3268
    %v3285 = vcombine.high %v3275, %v3275
    %v3286 = vcombine.high %v3282, %v3282
    %v3287 = vlaneseq
    %v3288 = vshrl.u32 %v3287, 7
    %v3289 = vsub.s32 0, %v3288
    %v3290 = vrot.slane %v3261, %v3289
    %v3291 = vlaneseq
    %v3292 = vshrl.u32 %v3291, 7
    %v3293 = vsub.s32 0, %v3292
    %v3294 = vrot.slane %v3275, %v3293
    %v3295 = vlaneseq
    %v3296 = vshrl.u32 %v3295, 7
    %v3297 = vsub.s32 0, %v3296
    %v3298 = vrot.slane %v3283, %v3297
    %v3299 = vlaneseq
    %v3300 = vshrl.u32 %v3299, 7
    %v3301 = vsub.s32 0, %v3300
    %v3302 = vrot.slane %v3285, %v3301
    %v3303 = vlaneseq
    %v3304 = vshrl.u32 %v3303, 7
    %v3305 = vsub.s32 0, %v3304
    %v3306 = vrot.slane %v3268, %v3305
    %v3307 = vlaneseq
    %v3308 = vshrl.u32 %v3307, 7
    %v3309 = vsub.s32 0, %v3308
    %v3310 = vrot.slane %v3282, %v3309
    %v3311 = vlaneseq
    %v3312 = vshrl.u32 %v3311, 7
    %v3313 = vsub.s32 0, %v3312
    %v3314 = vrot.slane %v3284, %v3313
    %v3315 = vlaneseq
    %v3316 = vshrl.u32 %v3315, 7
    %v3317 = vsub.s32 0, %v3316
    %v3318 = vrot.slane %v3286, %v3317
    %v3327 = vmul.f32 %v3290, %v3136
    %v3328 = vmul.f32 %v3294, %v3136
    %v3329 = vmul.f32 %v3298, %v3136
    %v3330 = vmul.f32 %v3302, %v3136
    %v3331 = vmul.f32 %v3306, %v3136
    %v3332 = vmul.f32 %v3310, %v3136
    %v3333 = vmul.f32 %v3314, %v3136
    %v3334 = vmul.f32 %v3318, %v3136
    %v3335 = vpack.c.bf16 %v3230, %v3229
    %v3336 = vpack.c.bf16 %v3232, %v3231
    %v3337 = vpack.c.bf16 %v3234, %v3233
    %v3338 = vpack.c.bf16 %v3236, %v3235
    %v3339 = vpack.c.bf16 %v3328, %v3327
    %v3340 = vpack.c.bf16 %v3330, %v3329
    %v3341 = vpack.c.bf16 %v3332, %v3331
    %v3342 = vpack.c.bf16 %v3334, %v3333
    %v3343 = vld [vmem:[%s12] sm:$0xf]
    %v3344 = vld [vmem:[%s12 + $0x4] sm:$0xf]
    %v3345 = vlaneseq
    %v3346 = vshrl.u32 %v3345, 7
    %v3347 = vsub.s32 4, %v3346
    %v3348 = vrot.slane %v102, %v3347
    %v3351 = vunpack.c.l.b16 %v3343
    %v3352 = vunpack.c.l.b16 %v3344
    %v3353 = vpack.c.b16 %v3352, %v3351
    %v3356 = vsel %vm193, %v3335, 0
    %v3359 = vsel %vm193, %v3336, 0
    %v3362 = vsel %vm193, %v3337, 0
    %v3365 = vsel %vm193, %v3338, 0
    %v3368 = vsel %vm193, %v3339, 0
    %v3371 = vsel %vm193, %v3340, 0
    %v3374 = vsel %vm193, %v3341, 0
    %v3377 = vsel %vm193, %v3342, 0
    %3379 = vmatprep.subr.bf16.mxu0 0
    %3380 = vmatpush1.bf16.msra.mxu0 %v3353
    %3381 = vmatprep.subr.bf16.mxu0 0
    %3382 = vmatpush1.bf16.msra.mxu0 0
    %3383 = vmatprep.subr.bf16.mxu0 0
    %3384 = vmatpush1.bf16.msra.mxu0 0
    %3385 = vmatprep.subr.bf16.mxu0 0
    %3386 = vmatpush1.bf16.msra.mxu0 0
    %3387 = vmatprep.subr.bf16.mxu0 0
    %3388 = vmatpush1.bf16.msra.mxu0 0
    %3389 = vmatprep.subr.bf16.mxu0 0
    %3390 = vmatpush1.bf16.msra.mxu0 0
    %3391 = vmatprep.subr.bf16.mxu0 0
    %3392 = vmatpush1.bf16.msra.mxu0 0
    %3393 = vmatprep.subr.bf16.mxu0 0
    %3394 = vmatpush1.bf16.msra.mxu0 0
    %3395 = vmatprep.subr.bf16.mxu0 0
    %3396 = vmatpush1.bf16.msra.mxu0 0
    %3397 = vmatprep.subr.bf16.mxu0 0
    %3398 = vmatpush1.bf16.msra.mxu0 0
    %3399 = vmatprep.subr.bf16.mxu0 0
    %3400 = vmatpush1.bf16.msra.mxu0 0
    %3401 = vmatprep.subr.bf16.mxu0 0
    %3402 = vmatpush1.bf16.msra.mxu0 0
    %3403 = vmatprep.subr.bf16.mxu0 0
    %3404 = vmatpush1.bf16.msra.mxu0 0
    %3405 = vmatprep.subr.bf16.mxu0 0
    %3406 = vmatpush1.bf16.msra.mxu0 0
    %3407 = vmatprep.subr.bf16.mxu0 0
    %3408 = vmatpush1.bf16.msra.mxu0 0
    %3409 = vmatprep.subr.bf16.mxu0 0
    %3410 = vmatpush1.bf16.msra.mxu0 0
    %3411 = vmatprep.mubr.bf16.mxu0 0
    %3412 = vmatmul.mubr.bf16.gmra.mrb[0].mxu0 %v3356
    %v3413 = vpop.f32.mrb[0].mxu0
    %v3414 = vadd.f32 %v3348, %v3413
    %v3415 = vpop.f32.mrb[0].mxu0
    %v3416 = vpop.f32.mrb[0].mxu0
    %v3417 = vadd.f32 %v3348, %v3416
    %v3418 = vpop.f32.mrb[0].mxu0
    %3419 = vmatprep.mubr.bf16.mxu0 0
    %3420 = vmatmul.mubr.bf16.gmra.mrb[0].mxu0 %v3359
    %v3421 = vpop.f32.mrb[0].mxu0
    %v3422 = vadd.f32 %v3348, %v3421
    %v3423 = vpop.f32.mrb[0].mxu0
    %v3424 = vpop.f32.mrb[0].mxu0
    %v3425 = vadd.f32 %v3348, %v3424
    %v3426 = vpop.f32.mrb[0].mxu0
    %3427 = vmatprep.mubr.bf16.mxu0 0
    %3428 = vmatmul.mubr.bf16.gmra.mrb[0].mxu0 %v3362
    %v3429 = vpop.f32.mrb[0].mxu0
    %v3430 = vadd.f32 %v3348, %v3429
    %v3431 = vpop.f32.mrb[0].mxu0
    %v3432 = vpop.f32.mrb[0].mxu0
    %v3433 = vadd.f32 %v3348, %v3432
    %v3434 = vpop.f32.mrb[0].mxu0
    %3435 = vmatprep.mubr.bf16.mxu0 0
    %3436 = vmatmul.mubr.bf16.gmra.mrb[0].mxu0 %v3365
    %v3437 = vpop.f32.mrb[0].mxu0
    %v3438 = vadd.f32 %v3348, %v3437
    %v3439 = vpop.f32.mrb[0].mxu0
    %v3440 = vpop.f32.mrb[0].mxu0
    %v3441 = vadd.f32 %v3348, %v3440
    %v3442 = vpop.f32.mrb[0].mxu0
    %3443 = vmatprep.mubr.bf16.mxu0 0
    %3444 = vmatmul.mubr.bf16.gmra.mrb[0].mxu0 %v3368
    %v3445 = vpop.f32.mrb[0].mxu0
    %v3446 = vadd.f32 %v3348, %v3445
    %v3447 = vpop.f32.mrb[0].mxu0
    %v3448 = vpop.f32.mrb[0].mxu0
    %v3449 = vadd.f32 %v3348, %v3448
    %v3450 = vpop.f32.mrb[0].mxu0
    %3451 = vmatprep.mubr.bf16.mxu0 0
    %3452 = vmatmul.mubr.bf16.gmra.mrb[0].mxu0 %v3371
    %v3453 = vpop.f32.mrb[0].mxu0
    %v3454 = vadd.f32 %v3348, %v3453
    %v3455 = vpop.f32.mrb[0].mxu0
    %v3456 = vpop.f32.mrb[0].mxu0
    %v3457 = vadd.f32 %v3348, %v3456
    %v3458 = vpop.f32.mrb[0].mxu0
    %3459 = vmatprep.mubr.bf16.mxu0 0
    %3460 = vmatmul.mubr.bf16.gmra.mrb[0].mxu0 %v3374
    %v3461 = vpop.f32.mrb[0].mxu0
    %v3462 = vadd.f32 %v3348, %v3461
    %v3463 = vpop.f32.mrb[0].mxu0
    %v3464 = vpop.f32.mrb[0].mxu0
    %v3465 = vadd.f32 %v3348, %v3464
    %v3466 = vpop.f32.mrb[0].mxu0
    %3467 = vmatprep.mubr.bf16.mxu0 0
    %3468 = vmatmul.mubr.bf16.gmra.mrb[0].mxu0 %v3377
    %v3469 = vpop.f32.mrb[0].mxu0
    %v3470 = vadd.f32 %v3348, %v3469
    %v3471 = vpop.f32.mrb[0].mxu0
    %v3472 = vpop.f32.mrb[0].mxu0
    %v3473 = vadd.f32 %v3348, %v3472
    %v3474 = vpop.f32.mrb[0].mxu0
    %3475 = vdwg.mxu0
    %v3476 = vmul.f32 %v3414, %v78
    %v3477 = vmul.f32 %v3417, %v79
    %v3478 = vmul.f32 %v3422, %v80
    %v3479 = vmul.f32 %v3425, %v81
    %v3480 = vmul.f32 %v3430, %v82
    %v3481 = vmul.f32 %v3433, %v83
    %v3482 = vmul.f32 %v3438, %v84
    %v3483 = vmul.f32 %v3441, %v85
    %v3484 = vmul.f32 %v3446, %v86
    %v3485 = vmul.f32 %v3449, %v87
    %v3486 = vmul.f32 %v3454, %v88
    %v3487 = vmul.f32 %v3457, %v89
    %v3488 = vmul.f32 %v3462, %v90
    %v3489 = vmul.f32 %v3465, %v91
    %v3490 = vmul.f32 %v3470, %v92
    %v3491 = vmul.f32 %v3473, %v93
    %v3492 = vadd.f32 %v62, %v3476
    %v3493 = vadd.f32 %v63, %v3477
    %v3494 = vadd.f32 %v64, %v3478
    %v3495 = vadd.f32 %v65, %v3479
    %v3496 = vadd.f32 %v66, %v3480
    %v3497 = vadd.f32 %v67, %v3481
    %v3498 = vadd.f32 %v68, %v3482
    %v3499 = vadd.f32 %v69, %v3483
    %v3500 = vadd.f32 %v70, %v3484
    %v3501 = vadd.f32 %v71, %v3485
    %v3502 = vadd.f32 %v72, %v3486
    %v3503 = vadd.f32 %v73, %v3487
    %v3504 = vadd.f32 %v74, %v3488
    %v3505 = vadd.f32 %v75, %v3489
    %v3506 = vadd.f32 %v76, %v3490
    %v3507 = vadd.f32 %v77, %v3491
    %v3508 = vsel %vm193, %v3492, 0.0
    %3509 = vadd.xlane.f32.xlu0 %v3508
    %v3510 = vpop.xlane.xlu0 %3509
    %v3511 = vsel %vm193, %v3493, 0.0
    %3512 = vadd.xlane.f32.xlu0 %v3511
    %v3513 = vpop.xlane.xlu0 %3512
    %v3514 = vsel %vm193, %v3494, 0.0
    %3515 = vadd.xlane.f32.xlu0 %v3514
    %v3516 = vpop.xlane.xlu0 %3515
    %v3517 = vsel %vm193, %v3495, 0.0
    %3518 = vadd.xlane.f32.xlu0 %v3517
    %v3519 = vpop.xlane.xlu0 %3518
    %v3520 = vsel %vm193, %v3496, 0.0
    %3521 = vadd.xlane.f32.xlu0 %v3520
    %v3522 = vpop.xlane.xlu0 %3521
    %v3523 = vsel %vm193, %v3497, 0.0
    %3524 = vadd.xlane.f32.xlu0 %v3523
    %v3525 = vpop.xlane.xlu0 %3524
    %v3526 = vsel %vm193, %v3498, 0.0
    %3527 = vadd.xlane.f32.xlu0 %v3526
    %v3528 = vpop.xlane.xlu0 %3527
    %v3529 = vsel %vm193, %v3499, 0.0
    %3530 = vadd.xlane.f32.xlu0 %v3529
    %v3531 = vpop.xlane.xlu0 %3530
    %v3532 = vsel %vm193, %v3500, 0.0
    %3533 = vadd.xlane.f32.xlu0 %v3532
    %v3534 = vpop.xlane.xlu0 %3533
    %v3535 = vsel %vm193, %v3501, 0.0
    %3536 = vadd.xlane.f32.xlu0 %v3535
    %v3537 = vpop.xlane.xlu0 %3536
    %v3538 = vsel %vm193, %v3502, 0.0
    %3539 = vadd.xlane.f32.xlu0 %v3538
    %v3540 = vpop.xlane.xlu0 %3539
    %v3541 = vsel %vm193, %v3503, 0.0
    %3542 = vadd.xlane.f32.xlu0 %v3541
    %v3543 = vpop.xlane.xlu0 %3542
    %v3544 = vsel %vm193, %v3504, 0.0
    %3545 = vadd.xlane.f32.xlu0 %v3544
    %v3546 = vpop.xlane.xlu0 %3545
    %v3547 = vsel %vm193, %v3505, 0.0
    %3548 = vadd.xlane.f32.xlu0 %v3547
    %v3549 = vpop.xlane.xlu0 %3548
    %v3550 = vsel %vm193, %v3506, 0.0
    %3551 = vadd.xlane.f32.xlu0 %v3550
    %v3552 = vpop.xlane.xlu0 %3551
    %v3553 = vsel %vm193, %v3507, 0.0
    %3554 = vadd.xlane.f32.xlu0 %v3553
    %v3555 = vpop.xlane.xlu0 %3554
    %v3556 = vmul.f32 %v3510, %v242
    %v3557 = vmul.f32 %v3513, %v242
    %v3558 = vmul.f32 %v3516, %v242
    %v3559 = vmul.f32 %v3519, %v242
    %v3560 = vmul.f32 %v3522, %v242
    %v3561 = vmul.f32 %v3525, %v242
    %v3562 = vmul.f32 %v3528, %v242
    %v3563 = vmul.f32 %v3531, %v242
    %v3564 = vmul.f32 %v3534, %v242
    %v3565 = vmul.f32 %v3537, %v242
    %v3566 = vmul.f32 %v3540, %v242
    %v3567 = vmul.f32 %v3543, %v242
    %v3568 = vmul.f32 %v3546, %v242
    %v3569 = vmul.f32 %v3549, %v242
    %v3570 = vmul.f32 %v3552, %v242
    %v3571 = vmul.f32 %v3555, %v242
    %v3572 = vsub.f32 %v3492, %v3556
    %v3573 = vsub.f32 %v3493, %v3557
    %v3574 = vsub.f32 %v3494, %v3558
    %v3575 = vsub.f32 %v3495, %v3559
    %v3576 = vsub.f32 %v3496, %v3560
    %v3577 = vsub.f32 %v3497, %v3561
    %v3578 = vsub.f32 %v3498, %v3562
    %v3579 = vsub.f32 %v3499, %v3563
    %v3580 = vsub.f32 %v3500, %v3564
    %v3581 = vsub.f32 %v3501, %v3565
    %v3582 = vsub.f32 %v3502, %v3566
    %v3583 = vsub.f32 %v3503, %v3567
    %v3584 = vsub.f32 %v3504, %v3568
    %v3585 = vsub.f32 %v3505, %v3569
    %v3586 = vsub.f32 %v3506, %v3570
    %v3587 = vsub.f32 %v3507, %v3571
    %v3588 = vmul.f32 %v3572, %v3572
    %v3589 = vmul.f32 %v3573, %v3573
    %v3590 = vmul.f32 %v3574, %v3574
    %v3591 = vmul.f32 %v3575, %v3575
    %v3592 = vmul.f32 %v3576, %v3576
    %v3593 = vmul.f32 %v3577, %v3577
    %v3594 = vmul.f32 %v3578, %v3578
    %v3595 = vmul.f32 %v3579, %v3579
    %v3596 = vmul.f32 %v3580, %v3580
    %v3597 = vmul.f32 %v3581, %v3581
    %v3598 = vmul.f32 %v3582, %v3582
    %v3599 = vmul.f32 %v3583, %v3583
    %v3600 = vmul.f32 %v3584, %v3584
    %v3601 = vmul.f32 %v3585, %v3585
    %v3602 = vmul.f32 %v3586, %v3586
    %v3603 = vmul.f32 %v3587, %v3587
    %v3604 = vsel %vm193, %v3588, 0.0
    %3605 = vadd.xlane.f32.xlu0 %v3604
    %v3606 = vpop.xlane.xlu0 %3605
    %v3607 = vsel %vm193, %v3589, 0.0
    %3608 = vadd.xlane.f32.xlu0 %v3607
    %v3609 = vpop.xlane.xlu0 %3608
    %v3610 = vsel %vm193, %v3590, 0.0
    %3611 = vadd.xlane.f32.xlu0 %v3610
    %v3612 = vpop.xlane.xlu0 %3611
    %v3613 = vsel %vm193, %v3591, 0.0
    %3614 = vadd.xlane.f32.xlu0 %v3613
    %v3615 = vpop.xlane.xlu0 %3614
    %v3616 = vsel %vm193, %v3592, 0.0
    %3617 = vadd.xlane.f32.xlu0 %v3616
    %v3618 = vpop.xlane.xlu0 %3617
    %v3619 = vsel %vm193, %v3593, 0.0
    %3620 = vadd.xlane.f32.xlu0 %v3619
    %v3621 = vpop.xlane.xlu0 %3620
    %v3622 = vsel %vm193, %v3594, 0.0
    %3623 = vadd.xlane.f32.xlu0 %v3622
    %v3624 = vpop.xlane.xlu0 %3623
    %v3625 = vsel %vm193, %v3595, 0.0
    %3626 = vadd.xlane.f32.xlu0 %v3625
    %v3627 = vpop.xlane.xlu0 %3626
    %v3628 = vsel %vm193, %v3596, 0.0
    %3629 = vadd.xlane.f32.xlu0 %v3628
    %v3630 = vpop.xlane.xlu0 %3629
    %v3631 = vsel %vm193, %v3597, 0.0
    %3632 = vadd.xlane.f32.xlu0 %v3631
    %v3633 = vpop.xlane.xlu0 %3632
    %v3634 = vsel %vm193, %v3598, 0.0
    %3635 = vadd.xlane.f32.xlu0 %v3634
    %v3636 = vpop.xlane.xlu0 %3635
    %v3637 = vsel %vm193, %v3599, 0.0
    %3638 = vadd.xlane.f32.xlu0 %v3637
    %v3639 = vpop.xlane.xlu0 %3638
    %v3640 = vsel %vm193, %v3600, 0.0
    %3641 = vadd.xlane.f32.xlu0 %v3640
    %v3642 = vpop.xlane.xlu0 %3641
    %v3643 = vsel %vm193, %v3601, 0.0
    %3644 = vadd.xlane.f32.xlu0 %v3643
    %v3645 = vpop.xlane.xlu0 %3644
    %v3646 = vsel %vm193, %v3602, 0.0
    %3647 = vadd.xlane.f32.xlu0 %v3646
    %v3648 = vpop.xlane.xlu0 %3647
    %v3649 = vsel %vm193, %v3603, 0.0
    %3650 = vadd.xlane.f32.xlu0 %v3649
    %v3651 = vpop.xlane.xlu0 %3650
    %v3652 = vmul.f32 %v3606, %v242
    %v3653 = vmul.f32 %v3609, %v242
    %v3654 = vmul.f32 %v3612, %v242
    %v3655 = vmul.f32 %v3615, %v242
    %v3656 = vmul.f32 %v3618, %v242
    %v3657 = vmul.f32 %v3621, %v242
    %v3658 = vmul.f32 %v3624, %v242
    %v3659 = vmul.f32 %v3627, %v242
    %v3660 = vmul.f32 %v3630, %v242
    %v3661 = vmul.f32 %v3633, %v242
    %v3662 = vmul.f32 %v3636, %v242
    %v3663 = vmul.f32 %v3639, %v242
    %v3664 = vmul.f32 %v3642, %v242
    %v3665 = vmul.f32 %v3645, %v242
    %v3666 = vmul.f32 %v3648, %v242
    %v3667 = vmul.f32 %v3651, %v242
    %v3668 = vadd.f32 %v3652, 1e-05
    %v3669 = vadd.f32 %v3653, 1e-05
    %v3670 = vadd.f32 %v3654, 1e-05
    %v3671 = vadd.f32 %v3655, 1e-05
    %v3672 = vadd.f32 %v3656, 1e-05
    %v3673 = vadd.f32 %v3657, 1e-05
    %v3674 = vadd.f32 %v3658, 1e-05
    %v3675 = vadd.f32 %v3659, 1e-05
    %v3676 = vadd.f32 %v3660, 1e-05
    %v3677 = vadd.f32 %v3661, 1e-05
    %v3678 = vadd.f32 %v3662, 1e-05
    %v3679 = vadd.f32 %v3663, 1e-05
    %v3680 = vadd.f32 %v3664, 1e-05
    %v3681 = vadd.f32 %v3665, 1e-05
    %v3682 = vadd.f32 %v3666, 1e-05
    %v3683 = vadd.f32 %v3667, 1e-05
    %v3684 = vrsqrt.pop %v3668
    %v3685 = vrsqrt.pop %v3669
    %v3686 = vrsqrt.pop %v3670
    %v3687 = vrsqrt.pop %v3671
    %v3688 = vrsqrt.pop %v3672
    %v3689 = vrsqrt.pop %v3673
    %v3690 = vrsqrt.pop %v3674
    %v3691 = vrsqrt.pop %v3675
    %v3692 = vrsqrt.pop %v3676
    %v3693 = vrsqrt.pop %v3677
    %v3694 = vrsqrt.pop %v3678
    %v3695 = vrsqrt.pop %v3679
    %v3696 = vrsqrt.pop %v3680
    %v3697 = vrsqrt.pop %v3681
    %v3698 = vrsqrt.pop %v3682
    %v3699 = vrsqrt.pop %v3683
    %v3700 = vmul.f32 %v3572, %v3684
    %v3701 = vmul.f32 %v3573, %v3685
    %v3702 = vmul.f32 %v3574, %v3686
    %v3703 = vmul.f32 %v3575, %v3687
    %v3704 = vmul.f32 %v3576, %v3688
    %v3705 = vmul.f32 %v3577, %v3689
    %v3706 = vmul.f32 %v3578, %v3690
    %v3707 = vmul.f32 %v3579, %v3691
    %v3708 = vmul.f32 %v3580, %v3692
    %v3709 = vmul.f32 %v3581, %v3693
    %v3710 = vmul.f32 %v3582, %v3694
    %v3711 = vmul.f32 %v3583, %v3695
    %v3712 = vmul.f32 %v3584, %v3696
    %v3713 = vmul.f32 %v3585, %v3697
    %v3714 = vmul.f32 %v3586, %v3698
    %v3715 = vmul.f32 %v3587, %v3699
    %v3716 = vlaneseq
    %v3717 = vshrl.u32 %v3716, 7
    %v3718 = vsub.s32 5, %v3717
    %v3719 = vrot.slane %v102, %v3718
    %v3720 = vmul.f32 %v3700, %v3719
    %v3721 = vmul.f32 %v3701, %v3719
    %v3722 = vmul.f32 %v3702, %v3719
    %v3723 = vmul.f32 %v3703, %v3719
    %v3724 = vmul.f32 %v3704, %v3719
    %v3725 = vmul.f32 %v3705, %v3719
    %v3726 = vmul.f32 %v3706, %v3719
    %v3727 = vmul.f32 %v3707, %v3719
    %v3728 = vmul.f32 %v3708, %v3719
    %v3729 = vmul.f32 %v3709, %v3719
    %v3730 = vmul.f32 %v3710, %v3719
    %v3731 = vmul.f32 %v3711, %v3719
    %v3732 = vmul.f32 %v3712, %v3719
    %v3733 = vmul.f32 %v3713, %v3719
    %v3734 = vmul.f32 %v3714, %v3719
    %v3735 = vmul.f32 %v3715, %v3719
    %v3736 = vlaneseq
    %v3737 = vshrl.u32 %v3736, 7
    %v3738 = vsub.s32 6, %v3737
    %v3739 = vrot.slane %v102, %v3738
    %v3740 = vadd.f32 %v3720, %v3739
    %v3741 = vadd.f32 %v3721, %v3739
    %v3742 = vadd.f32 %v3722, %v3739
    %v3743 = vadd.f32 %v3723, %v3739
    %v3744 = vadd.f32 %v3724, %v3739
    %v3745 = vadd.f32 %v3725, %v3739
    %v3746 = vadd.f32 %v3726, %v3739
    %v3747 = vadd.f32 %v3727, %v3739
    %v3748 = vadd.f32 %v3728, %v3739
    %v3749 = vadd.f32 %v3729, %v3739
    %v3750 = vadd.f32 %v3730, %v3739
    %v3751 = vadd.f32 %v3731, %v3739
    %v3752 = vadd.f32 %v3732, %v3739
    %v3753 = vadd.f32 %v3733, %v3739
    %v3754 = vadd.f32 %v3734, %v3739
    %v3755 = vadd.f32 %v3735, %v3739
    %v3756 = vpack.c.bf16 %v3741, %v3740
    %v3757 = vpack.c.bf16 %v3743, %v3742
    %v3758 = vpack.c.bf16 %v3745, %v3744
    %v3759 = vpack.c.bf16 %v3747, %v3746
    %v3760 = vpack.c.bf16 %v3749, %v3748
    %v3761 = vpack.c.bf16 %v3751, %v3750
    %v3762 = vpack.c.bf16 %v3753, %v3752
    %v3763 = vpack.c.bf16 %v3755, %v3754
    %v3764 = vld [vmem:[%s13] sm:$0xf]
    %v3765 = vld [vmem:[%s13 + $0x4] sm:$0xf]
    %v3766 = vlaneseq
    %v3767 = vshrl.u32 %v3766, 7
    %v3768 = vsub.s32 7, %v3767
    %v3769 = vrot.slane %v102, %v3768
    %v3772 = vunpack.c.l.b16 %v3764
    %v3773 = vunpack.c.l.b16 %v3765
    %v3774 = vpack.c.b16 %v3773, %v3772
    %v3777 = vsel %vm193, %v3756, 0
    %v3780 = vsel %vm193, %v3757, 0
    %v3783 = vsel %vm193, %v3758, 0
    %v3786 = vsel %vm193, %v3759, 0
    %v3789 = vsel %vm193, %v3760, 0
    %v3792 = vsel %vm193, %v3761, 0
    %v3795 = vsel %vm193, %v3762, 0
    %v3798 = vsel %vm193, %v3763, 0
    %3800 = vmatprep.subr.bf16.mxu0 0
    %3801 = vmatpush1.bf16.msra.mxu0 %v3774
    %3802 = vmatprep.subr.bf16.mxu0 0
    %3803 = vmatpush1.bf16.msra.mxu0 0
    %3804 = vmatprep.subr.bf16.mxu0 0
    %3805 = vmatpush1.bf16.msra.mxu0 0
    %3806 = vmatprep.subr.bf16.mxu0 0
    %3807 = vmatpush1.bf16.msra.mxu0 0
    %3808 = vmatprep.subr.bf16.mxu0 0
    %3809 = vmatpush1.bf16.msra.mxu0 0
    %3810 = vmatprep.subr.bf16.mxu0 0
    %3811 = vmatpush1.bf16.msra.mxu0 0
    %3812 = vmatprep.subr.bf16.mxu0 0
    %3813 = vmatpush1.bf16.msra.mxu0 0
    %3814 = vmatprep.subr.bf16.mxu0 0
    %3815 = vmatpush1.bf16.msra.mxu0 0
    %3816 = vmatprep.subr.bf16.mxu0 0
    %3817 = vmatpush1.bf16.msra.mxu0 0
    %3818 = vmatprep.subr.bf16.mxu0 0
    %3819 = vmatpush1.bf16.msra.mxu0 0
    %3820 = vmatprep.subr.bf16.mxu0 0
    %3821 = vmatpush1.bf16.msra.mxu0 0
    %3822 = vmatprep.subr.bf16.mxu0 0
    %3823 = vmatpush1.bf16.msra.mxu0 0
    %3824 = vmatprep.subr.bf16.mxu0 0
    %3825 = vmatpush1.bf16.msra.mxu0 0
    %3826 = vmatprep.subr.bf16.mxu0 0
    %3827 = vmatpush1.bf16.msra.mxu0 0
    %3828 = vmatprep.subr.bf16.mxu0 0
    %3829 = vmatpush1.bf16.msra.mxu0 0
    %3830 = vmatprep.subr.bf16.mxu0 0
    %3831 = vmatpush1.bf16.msra.mxu0 0
    %3832 = vmatprep.mubr.bf16.mxu0 0
    %3833 = vmatmul.mubr.bf16.gmra.mrb[0].mxu0 %v3777
    %v3834 = vpop.f32.mrb[0].mxu0
    %v3835 = vadd.f32 %v3769, %v3834
    %v3836 = vpop.f32.mrb[0].mxu0
    %v3837 = vpop.f32.mrb[0].mxu0
    %v3838 = vadd.f32 %v3769, %v3837
    %v3839 = vpop.f32.mrb[0].mxu0
    %3840 = vmatprep.mubr.bf16.mxu0 0
    %3841 = vmatmul.mubr.bf16.gmra.mrb[0].mxu0 %v3780
    %v3842 = vpop.f32.mrb[0].mxu0
    %v3843 = vadd.f32 %v3769, %v3842
    %v3844 = vpop.f32.mrb[0].mxu0
    %v3845 = vpop.f32.mrb[0].mxu0
    %v3846 = vadd.f32 %v3769, %v3845
    %v3847 = vpop.f32.mrb[0].mxu0
    %3848 = vmatprep.mubr.bf16.mxu0 0
    %3849 = vmatmul.mubr.bf16.gmra.mrb[0].mxu0 %v3783
    %v3850 = vpop.f32.mrb[0].mxu0
    %v3851 = vadd.f32 %v3769, %v3850
    %v3852 = vpop.f32.mrb[0].mxu0
    %v3853 = vpop.f32.mrb[0].mxu0
    %v3854 = vadd.f32 %v3769, %v3853
    %v3855 = vpop.f32.mrb[0].mxu0
    %3856 = vmatprep.mubr.bf16.mxu0 0
    %3857 = vmatmul.mubr.bf16.gmra.mrb[0].mxu0 %v3786
    %v3858 = vpop.f32.mrb[0].mxu0
    %v3859 = vadd.f32 %v3769, %v3858
    %v3860 = vpop.f32.mrb[0].mxu0
    %v3861 = vpop.f32.mrb[0].mxu0
    %v3862 = vadd.f32 %v3769, %v3861
    %v3863 = vpop.f32.mrb[0].mxu0
    %3864 = vmatprep.mubr.bf16.mxu0 0
    %3865 = vmatmul.mubr.bf16.gmra.mrb[0].mxu0 %v3789
    %v3866 = vpop.f32.mrb[0].mxu0
    %v3867 = vadd.f32 %v3769, %v3866
    %v3868 = vpop.f32.mrb[0].mxu0
    %v3869 = vpop.f32.mrb[0].mxu0
    %v3870 = vadd.f32 %v3769, %v3869
    %v3871 = vpop.f32.mrb[0].mxu0
    %3872 = vmatprep.mubr.bf16.mxu0 0
    %3873 = vmatmul.mubr.bf16.gmra.mrb[0].mxu0 %v3792
    %v3874 = vpop.f32.mrb[0].mxu0
    %v3875 = vadd.f32 %v3769, %v3874
    %v3876 = vpop.f32.mrb[0].mxu0
    %v3877 = vpop.f32.mrb[0].mxu0
    %v3878 = vadd.f32 %v3769, %v3877
    %v3879 = vpop.f32.mrb[0].mxu0
    %3880 = vmatprep.mubr.bf16.mxu0 0
    %3881 = vmatmul.mubr.bf16.gmra.mrb[0].mxu0 %v3795
    %v3882 = vpop.f32.mrb[0].mxu0
    %v3883 = vadd.f32 %v3769, %v3882
    %v3884 = vpop.f32.mrb[0].mxu0
    %v3885 = vpop.f32.mrb[0].mxu0
    %v3886 = vadd.f32 %v3769, %v3885
    %v3887 = vpop.f32.mrb[0].mxu0
    %3888 = vmatprep.mubr.bf16.mxu0 0
    %3889 = vmatmul.mubr.bf16.gmra.mrb[0].mxu0 %v3798
    %v3890 = vpop.f32.mrb[0].mxu0
    %v3891 = vadd.f32 %v3769, %v3890
    %v3892 = vpop.f32.mrb[0].mxu0
    %v3893 = vpop.f32.mrb[0].mxu0
    %v3894 = vadd.f32 %v3769, %v3893
    %v3895 = vpop.f32.mrb[0].mxu0
    %3896 = vdwg.mxu0
    %v3897 = vmax.f32 %v3835, 0.0
    %v3898 = vmax.f32 %v3838, 0.0
    %v3899 = vmax.f32 %v3843, 0.0
    %v3900 = vmax.f32 %v3846, 0.0
    %v3901 = vmax.f32 %v3851, 0.0
    %v3902 = vmax.f32 %v3854, 0.0
    %v3903 = vmax.f32 %v3859, 0.0
    %v3904 = vmax.f32 %v3862, 0.0
    %v3905 = vmax.f32 %v3867, 0.0
    %v3906 = vmax.f32 %v3870, 0.0
    %v3907 = vmax.f32 %v3875, 0.0
    %v3908 = vmax.f32 %v3878, 0.0
    %v3909 = vmax.f32 %v3883, 0.0
    %v3910 = vmax.f32 %v3886, 0.0
    %v3911 = vmax.f32 %v3891, 0.0
    %v3912 = vmax.f32 %v3894, 0.0
    %v3913 = vpack.c.bf16 %v3898, %v3897
    %v3914 = vpack.c.bf16 %v3900, %v3899
    %v3915 = vpack.c.bf16 %v3902, %v3901
    %v3916 = vpack.c.bf16 %v3904, %v3903
    %v3917 = vpack.c.bf16 %v3906, %v3905
    %v3918 = vpack.c.bf16 %v3908, %v3907
    %v3919 = vpack.c.bf16 %v3910, %v3909
    %v3920 = vpack.c.bf16 %v3912, %v3911
    %v3921 = vld [vmem:[%s14] sm:$0xf]
    %v3922 = vld [vmem:[%s14 + $0x4] sm:$0xf]
    %v3923 = vld [vmem:[%s14 + $0x8] sm:$0xf]
    %v3924 = vld [vmem:[%s14 + $0xc] sm:$0xf]
    %v3929 = vunpack.c.l.b16 %v3921
    %v3930 = vunpack.c.l.b16 %v3922
    %v3931 = vunpack.c.l.b16 %v3923
    %v3932 = vunpack.c.l.b16 %v3924
    %v3933 = vpack.c.b16 %v3930, %v3929
    %v3934 = vpack.c.b16 %v3932, %v3931
    %v3938 = vsel %vm152, %v3913, 0
    %v3941 = vsel %vm152, %v3914, 0
    %v3944 = vsel %vm152, %v3915, 0
    %v3947 = vsel %vm152, %v3916, 0
    %v3950 = vsel %vm152, %v3917, 0
    %v3953 = vsel %vm152, %v3918, 0
    %v3956 = vsel %vm152, %v3919, 0
    %v3959 = vsel %vm152, %v3920, 0
    %3961 = vmatprep.subr.bf16.mxu0 0
    %3962 = vmatpush1.bf16.msra.mxu0 %v3933
    %3963 = vmatprep.subr.bf16.mxu0 0
    %3964 = vmatpush1.bf16.msra.mxu0 %v3934
    %3965 = vmatprep.subr.bf16.mxu0 0
    %3966 = vmatpush1.bf16.msra.mxu0 0
    %3967 = vmatprep.subr.bf16.mxu0 0
    %3968 = vmatpush1.bf16.msra.mxu0 0
    %3969 = vmatprep.subr.bf16.mxu0 0
    %3970 = vmatpush1.bf16.msra.mxu0 0
    %3971 = vmatprep.subr.bf16.mxu0 0
    %3972 = vmatpush1.bf16.msra.mxu0 0
    %3973 = vmatprep.subr.bf16.mxu0 0
    %3974 = vmatpush1.bf16.msra.mxu0 0
    %3975 = vmatprep.subr.bf16.mxu0 0
    %3976 = vmatpush1.bf16.msra.mxu0 0
    %3977 = vmatprep.subr.bf16.mxu0 0
    %3978 = vmatpush1.bf16.msra.mxu0 0
    %3979 = vmatprep.subr.bf16.mxu0 0
    %3980 = vmatpush1.bf16.msra.mxu0 0
    %3981 = vmatprep.subr.bf16.mxu0 0
    %3982 = vmatpush1.bf16.msra.mxu0 0
    %3983 = vmatprep.subr.bf16.mxu0 0
    %3984 = vmatpush1.bf16.msra.mxu0 0
    %3985 = vmatprep.subr.bf16.mxu0 0
    %3986 = vmatpush1.bf16.msra.mxu0 0
    %3987 = vmatprep.subr.bf16.mxu0 0
    %3988 = vmatpush1.bf16.msra.mxu0 0
    %3989 = vmatprep.subr.bf16.mxu0 0
    %3990 = vmatpush1.bf16.msra.mxu0 0
    %3991 = vmatprep.subr.bf16.mxu0 0
    %3992 = vmatpush1.bf16.msra.mxu0 0
    %3993 = vmatprep.mubr.bf16.mxu0 0
    %3994 = vmatmul.mubr.bf16.gmra.mrb[0].mxu0 %v3938
    %v3995 = vpop.f32.mrb[0].mxu0
    %v3996 = vadd.f32 0.0, %v3995
    %v3997 = vpop.f32.mrb[0].mxu0
    %v3998 = vpop.f32.mrb[0].mxu0
    %v3999 = vadd.f32 0.0, %v3998
    %v4000 = vpop.f32.mrb[0].mxu0
    %4001 = vmatprep.mubr.bf16.mxu0 0
    %4002 = vmatmul.mubr.bf16.gmra.mrb[0].mxu0 %v3941
    %v4003 = vpop.f32.mrb[0].mxu0
    %v4004 = vadd.f32 0.0, %v4003
    %v4005 = vpop.f32.mrb[0].mxu0
    %v4006 = vpop.f32.mrb[0].mxu0
    %v4007 = vadd.f32 0.0, %v4006
    %v4008 = vpop.f32.mrb[0].mxu0
    %4009 = vmatprep.mubr.bf16.mxu0 0
    %4010 = vmatmul.mubr.bf16.gmra.mrb[0].mxu0 %v3944
    %v4011 = vpop.f32.mrb[0].mxu0
    %v4012 = vadd.f32 0.0, %v4011
    %v4013 = vpop.f32.mrb[0].mxu0
    %v4014 = vpop.f32.mrb[0].mxu0
    %v4015 = vadd.f32 0.0, %v4014
    %v4016 = vpop.f32.mrb[0].mxu0
    %4017 = vmatprep.mubr.bf16.mxu0 0
    %4018 = vmatmul.mubr.bf16.gmra.mrb[0].mxu0 %v3947
    %v4019 = vpop.f32.mrb[0].mxu0
    %v4020 = vadd.f32 0.0, %v4019
    %v4021 = vpop.f32.mrb[0].mxu0
    %v4022 = vpop.f32.mrb[0].mxu0
    %v4023 = vadd.f32 0.0, %v4022
    %v4024 = vpop.f32.mrb[0].mxu0
    %4025 = vmatprep.mubr.bf16.mxu0 0
    %4026 = vmatmul.mubr.bf16.gmra.mrb[0].mxu0 %v3950
    %v4027 = vpop.f32.mrb[0].mxu0
    %v4028 = vadd.f32 0.0, %v4027
    %v4029 = vpop.f32.mrb[0].mxu0
    %v4030 = vpop.f32.mrb[0].mxu0
    %v4031 = vadd.f32 0.0, %v4030
    %v4032 = vpop.f32.mrb[0].mxu0
    %4033 = vmatprep.mubr.bf16.mxu0 0
    %4034 = vmatmul.mubr.bf16.gmra.mrb[0].mxu0 %v3953
    %v4035 = vpop.f32.mrb[0].mxu0
    %v4036 = vadd.f32 0.0, %v4035
    %v4037 = vpop.f32.mrb[0].mxu0
    %v4038 = vpop.f32.mrb[0].mxu0
    %v4039 = vadd.f32 0.0, %v4038
    %v4040 = vpop.f32.mrb[0].mxu0
    %4041 = vmatprep.mubr.bf16.mxu0 0
    %4042 = vmatmul.mubr.bf16.gmra.mrb[0].mxu0 %v3956
    %v4043 = vpop.f32.mrb[0].mxu0
    %v4044 = vadd.f32 0.0, %v4043
    %v4045 = vpop.f32.mrb[0].mxu0
    %v4046 = vpop.f32.mrb[0].mxu0
    %v4047 = vadd.f32 0.0, %v4046
    %v4048 = vpop.f32.mrb[0].mxu0
    %4049 = vmatprep.mubr.bf16.mxu0 0
    %4050 = vmatmul.mubr.bf16.gmra.mrb[0].mxu0 %v3959
    %v4051 = vpop.f32.mrb[0].mxu0
    %v4052 = vadd.f32 0.0, %v4051
    %v4053 = vpop.f32.mrb[0].mxu0
    %v4054 = vpop.f32.mrb[0].mxu0
    %v4055 = vadd.f32 0.0, %v4054
    %v4056 = vpop.f32.mrb[0].mxu0
    %4057 = vdwg.mxu0
    %v4058 = vadd.f32 %v3492, %v3996
    %v4059 = vadd.f32 %v3493, %v3999
    %v4060 = vadd.f32 %v3494, %v4004
    %v4061 = vadd.f32 %v3495, %v4007
    %v4062 = vadd.f32 %v3496, %v4012
    %v4063 = vadd.f32 %v3497, %v4015
    %v4064 = vadd.f32 %v3498, %v4020
    %v4065 = vadd.f32 %v3499, %v4023
    %v4066 = vadd.f32 %v3500, %v4028
    %v4067 = vadd.f32 %v3501, %v4031
    %v4068 = vadd.f32 %v3502, %v4036
    %v4069 = vadd.f32 %v3503, %v4039
    %v4070 = vadd.f32 %v3504, %v4044
    %v4071 = vadd.f32 %v3505, %v4047
    %v4072 = vadd.f32 %v3506, %v4052
    %v4073 = vadd.f32 %v3507, %v4055
    %v4074 = vlaneseq
    %v4075 = vshrl.u32 %v4074, 7
    %v4076 = vsub.s32 0, %v4075
    %v4077 = vrot.slane %v103, %v4076
    %v4078 = vadd.f32 %v4058, %v4077
    %v4079 = vadd.f32 %v4059, %v4077
    %v4080 = vadd.f32 %v4060, %v4077
    %v4081 = vadd.f32 %v4061, %v4077
    %v4082 = vadd.f32 %v4062, %v4077
    %v4083 = vadd.f32 %v4063, %v4077
    %v4084 = vadd.f32 %v4064, %v4077
    %v4085 = vadd.f32 %v4065, %v4077
    %v4086 = vadd.f32 %v4066, %v4077
    %v4087 = vadd.f32 %v4067, %v4077
    %v4088 = vadd.f32 %v4068, %v4077
    %v4089 = vadd.f32 %v4069, %v4077
    %v4090 = vadd.f32 %v4070, %v4077
    %v4091 = vadd.f32 %v4071, %v4077
    %v4092 = vadd.f32 %v4072, %v4077
    %v4093 = vadd.f32 %v4073, %v4077
    %s4094 = scalar_lea.vmem %s15, 16
    %v4095 = vld [vmem:[%s4094] sm:$0xff]
    %v4096 = vld [vmem:[%s4094 + $0x8] sm:$0x1]
    %s4097 = scalar_lea.vmem %s16, 16
    %v4098 = vld [vmem:[%s4097] sm:$0xff]
    %v4099 = vld [vmem:[%s4097 + $0x8] sm:$0x1]
    %s4100 = scalar_lea.vmem %s4, 64
    %v4101 = vld [vmem:[%s4100] sm:$0xf]
    %v4102 = vld [vmem:[%s4100 + $0x4] sm:$0xf]
    %v4103 = vld [vmem:[%s4100 + $0x8] sm:$0xf]
    %v4104 = vld [vmem:[%s4100 + $0xc] sm:$0xf]
    %v4105 = vld [vmem:[%s4100 + $0x10] sm:$0xf]
    %v4106 = vld [vmem:[%s4100 + $0x14] sm:$0xf]
    %v4107 = vld [vmem:[%s4100 + $0x18] sm:$0xf]
    %v4108 = vld [vmem:[%s4100 + $0x1c] sm:$0xf]
    %v4109 = vld [vmem:[%s4100 + $0x20] sm:$0xf]
    %v4110 = vld [vmem:[%s4100 + $0x24] sm:$0xf]
    %v4111 = vld [vmem:[%s4100 + $0x28] sm:$0xf]
    %v4112 = vld [vmem:[%s4100 + $0x2c] sm:$0xf]
    %v4113 = vld [vmem:[%s4100 + $0x30] sm:$0xf]
    %v4114 = vld [vmem:[%s4100 + $0x34] sm:$0xf]
    %v4115 = vld [vmem:[%s4100 + $0x38] sm:$0xf]
    %v4116 = vld [vmem:[%s4100 + $0x3c] sm:$0xf]
    %s4117 = scalar_lea.vmem %s5, 64
    %v4118 = vld [vmem:[%s4117] sm:$0xf]
    %v4119 = vld [vmem:[%s4117 + $0x4] sm:$0xf]
    %v4120 = vld [vmem:[%s4117 + $0x8] sm:$0xf]
    %v4121 = vld [vmem:[%s4117 + $0xc] sm:$0xf]
    %v4122 = vld [vmem:[%s4117 + $0x10] sm:$0xf]
    %v4123 = vld [vmem:[%s4117 + $0x14] sm:$0xf]
    %v4124 = vld [vmem:[%s4117 + $0x18] sm:$0xf]
    %v4125 = vld [vmem:[%s4117 + $0x1c] sm:$0xf]
    %v4126 = vld [vmem:[%s4117 + $0x20] sm:$0xf]
    %v4127 = vld [vmem:[%s4117 + $0x24] sm:$0xf]
    %v4128 = vld [vmem:[%s4117 + $0x28] sm:$0xf]
    %v4129 = vld [vmem:[%s4117 + $0x2c] sm:$0xf]
    %v4130 = vld [vmem:[%s4117 + $0x30] sm:$0xf]
    %v4131 = vld [vmem:[%s4117 + $0x34] sm:$0xf]
    %v4132 = vld [vmem:[%s4117 + $0x38] sm:$0xf]
    %v4133 = vld [vmem:[%s4117 + $0x3c] sm:$0xf]
    %s4134 = scalar_lea.vmem %s6, 64
    %v4135 = vld [vmem:[%s4134] sm:$0xf]
    %v4136 = vld [vmem:[%s4134 + $0x4] sm:$0xf]
    %v4137 = vld [vmem:[%s4134 + $0x8] sm:$0xf]
    %v4138 = vld [vmem:[%s4134 + $0xc] sm:$0xf]
    %v4139 = vld [vmem:[%s4134 + $0x10] sm:$0xf]
    %v4140 = vld [vmem:[%s4134 + $0x14] sm:$0xf]
    %v4141 = vld [vmem:[%s4134 + $0x18] sm:$0xf]
    %v4142 = vld [vmem:[%s4134 + $0x1c] sm:$0xf]
    %v4143 = vld [vmem:[%s4134 + $0x20] sm:$0xf]
    %v4144 = vld [vmem:[%s4134 + $0x24] sm:$0xf]
    %v4145 = vld [vmem:[%s4134 + $0x28] sm:$0xf]
    %v4146 = vld [vmem:[%s4134 + $0x2c] sm:$0xf]
    %v4147 = vld [vmem:[%s4134 + $0x30] sm:$0xf]
    %v4148 = vld [vmem:[%s4134 + $0x34] sm:$0xf]
    %v4149 = vld [vmem:[%s4134 + $0x38] sm:$0xf]
    %v4150 = vld [vmem:[%s4134 + $0x3c] sm:$0xf]
    %v4151 = vlaneseq
    %v4152 = vshrl.u32 %v4151, 7
    %v4153 = vsub.s32 0, %v4152
    %v4154 = vrot.slane %v4095, %v4153
    %v4155 = vmul.f32 %v2999, %v4154
    %v4156 = vmul.f32 %v3000, %v4154
    %v4157 = vlaneseq
    %v4158 = vshrl.u32 %v4157, 7
    %v4159 = vsub.s32 1, %v4158
    %v4160 = vrot.slane %v4095, %v4159
    %v4161 = vadd.f32 %v4155, %v4160
    %v4162 = vadd.f32 %v4156, %v4160
    %v4163 = vpack.c.bf16 %v4162, %v4161
    %v4164 = vsel %vm193, %v4078, 0.0
    %4165 = vadd.xlane.f32.xlu0 %v4164
    %v4166 = vpop.xlane.xlu0 %4165
    %v4167 = vsel %vm193, %v4079, 0.0
    %4168 = vadd.xlane.f32.xlu0 %v4167
    %v4169 = vpop.xlane.xlu0 %4168
    %v4170 = vsel %vm193, %v4080, 0.0
    %4171 = vadd.xlane.f32.xlu0 %v4170
    %v4172 = vpop.xlane.xlu0 %4171
    %v4173 = vsel %vm193, %v4081, 0.0
    %4174 = vadd.xlane.f32.xlu0 %v4173
    %v4175 = vpop.xlane.xlu0 %4174
    %v4176 = vsel %vm193, %v4082, 0.0
    %4177 = vadd.xlane.f32.xlu0 %v4176
    %v4178 = vpop.xlane.xlu0 %4177
    %v4179 = vsel %vm193, %v4083, 0.0
    %4180 = vadd.xlane.f32.xlu0 %v4179
    %v4181 = vpop.xlane.xlu0 %4180
    %v4182 = vsel %vm193, %v4084, 0.0
    %4183 = vadd.xlane.f32.xlu0 %v4182
    %v4184 = vpop.xlane.xlu0 %4183
    %v4185 = vsel %vm193, %v4085, 0.0
    %4186 = vadd.xlane.f32.xlu0 %v4185
    %v4187 = vpop.xlane.xlu0 %4186
    %v4188 = vsel %vm193, %v4086, 0.0
    %4189 = vadd.xlane.f32.xlu0 %v4188
    %v4190 = vpop.xlane.xlu0 %4189
    %v4191 = vsel %vm193, %v4087, 0.0
    %4192 = vadd.xlane.f32.xlu0 %v4191
    %v4193 = vpop.xlane.xlu0 %4192
    %v4194 = vsel %vm193, %v4088, 0.0
    %4195 = vadd.xlane.f32.xlu0 %v4194
    %v4196 = vpop.xlane.xlu0 %4195
    %v4197 = vsel %vm193, %v4089, 0.0
    %4198 = vadd.xlane.f32.xlu0 %v4197
    %v4199 = vpop.xlane.xlu0 %4198
    %v4200 = vsel %vm193, %v4090, 0.0
    %4201 = vadd.xlane.f32.xlu0 %v4200
    %v4202 = vpop.xlane.xlu0 %4201
    %v4203 = vsel %vm193, %v4091, 0.0
    %4204 = vadd.xlane.f32.xlu0 %v4203
    %v4205 = vpop.xlane.xlu0 %4204
    %v4206 = vsel %vm193, %v4092, 0.0
    %4207 = vadd.xlane.f32.xlu0 %v4206
    %v4208 = vpop.xlane.xlu0 %4207
    %v4209 = vsel %vm193, %v4093, 0.0
    %4210 = vadd.xlane.f32.xlu0 %v4209
    %v4211 = vpop.xlane.xlu0 %4210
    %v4212 = vmul.f32 %v4166, %v242
    %v4213 = vmul.f32 %v4169, %v242
    %v4214 = vmul.f32 %v4172, %v242
    %v4215 = vmul.f32 %v4175, %v242
    %v4216 = vmul.f32 %v4178, %v242
    %v4217 = vmul.f32 %v4181, %v242
    %v4218 = vmul.f32 %v4184, %v242
    %v4219 = vmul.f32 %v4187, %v242
    %v4220 = vmul.f32 %v4190, %v242
    %v4221 = vmul.f32 %v4193, %v242
    %v4222 = vmul.f32 %v4196, %v242
    %v4223 = vmul.f32 %v4199, %v242
    %v4224 = vmul.f32 %v4202, %v242
    %v4225 = vmul.f32 %v4205, %v242
    %v4226 = vmul.f32 %v4208, %v242
    %v4227 = vmul.f32 %v4211, %v242
    %v4228 = vsub.f32 %v4078, %v4212
    %v4229 = vsub.f32 %v4079, %v4213
    %v4230 = vsub.f32 %v4080, %v4214
    %v4231 = vsub.f32 %v4081, %v4215
    %v4232 = vsub.f32 %v4082, %v4216
    %v4233 = vsub.f32 %v4083, %v4217
    %v4234 = vsub.f32 %v4084, %v4218
    %v4235 = vsub.f32 %v4085, %v4219
    %v4236 = vsub.f32 %v4086, %v4220
    %v4237 = vsub.f32 %v4087, %v4221
    %v4238 = vsub.f32 %v4088, %v4222
    %v4239 = vsub.f32 %v4089, %v4223
    %v4240 = vsub.f32 %v4090, %v4224
    %v4241 = vsub.f32 %v4091, %v4225
    %v4242 = vsub.f32 %v4092, %v4226
    %v4243 = vsub.f32 %v4093, %v4227
    %v4244 = vmul.f32 %v4228, %v4228
    %v4245 = vmul.f32 %v4229, %v4229
    %v4246 = vmul.f32 %v4230, %v4230
    %v4247 = vmul.f32 %v4231, %v4231
    %v4248 = vmul.f32 %v4232, %v4232
    %v4249 = vmul.f32 %v4233, %v4233
    %v4250 = vmul.f32 %v4234, %v4234
    %v4251 = vmul.f32 %v4235, %v4235
    %v4252 = vmul.f32 %v4236, %v4236
    %v4253 = vmul.f32 %v4237, %v4237
    %v4254 = vmul.f32 %v4238, %v4238
    %v4255 = vmul.f32 %v4239, %v4239
    %v4256 = vmul.f32 %v4240, %v4240
    %v4257 = vmul.f32 %v4241, %v4241
    %v4258 = vmul.f32 %v4242, %v4242
    %v4259 = vmul.f32 %v4243, %v4243
    %v4260 = vsel %vm193, %v4244, 0.0
    %4261 = vadd.xlane.f32.xlu0 %v4260
    %v4262 = vpop.xlane.xlu0 %4261
    %v4263 = vsel %vm193, %v4245, 0.0
    %4264 = vadd.xlane.f32.xlu0 %v4263
    %v4265 = vpop.xlane.xlu0 %4264
    %v4266 = vsel %vm193, %v4246, 0.0
    %4267 = vadd.xlane.f32.xlu0 %v4266
    %v4268 = vpop.xlane.xlu0 %4267
    %v4269 = vsel %vm193, %v4247, 0.0
    %4270 = vadd.xlane.f32.xlu0 %v4269
    %v4271 = vpop.xlane.xlu0 %4270
    %v4272 = vsel %vm193, %v4248, 0.0
    %4273 = vadd.xlane.f32.xlu0 %v4272
    %v4274 = vpop.xlane.xlu0 %4273
    %v4275 = vsel %vm193, %v4249, 0.0
    %4276 = vadd.xlane.f32.xlu0 %v4275
    %v4277 = vpop.xlane.xlu0 %4276
    %v4278 = vsel %vm193, %v4250, 0.0
    %4279 = vadd.xlane.f32.xlu0 %v4278
    %v4280 = vpop.xlane.xlu0 %4279
    %v4281 = vsel %vm193, %v4251, 0.0
    %4282 = vadd.xlane.f32.xlu0 %v4281
    %v4283 = vpop.xlane.xlu0 %4282
    %v4284 = vsel %vm193, %v4252, 0.0
    %4285 = vadd.xlane.f32.xlu0 %v4284
    %v4286 = vpop.xlane.xlu0 %4285
    %v4287 = vsel %vm193, %v4253, 0.0
    %4288 = vadd.xlane.f32.xlu0 %v4287
    %v4289 = vpop.xlane.xlu0 %4288
    %v4290 = vsel %vm193, %v4254, 0.0
    %4291 = vadd.xlane.f32.xlu0 %v4290
    %v4292 = vpop.xlane.xlu0 %4291
    %v4293 = vsel %vm193, %v4255, 0.0
    %4294 = vadd.xlane.f32.xlu0 %v4293
    %v4295 = vpop.xlane.xlu0 %4294
    %v4296 = vsel %vm193, %v4256, 0.0
    %4297 = vadd.xlane.f32.xlu0 %v4296
    %v4298 = vpop.xlane.xlu0 %4297
    %v4299 = vsel %vm193, %v4257, 0.0
    %4300 = vadd.xlane.f32.xlu0 %v4299
    %v4301 = vpop.xlane.xlu0 %4300
    %v4302 = vsel %vm193, %v4258, 0.0
    %4303 = vadd.xlane.f32.xlu0 %v4302
    %v4304 = vpop.xlane.xlu0 %4303
    %v4305 = vsel %vm193, %v4259, 0.0
    %4306 = vadd.xlane.f32.xlu0 %v4305
    %v4307 = vpop.xlane.xlu0 %4306
    %v4308 = vmul.f32 %v4262, %v242
    %v4309 = vmul.f32 %v4265, %v242
    %v4310 = vmul.f32 %v4268, %v242
    %v4311 = vmul.f32 %v4271, %v242
    %v4312 = vmul.f32 %v4274, %v242
    %v4313 = vmul.f32 %v4277, %v242
    %v4314 = vmul.f32 %v4280, %v242
    %v4315 = vmul.f32 %v4283, %v242
    %v4316 = vmul.f32 %v4286, %v242
    %v4317 = vmul.f32 %v4289, %v242
    %v4318 = vmul.f32 %v4292, %v242
    %v4319 = vmul.f32 %v4295, %v242
    %v4320 = vmul.f32 %v4298, %v242
    %v4321 = vmul.f32 %v4301, %v242
    %v4322 = vmul.f32 %v4304, %v242
    %v4323 = vmul.f32 %v4307, %v242
    %v4324 = vadd.f32 %v4308, 1e-05
    %v4325 = vadd.f32 %v4309, 1e-05
    %v4326 = vadd.f32 %v4310, 1e-05
    %v4327 = vadd.f32 %v4311, 1e-05
    %v4328 = vadd.f32 %v4312, 1e-05
    %v4329 = vadd.f32 %v4313, 1e-05
    %v4330 = vadd.f32 %v4314, 1e-05
    %v4331 = vadd.f32 %v4315, 1e-05
    %v4332 = vadd.f32 %v4316, 1e-05
    %v4333 = vadd.f32 %v4317, 1e-05
    %v4334 = vadd.f32 %v4318, 1e-05
    %v4335 = vadd.f32 %v4319, 1e-05
    %v4336 = vadd.f32 %v4320, 1e-05
    %v4337 = vadd.f32 %v4321, 1e-05
    %v4338 = vadd.f32 %v4322, 1e-05
    %v4339 = vadd.f32 %v4323, 1e-05
    %v4340 = vrsqrt.pop %v4324
    %v4341 = vrsqrt.pop %v4325
    %v4342 = vrsqrt.pop %v4326
    %v4343 = vrsqrt.pop %v4327
    %v4344 = vrsqrt.pop %v4328
    %v4345 = vrsqrt.pop %v4329
    %v4346 = vrsqrt.pop %v4330
    %v4347 = vrsqrt.pop %v4331
    %v4348 = vrsqrt.pop %v4332
    %v4349 = vrsqrt.pop %v4333
    %v4350 = vrsqrt.pop %v4334
    %v4351 = vrsqrt.pop %v4335
    %v4352 = vrsqrt.pop %v4336
    %v4353 = vrsqrt.pop %v4337
    %v4354 = vrsqrt.pop %v4338
    %v4355 = vrsqrt.pop %v4339
    %v4356 = vmul.f32 %v4228, %v4340
    %v4357 = vmul.f32 %v4229, %v4341
    %v4358 = vmul.f32 %v4230, %v4342
    %v4359 = vmul.f32 %v4231, %v4343
    %v4360 = vmul.f32 %v4232, %v4344
    %v4361 = vmul.f32 %v4233, %v4345
    %v4362 = vmul.f32 %v4234, %v4346
    %v4363 = vmul.f32 %v4235, %v4347
    %v4364 = vmul.f32 %v4236, %v4348
    %v4365 = vmul.f32 %v4237, %v4349
    %v4366 = vmul.f32 %v4238, %v4350
    %v4367 = vmul.f32 %v4239, %v4351
    %v4368 = vmul.f32 %v4240, %v4352
    %v4369 = vmul.f32 %v4241, %v4353
    %v4370 = vmul.f32 %v4242, %v4354
    %v4371 = vmul.f32 %v4243, %v4355
    %v4372 = vlaneseq
    %v4373 = vshrl.u32 %v4372, 7
    %v4374 = vsub.s32 2, %v4373
    %v4375 = vrot.slane %v4095, %v4374
    %v4376 = vmul.f32 %v4356, %v4375
    %v4377 = vmul.f32 %v4357, %v4375
    %v4378 = vmul.f32 %v4358, %v4375
    %v4379 = vmul.f32 %v4359, %v4375
    %v4380 = vmul.f32 %v4360, %v4375
    %v4381 = vmul.f32 %v4361, %v4375
    %v4382 = vmul.f32 %v4362, %v4375
    %v4383 = vmul.f32 %v4363, %v4375
    %v4384 = vmul.f32 %v4364, %v4375
    %v4385 = vmul.f32 %v4365, %v4375
    %v4386 = vmul.f32 %v4366, %v4375
    %v4387 = vmul.f32 %v4367, %v4375
    %v4388 = vmul.f32 %v4368, %v4375
    %v4389 = vmul.f32 %v4369, %v4375
    %v4390 = vmul.f32 %v4370, %v4375
    %v4391 = vmul.f32 %v4371, %v4375
    %v4392 = vlaneseq
    %v4393 = vshrl.u32 %v4392, 7
    %v4394 = vsub.s32 3, %v4393
    %v4395 = vrot.slane %v4095, %v4394
    %v4396 = vadd.f32 %v4376, %v4395
    %v4397 = vadd.f32 %v4377, %v4395
    %v4398 = vadd.f32 %v4378, %v4395
    %v4399 = vadd.f32 %v4379, %v4395
    %v4400 = vadd.f32 %v4380, %v4395
    %v4401 = vadd.f32 %v4381, %v4395
    %v4402 = vadd.f32 %v4382, %v4395
    %v4403 = vadd.f32 %v4383, %v4395
    %v4404 = vadd.f32 %v4384, %v4395
    %v4405 = vadd.f32 %v4385, %v4395
    %v4406 = vadd.f32 %v4386, %v4395
    %v4407 = vadd.f32 %v4387, %v4395
    %v4408 = vadd.f32 %v4388, %v4395
    %v4409 = vadd.f32 %v4389, %v4395
    %v4410 = vadd.f32 %v4390, %v4395
    %v4411 = vadd.f32 %v4391, %v4395
    %v4412 = vpack.c.bf16 %v4397, %v4396
    %v4413 = vpack.c.bf16 %v4399, %v4398
    %v4414 = vpack.c.bf16 %v4401, %v4400
    %v4415 = vpack.c.bf16 %v4403, %v4402
    %v4416 = vpack.c.bf16 %v4405, %v4404
    %v4417 = vpack.c.bf16 %v4407, %v4406
    %v4418 = vpack.c.bf16 %v4409, %v4408
    %v4419 = vpack.c.bf16 %v4411, %v4410
    %s4420 = scalar_lea.vmem %s7, 8
    %v4421 = vld [vmem:[%s4420] sm:$0xf]
    %v4422 = vld [vmem:[%s4420 + $0x4] sm:$0xf]
    %v4425 = vunpack.c.l.b16 %v4421
    %v4426 = vunpack.c.l.b16 %v4422
    %v4427 = vpack.c.b16 %v4426, %v4425
    %v4430 = vsel %vm193, %v4412, 0
    %v4433 = vsel %vm193, %v4413, 0
    %v4436 = vsel %vm193, %v4414, 0
    %v4439 = vsel %vm193, %v4415, 0
    %v4442 = vsel %vm193, %v4416, 0
    %v4445 = vsel %vm193, %v4417, 0
    %v4448 = vsel %vm193, %v4418, 0
    %v4451 = vsel %vm193, %v4419, 0
    %4453 = vmatprep.subr.bf16.mxu0 0
    %4454 = vmatpush1.bf16.msra.mxu0 %v4427
    %4455 = vmatprep.subr.bf16.mxu0 0
    %4456 = vmatpush1.bf16.msra.mxu0 0
    %4457 = vmatprep.subr.bf16.mxu0 0
    %4458 = vmatpush1.bf16.msra.mxu0 0
    %4459 = vmatprep.subr.bf16.mxu0 0
    %4460 = vmatpush1.bf16.msra.mxu0 0
    %4461 = vmatprep.subr.bf16.mxu0 0
    %4462 = vmatpush1.bf16.msra.mxu0 0
    %4463 = vmatprep.subr.bf16.mxu0 0
    %4464 = vmatpush1.bf16.msra.mxu0 0
    %4465 = vmatprep.subr.bf16.mxu0 0
    %4466 = vmatpush1.bf16.msra.mxu0 0
    %4467 = vmatprep.subr.bf16.mxu0 0
    %4468 = vmatpush1.bf16.msra.mxu0 0
    %4469 = vmatprep.subr.bf16.mxu0 0
    %4470 = vmatpush1.bf16.msra.mxu0 0
    %4471 = vmatprep.subr.bf16.mxu0 0
    %4472 = vmatpush1.bf16.msra.mxu0 0
    %4473 = vmatprep.subr.bf16.mxu0 0
    %4474 = vmatpush1.bf16.msra.mxu0 0
    %4475 = vmatprep.subr.bf16.mxu0 0
    %4476 = vmatpush1.bf16.msra.mxu0 0
    %4477 = vmatprep.subr.bf16.mxu0 0
    %4478 = vmatpush1.bf16.msra.mxu0 0
    %4479 = vmatprep.subr.bf16.mxu0 0
    %4480 = vmatpush1.bf16.msra.mxu0 0
    %4481 = vmatprep.subr.bf16.mxu0 0
    %4482 = vmatpush1.bf16.msra.mxu0 0
    %4483 = vmatprep.subr.bf16.mxu0 0
    %4484 = vmatpush1.bf16.msra.mxu0 0
    %4485 = vmatprep.mubr.bf16.mxu0 0
    %4486 = vmatmul.mubr.bf16.gmra.mrb[0].mxu0 %v4430
    %v4487 = vpop.f32.mrb[0].mxu0
    %v4488 = vadd.f32 0.0, %v4487
    %v4489 = vpop.f32.mrb[0].mxu0
    %v4490 = vpop.f32.mrb[0].mxu0
    %v4491 = vadd.f32 0.0, %v4490
    %v4492 = vpop.f32.mrb[0].mxu0
    %4493 = vmatprep.mubr.bf16.mxu0 0
    %4494 = vmatmul.mubr.bf16.gmra.mrb[0].mxu0 %v4433
    %v4495 = vpop.f32.mrb[0].mxu0
    %v4496 = vadd.f32 0.0, %v4495
    %v4497 = vpop.f32.mrb[0].mxu0
    %v4498 = vpop.f32.mrb[0].mxu0
    %v4499 = vadd.f32 0.0, %v4498
    %v4500 = vpop.f32.mrb[0].mxu0
    %4501 = vmatprep.mubr.bf16.mxu0 0
    %4502 = vmatmul.mubr.bf16.gmra.mrb[0].mxu0 %v4436
    %v4503 = vpop.f32.mrb[0].mxu0
    %v4504 = vadd.f32 0.0, %v4503
    %v4505 = vpop.f32.mrb[0].mxu0
    %v4506 = vpop.f32.mrb[0].mxu0
    %v4507 = vadd.f32 0.0, %v4506
    %v4508 = vpop.f32.mrb[0].mxu0
    %4509 = vmatprep.mubr.bf16.mxu0 0
    %4510 = vmatmul.mubr.bf16.gmra.mrb[0].mxu0 %v4439
    %v4511 = vpop.f32.mrb[0].mxu0
    %v4512 = vadd.f32 0.0, %v4511
    %v4513 = vpop.f32.mrb[0].mxu0
    %v4514 = vpop.f32.mrb[0].mxu0
    %v4515 = vadd.f32 0.0, %v4514
    %v4516 = vpop.f32.mrb[0].mxu0
    %4517 = vmatprep.mubr.bf16.mxu0 0
    %4518 = vmatmul.mubr.bf16.gmra.mrb[0].mxu0 %v4442
    %v4519 = vpop.f32.mrb[0].mxu0
    %v4520 = vadd.f32 0.0, %v4519
    %v4521 = vpop.f32.mrb[0].mxu0
    %v4522 = vpop.f32.mrb[0].mxu0
    %v4523 = vadd.f32 0.0, %v4522
    %v4524 = vpop.f32.mrb[0].mxu0
    %4525 = vmatprep.mubr.bf16.mxu0 0
    %4526 = vmatmul.mubr.bf16.gmra.mrb[0].mxu0 %v4445
    %v4527 = vpop.f32.mrb[0].mxu0
    %v4528 = vadd.f32 0.0, %v4527
    %v4529 = vpop.f32.mrb[0].mxu0
    %v4530 = vpop.f32.mrb[0].mxu0
    %v4531 = vadd.f32 0.0, %v4530
    %v4532 = vpop.f32.mrb[0].mxu0
    %4533 = vmatprep.mubr.bf16.mxu0 0
    %4534 = vmatmul.mubr.bf16.gmra.mrb[0].mxu0 %v4448
    %v4535 = vpop.f32.mrb[0].mxu0
    %v4536 = vadd.f32 0.0, %v4535
    %v4537 = vpop.f32.mrb[0].mxu0
    %v4538 = vpop.f32.mrb[0].mxu0
    %v4539 = vadd.f32 0.0, %v4538
    %v4540 = vpop.f32.mrb[0].mxu0
    %4541 = vmatprep.mubr.bf16.mxu0 0
    %4542 = vmatmul.mubr.bf16.gmra.mrb[0].mxu0 %v4451
    %v4543 = vpop.f32.mrb[0].mxu0
    %v4544 = vadd.f32 0.0, %v4543
    %v4545 = vpop.f32.mrb[0].mxu0
    %v4546 = vpop.f32.mrb[0].mxu0
    %v4547 = vadd.f32 0.0, %v4546
    %v4548 = vpop.f32.mrb[0].mxu0
    %4549 = vdwg.mxu0
    %v4554 = vunpack.c.l.b16 %v4101
    %v4555 = vunpack.c.l.b16 %v4102
    %v4556 = vunpack.c.l.b16 %v4103
    %v4557 = vunpack.c.l.b16 %v4104
    %v4558 = vpack.c.b16 %v4555, %v4554
    %v4559 = vpack.c.b16 %v4557, %v4556
    %v4563 = vsel %vm152, %v4163, 0
    %4565 = vmatprep.subr.bf16.mxu0 0
    %4566 = vmatpush1.bf16.msra.mxu0 %v4558
    %4567 = vmatprep.subr.bf16.mxu0 0
    %4568 = vmatpush1.bf16.msra.mxu0 %v4559
    %4569 = vmatprep.subr.bf16.mxu0 0
    %4570 = vmatpush1.bf16.msra.mxu0 0
    %4571 = vmatprep.subr.bf16.mxu0 0
    %4572 = vmatpush1.bf16.msra.mxu0 0
    %4573 = vmatprep.subr.bf16.mxu0 0
    %4574 = vmatpush1.bf16.msra.mxu0 0
    %4575 = vmatprep.subr.bf16.mxu0 0
    %4576 = vmatpush1.bf16.msra.mxu0 0
    %4577 = vmatprep.subr.bf16.mxu0 0
    %4578 = vmatpush1.bf16.msra.mxu0 0
    %4579 = vmatprep.subr.bf16.mxu0 0
    %4580 = vmatpush1.bf16.msra.mxu0 0
    %4581 = vmatprep.subr.bf16.mxu0 0
    %4582 = vmatpush1.bf16.msra.mxu0 0
    %4583 = vmatprep.subr.bf16.mxu0 0
    %4584 = vmatpush1.bf16.msra.mxu0 0
    %4585 = vmatprep.subr.bf16.mxu0 0
    %4586 = vmatpush1.bf16.msra.mxu0 0
    %4587 = vmatprep.subr.bf16.mxu0 0
    %4588 = vmatpush1.bf16.msra.mxu0 0
    %4589 = vmatprep.subr.bf16.mxu0 0
    %4590 = vmatpush1.bf16.msra.mxu0 0
    %4591 = vmatprep.subr.bf16.mxu0 0
    %4592 = vmatpush1.bf16.msra.mxu0 0
    %4593 = vmatprep.subr.bf16.mxu0 0
    %4594 = vmatpush1.bf16.msra.mxu0 0
    %4595 = vmatprep.subr.bf16.mxu0 0
    %4596 = vmatpush1.bf16.msra.mxu0 0
    %4597 = vmatprep.mubr.bf16.mxu0 0
    %4598 = vmatmul.mubr.bf16.gmra.mrb[0].mxu0 %v4563
    %v4599 = vpop.f32.mrb[0].mxu0
    %v4600 = vadd.f32 0.0, %v4599
    %v4601 = vpop.f32.mrb[0].mxu0
    %v4602 = vpop.f32.mrb[0].mxu0
    %v4603 = vadd.f32 0.0, %v4602
    %v4604 = vpop.f32.mrb[0].mxu0
    %4605 = vdwg.mxu0
    %v4610 = vunpack.c.l.b16 %v4118
    %v4611 = vunpack.c.l.b16 %v4119
    %v4612 = vunpack.c.l.b16 %v4120
    %v4613 = vunpack.c.l.b16 %v4121
    %v4614 = vpack.c.b16 %v4611, %v4610
    %v4615 = vpack.c.b16 %v4613, %v4612
    %4618 = vmatprep.subr.bf16.mxu0 0
    %4619 = vmatpush1.bf16.msra.mxu0 %v4614
    %4620 = vmatprep.subr.bf16.mxu0 0
    %4621 = vmatpush1.bf16.msra.mxu0 %v4615
    %4622 = vmatprep.subr.bf16.mxu0 0
    %4623 = vmatpush1.bf16.msra.mxu0 0
    %4624 = vmatprep.subr.bf16.mxu0 0
    %4625 = vmatpush1.bf16.msra.mxu0 0
    %4626 = vmatprep.subr.bf16.mxu0 0
    %4627 = vmatpush1.bf16.msra.mxu0 0
    %4628 = vmatprep.subr.bf16.mxu0 0
    %4629 = vmatpush1.bf16.msra.mxu0 0
    %4630 = vmatprep.subr.bf16.mxu0 0
    %4631 = vmatpush1.bf16.msra.mxu0 0
    %4632 = vmatprep.subr.bf16.mxu0 0
    %4633 = vmatpush1.bf16.msra.mxu0 0
    %4634 = vmatprep.subr.bf16.mxu0 0
    %4635 = vmatpush1.bf16.msra.mxu0 0
    %4636 = vmatprep.subr.bf16.mxu0 0
    %4637 = vmatpush1.bf16.msra.mxu0 0
    %4638 = vmatprep.subr.bf16.mxu0 0
    %4639 = vmatpush1.bf16.msra.mxu0 0
    %4640 = vmatprep.subr.bf16.mxu0 0
    %4641 = vmatpush1.bf16.msra.mxu0 0
    %4642 = vmatprep.subr.bf16.mxu0 0
    %4643 = vmatpush1.bf16.msra.mxu0 0
    %4644 = vmatprep.subr.bf16.mxu0 0
    %4645 = vmatpush1.bf16.msra.mxu0 0
    %4646 = vmatprep.subr.bf16.mxu0 0
    %4647 = vmatpush1.bf16.msra.mxu0 0
    %4648 = vmatprep.subr.bf16.mxu0 0
    %4649 = vmatpush1.bf16.msra.mxu0 0
    %4650 = vmatprep.mubr.bf16.mxu0 0
    %4651 = vmatmul.mubr.bf16.gmra.mrb[0].mxu0 %v4563
    %v4652 = vpop.f32.mrb[0].mxu0
    %v4653 = vadd.f32 0.0, %v4652
    %v4654 = vpop.f32.mrb[0].mxu0
    %v4655 = vpop.f32.mrb[0].mxu0
    %v4656 = vadd.f32 0.0, %v4655
    %v4657 = vpop.f32.mrb[0].mxu0
    %4658 = vdwg.mxu0
    %v4663 = vunpack.c.l.b16 %v4135
    %v4664 = vunpack.c.l.b16 %v4136
    %v4665 = vunpack.c.l.b16 %v4137
    %v4666 = vunpack.c.l.b16 %v4138
    %v4667 = vpack.c.b16 %v4664, %v4663
    %v4668 = vpack.c.b16 %v4666, %v4665
    %4671 = vmatprep.subr.bf16.mxu0 0
    %4672 = vmatpush1.bf16.msra.mxu0 %v4667
    %4673 = vmatprep.subr.bf16.mxu0 0
    %4674 = vmatpush1.bf16.msra.mxu0 %v4668
    %4675 = vmatprep.subr.bf16.mxu0 0
    %4676 = vmatpush1.bf16.msra.mxu0 0
    %4677 = vmatprep.subr.bf16.mxu0 0
    %4678 = vmatpush1.bf16.msra.mxu0 0
    %4679 = vmatprep.subr.bf16.mxu0 0
    %4680 = vmatpush1.bf16.msra.mxu0 0
    %4681 = vmatprep.subr.bf16.mxu0 0
    %4682 = vmatpush1.bf16.msra.mxu0 0
    %4683 = vmatprep.subr.bf16.mxu0 0
    %4684 = vmatpush1.bf16.msra.mxu0 0
    %4685 = vmatprep.subr.bf16.mxu0 0
    %4686 = vmatpush1.bf16.msra.mxu0 0
    %4687 = vmatprep.subr.bf16.mxu0 0
    %4688 = vmatpush1.bf16.msra.mxu0 0
    %4689 = vmatprep.subr.bf16.mxu0 0
    %4690 = vmatpush1.bf16.msra.mxu0 0
    %4691 = vmatprep.subr.bf16.mxu0 0
    %4692 = vmatpush1.bf16.msra.mxu0 0
    %4693 = vmatprep.subr.bf16.mxu0 0
    %4694 = vmatpush1.bf16.msra.mxu0 0
    %4695 = vmatprep.subr.bf16.mxu0 0
    %4696 = vmatpush1.bf16.msra.mxu0 0
    %4697 = vmatprep.subr.bf16.mxu0 0
    %4698 = vmatpush1.bf16.msra.mxu0 0
    %4699 = vmatprep.subr.bf16.mxu0 0
    %4700 = vmatpush1.bf16.msra.mxu0 0
    %4701 = vmatprep.subr.bf16.mxu0 0
    %4702 = vmatpush1.bf16.msra.mxu0 0
    %4703 = vmatprep.mubr.bf16.mxu0 0
    %4704 = vmatmul.mubr.bf16.gmra.mrb[0].mxu0 %v4563
    %v4705 = vpop.f32.mrb[0].mxu0
    %v4706 = vadd.f32 0.0, %v4705
    %v4707 = vpop.f32.mrb[0].mxu0
    %v4708 = vpop.f32.mrb[0].mxu0
    %v4709 = vadd.f32 0.0, %v4708
    %v4710 = vpop.f32.mrb[0].mxu0
    %4711 = vdwg.mxu0
    %v4716 = vunpack.c.l.b16 %v4105
    %v4717 = vunpack.c.l.b16 %v4106
    %v4718 = vunpack.c.l.b16 %v4107
    %v4719 = vunpack.c.l.b16 %v4108
    %v4720 = vpack.c.b16 %v4717, %v4716
    %v4721 = vpack.c.b16 %v4719, %v4718
    %4724 = vmatprep.subr.bf16.mxu0 0
    %4725 = vmatpush1.bf16.msra.mxu0 %v4720
    %4726 = vmatprep.subr.bf16.mxu0 0
    %4727 = vmatpush1.bf16.msra.mxu0 %v4721
    %4728 = vmatprep.subr.bf16.mxu0 0
    %4729 = vmatpush1.bf16.msra.mxu0 0
    %4730 = vmatprep.subr.bf16.mxu0 0
    %4731 = vmatpush1.bf16.msra.mxu0 0
    %4732 = vmatprep.subr.bf16.mxu0 0
    %4733 = vmatpush1.bf16.msra.mxu0 0
    %4734 = vmatprep.subr.bf16.mxu0 0
    %4735 = vmatpush1.bf16.msra.mxu0 0
    %4736 = vmatprep.subr.bf16.mxu0 0
    %4737 = vmatpush1.bf16.msra.mxu0 0
    %4738 = vmatprep.subr.bf16.mxu0 0
    %4739 = vmatpush1.bf16.msra.mxu0 0
    %4740 = vmatprep.subr.bf16.mxu0 0
    %4741 = vmatpush1.bf16.msra.mxu0 0
    %4742 = vmatprep.subr.bf16.mxu0 0
    %4743 = vmatpush1.bf16.msra.mxu0 0
    %4744 = vmatprep.subr.bf16.mxu0 0
    %4745 = vmatpush1.bf16.msra.mxu0 0
    %4746 = vmatprep.subr.bf16.mxu0 0
    %4747 = vmatpush1.bf16.msra.mxu0 0
    %4748 = vmatprep.subr.bf16.mxu0 0
    %4749 = vmatpush1.bf16.msra.mxu0 0
    %4750 = vmatprep.subr.bf16.mxu0 0
    %4751 = vmatpush1.bf16.msra.mxu0 0
    %4752 = vmatprep.subr.bf16.mxu0 0
    %4753 = vmatpush1.bf16.msra.mxu0 0
    %4754 = vmatprep.subr.bf16.mxu0 0
    %4755 = vmatpush1.bf16.msra.mxu0 0
    %4756 = vmatprep.mubr.bf16.mxu0 0
    %4757 = vmatmul.mubr.bf16.gmra.mrb[0].mxu0 %v4563
    %v4758 = vpop.f32.mrb[0].mxu0
    %v4759 = vadd.f32 0.0, %v4758
    %v4760 = vpop.f32.mrb[0].mxu0
    %v4761 = vpop.f32.mrb[0].mxu0
    %v4762 = vadd.f32 0.0, %v4761
    %v4763 = vpop.f32.mrb[0].mxu0
    %4764 = vdwg.mxu0
    %v4769 = vunpack.c.l.b16 %v4122
    %v4770 = vunpack.c.l.b16 %v4123
    %v4771 = vunpack.c.l.b16 %v4124
    %v4772 = vunpack.c.l.b16 %v4125
    %v4773 = vpack.c.b16 %v4770, %v4769
    %v4774 = vpack.c.b16 %v4772, %v4771
    %4777 = vmatprep.subr.bf16.mxu0 0
    %4778 = vmatpush1.bf16.msra.mxu0 %v4773
    %4779 = vmatprep.subr.bf16.mxu0 0
    %4780 = vmatpush1.bf16.msra.mxu0 %v4774
    %4781 = vmatprep.subr.bf16.mxu0 0
    %4782 = vmatpush1.bf16.msra.mxu0 0
    %4783 = vmatprep.subr.bf16.mxu0 0
    %4784 = vmatpush1.bf16.msra.mxu0 0
    %4785 = vmatprep.subr.bf16.mxu0 0
    %4786 = vmatpush1.bf16.msra.mxu0 0
    %4787 = vmatprep.subr.bf16.mxu0 0
    %4788 = vmatpush1.bf16.msra.mxu0 0
    %4789 = vmatprep.subr.bf16.mxu0 0
    %4790 = vmatpush1.bf16.msra.mxu0 0
    %4791 = vmatprep.subr.bf16.mxu0 0
    %4792 = vmatpush1.bf16.msra.mxu0 0
    %4793 = vmatprep.subr.bf16.mxu0 0
    %4794 = vmatpush1.bf16.msra.mxu0 0
    %4795 = vmatprep.subr.bf16.mxu0 0
    %4796 = vmatpush1.bf16.msra.mxu0 0
    %4797 = vmatprep.subr.bf16.mxu0 0
    %4798 = vmatpush1.bf16.msra.mxu0 0
    %4799 = vmatprep.subr.bf16.mxu0 0
    %4800 = vmatpush1.bf16.msra.mxu0 0
    %4801 = vmatprep.subr.bf16.mxu0 0
    %4802 = vmatpush1.bf16.msra.mxu0 0
    %4803 = vmatprep.subr.bf16.mxu0 0
    %4804 = vmatpush1.bf16.msra.mxu0 0
    %4805 = vmatprep.subr.bf16.mxu0 0
    %4806 = vmatpush1.bf16.msra.mxu0 0
    %4807 = vmatprep.subr.bf16.mxu0 0
    %4808 = vmatpush1.bf16.msra.mxu0 0
    %4809 = vmatprep.mubr.bf16.mxu0 0
    %4810 = vmatmul.mubr.bf16.gmra.mrb[0].mxu0 %v4563
    %v4811 = vpop.f32.mrb[0].mxu0
    %v4812 = vadd.f32 0.0, %v4811
    %v4813 = vpop.f32.mrb[0].mxu0
    %v4814 = vpop.f32.mrb[0].mxu0
    %v4815 = vadd.f32 0.0, %v4814
    %v4816 = vpop.f32.mrb[0].mxu0
    %4817 = vdwg.mxu0
    %v4822 = vunpack.c.l.b16 %v4139
    %v4823 = vunpack.c.l.b16 %v4140
    %v4824 = vunpack.c.l.b16 %v4141
    %v4825 = vunpack.c.l.b16 %v4142
    %v4826 = vpack.c.b16 %v4823, %v4822
    %v4827 = vpack.c.b16 %v4825, %v4824
    %4830 = vmatprep.subr.bf16.mxu0 0
    %4831 = vmatpush1.bf16.msra.mxu0 %v4826
    %4832 = vmatprep.subr.bf16.mxu0 0
    %4833 = vmatpush1.bf16.msra.mxu0 %v4827
    %4834 = vmatprep.subr.bf16.mxu0 0
    %4835 = vmatpush1.bf16.msra.mxu0 0
    %4836 = vmatprep.subr.bf16.mxu0 0
    %4837 = vmatpush1.bf16.msra.mxu0 0
    %4838 = vmatprep.subr.bf16.mxu0 0
    %4839 = vmatpush1.bf16.msra.mxu0 0
    %4840 = vmatprep.subr.bf16.mxu0 0
    %4841 = vmatpush1.bf16.msra.mxu0 0
    %4842 = vmatprep.subr.bf16.mxu0 0
    %4843 = vmatpush1.bf16.msra.mxu0 0
    %4844 = vmatprep.subr.bf16.mxu0 0
    %4845 = vmatpush1.bf16.msra.mxu0 0
    %4846 = vmatprep.subr.bf16.mxu0 0
    %4847 = vmatpush1.bf16.msra.mxu0 0
    %4848 = vmatprep.subr.bf16.mxu0 0
    %4849 = vmatpush1.bf16.msra.mxu0 0
    %4850 = vmatprep.subr.bf16.mxu0 0
    %4851 = vmatpush1.bf16.msra.mxu0 0
    %4852 = vmatprep.subr.bf16.mxu0 0
    %4853 = vmatpush1.bf16.msra.mxu0 0
    %4854 = vmatprep.subr.bf16.mxu0 0
    %4855 = vmatpush1.bf16.msra.mxu0 0
    %4856 = vmatprep.subr.bf16.mxu0 0
    %4857 = vmatpush1.bf16.msra.mxu0 0
    %4858 = vmatprep.subr.bf16.mxu0 0
    %4859 = vmatpush1.bf16.msra.mxu0 0
    %4860 = vmatprep.subr.bf16.mxu0 0
    %4861 = vmatpush1.bf16.msra.mxu0 0
    %4862 = vmatprep.mubr.bf16.mxu0 0
    %4863 = vmatmul.mubr.bf16.gmra.mrb[0].mxu0 %v4563
    %v4864 = vpop.f32.mrb[0].mxu0
    %v4865 = vadd.f32 0.0, %v4864
    %v4866 = vpop.f32.mrb[0].mxu0
    %v4867 = vpop.f32.mrb[0].mxu0
    %v4868 = vadd.f32 0.0, %v4867
    %v4869 = vpop.f32.mrb[0].mxu0
    %4870 = vdwg.mxu0
    %v4875 = vunpack.c.l.b16 %v4109
    %v4876 = vunpack.c.l.b16 %v4110
    %v4877 = vunpack.c.l.b16 %v4111
    %v4878 = vunpack.c.l.b16 %v4112
    %v4879 = vpack.c.b16 %v4876, %v4875
    %v4880 = vpack.c.b16 %v4878, %v4877
    %4883 = vmatprep.subr.bf16.mxu0 0
    %4884 = vmatpush1.bf16.msra.mxu0 %v4879
    %4885 = vmatprep.subr.bf16.mxu0 0
    %4886 = vmatpush1.bf16.msra.mxu0 %v4880
    %4887 = vmatprep.subr.bf16.mxu0 0
    %4888 = vmatpush1.bf16.msra.mxu0 0
    %4889 = vmatprep.subr.bf16.mxu0 0
    %4890 = vmatpush1.bf16.msra.mxu0 0
    %4891 = vmatprep.subr.bf16.mxu0 0
    %4892 = vmatpush1.bf16.msra.mxu0 0
    %4893 = vmatprep.subr.bf16.mxu0 0
    %4894 = vmatpush1.bf16.msra.mxu0 0
    %4895 = vmatprep.subr.bf16.mxu0 0
    %4896 = vmatpush1.bf16.msra.mxu0 0
    %4897 = vmatprep.subr.bf16.mxu0 0
    %4898 = vmatpush1.bf16.msra.mxu0 0
    %4899 = vmatprep.subr.bf16.mxu0 0
    %4900 = vmatpush1.bf16.msra.mxu0 0
    %4901 = vmatprep.subr.bf16.mxu0 0
    %4902 = vmatpush1.bf16.msra.mxu0 0
    %4903 = vmatprep.subr.bf16.mxu0 0
    %4904 = vmatpush1.bf16.msra.mxu0 0
    %4905 = vmatprep.subr.bf16.mxu0 0
    %4906 = vmatpush1.bf16.msra.mxu0 0
    %4907 = vmatprep.subr.bf16.mxu0 0
    %4908 = vmatpush1.bf16.msra.mxu0 0
    %4909 = vmatprep.subr.bf16.mxu0 0
    %4910 = vmatpush1.bf16.msra.mxu0 0
    %4911 = vmatprep.subr.bf16.mxu0 0
    %4912 = vmatpush1.bf16.msra.mxu0 0
    %4913 = vmatprep.subr.bf16.mxu0 0
    %4914 = vmatpush1.bf16.msra.mxu0 0
    %4915 = vmatprep.mubr.bf16.mxu0 0
    %4916 = vmatmul.mubr.bf16.gmra.mrb[0].mxu0 %v4563
    %v4917 = vpop.f32.mrb[0].mxu0
    %v4918 = vadd.f32 0.0, %v4917
    %v4919 = vpop.f32.mrb[0].mxu0
    %v4920 = vpop.f32.mrb[0].mxu0
    %v4921 = vadd.f32 0.0, %v4920
    %v4922 = vpop.f32.mrb[0].mxu0
    %4923 = vdwg.mxu0
    %v4928 = vunpack.c.l.b16 %v4126
    %v4929 = vunpack.c.l.b16 %v4127
    %v4930 = vunpack.c.l.b16 %v4128
    %v4931 = vunpack.c.l.b16 %v4129
    %v4932 = vpack.c.b16 %v4929, %v4928
    %v4933 = vpack.c.b16 %v4931, %v4930
    %4936 = vmatprep.subr.bf16.mxu0 0
    %4937 = vmatpush1.bf16.msra.mxu0 %v4932
    %4938 = vmatprep.subr.bf16.mxu0 0
    %4939 = vmatpush1.bf16.msra.mxu0 %v4933
    %4940 = vmatprep.subr.bf16.mxu0 0
    %4941 = vmatpush1.bf16.msra.mxu0 0
    %4942 = vmatprep.subr.bf16.mxu0 0
    %4943 = vmatpush1.bf16.msra.mxu0 0
    %4944 = vmatprep.subr.bf16.mxu0 0
    %4945 = vmatpush1.bf16.msra.mxu0 0
    %4946 = vmatprep.subr.bf16.mxu0 0
    %4947 = vmatpush1.bf16.msra.mxu0 0
    %4948 = vmatprep.subr.bf16.mxu0 0
    %4949 = vmatpush1.bf16.msra.mxu0 0
    %4950 = vmatprep.subr.bf16.mxu0 0
    %4951 = vmatpush1.bf16.msra.mxu0 0
    %4952 = vmatprep.subr.bf16.mxu0 0
    %4953 = vmatpush1.bf16.msra.mxu0 0
    %4954 = vmatprep.subr.bf16.mxu0 0
    %4955 = vmatpush1.bf16.msra.mxu0 0
    %4956 = vmatprep.subr.bf16.mxu0 0
    %4957 = vmatpush1.bf16.msra.mxu0 0
    %4958 = vmatprep.subr.bf16.mxu0 0
    %4959 = vmatpush1.bf16.msra.mxu0 0
    %4960 = vmatprep.subr.bf16.mxu0 0
    %4961 = vmatpush1.bf16.msra.mxu0 0
    %4962 = vmatprep.subr.bf16.mxu0 0
    %4963 = vmatpush1.bf16.msra.mxu0 0
    %4964 = vmatprep.subr.bf16.mxu0 0
    %4965 = vmatpush1.bf16.msra.mxu0 0
    %4966 = vmatprep.subr.bf16.mxu0 0
    %4967 = vmatpush1.bf16.msra.mxu0 0
    %4968 = vmatprep.mubr.bf16.mxu0 0
    %4969 = vmatmul.mubr.bf16.gmra.mrb[0].mxu0 %v4563
    %v4970 = vpop.f32.mrb[0].mxu0
    %v4971 = vadd.f32 0.0, %v4970
    %v4972 = vpop.f32.mrb[0].mxu0
    %v4973 = vpop.f32.mrb[0].mxu0
    %v4974 = vadd.f32 0.0, %v4973
    %v4975 = vpop.f32.mrb[0].mxu0
    %4976 = vdwg.mxu0
    %v4981 = vunpack.c.l.b16 %v4143
    %v4982 = vunpack.c.l.b16 %v4144
    %v4983 = vunpack.c.l.b16 %v4145
    %v4984 = vunpack.c.l.b16 %v4146
    %v4985 = vpack.c.b16 %v4982, %v4981
    %v4986 = vpack.c.b16 %v4984, %v4983
    %4989 = vmatprep.subr.bf16.mxu0 0
    %4990 = vmatpush1.bf16.msra.mxu0 %v4985
    %4991 = vmatprep.subr.bf16.mxu0 0
    %4992 = vmatpush1.bf16.msra.mxu0 %v4986
    %4993 = vmatprep.subr.bf16.mxu0 0
    %4994 = vmatpush1.bf16.msra.mxu0 0
    %4995 = vmatprep.subr.bf16.mxu0 0
    %4996 = vmatpush1.bf16.msra.mxu0 0
    %4997 = vmatprep.subr.bf16.mxu0 0
    %4998 = vmatpush1.bf16.msra.mxu0 0
    %4999 = vmatprep.subr.bf16.mxu0 0
    %5000 = vmatpush1.bf16.msra.mxu0 0
    %5001 = vmatprep.subr.bf16.mxu0 0
    %5002 = vmatpush1.bf16.msra.mxu0 0
    %5003 = vmatprep.subr.bf16.mxu0 0
    %5004 = vmatpush1.bf16.msra.mxu0 0
    %5005 = vmatprep.subr.bf16.mxu0 0
    %5006 = vmatpush1.bf16.msra.mxu0 0
    %5007 = vmatprep.subr.bf16.mxu0 0
    %5008 = vmatpush1.bf16.msra.mxu0 0
    %5009 = vmatprep.subr.bf16.mxu0 0
    %5010 = vmatpush1.bf16.msra.mxu0 0
    %5011 = vmatprep.subr.bf16.mxu0 0
    %5012 = vmatpush1.bf16.msra.mxu0 0
    %5013 = vmatprep.subr.bf16.mxu0 0
    %5014 = vmatpush1.bf16.msra.mxu0 0
    %5015 = vmatprep.subr.bf16.mxu0 0
    %5016 = vmatpush1.bf16.msra.mxu0 0
    %5017 = vmatprep.subr.bf16.mxu0 0
    %5018 = vmatpush1.bf16.msra.mxu0 0
    %5019 = vmatprep.subr.bf16.mxu0 0
    %5020 = vmatpush1.bf16.msra.mxu0 0
    %5021 = vmatprep.mubr.bf16.mxu0 0
    %5022 = vmatmul.mubr.bf16.gmra.mrb[0].mxu0 %v4563
    %v5023 = vpop.f32.mrb[0].mxu0
    %v5024 = vadd.f32 0.0, %v5023
    %v5025 = vpop.f32.mrb[0].mxu0
    %v5026 = vpop.f32.mrb[0].mxu0
    %v5027 = vadd.f32 0.0, %v5026
    %v5028 = vpop.f32.mrb[0].mxu0
    %5029 = vdwg.mxu0
    %v5034 = vunpack.c.l.b16 %v4113
    %v5035 = vunpack.c.l.b16 %v4114
    %v5036 = vunpack.c.l.b16 %v4115
    %v5037 = vunpack.c.l.b16 %v4116
    %v5038 = vpack.c.b16 %v5035, %v5034
    %v5039 = vpack.c.b16 %v5037, %v5036
    %5042 = vmatprep.subr.bf16.mxu0 0
    %5043 = vmatpush1.bf16.msra.mxu0 %v5038
    %5044 = vmatprep.subr.bf16.mxu0 0
    %5045 = vmatpush1.bf16.msra.mxu0 %v5039
    %5046 = vmatprep.subr.bf16.mxu0 0
    %5047 = vmatpush1.bf16.msra.mxu0 0
    %5048 = vmatprep.subr.bf16.mxu0 0
    %5049 = vmatpush1.bf16.msra.mxu0 0
    %5050 = vmatprep.subr.bf16.mxu0 0
    %5051 = vmatpush1.bf16.msra.mxu0 0
    %5052 = vmatprep.subr.bf16.mxu0 0
    %5053 = vmatpush1.bf16.msra.mxu0 0
    %5054 = vmatprep.subr.bf16.mxu0 0
    %5055 = vmatpush1.bf16.msra.mxu0 0
    %5056 = vmatprep.subr.bf16.mxu0 0
    %5057 = vmatpush1.bf16.msra.mxu0 0
    %5058 = vmatprep.subr.bf16.mxu0 0
    %5059 = vmatpush1.bf16.msra.mxu0 0
    %5060 = vmatprep.subr.bf16.mxu0 0
    %5061 = vmatpush1.bf16.msra.mxu0 0
    %5062 = vmatprep.subr.bf16.mxu0 0
    %5063 = vmatpush1.bf16.msra.mxu0 0
    %5064 = vmatprep.subr.bf16.mxu0 0
    %5065 = vmatpush1.bf16.msra.mxu0 0
    %5066 = vmatprep.subr.bf16.mxu0 0
    %5067 = vmatpush1.bf16.msra.mxu0 0
    %5068 = vmatprep.subr.bf16.mxu0 0
    %5069 = vmatpush1.bf16.msra.mxu0 0
    %5070 = vmatprep.subr.bf16.mxu0 0
    %5071 = vmatpush1.bf16.msra.mxu0 0
    %5072 = vmatprep.subr.bf16.mxu0 0
    %5073 = vmatpush1.bf16.msra.mxu0 0
    %5074 = vmatprep.mubr.bf16.mxu0 0
    %5075 = vmatmul.mubr.bf16.gmra.mrb[0].mxu0 %v4563
    %v5076 = vpop.f32.mrb[0].mxu0
    %v5077 = vadd.f32 0.0, %v5076
    %v5078 = vpop.f32.mrb[0].mxu0
    %v5079 = vpop.f32.mrb[0].mxu0
    %v5080 = vadd.f32 0.0, %v5079
    %v5081 = vpop.f32.mrb[0].mxu0
    %5082 = vdwg.mxu0
    %v5087 = vunpack.c.l.b16 %v4130
    %v5088 = vunpack.c.l.b16 %v4131
    %v5089 = vunpack.c.l.b16 %v4132
    %v5090 = vunpack.c.l.b16 %v4133
    %v5091 = vpack.c.b16 %v5088, %v5087
    %v5092 = vpack.c.b16 %v5090, %v5089
    %5095 = vmatprep.subr.bf16.mxu0 0
    %5096 = vmatpush1.bf16.msra.mxu0 %v5091
    %5097 = vmatprep.subr.bf16.mxu0 0
    %5098 = vmatpush1.bf16.msra.mxu0 %v5092
    %5099 = vmatprep.subr.bf16.mxu0 0
    %5100 = vmatpush1.bf16.msra.mxu0 0
    %5101 = vmatprep.subr.bf16.mxu0 0
    %5102 = vmatpush1.bf16.msra.mxu0 0
    %5103 = vmatprep.subr.bf16.mxu0 0
    %5104 = vmatpush1.bf16.msra.mxu0 0
    %5105 = vmatprep.subr.bf16.mxu0 0
    %5106 = vmatpush1.bf16.msra.mxu0 0
    %5107 = vmatprep.subr.bf16.mxu0 0
    %5108 = vmatpush1.bf16.msra.mxu0 0
    %5109 = vmatprep.subr.bf16.mxu0 0
    %5110 = vmatpush1.bf16.msra.mxu0 0
    %5111 = vmatprep.subr.bf16.mxu0 0
    %5112 = vmatpush1.bf16.msra.mxu0 0
    %5113 = vmatprep.subr.bf16.mxu0 0
    %5114 = vmatpush1.bf16.msra.mxu0 0
    %5115 = vmatprep.subr.bf16.mxu0 0
    %5116 = vmatpush1.bf16.msra.mxu0 0
    %5117 = vmatprep.subr.bf16.mxu0 0
    %5118 = vmatpush1.bf16.msra.mxu0 0
    %5119 = vmatprep.subr.bf16.mxu0 0
    %5120 = vmatpush1.bf16.msra.mxu0 0
    %5121 = vmatprep.subr.bf16.mxu0 0
    %5122 = vmatpush1.bf16.msra.mxu0 0
    %5123 = vmatprep.subr.bf16.mxu0 0
    %5124 = vmatpush1.bf16.msra.mxu0 0
    %5125 = vmatprep.subr.bf16.mxu0 0
    %5126 = vmatpush1.bf16.msra.mxu0 0
    %5127 = vmatprep.mubr.bf16.mxu0 0
    %5128 = vmatmul.mubr.bf16.gmra.mrb[0].mxu0 %v4563
    %v5129 = vpop.f32.mrb[0].mxu0
    %v5130 = vadd.f32 0.0, %v5129
    %v5131 = vpop.f32.mrb[0].mxu0
    %v5132 = vpop.f32.mrb[0].mxu0
    %v5133 = vadd.f32 0.0, %v5132
    %v5134 = vpop.f32.mrb[0].mxu0
    %5135 = vdwg.mxu0
    %v5140 = vunpack.c.l.b16 %v4147
    %v5141 = vunpack.c.l.b16 %v4148
    %v5142 = vunpack.c.l.b16 %v4149
    %v5143 = vunpack.c.l.b16 %v4150
    %v5144 = vpack.c.b16 %v5141, %v5140
    %v5145 = vpack.c.b16 %v5143, %v5142
    %5148 = vmatprep.subr.bf16.mxu0 0
    %5149 = vmatpush1.bf16.msra.mxu0 %v5144
    %5150 = vmatprep.subr.bf16.mxu0 0
    %5151 = vmatpush1.bf16.msra.mxu0 %v5145
    %5152 = vmatprep.subr.bf16.mxu0 0
    %5153 = vmatpush1.bf16.msra.mxu0 0
    %5154 = vmatprep.subr.bf16.mxu0 0
    %5155 = vmatpush1.bf16.msra.mxu0 0
    %5156 = vmatprep.subr.bf16.mxu0 0
    %5157 = vmatpush1.bf16.msra.mxu0 0
    %5158 = vmatprep.subr.bf16.mxu0 0
    %5159 = vmatpush1.bf16.msra.mxu0 0
    %5160 = vmatprep.subr.bf16.mxu0 0
    %5161 = vmatpush1.bf16.msra.mxu0 0
    %5162 = vmatprep.subr.bf16.mxu0 0
    %5163 = vmatpush1.bf16.msra.mxu0 0
    %5164 = vmatprep.subr.bf16.mxu0 0
    %5165 = vmatpush1.bf16.msra.mxu0 0
    %5166 = vmatprep.subr.bf16.mxu0 0
    %5167 = vmatpush1.bf16.msra.mxu0 0
    %5168 = vmatprep.subr.bf16.mxu0 0
    %5169 = vmatpush1.bf16.msra.mxu0 0
    %5170 = vmatprep.subr.bf16.mxu0 0
    %5171 = vmatpush1.bf16.msra.mxu0 0
    %5172 = vmatprep.subr.bf16.mxu0 0
    %5173 = vmatpush1.bf16.msra.mxu0 0
    %5174 = vmatprep.subr.bf16.mxu0 0
    %5175 = vmatpush1.bf16.msra.mxu0 0
    %5176 = vmatprep.subr.bf16.mxu0 0
    %5177 = vmatpush1.bf16.msra.mxu0 0
    %5178 = vmatprep.subr.bf16.mxu0 0
    %5179 = vmatpush1.bf16.msra.mxu0 0
    %5180 = vmatprep.mubr.bf16.mxu0 0
    %5181 = vmatmul.mubr.bf16.gmra.mrb[0].mxu0 %v4563
    %v5182 = vpop.f32.mrb[0].mxu0
    %v5183 = vadd.f32 0.0, %v5182
    %v5184 = vpop.f32.mrb[0].mxu0
    %v5185 = vpop.f32.mrb[0].mxu0
    %v5186 = vadd.f32 0.0, %v5185
    %v5187 = vpop.f32.mrb[0].mxu0
    %5188 = vdwg.mxu0
    %5205 = vrot.lane.b32.xlu0 %v4488, 127
    %v5206 = vpop.permute.xlu0 %5205
    %5207 = vrot.lane.b32.xlu0 %v4491, 127
    %v5208 = vpop.permute.xlu0 %5207
    %5209 = vrot.lane.b32.xlu0 %v4496, 127
    %v5210 = vpop.permute.xlu0 %5209
    %5211 = vrot.lane.b32.xlu0 %v4499, 127
    %v5212 = vpop.permute.xlu0 %5211
    %5213 = vrot.lane.b32.xlu0 %v4504, 127
    %v5214 = vpop.permute.xlu0 %5213
    %5215 = vrot.lane.b32.xlu0 %v4507, 127
    %v5216 = vpop.permute.xlu0 %5215
    %5217 = vrot.lane.b32.xlu0 %v4512, 127
    %v5218 = vpop.permute.xlu0 %5217
    %5219 = vrot.lane.b32.xlu0 %v4515, 127
    %v5220 = vpop.permute.xlu0 %5219
    %5221 = vrot.lane.b32.xlu0 %v4520, 127
    %v5222 = vpop.permute.xlu0 %5221
    %5223 = vrot.lane.b32.xlu0 %v4523, 127
    %v5224 = vpop.permute.xlu0 %5223
    %5225 = vrot.lane.b32.xlu0 %v4528, 127
    %v5226 = vpop.permute.xlu0 %5225
    %5227 = vrot.lane.b32.xlu0 %v4531, 127
    %v5228 = vpop.permute.xlu0 %5227
    %5229 = vrot.lane.b32.xlu0 %v4536, 127
    %v5230 = vpop.permute.xlu0 %5229
    %5231 = vrot.lane.b32.xlu0 %v4539, 127
    %v5232 = vpop.permute.xlu0 %5231
    %5233 = vrot.lane.b32.xlu0 %v4544, 127
    %v5234 = vpop.permute.xlu0 %5233
    %5235 = vrot.lane.b32.xlu0 %v4547, 127
    %v5236 = vpop.permute.xlu0 %5235
    %5237 = vrot.lane.b32.xlu0 %v4488, 126
    %v5238 = vpop.permute.xlu0 %5237
    %5239 = vrot.lane.b32.xlu0 %v4491, 126
    %v5240 = vpop.permute.xlu0 %5239
    %5241 = vrot.lane.b32.xlu0 %v4496, 126
    %v5242 = vpop.permute.xlu0 %5241
    %5243 = vrot.lane.b32.xlu0 %v4499, 126
    %v5244 = vpop.permute.xlu0 %5243
    %5245 = vrot.lane.b32.xlu0 %v4504, 126
    %v5246 = vpop.permute.xlu0 %5245
    %5247 = vrot.lane.b32.xlu0 %v4507, 126
    %v5248 = vpop.permute.xlu0 %5247
    %5249 = vrot.lane.b32.xlu0 %v4512, 126
    %v5250 = vpop.permute.xlu0 %5249
    %5251 = vrot.lane.b32.xlu0 %v4515, 126
    %v5252 = vpop.permute.xlu0 %5251
    %5253 = vrot.lane.b32.xlu0 %v4520, 126
    %v5254 = vpop.permute.xlu0 %5253
    %5255 = vrot.lane.b32.xlu0 %v4523, 126
    %v5256 = vpop.permute.xlu0 %5255
    %5257 = vrot.lane.b32.xlu0 %v4528, 126
    %v5258 = vpop.permute.xlu0 %5257
    %5259 = vrot.lane.b32.xlu0 %v4531, 126
    %v5260 = vpop.permute.xlu0 %5259
    %5261 = vrot.lane.b32.xlu0 %v4536, 126
    %v5262 = vpop.permute.xlu0 %5261
    %5263 = vrot.lane.b32.xlu0 %v4539, 126
    %v5264 = vpop.permute.xlu0 %5263
    %5265 = vrot.lane.b32.xlu0 %v4544, 126
    %v5266 = vpop.permute.xlu0 %5265
    %5267 = vrot.lane.b32.xlu0 %v4547, 126
    %v5268 = vpop.permute.xlu0 %5267
    %5269 = vrot.lane.b32.xlu0 %v4488, 125
    %v5270 = vpop.permute.xlu0 %5269
    %5271 = vrot.lane.b32.xlu0 %v4491, 125
    %v5272 = vpop.permute.xlu0 %5271
    %5273 = vrot.lane.b32.xlu0 %v4496, 125
    %v5274 = vpop.permute.xlu0 %5273
    %5275 = vrot.lane.b32.xlu0 %v4499, 125
    %v5276 = vpop.permute.xlu0 %5275
    %5277 = vrot.lane.b32.xlu0 %v4504, 125
    %v5278 = vpop.permute.xlu0 %5277
    %5279 = vrot.lane.b32.xlu0 %v4507, 125
    %v5280 = vpop.permute.xlu0 %5279
    %5281 = vrot.lane.b32.xlu0 %v4512, 125
    %v5282 = vpop.permute.xlu0 %5281
    %5283 = vrot.lane.b32.xlu0 %v4515, 125
    %v5284 = vpop.permute.xlu0 %5283
    %5285 = vrot.lane.b32.xlu0 %v4520, 125
    %v5286 = vpop.permute.xlu0 %5285
    %5287 = vrot.lane.b32.xlu0 %v4523, 125
    %v5288 = vpop.permute.xlu0 %5287
    %5289 = vrot.lane.b32.xlu0 %v4528, 125
    %v5290 = vpop.permute.xlu0 %5289
    %5291 = vrot.lane.b32.xlu0 %v4531, 125
    %v5292 = vpop.permute.xlu0 %5291
    %5293 = vrot.lane.b32.xlu0 %v4536, 125
    %v5294 = vpop.permute.xlu0 %5293
    %5295 = vrot.lane.b32.xlu0 %v4539, 125
    %v5296 = vpop.permute.xlu0 %5295
    %5297 = vrot.lane.b32.xlu0 %v4544, 125
    %v5298 = vpop.permute.xlu0 %5297
    %5299 = vrot.lane.b32.xlu0 %v4547, 125
    %v5300 = vpop.permute.xlu0 %5299
    %v5301 = vpack.c.bf16 %v4600, %v4600
    %v5302 = vpack.c.bf16 %v4603, %v4603
    %v5303 = vpack.c.bf16 %v4759, %v4759
    %v5304 = vpack.c.bf16 %v4762, %v4762
    %v5305 = vpack.c.bf16 %v4918, %v4918
    %v5306 = vpack.c.bf16 %v4921, %v4921
    %v5307 = vpack.c.bf16 %v5077, %v5077
    %v5308 = vpack.c.bf16 %v5080, %v5080
    %v5309 = vpack.c.bf16 %v4653, %v4653
    %v5310 = vpack.c.bf16 %v4656, %v4656
    %v5311 = vpack.c.bf16 %v4812, %v4812
    %v5312 = vpack.c.bf16 %v4815, %v4815
    %v5313 = vpack.c.bf16 %v4971, %v4971
    %v5314 = vpack.c.bf16 %v4974, %v4974
    %v5315 = vpack.c.bf16 %v5130, %v5130
    %v5316 = vpack.c.bf16 %v5133, %v5133
    %v5318 = vsel %vm1347, %v5301, 0
    %v5321 = vsel %vm1347, %v5309, 0
    %5323 = vmatprep.subr.bf16.mxu0 0
    %5324 = vmatpush1.bf16.xpose.msra.mxu0 %v5321
    %5325 = vmatprep.subr.bf16.mxu0 0
    %5326 = vmatpush1.bf16.xpose.msra.mxu0 0
    %5327 = vmatprep.subr.bf16.mxu0 0
    %5328 = vmatpush1.bf16.xpose.msra.mxu0 0
    %5329 = vmatprep.subr.bf16.mxu0 0
    %5330 = vmatpush1.bf16.xpose.msra.mxu0 0
    %5331 = vmatprep.subr.bf16.mxu0 0
    %5332 = vmatpush1.bf16.xpose.msra.mxu0 0
    %5333 = vmatprep.subr.bf16.mxu0 0
    %5334 = vmatpush1.bf16.xpose.msra.mxu0 0
    %5335 = vmatprep.subr.bf16.mxu0 0
    %5336 = vmatpush1.bf16.xpose.msra.mxu0 0
    %5337 = vmatprep.subr.bf16.mxu0 0
    %5338 = vmatpush1.bf16.xpose.msra.mxu0 0
    %5339 = vmatprep.subr.bf16.mxu0 0
    %5340 = vmatpush1.bf16.xpose.msra.mxu0 0
    %5341 = vmatprep.subr.bf16.mxu0 0
    %5342 = vmatpush1.bf16.xpose.msra.mxu0 0
    %5343 = vmatprep.subr.bf16.mxu0 0
    %5344 = vmatpush1.bf16.xpose.msra.mxu0 0
    %5345 = vmatprep.subr.bf16.mxu0 0
    %5346 = vmatpush1.bf16.xpose.msra.mxu0 0
    %5347 = vmatprep.subr.bf16.mxu0 0
    %5348 = vmatpush1.bf16.xpose.msra.mxu0 0
    %5349 = vmatprep.subr.bf16.mxu0 0
    %5350 = vmatpush1.bf16.xpose.msra.mxu0 0
    %5351 = vmatprep.subr.bf16.mxu0 0
    %5352 = vmatpush1.bf16.xpose.msra.mxu0 0
    %5353 = vmatprep.subr.bf16.mxu0 0
    %5354 = vmatpush1.bf16.xpose.msra.mxu0 0
    %5355 = vmatprep.mubr.bf16.mxu0 0
    %5356 = vmatmul.mubr.bf16.gmra.mrb[0].mxu0 %v5318
    %v5357 = vpop.f32.mrb[0].mxu0
    %v5358 = vadd.f32 0.0, %v5357
    %v5359 = vpop.f32.mrb[0].mxu0
    %v5360 = vpop.f32.mrb[0].mxu0
    %v5361 = vpop.f32.mrb[0].mxu0
    %5362 = vdwg.mxu0
    %v5364 = vsel %vm1347, %v5302, 0
    %v5367 = vsel %vm1347, %v5310, 0
    %5369 = vmatprep.subr.bf16.mxu0 0
    %5370 = vmatpush1.bf16.xpose.msra.mxu0 %v5367
    %5371 = vmatprep.subr.bf16.mxu0 0
    %5372 = vmatpush1.bf16.xpose.msra.mxu0 0
    %5373 = vmatprep.subr.bf16.mxu0 0
    %5374 = vmatpush1.bf16.xpose.msra.mxu0 0
    %5375 = vmatprep.subr.bf16.mxu0 0
    %5376 = vmatpush1.bf16.xpose.msra.mxu0 0
    %5377 = vmatprep.subr.bf16.mxu0 0
    %5378 = vmatpush1.bf16.xpose.msra.mxu0 0
    %5379 = vmatprep.subr.bf16.mxu0 0
    %5380 = vmatpush1.bf16.xpose.msra.mxu0 0
    %5381 = vmatprep.subr.bf16.mxu0 0
    %5382 = vmatpush1.bf16.xpose.msra.mxu0 0
    %5383 = vmatprep.subr.bf16.mxu0 0
    %5384 = vmatpush1.bf16.xpose.msra.mxu0 0
    %5385 = vmatprep.subr.bf16.mxu0 0
    %5386 = vmatpush1.bf16.xpose.msra.mxu0 0
    %5387 = vmatprep.subr.bf16.mxu0 0
    %5388 = vmatpush1.bf16.xpose.msra.mxu0 0
    %5389 = vmatprep.subr.bf16.mxu0 0
    %5390 = vmatpush1.bf16.xpose.msra.mxu0 0
    %5391 = vmatprep.subr.bf16.mxu0 0
    %5392 = vmatpush1.bf16.xpose.msra.mxu0 0
    %5393 = vmatprep.subr.bf16.mxu0 0
    %5394 = vmatpush1.bf16.xpose.msra.mxu0 0
    %5395 = vmatprep.subr.bf16.mxu0 0
    %5396 = vmatpush1.bf16.xpose.msra.mxu0 0
    %5397 = vmatprep.subr.bf16.mxu0 0
    %5398 = vmatpush1.bf16.xpose.msra.mxu0 0
    %5399 = vmatprep.subr.bf16.mxu0 0
    %5400 = vmatpush1.bf16.xpose.msra.mxu0 0
    %5401 = vmatprep.mubr.bf16.mxu0 0
    %5402 = vmatmul.mubr.bf16.gmra.mrb[0].mxu0 %v5364
    %v5403 = vpop.f32.mrb[0].mxu0
    %v5404 = vadd.f32 0.0, %v5403
    %v5405 = vpop.f32.mrb[0].mxu0
    %v5406 = vpop.f32.mrb[0].mxu0
    %v5407 = vpop.f32.mrb[0].mxu0
    %5408 = vdwg.mxu0
    %v5410 = vsel %vm1347, %v5303, 0
    %v5413 = vsel %vm1347, %v5311, 0
    %5415 = vmatprep.subr.bf16.mxu0 0
    %5416 = vmatpush1.bf16.xpose.msra.mxu0 %v5413
    %5417 = vmatprep.subr.bf16.mxu0 0
    %5418 = vmatpush1.bf16.xpose.msra.mxu0 0
    %5419 = vmatprep.subr.bf16.mxu0 0
    %5420 = vmatpush1.bf16.xpose.msra.mxu0 0
    %5421 = vmatprep.subr.bf16.mxu0 0
    %5422 = vmatpush1.bf16.xpose.msra.mxu0 0
    %5423 = vmatprep.subr.bf16.mxu0 0
    %5424 = vmatpush1.bf16.xpose.msra.mxu0 0
    %5425 = vmatprep.subr.bf16.mxu0 0
    %5426 = vmatpush1.bf16.xpose.msra.mxu0 0
    %5427 = vmatprep.subr.bf16.mxu0 0
    %5428 = vmatpush1.bf16.xpose.msra.mxu0 0
    %5429 = vmatprep.subr.bf16.mxu0 0
    %5430 = vmatpush1.bf16.xpose.msra.mxu0 0
    %5431 = vmatprep.subr.bf16.mxu0 0
    %5432 = vmatpush1.bf16.xpose.msra.mxu0 0
    %5433 = vmatprep.subr.bf16.mxu0 0
    %5434 = vmatpush1.bf16.xpose.msra.mxu0 0
    %5435 = vmatprep.subr.bf16.mxu0 0
    %5436 = vmatpush1.bf16.xpose.msra.mxu0 0
    %5437 = vmatprep.subr.bf16.mxu0 0
    %5438 = vmatpush1.bf16.xpose.msra.mxu0 0
    %5439 = vmatprep.subr.bf16.mxu0 0
    %5440 = vmatpush1.bf16.xpose.msra.mxu0 0
    %5441 = vmatprep.subr.bf16.mxu0 0
    %5442 = vmatpush1.bf16.xpose.msra.mxu0 0
    %5443 = vmatprep.subr.bf16.mxu0 0
    %5444 = vmatpush1.bf16.xpose.msra.mxu0 0
    %5445 = vmatprep.subr.bf16.mxu0 0
    %5446 = vmatpush1.bf16.xpose.msra.mxu0 0
    %5447 = vmatprep.mubr.bf16.mxu0 0
    %5448 = vmatmul.mubr.bf16.gmra.mrb[0].mxu0 %v5410
    %v5449 = vpop.f32.mrb[0].mxu0
    %v5450 = vadd.f32 0.0, %v5449
    %v5451 = vpop.f32.mrb[0].mxu0
    %v5452 = vpop.f32.mrb[0].mxu0
    %v5453 = vpop.f32.mrb[0].mxu0
    %5454 = vdwg.mxu0
    %v5456 = vsel %vm1347, %v5304, 0
    %v5459 = vsel %vm1347, %v5312, 0
    %5461 = vmatprep.subr.bf16.mxu0 0
    %5462 = vmatpush1.bf16.xpose.msra.mxu0 %v5459
    %5463 = vmatprep.subr.bf16.mxu0 0
    %5464 = vmatpush1.bf16.xpose.msra.mxu0 0
    %5465 = vmatprep.subr.bf16.mxu0 0
    %5466 = vmatpush1.bf16.xpose.msra.mxu0 0
    %5467 = vmatprep.subr.bf16.mxu0 0
    %5468 = vmatpush1.bf16.xpose.msra.mxu0 0
    %5469 = vmatprep.subr.bf16.mxu0 0
    %5470 = vmatpush1.bf16.xpose.msra.mxu0 0
    %5471 = vmatprep.subr.bf16.mxu0 0
    %5472 = vmatpush1.bf16.xpose.msra.mxu0 0
    %5473 = vmatprep.subr.bf16.mxu0 0
    %5474 = vmatpush1.bf16.xpose.msra.mxu0 0
    %5475 = vmatprep.subr.bf16.mxu0 0
    %5476 = vmatpush1.bf16.xpose.msra.mxu0 0
    %5477 = vmatprep.subr.bf16.mxu0 0
    %5478 = vmatpush1.bf16.xpose.msra.mxu0 0
    %5479 = vmatprep.subr.bf16.mxu0 0
    %5480 = vmatpush1.bf16.xpose.msra.mxu0 0
    %5481 = vmatprep.subr.bf16.mxu0 0
    %5482 = vmatpush1.bf16.xpose.msra.mxu0 0
    %5483 = vmatprep.subr.bf16.mxu0 0
    %5484 = vmatpush1.bf16.xpose.msra.mxu0 0
    %5485 = vmatprep.subr.bf16.mxu0 0
    %5486 = vmatpush1.bf16.xpose.msra.mxu0 0
    %5487 = vmatprep.subr.bf16.mxu0 0
    %5488 = vmatpush1.bf16.xpose.msra.mxu0 0
    %5489 = vmatprep.subr.bf16.mxu0 0
    %5490 = vmatpush1.bf16.xpose.msra.mxu0 0
    %5491 = vmatprep.subr.bf16.mxu0 0
    %5492 = vmatpush1.bf16.xpose.msra.mxu0 0
    %5493 = vmatprep.mubr.bf16.mxu0 0
    %5494 = vmatmul.mubr.bf16.gmra.mrb[0].mxu0 %v5456
    %v5495 = vpop.f32.mrb[0].mxu0
    %v5496 = vadd.f32 0.0, %v5495
    %v5497 = vpop.f32.mrb[0].mxu0
    %v5498 = vpop.f32.mrb[0].mxu0
    %v5499 = vpop.f32.mrb[0].mxu0
    %5500 = vdwg.mxu0
    %v5502 = vsel %vm1347, %v5305, 0
    %v5505 = vsel %vm1347, %v5313, 0
    %5507 = vmatprep.subr.bf16.mxu0 0
    %5508 = vmatpush1.bf16.xpose.msra.mxu0 %v5505
    %5509 = vmatprep.subr.bf16.mxu0 0
    %5510 = vmatpush1.bf16.xpose.msra.mxu0 0
    %5511 = vmatprep.subr.bf16.mxu0 0
    %5512 = vmatpush1.bf16.xpose.msra.mxu0 0
    %5513 = vmatprep.subr.bf16.mxu0 0
    %5514 = vmatpush1.bf16.xpose.msra.mxu0 0
    %5515 = vmatprep.subr.bf16.mxu0 0
    %5516 = vmatpush1.bf16.xpose.msra.mxu0 0
    %5517 = vmatprep.subr.bf16.mxu0 0
    %5518 = vmatpush1.bf16.xpose.msra.mxu0 0
    %5519 = vmatprep.subr.bf16.mxu0 0
    %5520 = vmatpush1.bf16.xpose.msra.mxu0 0
    %5521 = vmatprep.subr.bf16.mxu0 0
    %5522 = vmatpush1.bf16.xpose.msra.mxu0 0
    %5523 = vmatprep.subr.bf16.mxu0 0
    %5524 = vmatpush1.bf16.xpose.msra.mxu0 0
    %5525 = vmatprep.subr.bf16.mxu0 0
    %5526 = vmatpush1.bf16.xpose.msra.mxu0 0
    %5527 = vmatprep.subr.bf16.mxu0 0
    %5528 = vmatpush1.bf16.xpose.msra.mxu0 0
    %5529 = vmatprep.subr.bf16.mxu0 0
    %5530 = vmatpush1.bf16.xpose.msra.mxu0 0
    %5531 = vmatprep.subr.bf16.mxu0 0
    %5532 = vmatpush1.bf16.xpose.msra.mxu0 0
    %5533 = vmatprep.subr.bf16.mxu0 0
    %5534 = vmatpush1.bf16.xpose.msra.mxu0 0
    %5535 = vmatprep.subr.bf16.mxu0 0
    %5536 = vmatpush1.bf16.xpose.msra.mxu0 0
    %5537 = vmatprep.subr.bf16.mxu0 0
    %5538 = vmatpush1.bf16.xpose.msra.mxu0 0
    %5539 = vmatprep.mubr.bf16.mxu0 0
    %5540 = vmatmul.mubr.bf16.gmra.mrb[0].mxu0 %v5502
    %v5541 = vpop.f32.mrb[0].mxu0
    %v5542 = vadd.f32 0.0, %v5541
    %v5543 = vpop.f32.mrb[0].mxu0
    %v5544 = vpop.f32.mrb[0].mxu0
    %v5545 = vpop.f32.mrb[0].mxu0
    %5546 = vdwg.mxu0
    %v5548 = vsel %vm1347, %v5306, 0
    %v5551 = vsel %vm1347, %v5314, 0
    %5553 = vmatprep.subr.bf16.mxu0 0
    %5554 = vmatpush1.bf16.xpose.msra.mxu0 %v5551
    %5555 = vmatprep.subr.bf16.mxu0 0
    %5556 = vmatpush1.bf16.xpose.msra.mxu0 0
    %5557 = vmatprep.subr.bf16.mxu0 0
    %5558 = vmatpush1.bf16.xpose.msra.mxu0 0
    %5559 = vmatprep.subr.bf16.mxu0 0
    %5560 = vmatpush1.bf16.xpose.msra.mxu0 0
    %5561 = vmatprep.subr.bf16.mxu0 0
    %5562 = vmatpush1.bf16.xpose.msra.mxu0 0
    %5563 = vmatprep.subr.bf16.mxu0 0
    %5564 = vmatpush1.bf16.xpose.msra.mxu0 0
    %5565 = vmatprep.subr.bf16.mxu0 0
    %5566 = vmatpush1.bf16.xpose.msra.mxu0 0
    %5567 = vmatprep.subr.bf16.mxu0 0
    %5568 = vmatpush1.bf16.xpose.msra.mxu0 0
    %5569 = vmatprep.subr.bf16.mxu0 0
    %5570 = vmatpush1.bf16.xpose.msra.mxu0 0
    %5571 = vmatprep.subr.bf16.mxu0 0
    %5572 = vmatpush1.bf16.xpose.msra.mxu0 0
    %5573 = vmatprep.subr.bf16.mxu0 0
    %5574 = vmatpush1.bf16.xpose.msra.mxu0 0
    %5575 = vmatprep.subr.bf16.mxu0 0
    %5576 = vmatpush1.bf16.xpose.msra.mxu0 0
    %5577 = vmatprep.subr.bf16.mxu0 0
    %5578 = vmatpush1.bf16.xpose.msra.mxu0 0
    %5579 = vmatprep.subr.bf16.mxu0 0
    %5580 = vmatpush1.bf16.xpose.msra.mxu0 0
    %5581 = vmatprep.subr.bf16.mxu0 0
    %5582 = vmatpush1.bf16.xpose.msra.mxu0 0
    %5583 = vmatprep.subr.bf16.mxu0 0
    %5584 = vmatpush1.bf16.xpose.msra.mxu0 0
    %5585 = vmatprep.mubr.bf16.mxu0 0
    %5586 = vmatmul.mubr.bf16.gmra.mrb[0].mxu0 %v5548
    %v5587 = vpop.f32.mrb[0].mxu0
    %v5588 = vadd.f32 0.0, %v5587
    %v5589 = vpop.f32.mrb[0].mxu0
    %v5590 = vpop.f32.mrb[0].mxu0
    %v5591 = vpop.f32.mrb[0].mxu0
    %5592 = vdwg.mxu0
    %v5594 = vsel %vm1347, %v5307, 0
    %v5597 = vsel %vm1347, %v5315, 0
    %5599 = vmatprep.subr.bf16.mxu0 0
    %5600 = vmatpush1.bf16.xpose.msra.mxu0 %v5597
    %5601 = vmatprep.subr.bf16.mxu0 0
    %5602 = vmatpush1.bf16.xpose.msra.mxu0 0
    %5603 = vmatprep.subr.bf16.mxu0 0
    %5604 = vmatpush1.bf16.xpose.msra.mxu0 0
    %5605 = vmatprep.subr.bf16.mxu0 0
    %5606 = vmatpush1.bf16.xpose.msra.mxu0 0
    %5607 = vmatprep.subr.bf16.mxu0 0
    %5608 = vmatpush1.bf16.xpose.msra.mxu0 0
    %5609 = vmatprep.subr.bf16.mxu0 0
    %5610 = vmatpush1.bf16.xpose.msra.mxu0 0
    %5611 = vmatprep.subr.bf16.mxu0 0
    %5612 = vmatpush1.bf16.xpose.msra.mxu0 0
    %5613 = vmatprep.subr.bf16.mxu0 0
    %5614 = vmatpush1.bf16.xpose.msra.mxu0 0
    %5615 = vmatprep.subr.bf16.mxu0 0
    %5616 = vmatpush1.bf16.xpose.msra.mxu0 0
    %5617 = vmatprep.subr.bf16.mxu0 0
    %5618 = vmatpush1.bf16.xpose.msra.mxu0 0
    %5619 = vmatprep.subr.bf16.mxu0 0
    %5620 = vmatpush1.bf16.xpose.msra.mxu0 0
    %5621 = vmatprep.subr.bf16.mxu0 0
    %5622 = vmatpush1.bf16.xpose.msra.mxu0 0
    %5623 = vmatprep.subr.bf16.mxu0 0
    %5624 = vmatpush1.bf16.xpose.msra.mxu0 0
    %5625 = vmatprep.subr.bf16.mxu0 0
    %5626 = vmatpush1.bf16.xpose.msra.mxu0 0
    %5627 = vmatprep.subr.bf16.mxu0 0
    %5628 = vmatpush1.bf16.xpose.msra.mxu0 0
    %5629 = vmatprep.subr.bf16.mxu0 0
    %5630 = vmatpush1.bf16.xpose.msra.mxu0 0
    %5631 = vmatprep.mubr.bf16.mxu0 0
    %5632 = vmatmul.mubr.bf16.gmra.mrb[0].mxu0 %v5594
    %v5633 = vpop.f32.mrb[0].mxu0
    %v5634 = vadd.f32 0.0, %v5633
    %v5635 = vpop.f32.mrb[0].mxu0
    %v5636 = vpop.f32.mrb[0].mxu0
    %v5637 = vpop.f32.mrb[0].mxu0
    %5638 = vdwg.mxu0
    %v5640 = vsel %vm1347, %v5308, 0
    %v5643 = vsel %vm1347, %v5316, 0
    %5645 = vmatprep.subr.bf16.mxu0 0
    %5646 = vmatpush1.bf16.xpose.msra.mxu0 %v5643
    %5647 = vmatprep.subr.bf16.mxu0 0
    %5648 = vmatpush1.bf16.xpose.msra.mxu0 0
    %5649 = vmatprep.subr.bf16.mxu0 0
    %5650 = vmatpush1.bf16.xpose.msra.mxu0 0
    %5651 = vmatprep.subr.bf16.mxu0 0
    %5652 = vmatpush1.bf16.xpose.msra.mxu0 0
    %5653 = vmatprep.subr.bf16.mxu0 0
    %5654 = vmatpush1.bf16.xpose.msra.mxu0 0
    %5655 = vmatprep.subr.bf16.mxu0 0
    %5656 = vmatpush1.bf16.xpose.msra.mxu0 0
    %5657 = vmatprep.subr.bf16.mxu0 0
    %5658 = vmatpush1.bf16.xpose.msra.mxu0 0
    %5659 = vmatprep.subr.bf16.mxu0 0
    %5660 = vmatpush1.bf16.xpose.msra.mxu0 0
    %5661 = vmatprep.subr.bf16.mxu0 0
    %5662 = vmatpush1.bf16.xpose.msra.mxu0 0
    %5663 = vmatprep.subr.bf16.mxu0 0
    %5664 = vmatpush1.bf16.xpose.msra.mxu0 0
    %5665 = vmatprep.subr.bf16.mxu0 0
    %5666 = vmatpush1.bf16.xpose.msra.mxu0 0
    %5667 = vmatprep.subr.bf16.mxu0 0
    %5668 = vmatpush1.bf16.xpose.msra.mxu0 0
    %5669 = vmatprep.subr.bf16.mxu0 0
    %5670 = vmatpush1.bf16.xpose.msra.mxu0 0
    %5671 = vmatprep.subr.bf16.mxu0 0
    %5672 = vmatpush1.bf16.xpose.msra.mxu0 0
    %5673 = vmatprep.subr.bf16.mxu0 0
    %5674 = vmatpush1.bf16.xpose.msra.mxu0 0
    %5675 = vmatprep.subr.bf16.mxu0 0
    %5676 = vmatpush1.bf16.xpose.msra.mxu0 0
    %5677 = vmatprep.mubr.bf16.mxu0 0
    %5678 = vmatmul.mubr.bf16.gmra.mrb[0].mxu0 %v5640
    %v5679 = vpop.f32.mrb[0].mxu0
    %v5680 = vadd.f32 0.0, %v5679
    %v5681 = vpop.f32.mrb[0].mxu0
    %v5682 = vpop.f32.mrb[0].mxu0
    %v5683 = vpop.f32.mrb[0].mxu0
    %5684 = vdwg.mxu0
    %v5685 = vmul.f32 %v5358, 0.35355338
    %v5686 = vmul.f32 %v5404, 0.35355338
    %v5687 = vmul.f32 %v5450, 0.35355338
    %v5688 = vmul.f32 %v5496, 0.35355338
    %v5689 = vmul.f32 %v5542, 0.35355338
    %v5690 = vmul.f32 %v5588, 0.35355338
    %v5691 = vmul.f32 %v5634, 0.35355338
    %v5692 = vmul.f32 %v5680, 0.35355338
    %5693 = vset.pattern.permute.xlu0 0
    %5694 = vperm.xlu0 %5693, %v4488
    %v5695 = vpop.permute.xlu0 %5694
    %5696 = vset.pattern.permute.xlu0 0
    %5697 = vperm.xlu0 %5696, %v4491
    %v5698 = vpop.permute.xlu0 %5697
    %5699 = vset.pattern.permute.xlu0 0
    %5700 = vperm.xlu0 %5699, %v4496
    %v5701 = vpop.permute.xlu0 %5700
    %5702 = vset.pattern.permute.xlu0 0
    %5703 = vperm.xlu0 %5702, %v4499
    %v5704 = vpop.permute.xlu0 %5703
    %5705 = vset.pattern.permute.xlu0 0
    %5706 = vperm.xlu0 %5705, %v4504
    %v5707 = vpop.permute.xlu0 %5706
    %5708 = vset.pattern.permute.xlu0 0
    %5709 = vperm.xlu0 %5708, %v4507
    %v5710 = vpop.permute.xlu0 %5709
    %5711 = vset.pattern.permute.xlu0 0
    %5712 = vperm.xlu0 %5711, %v4512
    %v5713 = vpop.permute.xlu0 %5712
    %5714 = vset.pattern.permute.xlu0 0
    %5715 = vperm.xlu0 %5714, %v4515
    %v5716 = vpop.permute.xlu0 %5715
    %5717 = vset.pattern.permute.xlu0 0
    %5718 = vperm.xlu0 %5717, %v4520
    %v5719 = vpop.permute.xlu0 %5718
    %5720 = vset.pattern.permute.xlu0 0
    %5721 = vperm.xlu0 %5720, %v4523
    %v5722 = vpop.permute.xlu0 %5721
    %5723 = vset.pattern.permute.xlu0 0
    %5724 = vperm.xlu0 %5723, %v4528
    %v5725 = vpop.permute.xlu0 %5724
    %5726 = vset.pattern.permute.xlu0 0
    %5727 = vperm.xlu0 %5726, %v4531
    %v5728 = vpop.permute.xlu0 %5727
    %5729 = vset.pattern.permute.xlu0 0
    %5730 = vperm.xlu0 %5729, %v4536
    %v5731 = vpop.permute.xlu0 %5730
    %5732 = vset.pattern.permute.xlu0 0
    %5733 = vperm.xlu0 %5732, %v4539
    %v5734 = vpop.permute.xlu0 %5733
    %5735 = vset.pattern.permute.xlu0 0
    %5736 = vperm.xlu0 %5735, %v4544
    %v5737 = vpop.permute.xlu0 %5736
    %5738 = vset.pattern.permute.xlu0 0
    %5739 = vperm.xlu0 %5738, %v4547
    %v5740 = vpop.permute.xlu0 %5739
    %5741 = vset.pattern.permute.xlu0 0
    %5742 = vperm.xlu0 %5741, %v5206
    %v5743 = vpop.permute.xlu0 %5742
    %5744 = vset.pattern.permute.xlu0 0
    %5745 = vperm.xlu0 %5744, %v5208
    %v5746 = vpop.permute.xlu0 %5745
    %5747 = vset.pattern.permute.xlu0 0
    %5748 = vperm.xlu0 %5747, %v5210
    %v5749 = vpop.permute.xlu0 %5748
    %5750 = vset.pattern.permute.xlu0 0
    %5751 = vperm.xlu0 %5750, %v5212
    %v5752 = vpop.permute.xlu0 %5751
    %5753 = vset.pattern.permute.xlu0 0
    %5754 = vperm.xlu0 %5753, %v5214
    %v5755 = vpop.permute.xlu0 %5754
    %5756 = vset.pattern.permute.xlu0 0
    %5757 = vperm.xlu0 %5756, %v5216
    %v5758 = vpop.permute.xlu0 %5757
    %5759 = vset.pattern.permute.xlu0 0
    %5760 = vperm.xlu0 %5759, %v5218
    %v5761 = vpop.permute.xlu0 %5760
    %5762 = vset.pattern.permute.xlu0 0
    %5763 = vperm.xlu0 %5762, %v5220
    %v5764 = vpop.permute.xlu0 %5763
    %5765 = vset.pattern.permute.xlu0 0
    %5766 = vperm.xlu0 %5765, %v5222
    %v5767 = vpop.permute.xlu0 %5766
    %5768 = vset.pattern.permute.xlu0 0
    %5769 = vperm.xlu0 %5768, %v5224
    %v5770 = vpop.permute.xlu0 %5769
    %5771 = vset.pattern.permute.xlu0 0
    %5772 = vperm.xlu0 %5771, %v5226
    %v5773 = vpop.permute.xlu0 %5772
    %5774 = vset.pattern.permute.xlu0 0
    %5775 = vperm.xlu0 %5774, %v5228
    %v5776 = vpop.permute.xlu0 %5775
    %5777 = vset.pattern.permute.xlu0 0
    %5778 = vperm.xlu0 %5777, %v5230
    %v5779 = vpop.permute.xlu0 %5778
    %5780 = vset.pattern.permute.xlu0 0
    %5781 = vperm.xlu0 %5780, %v5232
    %v5782 = vpop.permute.xlu0 %5781
    %5783 = vset.pattern.permute.xlu0 0
    %5784 = vperm.xlu0 %5783, %v5234
    %v5785 = vpop.permute.xlu0 %5784
    %5786 = vset.pattern.permute.xlu0 0
    %5787 = vperm.xlu0 %5786, %v5236
    %v5788 = vpop.permute.xlu0 %5787
    %5789 = vset.pattern.permute.xlu0 0
    %5790 = vperm.xlu0 %5789, %v5238
    %v5791 = vpop.permute.xlu0 %5790
    %5792 = vset.pattern.permute.xlu0 0
    %5793 = vperm.xlu0 %5792, %v5240
    %v5794 = vpop.permute.xlu0 %5793
    %5795 = vset.pattern.permute.xlu0 0
    %5796 = vperm.xlu0 %5795, %v5242
    %v5797 = vpop.permute.xlu0 %5796
    %5798 = vset.pattern.permute.xlu0 0
    %5799 = vperm.xlu0 %5798, %v5244
    %v5800 = vpop.permute.xlu0 %5799
    %5801 = vset.pattern.permute.xlu0 0
    %5802 = vperm.xlu0 %5801, %v5246
    %v5803 = vpop.permute.xlu0 %5802
    %5804 = vset.pattern.permute.xlu0 0
    %5805 = vperm.xlu0 %5804, %v5248
    %v5806 = vpop.permute.xlu0 %5805
    %5807 = vset.pattern.permute.xlu0 0
    %5808 = vperm.xlu0 %5807, %v5250
    %v5809 = vpop.permute.xlu0 %5808
    %5810 = vset.pattern.permute.xlu0 0
    %5811 = vperm.xlu0 %5810, %v5252
    %v5812 = vpop.permute.xlu0 %5811
    %5813 = vset.pattern.permute.xlu0 0
    %5814 = vperm.xlu0 %5813, %v5254
    %v5815 = vpop.permute.xlu0 %5814
    %5816 = vset.pattern.permute.xlu0 0
    %5817 = vperm.xlu0 %5816, %v5256
    %v5818 = vpop.permute.xlu0 %5817
    %5819 = vset.pattern.permute.xlu0 0
    %5820 = vperm.xlu0 %5819, %v5258
    %v5821 = vpop.permute.xlu0 %5820
    %5822 = vset.pattern.permute.xlu0 0
    %5823 = vperm.xlu0 %5822, %v5260
    %v5824 = vpop.permute.xlu0 %5823
    %5825 = vset.pattern.permute.xlu0 0
    %5826 = vperm.xlu0 %5825, %v5262
    %v5827 = vpop.permute.xlu0 %5826
    %5828 = vset.pattern.permute.xlu0 0
    %5829 = vperm.xlu0 %5828, %v5264
    %v5830 = vpop.permute.xlu0 %5829
    %5831 = vset.pattern.permute.xlu0 0
    %5832 = vperm.xlu0 %5831, %v5266
    %v5833 = vpop.permute.xlu0 %5832
    %5834 = vset.pattern.permute.xlu0 0
    %5835 = vperm.xlu0 %5834, %v5268
    %v5836 = vpop.permute.xlu0 %5835
    %5837 = vset.pattern.permute.xlu0 0
    %5838 = vperm.xlu0 %5837, %v5270
    %v5839 = vpop.permute.xlu0 %5838
    %5840 = vset.pattern.permute.xlu0 0
    %5841 = vperm.xlu0 %5840, %v5272
    %v5842 = vpop.permute.xlu0 %5841
    %5843 = vset.pattern.permute.xlu0 0
    %5844 = vperm.xlu0 %5843, %v5274
    %v5845 = vpop.permute.xlu0 %5844
    %5846 = vset.pattern.permute.xlu0 0
    %5847 = vperm.xlu0 %5846, %v5276
    %v5848 = vpop.permute.xlu0 %5847
    %5849 = vset.pattern.permute.xlu0 0
    %5850 = vperm.xlu0 %5849, %v5278
    %v5851 = vpop.permute.xlu0 %5850
    %5852 = vset.pattern.permute.xlu0 0
    %5853 = vperm.xlu0 %5852, %v5280
    %v5854 = vpop.permute.xlu0 %5853
    %5855 = vset.pattern.permute.xlu0 0
    %5856 = vperm.xlu0 %5855, %v5282
    %v5857 = vpop.permute.xlu0 %5856
    %5858 = vset.pattern.permute.xlu0 0
    %5859 = vperm.xlu0 %5858, %v5284
    %v5860 = vpop.permute.xlu0 %5859
    %5861 = vset.pattern.permute.xlu0 0
    %5862 = vperm.xlu0 %5861, %v5286
    %v5863 = vpop.permute.xlu0 %5862
    %5864 = vset.pattern.permute.xlu0 0
    %5865 = vperm.xlu0 %5864, %v5288
    %v5866 = vpop.permute.xlu0 %5865
    %5867 = vset.pattern.permute.xlu0 0
    %5868 = vperm.xlu0 %5867, %v5290
    %v5869 = vpop.permute.xlu0 %5868
    %5870 = vset.pattern.permute.xlu0 0
    %5871 = vperm.xlu0 %5870, %v5292
    %v5872 = vpop.permute.xlu0 %5871
    %5873 = vset.pattern.permute.xlu0 0
    %5874 = vperm.xlu0 %5873, %v5294
    %v5875 = vpop.permute.xlu0 %5874
    %5876 = vset.pattern.permute.xlu0 0
    %5877 = vperm.xlu0 %5876, %v5296
    %v5878 = vpop.permute.xlu0 %5877
    %5879 = vset.pattern.permute.xlu0 0
    %5880 = vperm.xlu0 %5879, %v5298
    %v5881 = vpop.permute.xlu0 %5880
    %5882 = vset.pattern.permute.xlu0 0
    %5883 = vperm.xlu0 %5882, %v5300
    %v5884 = vpop.permute.xlu0 %5883
    %v5885 = vlaneseq
    %v5886 = vshrl.u32 %v5885, 7
    %v5887 = vsub.s32 %v1917, %v5886
    %v5888 = vrot.slane %v5695, %v5887
    %v5889 = vlaneseq
    %v5890 = vshrl.u32 %v5889, 7
    %v5891 = vsub.s32 %v1917, %v5890
    %v5892 = vrot.slane %v5698, %v5891
    %v5893 = vlaneseq
    %v5894 = vshrl.u32 %v5893, 7
    %v5895 = vsub.s32 %v1917, %v5894
    %v5896 = vrot.slane %v5701, %v5895
    %v5897 = vlaneseq
    %v5898 = vshrl.u32 %v5897, 7
    %v5899 = vsub.s32 %v1917, %v5898
    %v5900 = vrot.slane %v5704, %v5899
    %v5901 = vlaneseq
    %v5902 = vshrl.u32 %v5901, 7
    %v5903 = vsub.s32 %v1917, %v5902
    %v5904 = vrot.slane %v5707, %v5903
    %v5905 = vlaneseq
    %v5906 = vshrl.u32 %v5905, 7
    %v5907 = vsub.s32 %v1917, %v5906
    %v5908 = vrot.slane %v5710, %v5907
    %v5909 = vlaneseq
    %v5910 = vshrl.u32 %v5909, 7
    %v5911 = vsub.s32 %v1917, %v5910
    %v5912 = vrot.slane %v5713, %v5911
    %v5913 = vlaneseq
    %v5914 = vshrl.u32 %v5913, 7
    %v5915 = vsub.s32 %v1917, %v5914
    %v5916 = vrot.slane %v5716, %v5915
    %v5917 = vlaneseq
    %v5918 = vshrl.u32 %v5917, 7
    %v5919 = vsub.s32 %v1917, %v5918
    %v5920 = vrot.slane %v5719, %v5919
    %v5921 = vlaneseq
    %v5922 = vshrl.u32 %v5921, 7
    %v5923 = vsub.s32 %v1917, %v5922
    %v5924 = vrot.slane %v5722, %v5923
    %v5925 = vlaneseq
    %v5926 = vshrl.u32 %v5925, 7
    %v5927 = vsub.s32 %v1917, %v5926
    %v5928 = vrot.slane %v5725, %v5927
    %v5929 = vlaneseq
    %v5930 = vshrl.u32 %v5929, 7
    %v5931 = vsub.s32 %v1917, %v5930
    %v5932 = vrot.slane %v5728, %v5931
    %v5933 = vlaneseq
    %v5934 = vshrl.u32 %v5933, 7
    %v5935 = vsub.s32 %v1917, %v5934
    %v5936 = vrot.slane %v5731, %v5935
    %v5937 = vlaneseq
    %v5938 = vshrl.u32 %v5937, 7
    %v5939 = vsub.s32 %v1917, %v5938
    %v5940 = vrot.slane %v5734, %v5939
    %v5941 = vlaneseq
    %v5942 = vshrl.u32 %v5941, 7
    %v5943 = vsub.s32 %v1917, %v5942
    %v5944 = vrot.slane %v5737, %v5943
    %v5945 = vlaneseq
    %v5946 = vshrl.u32 %v5945, 7
    %v5947 = vsub.s32 %v1917, %v5946
    %v5948 = vrot.slane %v5740, %v5947
    %v5949 = vlaneseq
    %v5950 = vshrl.u32 %v5949, 7
    %v5951 = vsub.s32 %v1917, %v5950
    %v5952 = vrot.slane %v5743, %v5951
    %v5953 = vlaneseq
    %v5954 = vshrl.u32 %v5953, 7
    %v5955 = vsub.s32 %v1917, %v5954
    %v5956 = vrot.slane %v5746, %v5955
    %v5957 = vlaneseq
    %v5958 = vshrl.u32 %v5957, 7
    %v5959 = vsub.s32 %v1917, %v5958
    %v5960 = vrot.slane %v5749, %v5959
    %v5961 = vlaneseq
    %v5962 = vshrl.u32 %v5961, 7
    %v5963 = vsub.s32 %v1917, %v5962
    %v5964 = vrot.slane %v5752, %v5963
    %v5965 = vlaneseq
    %v5966 = vshrl.u32 %v5965, 7
    %v5967 = vsub.s32 %v1917, %v5966
    %v5968 = vrot.slane %v5755, %v5967
    %v5969 = vlaneseq
    %v5970 = vshrl.u32 %v5969, 7
    %v5971 = vsub.s32 %v1917, %v5970
    %v5972 = vrot.slane %v5758, %v5971
    %v5973 = vlaneseq
    %v5974 = vshrl.u32 %v5973, 7
    %v5975 = vsub.s32 %v1917, %v5974
    %v5976 = vrot.slane %v5761, %v5975
    %v5977 = vlaneseq
    %v5978 = vshrl.u32 %v5977, 7
    %v5979 = vsub.s32 %v1917, %v5978
    %v5980 = vrot.slane %v5764, %v5979
    %v5981 = vlaneseq
    %v5982 = vshrl.u32 %v5981, 7
    %v5983 = vsub.s32 %v1917, %v5982
    %v5984 = vrot.slane %v5767, %v5983
    %v5985 = vlaneseq
    %v5986 = vshrl.u32 %v5985, 7
    %v5987 = vsub.s32 %v1917, %v5986
    %v5988 = vrot.slane %v5770, %v5987
    %v5989 = vlaneseq
    %v5990 = vshrl.u32 %v5989, 7
    %v5991 = vsub.s32 %v1917, %v5990
    %v5992 = vrot.slane %v5773, %v5991
    %v5993 = vlaneseq
    %v5994 = vshrl.u32 %v5993, 7
    %v5995 = vsub.s32 %v1917, %v5994
    %v5996 = vrot.slane %v5776, %v5995
    %v5997 = vlaneseq
    %v5998 = vshrl.u32 %v5997, 7
    %v5999 = vsub.s32 %v1917, %v5998
    %v6000 = vrot.slane %v5779, %v5999
    %v6001 = vlaneseq
    %v6002 = vshrl.u32 %v6001, 7
    %v6003 = vsub.s32 %v1917, %v6002
    %v6004 = vrot.slane %v5782, %v6003
    %v6005 = vlaneseq
    %v6006 = vshrl.u32 %v6005, 7
    %v6007 = vsub.s32 %v1917, %v6006
    %v6008 = vrot.slane %v5785, %v6007
    %v6009 = vlaneseq
    %v6010 = vshrl.u32 %v6009, 7
    %v6011 = vsub.s32 %v1917, %v6010
    %v6012 = vrot.slane %v5788, %v6011
    %v6013 = vlaneseq
    %v6014 = vshrl.u32 %v6013, 7
    %v6015 = vsub.s32 %v1917, %v6014
    %v6016 = vrot.slane %v5791, %v6015
    %v6017 = vlaneseq
    %v6018 = vshrl.u32 %v6017, 7
    %v6019 = vsub.s32 %v1917, %v6018
    %v6020 = vrot.slane %v5794, %v6019
    %v6021 = vlaneseq
    %v6022 = vshrl.u32 %v6021, 7
    %v6023 = vsub.s32 %v1917, %v6022
    %v6024 = vrot.slane %v5797, %v6023
    %v6025 = vlaneseq
    %v6026 = vshrl.u32 %v6025, 7
    %v6027 = vsub.s32 %v1917, %v6026
    %v6028 = vrot.slane %v5800, %v6027
    %v6029 = vlaneseq
    %v6030 = vshrl.u32 %v6029, 7
    %v6031 = vsub.s32 %v1917, %v6030
    %v6032 = vrot.slane %v5803, %v6031
    %v6033 = vlaneseq
    %v6034 = vshrl.u32 %v6033, 7
    %v6035 = vsub.s32 %v1917, %v6034
    %v6036 = vrot.slane %v5806, %v6035
    %v6037 = vlaneseq
    %v6038 = vshrl.u32 %v6037, 7
    %v6039 = vsub.s32 %v1917, %v6038
    %v6040 = vrot.slane %v5809, %v6039
    %v6041 = vlaneseq
    %v6042 = vshrl.u32 %v6041, 7
    %v6043 = vsub.s32 %v1917, %v6042
    %v6044 = vrot.slane %v5812, %v6043
    %v6045 = vlaneseq
    %v6046 = vshrl.u32 %v6045, 7
    %v6047 = vsub.s32 %v1917, %v6046
    %v6048 = vrot.slane %v5815, %v6047
    %v6049 = vlaneseq
    %v6050 = vshrl.u32 %v6049, 7
    %v6051 = vsub.s32 %v1917, %v6050
    %v6052 = vrot.slane %v5818, %v6051
    %v6053 = vlaneseq
    %v6054 = vshrl.u32 %v6053, 7
    %v6055 = vsub.s32 %v1917, %v6054
    %v6056 = vrot.slane %v5821, %v6055
    %v6057 = vlaneseq
    %v6058 = vshrl.u32 %v6057, 7
    %v6059 = vsub.s32 %v1917, %v6058
    %v6060 = vrot.slane %v5824, %v6059
    %v6061 = vlaneseq
    %v6062 = vshrl.u32 %v6061, 7
    %v6063 = vsub.s32 %v1917, %v6062
    %v6064 = vrot.slane %v5827, %v6063
    %v6065 = vlaneseq
    %v6066 = vshrl.u32 %v6065, 7
    %v6067 = vsub.s32 %v1917, %v6066
    %v6068 = vrot.slane %v5830, %v6067
    %v6069 = vlaneseq
    %v6070 = vshrl.u32 %v6069, 7
    %v6071 = vsub.s32 %v1917, %v6070
    %v6072 = vrot.slane %v5833, %v6071
    %v6073 = vlaneseq
    %v6074 = vshrl.u32 %v6073, 7
    %v6075 = vsub.s32 %v1917, %v6074
    %v6076 = vrot.slane %v5836, %v6075
    %v6077 = vlaneseq
    %v6078 = vshrl.u32 %v6077, 7
    %v6079 = vsub.s32 %v1917, %v6078
    %v6080 = vrot.slane %v5839, %v6079
    %v6081 = vlaneseq
    %v6082 = vshrl.u32 %v6081, 7
    %v6083 = vsub.s32 %v1917, %v6082
    %v6084 = vrot.slane %v5842, %v6083
    %v6085 = vlaneseq
    %v6086 = vshrl.u32 %v6085, 7
    %v6087 = vsub.s32 %v1917, %v6086
    %v6088 = vrot.slane %v5845, %v6087
    %v6089 = vlaneseq
    %v6090 = vshrl.u32 %v6089, 7
    %v6091 = vsub.s32 %v1917, %v6090
    %v6092 = vrot.slane %v5848, %v6091
    %v6093 = vlaneseq
    %v6094 = vshrl.u32 %v6093, 7
    %v6095 = vsub.s32 %v1917, %v6094
    %v6096 = vrot.slane %v5851, %v6095
    %v6097 = vlaneseq
    %v6098 = vshrl.u32 %v6097, 7
    %v6099 = vsub.s32 %v1917, %v6098
    %v6100 = vrot.slane %v5854, %v6099
    %v6101 = vlaneseq
    %v6102 = vshrl.u32 %v6101, 7
    %v6103 = vsub.s32 %v1917, %v6102
    %v6104 = vrot.slane %v5857, %v6103
    %v6105 = vlaneseq
    %v6106 = vshrl.u32 %v6105, 7
    %v6107 = vsub.s32 %v1917, %v6106
    %v6108 = vrot.slane %v5860, %v6107
    %v6109 = vlaneseq
    %v6110 = vshrl.u32 %v6109, 7
    %v6111 = vsub.s32 %v1917, %v6110
    %v6112 = vrot.slane %v5863, %v6111
    %v6113 = vlaneseq
    %v6114 = vshrl.u32 %v6113, 7
    %v6115 = vsub.s32 %v1917, %v6114
    %v6116 = vrot.slane %v5866, %v6115
    %v6117 = vlaneseq
    %v6118 = vshrl.u32 %v6117, 7
    %v6119 = vsub.s32 %v1917, %v6118
    %v6120 = vrot.slane %v5869, %v6119
    %v6121 = vlaneseq
    %v6122 = vshrl.u32 %v6121, 7
    %v6123 = vsub.s32 %v1917, %v6122
    %v6124 = vrot.slane %v5872, %v6123
    %v6125 = vlaneseq
    %v6126 = vshrl.u32 %v6125, 7
    %v6127 = vsub.s32 %v1917, %v6126
    %v6128 = vrot.slane %v5875, %v6127
    %v6129 = vlaneseq
    %v6130 = vshrl.u32 %v6129, 7
    %v6131 = vsub.s32 %v1917, %v6130
    %v6132 = vrot.slane %v5878, %v6131
    %v6133 = vlaneseq
    %v6134 = vshrl.u32 %v6133, 7
    %v6135 = vsub.s32 %v1917, %v6134
    %v6136 = vrot.slane %v5881, %v6135
    %v6137 = vlaneseq
    %v6138 = vshrl.u32 %v6137, 7
    %v6139 = vsub.s32 %v1917, %v6138
    %v6140 = vrot.slane %v5884, %v6139
    %v6141 = vsel %vm2174, %v5892, %v5888
    %v6142 = vsel %vm2176, %v5896, %v6141
    %v6143 = vsel %vm2178, %v5900, %v6142
    %v6144 = vsel %vm2180, %v5904, %v6143
    %v6145 = vsel %vm2182, %v5908, %v6144
    %v6146 = vsel %vm2184, %v5912, %v6145
    %v6147 = vsel %vm2186, %v5916, %v6146
    %v6148 = vsel %vm2174, %v5924, %v5920
    %v6149 = vsel %vm2176, %v5928, %v6148
    %v6150 = vsel %vm2178, %v5932, %v6149
    %v6151 = vsel %vm2180, %v5936, %v6150
    %v6152 = vsel %vm2182, %v5940, %v6151
    %v6153 = vsel %vm2184, %v5944, %v6152
    %v6154 = vsel %vm2186, %v5948, %v6153
    %v6155 = vsel %vm2174, %v5956, %v5952
    %v6156 = vsel %vm2176, %v5960, %v6155
    %v6157 = vsel %vm2178, %v5964, %v6156
    %v6158 = vsel %vm2180, %v5968, %v6157
    %v6159 = vsel %vm2182, %v5972, %v6158
    %v6160 = vsel %vm2184, %v5976, %v6159
    %v6161 = vsel %vm2186, %v5980, %v6160
    %v6162 = vsel %vm2174, %v5988, %v5984
    %v6163 = vsel %vm2176, %v5992, %v6162
    %v6164 = vsel %vm2178, %v5996, %v6163
    %v6165 = vsel %vm2180, %v6000, %v6164
    %v6166 = vsel %vm2182, %v6004, %v6165
    %v6167 = vsel %vm2184, %v6008, %v6166
    %v6168 = vsel %vm2186, %v6012, %v6167
    %v6169 = vsel %vm2174, %v6020, %v6016
    %v6170 = vsel %vm2176, %v6024, %v6169
    %v6171 = vsel %vm2178, %v6028, %v6170
    %v6172 = vsel %vm2180, %v6032, %v6171
    %v6173 = vsel %vm2182, %v6036, %v6172
    %v6174 = vsel %vm2184, %v6040, %v6173
    %v6175 = vsel %vm2186, %v6044, %v6174
    %v6176 = vsel %vm2174, %v6052, %v6048
    %v6177 = vsel %vm2176, %v6056, %v6176
    %v6178 = vsel %vm2178, %v6060, %v6177
    %v6179 = vsel %vm2180, %v6064, %v6178
    %v6180 = vsel %vm2182, %v6068, %v6179
    %v6181 = vsel %vm2184, %v6072, %v6180
    %v6182 = vsel %vm2186, %v6076, %v6181
    %v6183 = vsel %vm2174, %v6084, %v6080
    %v6184 = vsel %vm2176, %v6088, %v6183
    %v6185 = vsel %vm2178, %v6092, %v6184
    %v6186 = vsel %vm2180, %v6096, %v6185
    %v6187 = vsel %vm2182, %v6100, %v6186
    %v6188 = vsel %vm2184, %v6104, %v6187
    %v6189 = vsel %vm2186, %v6108, %v6188
    %v6190 = vsel %vm2174, %v6116, %v6112
    %v6191 = vsel %vm2176, %v6120, %v6190
    %v6192 = vsel %vm2178, %v6124, %v6191
    %v6193 = vsel %vm2180, %v6128, %v6192
    %v6194 = vsel %vm2182, %v6132, %v6193
    %v6195 = vsel %vm2184, %v6136, %v6194
    %v6196 = vsel %vm2186, %v6140, %v6195
    %v6205 = vadd.f32 %v5685, %v6147
    %v6206 = vadd.f32 %v5686, %v6154
    %v6207 = vadd.f32 %v5687, %v6161
    %v6208 = vadd.f32 %v5688, %v6168
    %v6209 = vadd.f32 %v5689, %v6175
    %v6210 = vadd.f32 %v5690, %v6182
    %v6211 = vadd.f32 %v5691, %v6189
    %v6212 = vadd.f32 %v5692, %v6196
    %v6213 = vadd.f32 %v6205, %v98
    %v6214 = vadd.f32 %v6206, %v99
    %v6215 = vadd.f32 %v6207, %v98
    %v6216 = vadd.f32 %v6208, %v99
    %v6217 = vadd.f32 %v6209, %v98
    %v6218 = vadd.f32 %v6210, %v99
    %v6219 = vadd.f32 %v6211, %v98
    %v6220 = vadd.f32 %v6212, %v99
    %v6221 = vsel %vm1347, %v6213, -inf
    %6222 = vmax.xlane.f32.xlu0 %v6221
    %v6223 = vpop.xlane.xlu0 %6222
    %v6224 = vsel %vm1347, %v6214, -inf
    %6225 = vmax.xlane.f32.xlu0 %v6224
    %v6226 = vpop.xlane.xlu0 %6225
    %v6227 = vsel %vm1347, %v6215, -inf
    %6228 = vmax.xlane.f32.xlu0 %v6227
    %v6229 = vpop.xlane.xlu0 %6228
    %v6230 = vsel %vm1347, %v6216, -inf
    %6231 = vmax.xlane.f32.xlu0 %v6230
    %v6232 = vpop.xlane.xlu0 %6231
    %v6233 = vsel %vm1347, %v6217, -inf
    %6234 = vmax.xlane.f32.xlu0 %v6233
    %v6235 = vpop.xlane.xlu0 %6234
    %v6236 = vsel %vm1347, %v6218, -inf
    %6237 = vmax.xlane.f32.xlu0 %v6236
    %v6238 = vpop.xlane.xlu0 %6237
    %v6239 = vsel %vm1347, %v6219, -inf
    %6240 = vmax.xlane.f32.xlu0 %v6239
    %v6241 = vpop.xlane.xlu0 %6240
    %v6242 = vsel %vm1347, %v6220, -inf
    %6243 = vmax.xlane.f32.xlu0 %v6242
    %v6244 = vpop.xlane.xlu0 %6243
    %v6245 = vsub.f32 %v6213, %v6223
    %v6246 = vsub.f32 %v6214, %v6226
    %v6247 = vsub.f32 %v6215, %v6229
    %v6248 = vsub.f32 %v6216, %v6232
    %v6249 = vsub.f32 %v6217, %v6235
    %v6250 = vsub.f32 %v6218, %v6238
    %v6251 = vsub.f32 %v6219, %v6241
    %v6252 = vsub.f32 %v6220, %v6244
    %v6253 = vmul.f32 %v6245, 1.442695
    %v6254 = vpow.pop %v6253
    %v6255 = vmul.f32 %v6246, 1.442695
    %v6256 = vpow.pop %v6255
    %v6257 = vmul.f32 %v6247, 1.442695
    %v6258 = vpow.pop %v6257
    %v6259 = vmul.f32 %v6248, 1.442695
    %v6260 = vpow.pop %v6259
    %v6261 = vmul.f32 %v6249, 1.442695
    %v6262 = vpow.pop %v6261
    %v6263 = vmul.f32 %v6250, 1.442695
    %v6264 = vpow.pop %v6263
    %v6265 = vmul.f32 %v6251, 1.442695
    %v6266 = vpow.pop %v6265
    %v6267 = vmul.f32 %v6252, 1.442695
    %v6268 = vpow.pop %v6267
    %v6269 = vsel %vm1347, %v6254, 0.0
    %6270 = vadd.xlane.f32.xlu0 %v6269
    %v6271 = vpop.xlane.xlu0 %6270
    %v6272 = vsel %vm1347, %v6256, 0.0
    %6273 = vadd.xlane.f32.xlu0 %v6272
    %v6274 = vpop.xlane.xlu0 %6273
    %v6275 = vsel %vm1347, %v6258, 0.0
    %6276 = vadd.xlane.f32.xlu0 %v6275
    %v6277 = vpop.xlane.xlu0 %6276
    %v6278 = vsel %vm1347, %v6260, 0.0
    %6279 = vadd.xlane.f32.xlu0 %v6278
    %v6280 = vpop.xlane.xlu0 %6279
    %v6281 = vsel %vm1347, %v6262, 0.0
    %6282 = vadd.xlane.f32.xlu0 %v6281
    %v6283 = vpop.xlane.xlu0 %6282
    %v6284 = vsel %vm1347, %v6264, 0.0
    %6285 = vadd.xlane.f32.xlu0 %v6284
    %v6286 = vpop.xlane.xlu0 %6285
    %v6287 = vsel %vm1347, %v6266, 0.0
    %6288 = vadd.xlane.f32.xlu0 %v6287
    %v6289 = vpop.xlane.xlu0 %6288
    %v6290 = vsel %vm1347, %v6268, 0.0
    %6291 = vadd.xlane.f32.xlu0 %v6290
    %v6292 = vpop.xlane.xlu0 %6291
    %v6293 = vrcp.pop %v6271
    %v6294 = vmul.f32 %v6254, %v6293
    %v6295 = vrcp.pop %v6274
    %v6296 = vmul.f32 %v6256, %v6295
    %v6297 = vrcp.pop %v6277
    %v6298 = vmul.f32 %v6258, %v6297
    %v6299 = vrcp.pop %v6280
    %v6300 = vmul.f32 %v6260, %v6299
    %v6301 = vrcp.pop %v6283
    %v6302 = vmul.f32 %v6262, %v6301
    %v6303 = vrcp.pop %v6286
    %v6304 = vmul.f32 %v6264, %v6303
    %v6305 = vrcp.pop %v6289
    %v6306 = vmul.f32 %v6266, %v6305
    %v6307 = vrcp.pop %v6292
    %v6308 = vmul.f32 %v6268, %v6307
    %v6309 = vpack.c.bf16 %v6294, %v6294
    %v6310 = vpack.c.bf16 %v6296, %v6296
    %v6311 = vpack.c.bf16 %v6298, %v6298
    %v6312 = vpack.c.bf16 %v6300, %v6300
    %v6313 = vpack.c.bf16 %v6302, %v6302
    %v6314 = vpack.c.bf16 %v6304, %v6304
    %v6315 = vpack.c.bf16 %v6306, %v6306
    %v6316 = vpack.c.bf16 %v6308, %v6308
    %v6317 = vpack.c.bf16 %v4706, %v4706
    %v6318 = vpack.c.bf16 %v4709, %v4709
    %v6319 = vpack.c.bf16 %v4865, %v4865
    %v6320 = vpack.c.bf16 %v4868, %v4868
    %v6321 = vpack.c.bf16 %v5024, %v5024
    %v6322 = vpack.c.bf16 %v5027, %v5027
    %v6323 = vpack.c.bf16 %v5183, %v5183
    %v6324 = vpack.c.bf16 %v5186, %v5186
    %v6326 = vsel %vm1347, %v6309, 0
    %v6329 = vsel %vm2368, %v6317, 0
    %6331 = vmatprep.subr.bf16.mxu0 0
    %6332 = vmatpush1.bf16.msra.mxu0 %v6329
    %6333 = vmatprep.subr.bf16.mxu0 0
    %6334 = vmatpush1.bf16.msra.mxu0 0
    %6335 = vmatprep.subr.bf16.mxu0 0
    %6336 = vmatpush1.bf16.msra.mxu0 0
    %6337 = vmatprep.subr.bf16.mxu0 0
    %6338 = vmatpush1.bf16.msra.mxu0 0
    %6339 = vmatprep.subr.bf16.mxu0 0
    %6340 = vmatpush1.bf16.msra.mxu0 0
    %6341 = vmatprep.subr.bf16.mxu0 0
    %6342 = vmatpush1.bf16.msra.mxu0 0
    %6343 = vmatprep.subr.bf16.mxu0 0
    %6344 = vmatpush1.bf16.msra.mxu0 0
    %6345 = vmatprep.subr.bf16.mxu0 0
    %6346 = vmatpush1.bf16.msra.mxu0 0
    %6347 = vmatprep.subr.bf16.mxu0 0
    %6348 = vmatpush1.bf16.msra.mxu0 0
    %6349 = vmatprep.subr.bf16.mxu0 0
    %6350 = vmatpush1.bf16.msra.mxu0 0
    %6351 = vmatprep.subr.bf16.mxu0 0
    %6352 = vmatpush1.bf16.msra.mxu0 0
    %6353 = vmatprep.subr.bf16.mxu0 0
    %6354 = vmatpush1.bf16.msra.mxu0 0
    %6355 = vmatprep.subr.bf16.mxu0 0
    %6356 = vmatpush1.bf16.msra.mxu0 0
    %6357 = vmatprep.subr.bf16.mxu0 0
    %6358 = vmatpush1.bf16.msra.mxu0 0
    %6359 = vmatprep.subr.bf16.mxu0 0
    %6360 = vmatpush1.bf16.msra.mxu0 0
    %6361 = vmatprep.subr.bf16.mxu0 0
    %6362 = vmatpush1.bf16.msra.mxu0 0
    %6363 = vmatprep.mubr.bf16.mxu0 0
    %6364 = vmatmul.mubr.bf16.gmra.mrb[0].mxu0 %v6326
    %v6365 = vpop.f32.mrb[0].mxu0
    %v6366 = vadd.f32 0.0, %v6365
    %v6367 = vpop.f32.mrb[0].mxu0
    %v6368 = vpop.f32.mrb[0].mxu0
    %v6369 = vpop.f32.mrb[0].mxu0
    %6370 = vdwg.mxu0
    %v6372 = vsel %vm1347, %v6310, 0
    %v6375 = vsel %vm2368, %v6318, 0
    %6377 = vmatprep.subr.bf16.mxu0 0
    %6378 = vmatpush1.bf16.msra.mxu0 %v6375
    %6379 = vmatprep.subr.bf16.mxu0 0
    %6380 = vmatpush1.bf16.msra.mxu0 0
    %6381 = vmatprep.subr.bf16.mxu0 0
    %6382 = vmatpush1.bf16.msra.mxu0 0
    %6383 = vmatprep.subr.bf16.mxu0 0
    %6384 = vmatpush1.bf16.msra.mxu0 0
    %6385 = vmatprep.subr.bf16.mxu0 0
    %6386 = vmatpush1.bf16.msra.mxu0 0
    %6387 = vmatprep.subr.bf16.mxu0 0
    %6388 = vmatpush1.bf16.msra.mxu0 0
    %6389 = vmatprep.subr.bf16.mxu0 0
    %6390 = vmatpush1.bf16.msra.mxu0 0
    %6391 = vmatprep.subr.bf16.mxu0 0
    %6392 = vmatpush1.bf16.msra.mxu0 0
    %6393 = vmatprep.subr.bf16.mxu0 0
    %6394 = vmatpush1.bf16.msra.mxu0 0
    %6395 = vmatprep.subr.bf16.mxu0 0
    %6396 = vmatpush1.bf16.msra.mxu0 0
    %6397 = vmatprep.subr.bf16.mxu0 0
    %6398 = vmatpush1.bf16.msra.mxu0 0
    %6399 = vmatprep.subr.bf16.mxu0 0
    %6400 = vmatpush1.bf16.msra.mxu0 0
    %6401 = vmatprep.subr.bf16.mxu0 0
    %6402 = vmatpush1.bf16.msra.mxu0 0
    %6403 = vmatprep.subr.bf16.mxu0 0
    %6404 = vmatpush1.bf16.msra.mxu0 0
    %6405 = vmatprep.subr.bf16.mxu0 0
    %6406 = vmatpush1.bf16.msra.mxu0 0
    %6407 = vmatprep.subr.bf16.mxu0 0
    %6408 = vmatpush1.bf16.msra.mxu0 0
    %6409 = vmatprep.mubr.bf16.mxu0 0
    %6410 = vmatmul.mubr.bf16.gmra.mrb[0].mxu0 %v6372
    %v6411 = vpop.f32.mrb[0].mxu0
    %v6412 = vadd.f32 0.0, %v6411
    %v6413 = vpop.f32.mrb[0].mxu0
    %v6414 = vpop.f32.mrb[0].mxu0
    %v6415 = vpop.f32.mrb[0].mxu0
    %6416 = vdwg.mxu0
    %v6418 = vsel %vm1347, %v6311, 0
    %v6421 = vsel %vm2368, %v6319, 0
    %6423 = vmatprep.subr.bf16.mxu0 0
    %6424 = vmatpush1.bf16.msra.mxu0 %v6421
    %6425 = vmatprep.subr.bf16.mxu0 0
    %6426 = vmatpush1.bf16.msra.mxu0 0
    %6427 = vmatprep.subr.bf16.mxu0 0
    %6428 = vmatpush1.bf16.msra.mxu0 0
    %6429 = vmatprep.subr.bf16.mxu0 0
    %6430 = vmatpush1.bf16.msra.mxu0 0
    %6431 = vmatprep.subr.bf16.mxu0 0
    %6432 = vmatpush1.bf16.msra.mxu0 0
    %6433 = vmatprep.subr.bf16.mxu0 0
    %6434 = vmatpush1.bf16.msra.mxu0 0
    %6435 = vmatprep.subr.bf16.mxu0 0
    %6436 = vmatpush1.bf16.msra.mxu0 0
    %6437 = vmatprep.subr.bf16.mxu0 0
    %6438 = vmatpush1.bf16.msra.mxu0 0
    %6439 = vmatprep.subr.bf16.mxu0 0
    %6440 = vmatpush1.bf16.msra.mxu0 0
    %6441 = vmatprep.subr.bf16.mxu0 0
    %6442 = vmatpush1.bf16.msra.mxu0 0
    %6443 = vmatprep.subr.bf16.mxu0 0
    %6444 = vmatpush1.bf16.msra.mxu0 0
    %6445 = vmatprep.subr.bf16.mxu0 0
    %6446 = vmatpush1.bf16.msra.mxu0 0
    %6447 = vmatprep.subr.bf16.mxu0 0
    %6448 = vmatpush1.bf16.msra.mxu0 0
    %6449 = vmatprep.subr.bf16.mxu0 0
    %6450 = vmatpush1.bf16.msra.mxu0 0
    %6451 = vmatprep.subr.bf16.mxu0 0
    %6452 = vmatpush1.bf16.msra.mxu0 0
    %6453 = vmatprep.subr.bf16.mxu0 0
    %6454 = vmatpush1.bf16.msra.mxu0 0
    %6455 = vmatprep.mubr.bf16.mxu0 0
    %6456 = vmatmul.mubr.bf16.gmra.mrb[0].mxu0 %v6418
    %v6457 = vpop.f32.mrb[0].mxu0
    %v6458 = vadd.f32 0.0, %v6457
    %v6459 = vpop.f32.mrb[0].mxu0
    %v6460 = vpop.f32.mrb[0].mxu0
    %v6461 = vpop.f32.mrb[0].mxu0
    %6462 = vdwg.mxu0
    %v6464 = vsel %vm1347, %v6312, 0
    %v6467 = vsel %vm2368, %v6320, 0
    %6469 = vmatprep.subr.bf16.mxu0 0
    %6470 = vmatpush1.bf16.msra.mxu0 %v6467
    %6471 = vmatprep.subr.bf16.mxu0 0
    %6472 = vmatpush1.bf16.msra.mxu0 0
    %6473 = vmatprep.subr.bf16.mxu0 0
    %6474 = vmatpush1.bf16.msra.mxu0 0
    %6475 = vmatprep.subr.bf16.mxu0 0
    %6476 = vmatpush1.bf16.msra.mxu0 0
    %6477 = vmatprep.subr.bf16.mxu0 0
    %6478 = vmatpush1.bf16.msra.mxu0 0
    %6479 = vmatprep.subr.bf16.mxu0 0
    %6480 = vmatpush1.bf16.msra.mxu0 0
    %6481 = vmatprep.subr.bf16.mxu0 0
    %6482 = vmatpush1.bf16.msra.mxu0 0
    %6483 = vmatprep.subr.bf16.mxu0 0
    %6484 = vmatpush1.bf16.msra.mxu0 0
    %6485 = vmatprep.subr.bf16.mxu0 0
    %6486 = vmatpush1.bf16.msra.mxu0 0
    %6487 = vmatprep.subr.bf16.mxu0 0
    %6488 = vmatpush1.bf16.msra.mxu0 0
    %6489 = vmatprep.subr.bf16.mxu0 0
    %6490 = vmatpush1.bf16.msra.mxu0 0
    %6491 = vmatprep.subr.bf16.mxu0 0
    %6492 = vmatpush1.bf16.msra.mxu0 0
    %6493 = vmatprep.subr.bf16.mxu0 0
    %6494 = vmatpush1.bf16.msra.mxu0 0
    %6495 = vmatprep.subr.bf16.mxu0 0
    %6496 = vmatpush1.bf16.msra.mxu0 0
    %6497 = vmatprep.subr.bf16.mxu0 0
    %6498 = vmatpush1.bf16.msra.mxu0 0
    %6499 = vmatprep.subr.bf16.mxu0 0
    %6500 = vmatpush1.bf16.msra.mxu0 0
    %6501 = vmatprep.mubr.bf16.mxu0 0
    %6502 = vmatmul.mubr.bf16.gmra.mrb[0].mxu0 %v6464
    %v6503 = vpop.f32.mrb[0].mxu0
    %v6504 = vadd.f32 0.0, %v6503
    %v6505 = vpop.f32.mrb[0].mxu0
    %v6506 = vpop.f32.mrb[0].mxu0
    %v6507 = vpop.f32.mrb[0].mxu0
    %6508 = vdwg.mxu0
    %v6510 = vsel %vm1347, %v6313, 0
    %v6513 = vsel %vm2368, %v6321, 0
    %6515 = vmatprep.subr.bf16.mxu0 0
    %6516 = vmatpush1.bf16.msra.mxu0 %v6513
    %6517 = vmatprep.subr.bf16.mxu0 0
    %6518 = vmatpush1.bf16.msra.mxu0 0
    %6519 = vmatprep.subr.bf16.mxu0 0
    %6520 = vmatpush1.bf16.msra.mxu0 0
    %6521 = vmatprep.subr.bf16.mxu0 0
    %6522 = vmatpush1.bf16.msra.mxu0 0
    %6523 = vmatprep.subr.bf16.mxu0 0
    %6524 = vmatpush1.bf16.msra.mxu0 0
    %6525 = vmatprep.subr.bf16.mxu0 0
    %6526 = vmatpush1.bf16.msra.mxu0 0
    %6527 = vmatprep.subr.bf16.mxu0 0
    %6528 = vmatpush1.bf16.msra.mxu0 0
    %6529 = vmatprep.subr.bf16.mxu0 0
    %6530 = vmatpush1.bf16.msra.mxu0 0
    %6531 = vmatprep.subr.bf16.mxu0 0
    %6532 = vmatpush1.bf16.msra.mxu0 0
    %6533 = vmatprep.subr.bf16.mxu0 0
    %6534 = vmatpush1.bf16.msra.mxu0 0
    %6535 = vmatprep.subr.bf16.mxu0 0
    %6536 = vmatpush1.bf16.msra.mxu0 0
    %6537 = vmatprep.subr.bf16.mxu0 0
    %6538 = vmatpush1.bf16.msra.mxu0 0
    %6539 = vmatprep.subr.bf16.mxu0 0
    %6540 = vmatpush1.bf16.msra.mxu0 0
    %6541 = vmatprep.subr.bf16.mxu0 0
    %6542 = vmatpush1.bf16.msra.mxu0 0
    %6543 = vmatprep.subr.bf16.mxu0 0
    %6544 = vmatpush1.bf16.msra.mxu0 0
    %6545 = vmatprep.subr.bf16.mxu0 0
    %6546 = vmatpush1.bf16.msra.mxu0 0
    %6547 = vmatprep.mubr.bf16.mxu0 0
    %6548 = vmatmul.mubr.bf16.gmra.mrb[0].mxu0 %v6510
    %v6549 = vpop.f32.mrb[0].mxu0
    %v6550 = vadd.f32 0.0, %v6549
    %v6551 = vpop.f32.mrb[0].mxu0
    %v6552 = vpop.f32.mrb[0].mxu0
    %v6553 = vpop.f32.mrb[0].mxu0
    %6554 = vdwg.mxu0
    %v6556 = vsel %vm1347, %v6314, 0
    %v6559 = vsel %vm2368, %v6322, 0
    %6561 = vmatprep.subr.bf16.mxu0 0
    %6562 = vmatpush1.bf16.msra.mxu0 %v6559
    %6563 = vmatprep.subr.bf16.mxu0 0
    %6564 = vmatpush1.bf16.msra.mxu0 0
    %6565 = vmatprep.subr.bf16.mxu0 0
    %6566 = vmatpush1.bf16.msra.mxu0 0
    %6567 = vmatprep.subr.bf16.mxu0 0
    %6568 = vmatpush1.bf16.msra.mxu0 0
    %6569 = vmatprep.subr.bf16.mxu0 0
    %6570 = vmatpush1.bf16.msra.mxu0 0
    %6571 = vmatprep.subr.bf16.mxu0 0
    %6572 = vmatpush1.bf16.msra.mxu0 0
    %6573 = vmatprep.subr.bf16.mxu0 0
    %6574 = vmatpush1.bf16.msra.mxu0 0
    %6575 = vmatprep.subr.bf16.mxu0 0
    %6576 = vmatpush1.bf16.msra.mxu0 0
    %6577 = vmatprep.subr.bf16.mxu0 0
    %6578 = vmatpush1.bf16.msra.mxu0 0
    %6579 = vmatprep.subr.bf16.mxu0 0
    %6580 = vmatpush1.bf16.msra.mxu0 0
    %6581 = vmatprep.subr.bf16.mxu0 0
    %6582 = vmatpush1.bf16.msra.mxu0 0
    %6583 = vmatprep.subr.bf16.mxu0 0
    %6584 = vmatpush1.bf16.msra.mxu0 0
    %6585 = vmatprep.subr.bf16.mxu0 0
    %6586 = vmatpush1.bf16.msra.mxu0 0
    %6587 = vmatprep.subr.bf16.mxu0 0
    %6588 = vmatpush1.bf16.msra.mxu0 0
    %6589 = vmatprep.subr.bf16.mxu0 0
    %6590 = vmatpush1.bf16.msra.mxu0 0
    %6591 = vmatprep.subr.bf16.mxu0 0
    %6592 = vmatpush1.bf16.msra.mxu0 0
    %6593 = vmatprep.mubr.bf16.mxu0 0
    %6594 = vmatmul.mubr.bf16.gmra.mrb[0].mxu0 %v6556
    %v6595 = vpop.f32.mrb[0].mxu0
    %v6596 = vadd.f32 0.0, %v6595
    %v6597 = vpop.f32.mrb[0].mxu0
    %v6598 = vpop.f32.mrb[0].mxu0
    %v6599 = vpop.f32.mrb[0].mxu0
    %6600 = vdwg.mxu0
    %v6602 = vsel %vm1347, %v6315, 0
    %v6605 = vsel %vm2368, %v6323, 0
    %6607 = vmatprep.subr.bf16.mxu0 0
    %6608 = vmatpush1.bf16.msra.mxu0 %v6605
    %6609 = vmatprep.subr.bf16.mxu0 0
    %6610 = vmatpush1.bf16.msra.mxu0 0
    %6611 = vmatprep.subr.bf16.mxu0 0
    %6612 = vmatpush1.bf16.msra.mxu0 0
    %6613 = vmatprep.subr.bf16.mxu0 0
    %6614 = vmatpush1.bf16.msra.mxu0 0
    %6615 = vmatprep.subr.bf16.mxu0 0
    %6616 = vmatpush1.bf16.msra.mxu0 0
    %6617 = vmatprep.subr.bf16.mxu0 0
    %6618 = vmatpush1.bf16.msra.mxu0 0
    %6619 = vmatprep.subr.bf16.mxu0 0
    %6620 = vmatpush1.bf16.msra.mxu0 0
    %6621 = vmatprep.subr.bf16.mxu0 0
    %6622 = vmatpush1.bf16.msra.mxu0 0
    %6623 = vmatprep.subr.bf16.mxu0 0
    %6624 = vmatpush1.bf16.msra.mxu0 0
    %6625 = vmatprep.subr.bf16.mxu0 0
    %6626 = vmatpush1.bf16.msra.mxu0 0
    %6627 = vmatprep.subr.bf16.mxu0 0
    %6628 = vmatpush1.bf16.msra.mxu0 0
    %6629 = vmatprep.subr.bf16.mxu0 0
    %6630 = vmatpush1.bf16.msra.mxu0 0
    %6631 = vmatprep.subr.bf16.mxu0 0
    %6632 = vmatpush1.bf16.msra.mxu0 0
    %6633 = vmatprep.subr.bf16.mxu0 0
    %6634 = vmatpush1.bf16.msra.mxu0 0
    %6635 = vmatprep.subr.bf16.mxu0 0
    %6636 = vmatpush1.bf16.msra.mxu0 0
    %6637 = vmatprep.subr.bf16.mxu0 0
    %6638 = vmatpush1.bf16.msra.mxu0 0
    %6639 = vmatprep.mubr.bf16.mxu0 0
    %6640 = vmatmul.mubr.bf16.gmra.mrb[0].mxu0 %v6602
    %v6641 = vpop.f32.mrb[0].mxu0
    %v6642 = vadd.f32 0.0, %v6641
    %v6643 = vpop.f32.mrb[0].mxu0
    %v6644 = vpop.f32.mrb[0].mxu0
    %v6645 = vpop.f32.mrb[0].mxu0
    %6646 = vdwg.mxu0
    %v6648 = vsel %vm1347, %v6316, 0
    %v6651 = vsel %vm2368, %v6324, 0
    %6653 = vmatprep.subr.bf16.mxu0 0
    %6654 = vmatpush1.bf16.msra.mxu0 %v6651
    %6655 = vmatprep.subr.bf16.mxu0 0
    %6656 = vmatpush1.bf16.msra.mxu0 0
    %6657 = vmatprep.subr.bf16.mxu0 0
    %6658 = vmatpush1.bf16.msra.mxu0 0
    %6659 = vmatprep.subr.bf16.mxu0 0
    %6660 = vmatpush1.bf16.msra.mxu0 0
    %6661 = vmatprep.subr.bf16.mxu0 0
    %6662 = vmatpush1.bf16.msra.mxu0 0
    %6663 = vmatprep.subr.bf16.mxu0 0
    %6664 = vmatpush1.bf16.msra.mxu0 0
    %6665 = vmatprep.subr.bf16.mxu0 0
    %6666 = vmatpush1.bf16.msra.mxu0 0
    %6667 = vmatprep.subr.bf16.mxu0 0
    %6668 = vmatpush1.bf16.msra.mxu0 0
    %6669 = vmatprep.subr.bf16.mxu0 0
    %6670 = vmatpush1.bf16.msra.mxu0 0
    %6671 = vmatprep.subr.bf16.mxu0 0
    %6672 = vmatpush1.bf16.msra.mxu0 0
    %6673 = vmatprep.subr.bf16.mxu0 0
    %6674 = vmatpush1.bf16.msra.mxu0 0
    %6675 = vmatprep.subr.bf16.mxu0 0
    %6676 = vmatpush1.bf16.msra.mxu0 0
    %6677 = vmatprep.subr.bf16.mxu0 0
    %6678 = vmatpush1.bf16.msra.mxu0 0
    %6679 = vmatprep.subr.bf16.mxu0 0
    %6680 = vmatpush1.bf16.msra.mxu0 0
    %6681 = vmatprep.subr.bf16.mxu0 0
    %6682 = vmatpush1.bf16.msra.mxu0 0
    %6683 = vmatprep.subr.bf16.mxu0 0
    %6684 = vmatpush1.bf16.msra.mxu0 0
    %6685 = vmatprep.mubr.bf16.mxu0 0
    %6686 = vmatmul.mubr.bf16.gmra.mrb[0].mxu0 %v6648
    %v6687 = vpop.f32.mrb[0].mxu0
    %v6688 = vadd.f32 0.0, %v6687
    %v6689 = vpop.f32.mrb[0].mxu0
    %v6690 = vpop.f32.mrb[0].mxu0
    %v6691 = vpop.f32.mrb[0].mxu0
    %6692 = vdwg.mxu0
    %v6693 = vsel %vm152, %v6366, 0.0
    %v6694 = vsel %vm152, %v6458, 0.0
    %v6695 = vadd.f32 %v6693, %v6694
    %v6696 = vsel %vm152, %v6550, 0.0
    %v6697 = vadd.f32 %v6695, %v6696
    %v6698 = vsel %vm152, %v6642, 0.0
    %v6699 = vadd.f32 %v6697, %v6698
    %v6700 = vsel %vm152, %v6412, 0.0
    %v6701 = vsel %vm152, %v6504, 0.0
    %v6702 = vadd.f32 %v6700, %v6701
    %v6703 = vsel %vm152, %v6596, 0.0
    %v6704 = vadd.f32 %v6702, %v6703
    %v6705 = vsel %vm152, %v6688, 0.0
    %v6706 = vadd.f32 %v6704, %v6705
    %v6707 = vadd.f32 %v2973, %v6699
    %v6708 = vadd.f32 %v2974, %v6706
    %v6709 = vlaneseq
    %v6710 = vshrl.u32 %v6709, 7
    %v6711 = vsub.s32 4, %v6710
    %v6712 = vrot.slane %v4095, %v6711
    %v6713 = vadd.f32 %v6707, %v6712
    %v6714 = vadd.f32 %v6708, %v6712
    %v6715 = vsel %vm152, %v6713, 0.0
    %6716 = vadd.xlane.f32.xlu0 %v6715
    %v6717 = vpop.xlane.xlu0 %6716
    %v6718 = vsel %vm152, %v6714, 0.0
    %6719 = vadd.xlane.f32.xlu0 %v6718
    %v6720 = vpop.xlane.xlu0 %6719
    %v6721 = vmul.f32 %v6717, %v159
    %v6722 = vmul.f32 %v6720, %v159
    %v6723 = vsub.f32 %v6713, %v6721
    %v6724 = vsub.f32 %v6714, %v6722
    %v6725 = vmul.f32 %v6723, %v6723
    %v6726 = vmul.f32 %v6724, %v6724
    %v6727 = vsel %vm152, %v6725, 0.0
    %6728 = vadd.xlane.f32.xlu0 %v6727
    %v6729 = vpop.xlane.xlu0 %6728
    %v6730 = vsel %vm152, %v6726, 0.0
    %6731 = vadd.xlane.f32.xlu0 %v6730
    %v6732 = vpop.xlane.xlu0 %6731
    %v6733 = vmul.f32 %v6729, %v159
    %v6734 = vmul.f32 %v6732, %v159
    %v6735 = vadd.f32 %v6733, 1e-05
    %v6736 = vadd.f32 %v6734, 1e-05
    %v6737 = vrsqrt.pop %v6735
    %v6738 = vrsqrt.pop %v6736
    %v6739 = vmul.f32 %v6723, %v6737
    %v6740 = vmul.f32 %v6724, %v6738
    %v6741 = vlaneseq
    %v6742 = vshrl.u32 %v6741, 7
    %v6743 = vsub.s32 5, %v6742
    %v6744 = vrot.slane %v4095, %v6743
    %v6745 = vmul.f32 %v6739, %v6744
    %v6746 = vmul.f32 %v6740, %v6744
    %v6747 = vlaneseq
    %v6748 = vshrl.u32 %v6747, 7
    %v6749 = vsub.s32 6, %v6748
    %v6750 = vrot.slane %v4095, %v6749
    %v6751 = vadd.f32 %v6745, %v6750
    %v6752 = vadd.f32 %v6746, %v6750
    %v6753 = vpack.c.bf16 %v6752, %v6751
    %s6754 = scalar_lea.vmem %s8, 16
    %v6755 = vld [vmem:[%s6754] sm:$0xf]
    %v6756 = vld [vmem:[%s6754 + $0x4] sm:$0xf]
    %v6757 = vld [vmem:[%s6754 + $0x8] sm:$0xf]
    %v6758 = vld [vmem:[%s6754 + $0xc] sm:$0xf]
    %v6759 = vlaneseq
    %v6760 = vshrl.u32 %v6759, 7
    %v6761 = vsub.s32 7, %v6760
    %v6762 = vrot.slane %v4095, %v6761
    %v6767 = vunpack.c.l.b16 %v6755
    %v6768 = vunpack.c.l.b16 %v6756
    %v6769 = vunpack.c.l.b16 %v6757
    %v6770 = vunpack.c.l.b16 %v6758
    %v6771 = vpack.c.b16 %v6768, %v6767
    %v6772 = vpack.c.b16 %v6770, %v6769
    %v6776 = vsel %vm152, %v6753, 0
    %6778 = vmatprep.subr.bf16.mxu0 0
    %6779 = vmatpush1.bf16.msra.mxu0 %v6771
    %6780 = vmatprep.subr.bf16.mxu0 0
    %6781 = vmatpush1.bf16.msra.mxu0 %v6772
    %6782 = vmatprep.subr.bf16.mxu0 0
    %6783 = vmatpush1.bf16.msra.mxu0 0
    %6784 = vmatprep.subr.bf16.mxu0 0
    %6785 = vmatpush1.bf16.msra.mxu0 0
    %6786 = vmatprep.subr.bf16.mxu0 0
    %6787 = vmatpush1.bf16.msra.mxu0 0
    %6788 = vmatprep.subr.bf16.mxu0 0
    %6789 = vmatpush1.bf16.msra.mxu0 0
    %6790 = vmatprep.subr.bf16.mxu0 0
    %6791 = vmatpush1.bf16.msra.mxu0 0
    %6792 = vmatprep.subr.bf16.mxu0 0
    %6793 = vmatpush1.bf16.msra.mxu0 0
    %6794 = vmatprep.subr.bf16.mxu0 0
    %6795 = vmatpush1.bf16.msra.mxu0 0
    %6796 = vmatprep.subr.bf16.mxu0 0
    %6797 = vmatpush1.bf16.msra.mxu0 0
    %6798 = vmatprep.subr.bf16.mxu0 0
    %6799 = vmatpush1.bf16.msra.mxu0 0
    %6800 = vmatprep.subr.bf16.mxu0 0
    %6801 = vmatpush1.bf16.msra.mxu0 0
    %6802 = vmatprep.subr.bf16.mxu0 0
    %6803 = vmatpush1.bf16.msra.mxu0 0
    %6804 = vmatprep.subr.bf16.mxu0 0
    %6805 = vmatpush1.bf16.msra.mxu0 0
    %6806 = vmatprep.subr.bf16.mxu0 0
    %6807 = vmatpush1.bf16.msra.mxu0 0
    %6808 = vmatprep.subr.bf16.mxu0 0
    %6809 = vmatpush1.bf16.msra.mxu0 0
    %6810 = vmatprep.mubr.bf16.mxu0 0
    %6811 = vmatmul.mubr.bf16.gmra.mrb[0].mxu0 %v6776
    %v6812 = vpop.f32.mrb[0].mxu0
    %v6813 = vadd.f32 %v6762, %v6812
    %v6814 = vpop.f32.mrb[0].mxu0
    %v6815 = vpop.f32.mrb[0].mxu0
    %v6816 = vadd.f32 %v6762, %v6815
    %v6817 = vpop.f32.mrb[0].mxu0
    %6818 = vdwg.mxu0
    %v6819 = vmax.f32 %v6813, 0.0
    %v6820 = vmax.f32 %v6816, 0.0
    %v6821 = vpack.c.bf16 %v6820, %v6819
    %s6822 = scalar_lea.vmem %s9, 64
    %v6823 = vld [vmem:[%s6822] sm:$0xf]
    %v6824 = vld [vmem:[%s6822 + $0x4] sm:$0xf]
    %v6825 = vld [vmem:[%s6822 + $0x8] sm:$0xf]
    %v6826 = vld [vmem:[%s6822 + $0xc] sm:$0xf]
    %v6827 = vld [vmem:[%s6822 + $0x10] sm:$0xf]
    %v6828 = vld [vmem:[%s6822 + $0x14] sm:$0xf]
    %v6829 = vld [vmem:[%s6822 + $0x18] sm:$0xf]
    %v6830 = vld [vmem:[%s6822 + $0x1c] sm:$0xf]
    %v6831 = vld [vmem:[%s6822 + $0x20] sm:$0xf]
    %v6832 = vld [vmem:[%s6822 + $0x24] sm:$0xf]
    %v6833 = vld [vmem:[%s6822 + $0x28] sm:$0xf]
    %v6834 = vld [vmem:[%s6822 + $0x2c] sm:$0xf]
    %v6835 = vld [vmem:[%s6822 + $0x30] sm:$0xf]
    %v6836 = vld [vmem:[%s6822 + $0x34] sm:$0xf]
    %v6837 = vld [vmem:[%s6822 + $0x38] sm:$0xf]
    %v6838 = vld [vmem:[%s6822 + $0x3c] sm:$0xf]
    %v6855 = vunpack.c.l.b16 %v6823
    %v6856 = vunpack.c.l.b16 %v6824
    %v6857 = vunpack.c.l.b16 %v6825
    %v6858 = vunpack.c.l.b16 %v6826
    %v6859 = vunpack.c.l.b16 %v6827
    %v6860 = vunpack.c.l.b16 %v6828
    %v6861 = vunpack.c.l.b16 %v6829
    %v6862 = vunpack.c.l.b16 %v6830
    %v6863 = vunpack.c.l.b16 %v6831
    %v6864 = vunpack.c.l.b16 %v6832
    %v6865 = vunpack.c.l.b16 %v6833
    %v6866 = vunpack.c.l.b16 %v6834
    %v6867 = vunpack.c.l.b16 %v6835
    %v6868 = vunpack.c.l.b16 %v6836
    %v6869 = vunpack.c.l.b16 %v6837
    %v6870 = vunpack.c.l.b16 %v6838
    %v6871 = vpack.c.b16 %v6856, %v6855
    %v6872 = vpack.c.b16 %v6858, %v6857
    %v6873 = vpack.c.b16 %v6860, %v6859
    %v6874 = vpack.c.b16 %v6862, %v6861
    %v6875 = vpack.c.b16 %v6864, %v6863
    %v6876 = vpack.c.b16 %v6866, %v6865
    %v6877 = vpack.c.b16 %v6868, %v6867
    %v6878 = vpack.c.b16 %v6870, %v6869
    %6887 = vmatprep.subr.bf16.mxu0 0
    %6888 = vmatpush1.bf16.msra.mxu0 %v6871
    %6889 = vmatprep.subr.bf16.mxu0 0
    %6890 = vmatpush1.bf16.msra.mxu0 %v6872
    %6891 = vmatprep.subr.bf16.mxu0 0
    %6892 = vmatpush1.bf16.msra.mxu0 %v6873
    %6893 = vmatprep.subr.bf16.mxu0 0
    %6894 = vmatpush1.bf16.msra.mxu0 %v6874
    %6895 = vmatprep.subr.bf16.mxu0 0
    %6896 = vmatpush1.bf16.msra.mxu0 %v6875
    %6897 = vmatprep.subr.bf16.mxu0 0
    %6898 = vmatpush1.bf16.msra.mxu0 %v6876
    %6899 = vmatprep.subr.bf16.mxu0 0
    %6900 = vmatpush1.bf16.msra.mxu0 %v6877
    %6901 = vmatprep.subr.bf16.mxu0 0
    %6902 = vmatpush1.bf16.msra.mxu0 %v6878
    %6903 = vmatprep.subr.bf16.mxu0 0
    %6904 = vmatpush1.bf16.msra.mxu0 0
    %6905 = vmatprep.subr.bf16.mxu0 0
    %6906 = vmatpush1.bf16.msra.mxu0 0
    %6907 = vmatprep.subr.bf16.mxu0 0
    %6908 = vmatpush1.bf16.msra.mxu0 0
    %6909 = vmatprep.subr.bf16.mxu0 0
    %6910 = vmatpush1.bf16.msra.mxu0 0
    %6911 = vmatprep.subr.bf16.mxu0 0
    %6912 = vmatpush1.bf16.msra.mxu0 0
    %6913 = vmatprep.subr.bf16.mxu0 0
    %6914 = vmatpush1.bf16.msra.mxu0 0
    %6915 = vmatprep.subr.bf16.mxu0 0
    %6916 = vmatpush1.bf16.msra.mxu0 0
    %6917 = vmatprep.subr.bf16.mxu0 0
    %6918 = vmatpush1.bf16.msra.mxu0 0
    %6919 = vmatprep.mubr.bf16.mxu0 0
    %6920 = vmatmul.mubr.bf16.gmra.mrb[0].mxu0 %v6821
    %v6921 = vpop.f32.mrb[0].mxu0
    %v6922 = vadd.f32 0.0, %v6921
    %v6923 = vpop.f32.mrb[0].mxu0
    %v6924 = vpop.f32.mrb[0].mxu0
    %v6925 = vadd.f32 0.0, %v6924
    %v6926 = vpop.f32.mrb[0].mxu0
    %6927 = vdwg.mxu0
    %v6928 = vadd.f32 %v6713, %v6922
    %v6929 = vadd.f32 %v6714, %v6925
    %v6930 = vlaneseq
    %v6931 = vshrl.u32 %v6930, 7
    %v6932 = vsub.s32 0, %v6931
    %v6933 = vrot.slane %v4096, %v6932
    %v6934 = vadd.f32 %v6928, %v6933
    %v6935 = vadd.f32 %v6929, %v6933
    %v6936 = vsel %vm152, %v6934, 0.0
    %6937 = vadd.xlane.f32.xlu0 %v6936
    %v6938 = vpop.xlane.xlu0 %6937
    %v6939 = vsel %vm152, %v6935, 0.0
    %6940 = vadd.xlane.f32.xlu0 %v6939
    %v6941 = vpop.xlane.xlu0 %6940
    %v6942 = vmul.f32 %v6938, %v159
    %v6943 = vmul.f32 %v6941, %v159
    %v6944 = vsub.f32 %v6934, %v6942
    %v6945 = vsub.f32 %v6935, %v6943
    %v6946 = vmul.f32 %v6944, %v6944
    %v6947 = vmul.f32 %v6945, %v6945
    %v6948 = vsel %vm152, %v6946, 0.0
    %6949 = vadd.xlane.f32.xlu0 %v6948
    %v6950 = vpop.xlane.xlu0 %6949
    %v6951 = vsel %vm152, %v6947, 0.0
    %6952 = vadd.xlane.f32.xlu0 %v6951
    %v6953 = vpop.xlane.xlu0 %6952
    %v6954 = vmul.f32 %v6950, %v159
    %v6955 = vmul.f32 %v6953, %v159
    %v6956 = vadd.f32 %v6954, 1e-05
    %v6957 = vadd.f32 %v6955, 1e-05
    %v6958 = vrsqrt.pop %v6956
    %v6959 = vrsqrt.pop %v6957
    %v6960 = vmul.f32 %v6944, %v6958
    %v6961 = vmul.f32 %v6945, %v6959
    %v6962 = vlaneseq
    %v6963 = vshrl.u32 %v6962, 7
    %v6964 = vsub.s32 0, %v6963
    %v6965 = vrot.slane %v4098, %v6964
    %v6966 = vmul.f32 %v6960, %v6965
    %v6967 = vmul.f32 %v6961, %v6965
    %v6968 = vlaneseq
    %v6969 = vshrl.u32 %v6968, 7
    %v6970 = vsub.s32 1, %v6969
    %v6971 = vrot.slane %v4098, %v6970
    %v6972 = vadd.f32 %v6966, %v6971
    %v6973 = vadd.f32 %v6967, %v6971
    %v6974 = vpack.c.bf16 %v6973, %v6972
    %s6975 = scalar_lea.vmem %s10, 16
    %v6976 = vld [vmem:[%s6975] sm:$0xf]
    %v6977 = vld [vmem:[%s6975 + $0x4] sm:$0xf]
    %v6978 = vld [vmem:[%s6975 + $0x8] sm:$0xf]
    %v6979 = vld [vmem:[%s6975 + $0xc] sm:$0xf]
    %v6980 = vlaneseq
    %v6981 = vshrl.u32 %v6980, 7
    %v6982 = vsub.s32 2, %v6981
    %v6983 = vrot.slane %v4098, %v6982
    %v6988 = vunpack.c.l.b16 %v6976
    %v6989 = vunpack.c.l.b16 %v6977
    %v6990 = vunpack.c.l.b16 %v6978
    %v6991 = vunpack.c.l.b16 %v6979
    %v6992 = vpack.c.b16 %v6989, %v6988
    %v6993 = vpack.c.b16 %v6991, %v6990
    %v6997 = vsel %vm152, %v6974, 0
    %6999 = vmatprep.subr.bf16.mxu0 0
    %7000 = vmatpush1.bf16.msra.mxu0 %v6992
    %7001 = vmatprep.subr.bf16.mxu0 0
    %7002 = vmatpush1.bf16.msra.mxu0 %v6993
    %7003 = vmatprep.subr.bf16.mxu0 0
    %7004 = vmatpush1.bf16.msra.mxu0 0
    %7005 = vmatprep.subr.bf16.mxu0 0
    %7006 = vmatpush1.bf16.msra.mxu0 0
    %7007 = vmatprep.subr.bf16.mxu0 0
    %7008 = vmatpush1.bf16.msra.mxu0 0
    %7009 = vmatprep.subr.bf16.mxu0 0
    %7010 = vmatpush1.bf16.msra.mxu0 0
    %7011 = vmatprep.subr.bf16.mxu0 0
    %7012 = vmatpush1.bf16.msra.mxu0 0
    %7013 = vmatprep.subr.bf16.mxu0 0
    %7014 = vmatpush1.bf16.msra.mxu0 0
    %7015 = vmatprep.subr.bf16.mxu0 0
    %7016 = vmatpush1.bf16.msra.mxu0 0
    %7017 = vmatprep.subr.bf16.mxu0 0
    %7018 = vmatpush1.bf16.msra.mxu0 0
    %7019 = vmatprep.subr.bf16.mxu0 0
    %7020 = vmatpush1.bf16.msra.mxu0 0
    %7021 = vmatprep.subr.bf16.mxu0 0
    %7022 = vmatpush1.bf16.msra.mxu0 0
    %7023 = vmatprep.subr.bf16.mxu0 0
    %7024 = vmatpush1.bf16.msra.mxu0 0
    %7025 = vmatprep.subr.bf16.mxu0 0
    %7026 = vmatpush1.bf16.msra.mxu0 0
    %7027 = vmatprep.subr.bf16.mxu0 0
    %7028 = vmatpush1.bf16.msra.mxu0 0
    %7029 = vmatprep.subr.bf16.mxu0 0
    %7030 = vmatpush1.bf16.msra.mxu0 0
    %7031 = vmatprep.mubr.bf16.mxu0 0
    %7032 = vmatmul.mubr.bf16.gmra.mrb[0].mxu0 %v6997
    %v7033 = vpop.f32.mrb[0].mxu0
    %v7034 = vadd.f32 %v6983, %v7033
    %v7035 = vpop.f32.mrb[0].mxu0
    %v7036 = vpop.f32.mrb[0].mxu0
    %v7037 = vadd.f32 %v6983, %v7036
    %v7038 = vpop.f32.mrb[0].mxu0
    %7039 = vdwg.mxu0
    %s7040 = scalar_lea.vmem %s11, 16
    %v7041 = vld [vmem:[%s7040] sm:$0xf]
    %v7042 = vld [vmem:[%s7040 + $0x4] sm:$0xf]
    %v7043 = vld [vmem:[%s7040 + $0x8] sm:$0xf]
    %v7044 = vld [vmem:[%s7040 + $0xc] sm:$0xf]
    %v7045 = vlaneseq
    %v7046 = vshrl.u32 %v7045, 7
    %v7047 = vsub.s32 3, %v7046
    %v7048 = vrot.slane %v4098, %v7047
    %v7053 = vunpack.c.l.b16 %v7041
    %v7054 = vunpack.c.l.b16 %v7042
    %v7055 = vunpack.c.l.b16 %v7043
    %v7056 = vunpack.c.l.b16 %v7044
    %v7057 = vpack.c.b16 %v7054, %v7053
    %v7058 = vpack.c.b16 %v7056, %v7055
    %7061 = vmatprep.subr.bf16.mxu0 0
    %7062 = vmatpush1.bf16.msra.mxu0 %v7057
    %7063 = vmatprep.subr.bf16.mxu0 0
    %7064 = vmatpush1.bf16.msra.mxu0 %v7058
    %7065 = vmatprep.subr.bf16.mxu0 0
    %7066 = vmatpush1.bf16.msra.mxu0 0
    %7067 = vmatprep.subr.bf16.mxu0 0
    %7068 = vmatpush1.bf16.msra.mxu0 0
    %7069 = vmatprep.subr.bf16.mxu0 0
    %7070 = vmatpush1.bf16.msra.mxu0 0
    %7071 = vmatprep.subr.bf16.mxu0 0
    %7072 = vmatpush1.bf16.msra.mxu0 0
    %7073 = vmatprep.subr.bf16.mxu0 0
    %7074 = vmatpush1.bf16.msra.mxu0 0
    %7075 = vmatprep.subr.bf16.mxu0 0
    %7076 = vmatpush1.bf16.msra.mxu0 0
    %7077 = vmatprep.subr.bf16.mxu0 0
    %7078 = vmatpush1.bf16.msra.mxu0 0
    %7079 = vmatprep.subr.bf16.mxu0 0
    %7080 = vmatpush1.bf16.msra.mxu0 0
    %7081 = vmatprep.subr.bf16.mxu0 0
    %7082 = vmatpush1.bf16.msra.mxu0 0
    %7083 = vmatprep.subr.bf16.mxu0 0
    %7084 = vmatpush1.bf16.msra.mxu0 0
    %7085 = vmatprep.subr.bf16.mxu0 0
    %7086 = vmatpush1.bf16.msra.mxu0 0
    %7087 = vmatprep.subr.bf16.mxu0 0
    %7088 = vmatpush1.bf16.msra.mxu0 0
    %7089 = vmatprep.subr.bf16.mxu0 0
    %7090 = vmatpush1.bf16.msra.mxu0 0
    %7091 = vmatprep.subr.bf16.mxu0 0
    %7092 = vmatpush1.bf16.msra.mxu0 0
    %7093 = vmatprep.mubr.bf16.mxu0 0
    %7094 = vmatmul.mubr.bf16.gmra.mrb[0].mxu0 %v6997
    %v7095 = vpop.f32.mrb[0].mxu0
    %v7096 = vadd.f32 %v7048, %v7095
    %v7097 = vpop.f32.mrb[0].mxu0
    %v7098 = vpop.f32.mrb[0].mxu0
    %v7099 = vadd.f32 %v7048, %v7098
    %v7100 = vpop.f32.mrb[0].mxu0
    %7101 = vdwg.mxu0
    %v7103 = vcombine.high %v7034, %v7034
    %v7105 = vunpack.c.l.s4 1966171168
    %v7106 = vunpack.c.0.s8 %v7105
    %v7107 = vlaneseq
    %v7108 = vshrl.u32 %v7107, 7
    %v7109 = vsub.s32 %v7106, %v7108
    %v7110 = vrot.slane %v7034, %v7109
    %v7112 = vunpack.c.l.s4 1966171168
    %v7113 = vunpack.c.0.s8 %v7112
    %v7114 = vlaneseq
    %v7115 = vshrl.u32 %v7114, 7
    %v7116 = vsub.s32 %v7113, %v7115
    %v7117 = vrot.slane %v7103, %v7116
    %v7118 = vcombine.high %v7110, %v7110
    %v7119 = vcombine.high %v7117, %v7117
    %v7121 = vunpack.c.l.s4 1966171168
    %v7122 = vunpack.c.0.s8 %v7121
    %v7123 = vlaneseq
    %v7124 = vshrl.u32 %v7123, 7
    %v7125 = vsub.s32 %v7122, %v7124
    %v7126 = vrot.slane %v7110, %v7125
    %v7128 = vunpack.c.l.s4 1966171168
    %v7129 = vunpack.c.0.s8 %v7128
    %v7130 = vlaneseq
    %v7131 = vshrl.u32 %v7130, 7
    %v7132 = vsub.s32 %v7129, %v7131
    %v7133 = vrot.slane %v7117, %v7132
    %v7135 = vunpack.c.l.s4 1966171168
    %v7136 = vunpack.c.0.s8 %v7135
    %v7137 = vlaneseq
    %v7138 = vshrl.u32 %v7137, 7
    %v7139 = vsub.s32 %v7136, %v7138
    %v7140 = vrot.slane %v7118, %v7139
    %v7142 = vunpack.c.l.s4 1966171168
    %v7143 = vunpack.c.0.s8 %v7142
    %v7144 = vlaneseq
    %v7145 = vshrl.u32 %v7144, 7
    %v7146 = vsub.s32 %v7143, %v7145
    %v7147 = vrot.slane %v7119, %v7146
    %v7148 = vcombine.high %v7126, %v7126
    %v7149 = vcombine.high %v7133, %v7133
    %v7150 = vcombine.high %v7140, %v7140
    %v7151 = vcombine.high %v7147, %v7147
    %v7152 = vlaneseq
    %v7153 = vshrl.u32 %v7152, 7
    %v7154 = vsub.s32 0, %v7153
    %v7155 = vrot.slane %v7126, %v7154
    %v7156 = vlaneseq
    %v7157 = vshrl.u32 %v7156, 7
    %v7158 = vsub.s32 0, %v7157
    %v7159 = vrot.slane %v7140, %v7158
    %v7160 = vlaneseq
    %v7161 = vshrl.u32 %v7160, 7
    %v7162 = vsub.s32 0, %v7161
    %v7163 = vrot.slane %v7148, %v7162
    %v7164 = vlaneseq
    %v7165 = vshrl.u32 %v7164, 7
    %v7166 = vsub.s32 0, %v7165
    %v7167 = vrot.slane %v7150, %v7166
    %v7168 = vlaneseq
    %v7169 = vshrl.u32 %v7168, 7
    %v7170 = vsub.s32 0, %v7169
    %v7171 = vrot.slane %v7133, %v7170
    %v7172 = vlaneseq
    %v7173 = vshrl.u32 %v7172, 7
    %v7174 = vsub.s32 0, %v7173
    %v7175 = vrot.slane %v7147, %v7174
    %v7176 = vlaneseq
    %v7177 = vshrl.u32 %v7176, 7
    %v7178 = vsub.s32 0, %v7177
    %v7179 = vrot.slane %v7149, %v7178
    %v7180 = vlaneseq
    %v7181 = vshrl.u32 %v7180, 7
    %v7182 = vsub.s32 0, %v7181
    %v7183 = vrot.slane %v7151, %v7182
    %v7192 = vmul.f32 %v7155, %v7096
    %v7193 = vmul.f32 %v7159, %v7096
    %v7194 = vmul.f32 %v7163, %v7096
    %v7195 = vmul.f32 %v7167, %v7096
    %v7196 = vmul.f32 %v7171, %v7096
    %v7197 = vmul.f32 %v7175, %v7096
    %v7198 = vmul.f32 %v7179, %v7096
    %v7199 = vmul.f32 %v7183, %v7096
    %v7201 = vcombine.high %v7037, %v7037
    %v7203 = vunpack.c.l.s4 1966171168
    %v7204 = vunpack.c.0.s8 %v7203
    %v7205 = vlaneseq
    %v7206 = vshrl.u32 %v7205, 7
    %v7207 = vsub.s32 %v7204, %v7206
    %v7208 = vrot.slane %v7037, %v7207
    %v7210 = vunpack.c.l.s4 1966171168
    %v7211 = vunpack.c.0.s8 %v7210
    %v7212 = vlaneseq
    %v7213 = vshrl.u32 %v7212, 7
    %v7214 = vsub.s32 %v7211, %v7213
    %v7215 = vrot.slane %v7201, %v7214
    %v7216 = vcombine.high %v7208, %v7208
    %v7217 = vcombine.high %v7215, %v7215
    %v7219 = vunpack.c.l.s4 1966171168
    %v7220 = vunpack.c.0.s8 %v7219
    %v7221 = vlaneseq
    %v7222 = vshrl.u32 %v7221, 7
    %v7223 = vsub.s32 %v7220, %v7222
    %v7224 = vrot.slane %v7208, %v7223
    %v7226 = vunpack.c.l.s4 1966171168
    %v7227 = vunpack.c.0.s8 %v7226
    %v7228 = vlaneseq
    %v7229 = vshrl.u32 %v7228, 7
    %v7230 = vsub.s32 %v7227, %v7229
    %v7231 = vrot.slane %v7215, %v7230
    %v7233 = vunpack.c.l.s4 1966171168
    %v7234 = vunpack.c.0.s8 %v7233
    %v7235 = vlaneseq
    %v7236 = vshrl.u32 %v7235, 7
    %v7237 = vsub.s32 %v7234, %v7236
    %v7238 = vrot.slane %v7216, %v7237
    %v7240 = vunpack.c.l.s4 1966171168
    %v7241 = vunpack.c.0.s8 %v7240
    %v7242 = vlaneseq
    %v7243 = vshrl.u32 %v7242, 7
    %v7244 = vsub.s32 %v7241, %v7243
    %v7245 = vrot.slane %v7217, %v7244
    %v7246 = vcombine.high %v7224, %v7224
    %v7247 = vcombine.high %v7231, %v7231
    %v7248 = vcombine.high %v7238, %v7238
    %v7249 = vcombine.high %v7245, %v7245
    %v7250 = vlaneseq
    %v7251 = vshrl.u32 %v7250, 7
    %v7252 = vsub.s32 0, %v7251
    %v7253 = vrot.slane %v7224, %v7252
    %v7254 = vlaneseq
    %v7255 = vshrl.u32 %v7254, 7
    %v7256 = vsub.s32 0, %v7255
    %v7257 = vrot.slane %v7238, %v7256
    %v7258 = vlaneseq
    %v7259 = vshrl.u32 %v7258, 7
    %v7260 = vsub.s32 0, %v7259
    %v7261 = vrot.slane %v7246, %v7260
    %v7262 = vlaneseq
    %v7263 = vshrl.u32 %v7262, 7
    %v7264 = vsub.s32 0, %v7263
    %v7265 = vrot.slane %v7248, %v7264
    %v7266 = vlaneseq
    %v7267 = vshrl.u32 %v7266, 7
    %v7268 = vsub.s32 0, %v7267
    %v7269 = vrot.slane %v7231, %v7268
    %v7270 = vlaneseq
    %v7271 = vshrl.u32 %v7270, 7
    %v7272 = vsub.s32 0, %v7271
    %v7273 = vrot.slane %v7245, %v7272
    %v7274 = vlaneseq
    %v7275 = vshrl.u32 %v7274, 7
    %v7276 = vsub.s32 0, %v7275
    %v7277 = vrot.slane %v7247, %v7276
    %v7278 = vlaneseq
    %v7279 = vshrl.u32 %v7278, 7
    %v7280 = vsub.s32 0, %v7279
    %v7281 = vrot.slane %v7249, %v7280
    %v7290 = vmul.f32 %v7253, %v7099
    %v7291 = vmul.f32 %v7257, %v7099
    %v7292 = vmul.f32 %v7261, %v7099
    %v7293 = vmul.f32 %v7265, %v7099
    %v7294 = vmul.f32 %v7269, %v7099
    %v7295 = vmul.f32 %v7273, %v7099
    %v7296 = vmul.f32 %v7277, %v7099
    %v7297 = vmul.f32 %v7281, %v7099
    %v7298 = vpack.c.bf16 %v7193, %v7192
    %v7299 = vpack.c.bf16 %v7195, %v7194
    %v7300 = vpack.c.bf16 %v7197, %v7196
    %v7301 = vpack.c.bf16 %v7199, %v7198
    %v7302 = vpack.c.bf16 %v7291, %v7290
    %v7303 = vpack.c.bf16 %v7293, %v7292
    %v7304 = vpack.c.bf16 %v7295, %v7294
    %v7305 = vpack.c.bf16 %v7297, %v7296
    %s7306 = scalar_lea.vmem %s12, 8
    %v7307 = vld [vmem:[%s7306] sm:$0xf]
    %v7308 = vld [vmem:[%s7306 + $0x4] sm:$0xf]
    %v7309 = vlaneseq
    %v7310 = vshrl.u32 %v7309, 7
    %v7311 = vsub.s32 4, %v7310
    %v7312 = vrot.slane %v4098, %v7311
    %v7315 = vunpack.c.l.b16 %v7307
    %v7316 = vunpack.c.l.b16 %v7308
    %v7317 = vpack.c.b16 %v7316, %v7315
    %v7320 = vsel %vm193, %v7298, 0
    %v7323 = vsel %vm193, %v7299, 0
    %v7326 = vsel %vm193, %v7300, 0
    %v7329 = vsel %vm193, %v7301, 0
    %v7332 = vsel %vm193, %v7302, 0
    %v7335 = vsel %vm193, %v7303, 0
    %v7338 = vsel %vm193, %v7304, 0
    %v7341 = vsel %vm193, %v7305, 0
    %7343 = vmatprep.subr.bf16.mxu0 0
    %7344 = vmatpush1.bf16.msra.mxu0 %v7317
    %7345 = vmatprep.subr.bf16.mxu0 0
    %7346 = vmatpush1.bf16.msra.mxu0 0
    %7347 = vmatprep.subr.bf16.mxu0 0
    %7348 = vmatpush1.bf16.msra.mxu0 0
    %7349 = vmatprep.subr.bf16.mxu0 0
    %7350 = vmatpush1.bf16.msra.mxu0 0
    %7351 = vmatprep.subr.bf16.mxu0 0
    %7352 = vmatpush1.bf16.msra.mxu0 0
    %7353 = vmatprep.subr.bf16.mxu0 0
    %7354 = vmatpush1.bf16.msra.mxu0 0
    %7355 = vmatprep.subr.bf16.mxu0 0
    %7356 = vmatpush1.bf16.msra.mxu0 0
    %7357 = vmatprep.subr.bf16.mxu0 0
    %7358 = vmatpush1.bf16.msra.mxu0 0
    %7359 = vmatprep.subr.bf16.mxu0 0
    %7360 = vmatpush1.bf16.msra.mxu0 0
    %7361 = vmatprep.subr.bf16.mxu0 0
    %7362 = vmatpush1.bf16.msra.mxu0 0
    %7363 = vmatprep.subr.bf16.mxu0 0
    %7364 = vmatpush1.bf16.msra.mxu0 0
    %7365 = vmatprep.subr.bf16.mxu0 0
    %7366 = vmatpush1.bf16.msra.mxu0 0
    %7367 = vmatprep.subr.bf16.mxu0 0
    %7368 = vmatpush1.bf16.msra.mxu0 0
    %7369 = vmatprep.subr.bf16.mxu0 0
    %7370 = vmatpush1.bf16.msra.mxu0 0
    %7371 = vmatprep.subr.bf16.mxu0 0
    %7372 = vmatpush1.bf16.msra.mxu0 0
    %7373 = vmatprep.subr.bf16.mxu0 0
    %7374 = vmatpush1.bf16.msra.mxu0 0
    %7375 = vmatprep.mubr.bf16.mxu0 0
    %7376 = vmatmul.mubr.bf16.gmra.mrb[0].mxu0 %v7320
    %v7377 = vpop.f32.mrb[0].mxu0
    %v7378 = vadd.f32 %v7312, %v7377
    %v7379 = vpop.f32.mrb[0].mxu0
    %v7380 = vpop.f32.mrb[0].mxu0
    %v7381 = vadd.f32 %v7312, %v7380
    %v7382 = vpop.f32.mrb[0].mxu0
    %7383 = vmatprep.mubr.bf16.mxu0 0
    %7384 = vmatmul.mubr.bf16.gmra.mrb[0].mxu0 %v7323
    %v7385 = vpop.f32.mrb[0].mxu0
    %v7386 = vadd.f32 %v7312, %v7385
    %v7387 = vpop.f32.mrb[0].mxu0
    %v7388 = vpop.f32.mrb[0].mxu0
    %v7389 = vadd.f32 %v7312, %v7388
    %v7390 = vpop.f32.mrb[0].mxu0
    %7391 = vmatprep.mubr.bf16.mxu0 0
    %7392 = vmatmul.mubr.bf16.gmra.mrb[0].mxu0 %v7326
    %v7393 = vpop.f32.mrb[0].mxu0
    %v7394 = vadd.f32 %v7312, %v7393
    %v7395 = vpop.f32.mrb[0].mxu0
    %v7396 = vpop.f32.mrb[0].mxu0
    %v7397 = vadd.f32 %v7312, %v7396
    %v7398 = vpop.f32.mrb[0].mxu0
    %7399 = vmatprep.mubr.bf16.mxu0 0
    %7400 = vmatmul.mubr.bf16.gmra.mrb[0].mxu0 %v7329
    %v7401 = vpop.f32.mrb[0].mxu0
    %v7402 = vadd.f32 %v7312, %v7401
    %v7403 = vpop.f32.mrb[0].mxu0
    %v7404 = vpop.f32.mrb[0].mxu0
    %v7405 = vadd.f32 %v7312, %v7404
    %v7406 = vpop.f32.mrb[0].mxu0
    %7407 = vmatprep.mubr.bf16.mxu0 0
    %7408 = vmatmul.mubr.bf16.gmra.mrb[0].mxu0 %v7332
    %v7409 = vpop.f32.mrb[0].mxu0
    %v7410 = vadd.f32 %v7312, %v7409
    %v7411 = vpop.f32.mrb[0].mxu0
    %v7412 = vpop.f32.mrb[0].mxu0
    %v7413 = vadd.f32 %v7312, %v7412
    %v7414 = vpop.f32.mrb[0].mxu0
    %7415 = vmatprep.mubr.bf16.mxu0 0
    %7416 = vmatmul.mubr.bf16.gmra.mrb[0].mxu0 %v7335
    %v7417 = vpop.f32.mrb[0].mxu0
    %v7418 = vadd.f32 %v7312, %v7417
    %v7419 = vpop.f32.mrb[0].mxu0
    %v7420 = vpop.f32.mrb[0].mxu0
    %v7421 = vadd.f32 %v7312, %v7420
    %v7422 = vpop.f32.mrb[0].mxu0
    %7423 = vmatprep.mubr.bf16.mxu0 0
    %7424 = vmatmul.mubr.bf16.gmra.mrb[0].mxu0 %v7338
    %v7425 = vpop.f32.mrb[0].mxu0
    %v7426 = vadd.f32 %v7312, %v7425
    %v7427 = vpop.f32.mrb[0].mxu0
    %v7428 = vpop.f32.mrb[0].mxu0
    %v7429 = vadd.f32 %v7312, %v7428
    %v7430 = vpop.f32.mrb[0].mxu0
    %7431 = vmatprep.mubr.bf16.mxu0 0
    %7432 = vmatmul.mubr.bf16.gmra.mrb[0].mxu0 %v7341
    %v7433 = vpop.f32.mrb[0].mxu0
    %v7434 = vadd.f32 %v7312, %v7433
    %v7435 = vpop.f32.mrb[0].mxu0
    %v7436 = vpop.f32.mrb[0].mxu0
    %v7437 = vadd.f32 %v7312, %v7436
    %v7438 = vpop.f32.mrb[0].mxu0
    %7439 = vdwg.mxu0
    %v7440 = vmul.f32 %v7378, %v78
    %v7441 = vmul.f32 %v7381, %v79
    %v7442 = vmul.f32 %v7386, %v80
    %v7443 = vmul.f32 %v7389, %v81
    %v7444 = vmul.f32 %v7394, %v82
    %v7445 = vmul.f32 %v7397, %v83
    %v7446 = vmul.f32 %v7402, %v84
    %v7447 = vmul.f32 %v7405, %v85
    %v7448 = vmul.f32 %v7410, %v86
    %v7449 = vmul.f32 %v7413, %v87
    %v7450 = vmul.f32 %v7418, %v88
    %v7451 = vmul.f32 %v7421, %v89
    %v7452 = vmul.f32 %v7426, %v90
    %v7453 = vmul.f32 %v7429, %v91
    %v7454 = vmul.f32 %v7434, %v92
    %v7455 = vmul.f32 %v7437, %v93
    %v7456 = vadd.f32 %v4078, %v7440
    %v7457 = vadd.f32 %v4079, %v7441
    %v7458 = vadd.f32 %v4080, %v7442
    %v7459 = vadd.f32 %v4081, %v7443
    %v7460 = vadd.f32 %v4082, %v7444
    %v7461 = vadd.f32 %v4083, %v7445
    %v7462 = vadd.f32 %v4084, %v7446
    %v7463 = vadd.f32 %v4085, %v7447
    %v7464 = vadd.f32 %v4086, %v7448
    %v7465 = vadd.f32 %v4087, %v7449
    %v7466 = vadd.f32 %v4088, %v7450
    %v7467 = vadd.f32 %v4089, %v7451
    %v7468 = vadd.f32 %v4090, %v7452
    %v7469 = vadd.f32 %v4091, %v7453
    %v7470 = vadd.f32 %v4092, %v7454
    %v7471 = vadd.f32 %v4093, %v7455
    %v7472 = vsel %vm193, %v7456, 0.0
    %7473 = vadd.xlane.f32.xlu0 %v7472
    %v7474 = vpop.xlane.xlu0 %7473
    %v7475 = vsel %vm193, %v7457, 0.0
    %7476 = vadd.xlane.f32.xlu0 %v7475
    %v7477 = vpop.xlane.xlu0 %7476
    %v7478 = vsel %vm193, %v7458, 0.0
    %7479 = vadd.xlane.f32.xlu0 %v7478
    %v7480 = vpop.xlane.xlu0 %7479
    %v7481 = vsel %vm193, %v7459, 0.0
    %7482 = vadd.xlane.f32.xlu0 %v7481
    %v7483 = vpop.xlane.xlu0 %7482
    %v7484 = vsel %vm193, %v7460, 0.0
    %7485 = vadd.xlane.f32.xlu0 %v7484
    %v7486 = vpop.xlane.xlu0 %7485
    %v7487 = vsel %vm193, %v7461, 0.0
    %7488 = vadd.xlane.f32.xlu0 %v7487
    %v7489 = vpop.xlane.xlu0 %7488
    %v7490 = vsel %vm193, %v7462, 0.0
    %7491 = vadd.xlane.f32.xlu0 %v7490
    %v7492 = vpop.xlane.xlu0 %7491
    %v7493 = vsel %vm193, %v7463, 0.0
    %7494 = vadd.xlane.f32.xlu0 %v7493
    %v7495 = vpop.xlane.xlu0 %7494
    %v7496 = vsel %vm193, %v7464, 0.0
    %7497 = vadd.xlane.f32.xlu0 %v7496
    %v7498 = vpop.xlane.xlu0 %7497
    %v7499 = vsel %vm193, %v7465, 0.0
    %7500 = vadd.xlane.f32.xlu0 %v7499
    %v7501 = vpop.xlane.xlu0 %7500
    %v7502 = vsel %vm193, %v7466, 0.0
    %7503 = vadd.xlane.f32.xlu0 %v7502
    %v7504 = vpop.xlane.xlu0 %7503
    %v7505 = vsel %vm193, %v7467, 0.0
    %7506 = vadd.xlane.f32.xlu0 %v7505
    %v7507 = vpop.xlane.xlu0 %7506
    %v7508 = vsel %vm193, %v7468, 0.0
    %7509 = vadd.xlane.f32.xlu0 %v7508
    %v7510 = vpop.xlane.xlu0 %7509
    %v7511 = vsel %vm193, %v7469, 0.0
    %7512 = vadd.xlane.f32.xlu0 %v7511
    %v7513 = vpop.xlane.xlu0 %7512
    %v7514 = vsel %vm193, %v7470, 0.0
    %7515 = vadd.xlane.f32.xlu0 %v7514
    %v7516 = vpop.xlane.xlu0 %7515
    %v7517 = vsel %vm193, %v7471, 0.0
    %7518 = vadd.xlane.f32.xlu0 %v7517
    %v7519 = vpop.xlane.xlu0 %7518
    %v7520 = vmul.f32 %v7474, %v242
    %v7521 = vmul.f32 %v7477, %v242
    %v7522 = vmul.f32 %v7480, %v242
    %v7523 = vmul.f32 %v7483, %v242
    %v7524 = vmul.f32 %v7486, %v242
    %v7525 = vmul.f32 %v7489, %v242
    %v7526 = vmul.f32 %v7492, %v242
    %v7527 = vmul.f32 %v7495, %v242
    %v7528 = vmul.f32 %v7498, %v242
    %v7529 = vmul.f32 %v7501, %v242
    %v7530 = vmul.f32 %v7504, %v242
    %v7531 = vmul.f32 %v7507, %v242
    %v7532 = vmul.f32 %v7510, %v242
    %v7533 = vmul.f32 %v7513, %v242
    %v7534 = vmul.f32 %v7516, %v242
    %v7535 = vmul.f32 %v7519, %v242
    %v7536 = vsub.f32 %v7456, %v7520
    %v7537 = vsub.f32 %v7457, %v7521
    %v7538 = vsub.f32 %v7458, %v7522
    %v7539 = vsub.f32 %v7459, %v7523
    %v7540 = vsub.f32 %v7460, %v7524
    %v7541 = vsub.f32 %v7461, %v7525
    %v7542 = vsub.f32 %v7462, %v7526
    %v7543 = vsub.f32 %v7463, %v7527
    %v7544 = vsub.f32 %v7464, %v7528
    %v7545 = vsub.f32 %v7465, %v7529
    %v7546 = vsub.f32 %v7466, %v7530
    %v7547 = vsub.f32 %v7467, %v7531
    %v7548 = vsub.f32 %v7468, %v7532
    %v7549 = vsub.f32 %v7469, %v7533
    %v7550 = vsub.f32 %v7470, %v7534
    %v7551 = vsub.f32 %v7471, %v7535
    %v7552 = vmul.f32 %v7536, %v7536
    %v7553 = vmul.f32 %v7537, %v7537
    %v7554 = vmul.f32 %v7538, %v7538
    %v7555 = vmul.f32 %v7539, %v7539
    %v7556 = vmul.f32 %v7540, %v7540
    %v7557 = vmul.f32 %v7541, %v7541
    %v7558 = vmul.f32 %v7542, %v7542
    %v7559 = vmul.f32 %v7543, %v7543
    %v7560 = vmul.f32 %v7544, %v7544
    %v7561 = vmul.f32 %v7545, %v7545
    %v7562 = vmul.f32 %v7546, %v7546
    %v7563 = vmul.f32 %v7547, %v7547
    %v7564 = vmul.f32 %v7548, %v7548
    %v7565 = vmul.f32 %v7549, %v7549
    %v7566 = vmul.f32 %v7550, %v7550
    %v7567 = vmul.f32 %v7551, %v7551
    %v7568 = vsel %vm193, %v7552, 0.0
    %7569 = vadd.xlane.f32.xlu0 %v7568
    %v7570 = vpop.xlane.xlu0 %7569
    %v7571 = vsel %vm193, %v7553, 0.0
    %7572 = vadd.xlane.f32.xlu0 %v7571
    %v7573 = vpop.xlane.xlu0 %7572
    %v7574 = vsel %vm193, %v7554, 0.0
    %7575 = vadd.xlane.f32.xlu0 %v7574
    %v7576 = vpop.xlane.xlu0 %7575
    %v7577 = vsel %vm193, %v7555, 0.0
    %7578 = vadd.xlane.f32.xlu0 %v7577
    %v7579 = vpop.xlane.xlu0 %7578
    %v7580 = vsel %vm193, %v7556, 0.0
    %7581 = vadd.xlane.f32.xlu0 %v7580
    %v7582 = vpop.xlane.xlu0 %7581
    %v7583 = vsel %vm193, %v7557, 0.0
    %7584 = vadd.xlane.f32.xlu0 %v7583
    %v7585 = vpop.xlane.xlu0 %7584
    %v7586 = vsel %vm193, %v7558, 0.0
    %7587 = vadd.xlane.f32.xlu0 %v7586
    %v7588 = vpop.xlane.xlu0 %7587
    %v7589 = vsel %vm193, %v7559, 0.0
    %7590 = vadd.xlane.f32.xlu0 %v7589
    %v7591 = vpop.xlane.xlu0 %7590
    %v7592 = vsel %vm193, %v7560, 0.0
    %7593 = vadd.xlane.f32.xlu0 %v7592
    %v7594 = vpop.xlane.xlu0 %7593
    %v7595 = vsel %vm193, %v7561, 0.0
    %7596 = vadd.xlane.f32.xlu0 %v7595
    %v7597 = vpop.xlane.xlu0 %7596
    %v7598 = vsel %vm193, %v7562, 0.0
    %7599 = vadd.xlane.f32.xlu0 %v7598
    %v7600 = vpop.xlane.xlu0 %7599
    %v7601 = vsel %vm193, %v7563, 0.0
    %7602 = vadd.xlane.f32.xlu0 %v7601
    %v7603 = vpop.xlane.xlu0 %7602
    %v7604 = vsel %vm193, %v7564, 0.0
    %7605 = vadd.xlane.f32.xlu0 %v7604
    %v7606 = vpop.xlane.xlu0 %7605
    %v7607 = vsel %vm193, %v7565, 0.0
    %7608 = vadd.xlane.f32.xlu0 %v7607
    %v7609 = vpop.xlane.xlu0 %7608
    %v7610 = vsel %vm193, %v7566, 0.0
    %7611 = vadd.xlane.f32.xlu0 %v7610
    %v7612 = vpop.xlane.xlu0 %7611
    %v7613 = vsel %vm193, %v7567, 0.0
    %7614 = vadd.xlane.f32.xlu0 %v7613
    %v7615 = vpop.xlane.xlu0 %7614
    %v7616 = vmul.f32 %v7570, %v242
    %v7617 = vmul.f32 %v7573, %v242
    %v7618 = vmul.f32 %v7576, %v242
    %v7619 = vmul.f32 %v7579, %v242
    %v7620 = vmul.f32 %v7582, %v242
    %v7621 = vmul.f32 %v7585, %v242
    %v7622 = vmul.f32 %v7588, %v242
    %v7623 = vmul.f32 %v7591, %v242
    %v7624 = vmul.f32 %v7594, %v242
    %v7625 = vmul.f32 %v7597, %v242
    %v7626 = vmul.f32 %v7600, %v242
    %v7627 = vmul.f32 %v7603, %v242
    %v7628 = vmul.f32 %v7606, %v242
    %v7629 = vmul.f32 %v7609, %v242
    %v7630 = vmul.f32 %v7612, %v242
    %v7631 = vmul.f32 %v7615, %v242
    %v7632 = vadd.f32 %v7616, 1e-05
    %v7633 = vadd.f32 %v7617, 1e-05
    %v7634 = vadd.f32 %v7618, 1e-05
    %v7635 = vadd.f32 %v7619, 1e-05
    %v7636 = vadd.f32 %v7620, 1e-05
    %v7637 = vadd.f32 %v7621, 1e-05
    %v7638 = vadd.f32 %v7622, 1e-05
    %v7639 = vadd.f32 %v7623, 1e-05
    %v7640 = vadd.f32 %v7624, 1e-05
    %v7641 = vadd.f32 %v7625, 1e-05
    %v7642 = vadd.f32 %v7626, 1e-05
    %v7643 = vadd.f32 %v7627, 1e-05
    %v7644 = vadd.f32 %v7628, 1e-05
    %v7645 = vadd.f32 %v7629, 1e-05
    %v7646 = vadd.f32 %v7630, 1e-05
    %v7647 = vadd.f32 %v7631, 1e-05
    %v7648 = vrsqrt.pop %v7632
    %v7649 = vrsqrt.pop %v7633
    %v7650 = vrsqrt.pop %v7634
    %v7651 = vrsqrt.pop %v7635
    %v7652 = vrsqrt.pop %v7636
    %v7653 = vrsqrt.pop %v7637
    %v7654 = vrsqrt.pop %v7638
    %v7655 = vrsqrt.pop %v7639
    %v7656 = vrsqrt.pop %v7640
    %v7657 = vrsqrt.pop %v7641
    %v7658 = vrsqrt.pop %v7642
    %v7659 = vrsqrt.pop %v7643
    %v7660 = vrsqrt.pop %v7644
    %v7661 = vrsqrt.pop %v7645
    %v7662 = vrsqrt.pop %v7646
    %v7663 = vrsqrt.pop %v7647
    %v7664 = vmul.f32 %v7536, %v7648
    %v7665 = vmul.f32 %v7537, %v7649
    %v7666 = vmul.f32 %v7538, %v7650
    %v7667 = vmul.f32 %v7539, %v7651
    %v7668 = vmul.f32 %v7540, %v7652
    %v7669 = vmul.f32 %v7541, %v7653
    %v7670 = vmul.f32 %v7542, %v7654
    %v7671 = vmul.f32 %v7543, %v7655
    %v7672 = vmul.f32 %v7544, %v7656
    %v7673 = vmul.f32 %v7545, %v7657
    %v7674 = vmul.f32 %v7546, %v7658
    %v7675 = vmul.f32 %v7547, %v7659
    %v7676 = vmul.f32 %v7548, %v7660
    %v7677 = vmul.f32 %v7549, %v7661
    %v7678 = vmul.f32 %v7550, %v7662
    %v7679 = vmul.f32 %v7551, %v7663
    %v7680 = vlaneseq
    %v7681 = vshrl.u32 %v7680, 7
    %v7682 = vsub.s32 5, %v7681
    %v7683 = vrot.slane %v4098, %v7682
    %v7684 = vmul.f32 %v7664, %v7683
    %v7685 = vmul.f32 %v7665, %v7683
    %v7686 = vmul.f32 %v7666, %v7683
    %v7687 = vmul.f32 %v7667, %v7683
    %v7688 = vmul.f32 %v7668, %v7683
    %v7689 = vmul.f32 %v7669, %v7683
    %v7690 = vmul.f32 %v7670, %v7683
    %v7691 = vmul.f32 %v7671, %v7683
    %v7692 = vmul.f32 %v7672, %v7683
    %v7693 = vmul.f32 %v7673, %v7683
    %v7694 = vmul.f32 %v7674, %v7683
    %v7695 = vmul.f32 %v7675, %v7683
    %v7696 = vmul.f32 %v7676, %v7683
    %v7697 = vmul.f32 %v7677, %v7683
    %v7698 = vmul.f32 %v7678, %v7683
    %v7699 = vmul.f32 %v7679, %v7683
    %v7700 = vlaneseq
    %v7701 = vshrl.u32 %v7700, 7
    %v7702 = vsub.s32 6, %v7701
    %v7703 = vrot.slane %v4098, %v7702
    %v7704 = vadd.f32 %v7684, %v7703
    %v7705 = vadd.f32 %v7685, %v7703
    %v7706 = vadd.f32 %v7686, %v7703
    %v7707 = vadd.f32 %v7687, %v7703
    %v7708 = vadd.f32 %v7688, %v7703
    %v7709 = vadd.f32 %v7689, %v7703
    %v7710 = vadd.f32 %v7690, %v7703
    %v7711 = vadd.f32 %v7691, %v7703
    %v7712 = vadd.f32 %v7692, %v7703
    %v7713 = vadd.f32 %v7693, %v7703
    %v7714 = vadd.f32 %v7694, %v7703
    %v7715 = vadd.f32 %v7695, %v7703
    %v7716 = vadd.f32 %v7696, %v7703
    %v7717 = vadd.f32 %v7697, %v7703
    %v7718 = vadd.f32 %v7698, %v7703
    %v7719 = vadd.f32 %v7699, %v7703
    %v7720 = vpack.c.bf16 %v7705, %v7704
    %v7721 = vpack.c.bf16 %v7707, %v7706
    %v7722 = vpack.c.bf16 %v7709, %v7708
    %v7723 = vpack.c.bf16 %v7711, %v7710
    %v7724 = vpack.c.bf16 %v7713, %v7712
    %v7725 = vpack.c.bf16 %v7715, %v7714
    %v7726 = vpack.c.bf16 %v7717, %v7716
    %v7727 = vpack.c.bf16 %v7719, %v7718
    %s7728 = scalar_lea.vmem %s13, 8
    %v7729 = vld [vmem:[%s7728] sm:$0xf]
    %v7730 = vld [vmem:[%s7728 + $0x4] sm:$0xf]
    %v7731 = vlaneseq
    %v7732 = vshrl.u32 %v7731, 7
    %v7733 = vsub.s32 7, %v7732
    %v7734 = vrot.slane %v4098, %v7733
    %v7737 = vunpack.c.l.b16 %v7729
    %v7738 = vunpack.c.l.b16 %v7730
    %v7739 = vpack.c.b16 %v7738, %v7737
    %v7742 = vsel %vm193, %v7720, 0
    %v7745 = vsel %vm193, %v7721, 0
    %v7748 = vsel %vm193, %v7722, 0
    %v7751 = vsel %vm193, %v7723, 0
    %v7754 = vsel %vm193, %v7724, 0
    %v7757 = vsel %vm193, %v7725, 0
    %v7760 = vsel %vm193, %v7726, 0
    %v7763 = vsel %vm193, %v7727, 0
    %7765 = vmatprep.subr.bf16.mxu0 0
    %7766 = vmatpush1.bf16.msra.mxu0 %v7739
    %7767 = vmatprep.subr.bf16.mxu0 0
    %7768 = vmatpush1.bf16.msra.mxu0 0
    %7769 = vmatprep.subr.bf16.mxu0 0
    %7770 = vmatpush1.bf16.msra.mxu0 0
    %7771 = vmatprep.subr.bf16.mxu0 0
    %7772 = vmatpush1.bf16.msra.mxu0 0
    %7773 = vmatprep.subr.bf16.mxu0 0
    %7774 = vmatpush1.bf16.msra.mxu0 0
    %7775 = vmatprep.subr.bf16.mxu0 0
    %7776 = vmatpush1.bf16.msra.mxu0 0
    %7777 = vmatprep.subr.bf16.mxu0 0
    %7778 = vmatpush1.bf16.msra.mxu0 0
    %7779 = vmatprep.subr.bf16.mxu0 0
    %7780 = vmatpush1.bf16.msra.mxu0 0
    %7781 = vmatprep.subr.bf16.mxu0 0
    %7782 = vmatpush1.bf16.msra.mxu0 0
    %7783 = vmatprep.subr.bf16.mxu0 0
    %7784 = vmatpush1.bf16.msra.mxu0 0
    %7785 = vmatprep.subr.bf16.mxu0 0
    %7786 = vmatpush1.bf16.msra.mxu0 0
    %7787 = vmatprep.subr.bf16.mxu0 0
    %7788 = vmatpush1.bf16.msra.mxu0 0
    %7789 = vmatprep.subr.bf16.mxu0 0
    %7790 = vmatpush1.bf16.msra.mxu0 0
    %7791 = vmatprep.subr.bf16.mxu0 0
    %7792 = vmatpush1.bf16.msra.mxu0 0
    %7793 = vmatprep.subr.bf16.mxu0 0
    %7794 = vmatpush1.bf16.msra.mxu0 0
    %7795 = vmatprep.subr.bf16.mxu0 0
    %7796 = vmatpush1.bf16.msra.mxu0 0
    %7797 = vmatprep.mubr.bf16.mxu0 0
    %7798 = vmatmul.mubr.bf16.gmra.mrb[0].mxu0 %v7742
    %v7799 = vpop.f32.mrb[0].mxu0
    %v7800 = vadd.f32 %v7734, %v7799
    %v7801 = vpop.f32.mrb[0].mxu0
    %v7802 = vpop.f32.mrb[0].mxu0
    %v7803 = vadd.f32 %v7734, %v7802
    %v7804 = vpop.f32.mrb[0].mxu0
    %7805 = vmatprep.mubr.bf16.mxu0 0
    %7806 = vmatmul.mubr.bf16.gmra.mrb[0].mxu0 %v7745
    %v7807 = vpop.f32.mrb[0].mxu0
    %v7808 = vadd.f32 %v7734, %v7807
    %v7809 = vpop.f32.mrb[0].mxu0
    %v7810 = vpop.f32.mrb[0].mxu0
    %v7811 = vadd.f32 %v7734, %v7810
    %v7812 = vpop.f32.mrb[0].mxu0
    %7813 = vmatprep.mubr.bf16.mxu0 0
    %7814 = vmatmul.mubr.bf16.gmra.mrb[0].mxu0 %v7748
    %v7815 = vpop.f32.mrb[0].mxu0
    %v7816 = vadd.f32 %v7734, %v7815
    %v7817 = vpop.f32.mrb[0].mxu0
    %v7818 = vpop.f32.mrb[0].mxu0
    %v7819 = vadd.f32 %v7734, %v7818
    %v7820 = vpop.f32.mrb[0].mxu0
    %7821 = vmatprep.mubr.bf16.mxu0 0
    %7822 = vmatmul.mubr.bf16.gmra.mrb[0].mxu0 %v7751
    %v7823 = vpop.f32.mrb[0].mxu0
    %v7824 = vadd.f32 %v7734, %v7823
    %v7825 = vpop.f32.mrb[0].mxu0
    %v7826 = vpop.f32.mrb[0].mxu0
    %v7827 = vadd.f32 %v7734, %v7826
    %v7828 = vpop.f32.mrb[0].mxu0
    %7829 = vmatprep.mubr.bf16.mxu0 0
    %7830 = vmatmul.mubr.bf16.gmra.mrb[0].mxu0 %v7754
    %v7831 = vpop.f32.mrb[0].mxu0
    %v7832 = vadd.f32 %v7734, %v7831
    %v7833 = vpop.f32.mrb[0].mxu0
    %v7834 = vpop.f32.mrb[0].mxu0
    %v7835 = vadd.f32 %v7734, %v7834
    %v7836 = vpop.f32.mrb[0].mxu0
    %7837 = vmatprep.mubr.bf16.mxu0 0
    %7838 = vmatmul.mubr.bf16.gmra.mrb[0].mxu0 %v7757
    %v7839 = vpop.f32.mrb[0].mxu0
    %v7840 = vadd.f32 %v7734, %v7839
    %v7841 = vpop.f32.mrb[0].mxu0
    %v7842 = vpop.f32.mrb[0].mxu0
    %v7843 = vadd.f32 %v7734, %v7842
    %v7844 = vpop.f32.mrb[0].mxu0
    %7845 = vmatprep.mubr.bf16.mxu0 0
    %7846 = vmatmul.mubr.bf16.gmra.mrb[0].mxu0 %v7760
    %v7847 = vpop.f32.mrb[0].mxu0
    %v7848 = vadd.f32 %v7734, %v7847
    %v7849 = vpop.f32.mrb[0].mxu0
    %v7850 = vpop.f32.mrb[0].mxu0
    %v7851 = vadd.f32 %v7734, %v7850
    %v7852 = vpop.f32.mrb[0].mxu0
    %7853 = vmatprep.mubr.bf16.mxu0 0
    %7854 = vmatmul.mubr.bf16.gmra.mrb[0].mxu0 %v7763
    %v7855 = vpop.f32.mrb[0].mxu0
    %v7856 = vadd.f32 %v7734, %v7855
    %v7857 = vpop.f32.mrb[0].mxu0
    %v7858 = vpop.f32.mrb[0].mxu0
    %v7859 = vadd.f32 %v7734, %v7858
    %v7860 = vpop.f32.mrb[0].mxu0
    %7861 = vdwg.mxu0
    %v7862 = vmax.f32 %v7800, 0.0
    %v7863 = vmax.f32 %v7803, 0.0
    %v7864 = vmax.f32 %v7808, 0.0
    %v7865 = vmax.f32 %v7811, 0.0
    %v7866 = vmax.f32 %v7816, 0.0
    %v7867 = vmax.f32 %v7819, 0.0
    %v7868 = vmax.f32 %v7824, 0.0
    %v7869 = vmax.f32 %v7827, 0.0
    %v7870 = vmax.f32 %v7832, 0.0
    %v7871 = vmax.f32 %v7835, 0.0
    %v7872 = vmax.f32 %v7840, 0.0
    %v7873 = vmax.f32 %v7843, 0.0
    %v7874 = vmax.f32 %v7848, 0.0
    %v7875 = vmax.f32 %v7851, 0.0
    %v7876 = vmax.f32 %v7856, 0.0
    %v7877 = vmax.f32 %v7859, 0.0
    %v7878 = vpack.c.bf16 %v7863, %v7862
    %v7879 = vpack.c.bf16 %v7865, %v7864
    %v7880 = vpack.c.bf16 %v7867, %v7866
    %v7881 = vpack.c.bf16 %v7869, %v7868
    %v7882 = vpack.c.bf16 %v7871, %v7870
    %v7883 = vpack.c.bf16 %v7873, %v7872
    %v7884 = vpack.c.bf16 %v7875, %v7874
    %v7885 = vpack.c.bf16 %v7877, %v7876
    %s7886 = scalar_lea.vmem %s14, 16
    %v7887 = vld [vmem:[%s7886] sm:$0xf]
    %v7888 = vld [vmem:[%s7886 + $0x4] sm:$0xf]
    %v7889 = vld [vmem:[%s7886 + $0x8] sm:$0xf]
    %v7890 = vld [vmem:[%s7886 + $0xc] sm:$0xf]
    %v7895 = vunpack.c.l.b16 %v7887
    %v7896 = vunpack.c.l.b16 %v7888
    %v7897 = vunpack.c.l.b16 %v7889
    %v7898 = vunpack.c.l.b16 %v7890
    %v7899 = vpack.c.b16 %v7896, %v7895
    %v7900 = vpack.c.b16 %v7898, %v7897
    %v7904 = vsel %vm152, %v7878, 0
    %v7907 = vsel %vm152, %v7879, 0
    %v7910 = vsel %vm152, %v7880, 0
    %v7913 = vsel %vm152, %v7881, 0
    %v7916 = vsel %vm152, %v7882, 0
    %v7919 = vsel %vm152, %v7883, 0
    %v7922 = vsel %vm152, %v7884, 0
    %v7925 = vsel %vm152, %v7885, 0
    %7927 = vmatprep.subr.bf16.mxu0 0
    %7928 = vmatpush1.bf16.msra.mxu0 %v7899
    %7929 = vmatprep.subr.bf16.mxu0 0
    %7930 = vmatpush1.bf16.msra.mxu0 %v7900
    %7931 = vmatprep.subr.bf16.mxu0 0
    %7932 = vmatpush1.bf16.msra.mxu0 0
    %7933 = vmatprep.subr.bf16.mxu0 0
    %7934 = vmatpush1.bf16.msra.mxu0 0
    %7935 = vmatprep.subr.bf16.mxu0 0
    %7936 = vmatpush1.bf16.msra.mxu0 0
    %7937 = vmatprep.subr.bf16.mxu0 0
    %7938 = vmatpush1.bf16.msra.mxu0 0
    %7939 = vmatprep.subr.bf16.mxu0 0
    %7940 = vmatpush1.bf16.msra.mxu0 0
    %7941 = vmatprep.subr.bf16.mxu0 0
    %7942 = vmatpush1.bf16.msra.mxu0 0
    %7943 = vmatprep.subr.bf16.mxu0 0
    %7944 = vmatpush1.bf16.msra.mxu0 0
    %7945 = vmatprep.subr.bf16.mxu0 0
    %7946 = vmatpush1.bf16.msra.mxu0 0
    %7947 = vmatprep.subr.bf16.mxu0 0
    %7948 = vmatpush1.bf16.msra.mxu0 0
    %7949 = vmatprep.subr.bf16.mxu0 0
    %7950 = vmatpush1.bf16.msra.mxu0 0
    %7951 = vmatprep.subr.bf16.mxu0 0
    %7952 = vmatpush1.bf16.msra.mxu0 0
    %7953 = vmatprep.subr.bf16.mxu0 0
    %7954 = vmatpush1.bf16.msra.mxu0 0
    %7955 = vmatprep.subr.bf16.mxu0 0
    %7956 = vmatpush1.bf16.msra.mxu0 0
    %7957 = vmatprep.subr.bf16.mxu0 0
    %7958 = vmatpush1.bf16.msra.mxu0 0
    %7959 = vmatprep.mubr.bf16.mxu0 0
    %7960 = vmatmul.mubr.bf16.gmra.mrb[0].mxu0 %v7904
    %v7961 = vpop.f32.mrb[0].mxu0
    %v7962 = vadd.f32 0.0, %v7961
    %v7963 = vpop.f32.mrb[0].mxu0
    %v7964 = vpop.f32.mrb[0].mxu0
    %v7965 = vadd.f32 0.0, %v7964
    %v7966 = vpop.f32.mrb[0].mxu0
    %7967 = vmatprep.mubr.bf16.mxu0 0
    %7968 = vmatmul.mubr.bf16.gmra.mrb[0].mxu0 %v7907
    %v7969 = vpop.f32.mrb[0].mxu0
    %v7970 = vadd.f32 0.0, %v7969
    %v7971 = vpop.f32.mrb[0].mxu0
    %v7972 = vpop.f32.mrb[0].mxu0
    %v7973 = vadd.f32 0.0, %v7972
    %v7974 = vpop.f32.mrb[0].mxu0
    %7975 = vmatprep.mubr.bf16.mxu0 0
    %7976 = vmatmul.mubr.bf16.gmra.mrb[0].mxu0 %v7910
    %v7977 = vpop.f32.mrb[0].mxu0
    %v7978 = vadd.f32 0.0, %v7977
    %v7979 = vpop.f32.mrb[0].mxu0
    %v7980 = vpop.f32.mrb[0].mxu0
    %v7981 = vadd.f32 0.0, %v7980
    %v7982 = vpop.f32.mrb[0].mxu0
    %7983 = vmatprep.mubr.bf16.mxu0 0
    %7984 = vmatmul.mubr.bf16.gmra.mrb[0].mxu0 %v7913
    %v7985 = vpop.f32.mrb[0].mxu0
    %v7986 = vadd.f32 0.0, %v7985
    %v7987 = vpop.f32.mrb[0].mxu0
    %v7988 = vpop.f32.mrb[0].mxu0
    %v7989 = vadd.f32 0.0, %v7988
    %v7990 = vpop.f32.mrb[0].mxu0
    %7991 = vmatprep.mubr.bf16.mxu0 0
    %7992 = vmatmul.mubr.bf16.gmra.mrb[0].mxu0 %v7916
    %v7993 = vpop.f32.mrb[0].mxu0
    %v7994 = vadd.f32 0.0, %v7993
    %v7995 = vpop.f32.mrb[0].mxu0
    %v7996 = vpop.f32.mrb[0].mxu0
    %v7997 = vadd.f32 0.0, %v7996
    %v7998 = vpop.f32.mrb[0].mxu0
    %7999 = vmatprep.mubr.bf16.mxu0 0
    %8000 = vmatmul.mubr.bf16.gmra.mrb[0].mxu0 %v7919
    %v8001 = vpop.f32.mrb[0].mxu0
    %v8002 = vadd.f32 0.0, %v8001
    %v8003 = vpop.f32.mrb[0].mxu0
    %v8004 = vpop.f32.mrb[0].mxu0
    %v8005 = vadd.f32 0.0, %v8004
    %v8006 = vpop.f32.mrb[0].mxu0
    %8007 = vmatprep.mubr.bf16.mxu0 0
    %8008 = vmatmul.mubr.bf16.gmra.mrb[0].mxu0 %v7922
    %v8009 = vpop.f32.mrb[0].mxu0
    %v8010 = vadd.f32 0.0, %v8009
    %v8011 = vpop.f32.mrb[0].mxu0
    %v8012 = vpop.f32.mrb[0].mxu0
    %v8013 = vadd.f32 0.0, %v8012
    %v8014 = vpop.f32.mrb[0].mxu0
    %8015 = vmatprep.mubr.bf16.mxu0 0
    %8016 = vmatmul.mubr.bf16.gmra.mrb[0].mxu0 %v7925
    %v8017 = vpop.f32.mrb[0].mxu0
    %v8018 = vadd.f32 0.0, %v8017
    %v8019 = vpop.f32.mrb[0].mxu0
    %v8020 = vpop.f32.mrb[0].mxu0
    %v8021 = vadd.f32 0.0, %v8020
    %v8022 = vpop.f32.mrb[0].mxu0
    %8023 = vdwg.mxu0
    %v8024 = vadd.f32 %v7456, %v7962
    %v8025 = vadd.f32 %v7457, %v7965
    %v8026 = vadd.f32 %v7458, %v7970
    %v8027 = vadd.f32 %v7459, %v7973
    %v8028 = vadd.f32 %v7460, %v7978
    %v8029 = vadd.f32 %v7461, %v7981
    %v8030 = vadd.f32 %v7462, %v7986
    %v8031 = vadd.f32 %v7463, %v7989
    %v8032 = vadd.f32 %v7464, %v7994
    %v8033 = vadd.f32 %v7465, %v7997
    %v8034 = vadd.f32 %v7466, %v8002
    %v8035 = vadd.f32 %v7467, %v8005
    %v8036 = vadd.f32 %v7468, %v8010
    %v8037 = vadd.f32 %v7469, %v8013
    %v8038 = vadd.f32 %v7470, %v8018
    %v8039 = vadd.f32 %v7471, %v8021
    %v8040 = vlaneseq
    %v8041 = vshrl.u32 %v8040, 7
    %v8042 = vsub.s32 0, %v8041
    %v8043 = vrot.slane %v4099, %v8042
    %v8044 = vadd.f32 %v8024, %v8043
    %v8045 = vadd.f32 %v8025, %v8043
    %v8046 = vadd.f32 %v8026, %v8043
    %v8047 = vadd.f32 %v8027, %v8043
    %v8048 = vadd.f32 %v8028, %v8043
    %v8049 = vadd.f32 %v8029, %v8043
    %v8050 = vadd.f32 %v8030, %v8043
    %v8051 = vadd.f32 %v8031, %v8043
    %v8052 = vadd.f32 %v8032, %v8043
    %v8053 = vadd.f32 %v8033, %v8043
    %v8054 = vadd.f32 %v8034, %v8043
    %v8055 = vadd.f32 %v8035, %v8043
    %v8056 = vadd.f32 %v8036, %v8043
    %v8057 = vadd.f32 %v8037, %v8043
    %v8058 = vadd.f32 %v8038, %v8043
    %v8059 = vadd.f32 %v8039, %v8043
    %8060 = vst.msk [vmem:[#allocation2] sm:$0xff] %vm152, %v6934
    %8061 = vst.msk [vmem:[#allocation2 + $0x8] sm:$0xff] %vm152, %v6935
    %8062 = vst.msk [vmem:[%s18] sm:$0xff] %vm193, %v8044
    %8063 = vst.msk [vmem:[%s18 + $0x8] sm:$0xff] %vm193, %v8045
    %8064 = vst.msk [vmem:[%s18 + $0x10] sm:$0xff] %vm193, %v8046
    %8065 = vst.msk [vmem:[%s18 + $0x18] sm:$0xff] %vm193, %v8047
    %8066 = vst.msk [vmem:[%s18 + $0x20] sm:$0xff] %vm193, %v8048
    %8067 = vst.msk [vmem:[%s18 + $0x28] sm:$0xff] %vm193, %v8049
    %8068 = vst.msk [vmem:[%s18 + $0x30] sm:$0xff] %vm193, %v8050
    %8069 = vst.msk [vmem:[%s18 + $0x38] sm:$0xff] %vm193, %v8051
    %8070 = vst.msk [vmem:[%s18 + $0x40] sm:$0xff] %vm193, %v8052
    %8071 = vst.msk [vmem:[%s18 + $0x48] sm:$0xff] %vm193, %v8053
    %8072 = vst.msk [vmem:[%s18 + $0x50] sm:$0xff] %vm193, %v8054
    %8073 = vst.msk [vmem:[%s18 + $0x58] sm:$0xff] %vm193, %v8055
    %8074 = vst.msk [vmem:[%s18 + $0x60] sm:$0xff] %vm193, %v8056
    %8075 = vst.msk [vmem:[%s18 + $0x68] sm:$0xff] %vm193, %v8057
    %8076 = vst.msk [vmem:[%s18 + $0x70] sm:$0xff] %vm193, %v8058
    %8077 = vst.msk [vmem:[%s18 + $0x78] sm:$0xff] %vm193, %v8059
    // Predicated region
    $region70: #{tpu_custom_call.1} parent=1 // pred_check
      _
    $region71: #{tpu_custom_call.1} parent=1 // pred_check_branch
      %8079 = sbr.rel (0) target = $region73
    $region72: #{tpu_custom_call.1} parent=1 // pred_region
      %s8081 = ssub.s32 256, 256
      %8082 = vsyncadd [#allocation3], %s8081
      %s8083 = sshll.u32 [#allocation2], 4
      %s8084 = int_to_ptr.vmem [resolvable:$true] %s8083
      %8089 = dma.vmem_to_hbm [thread:$0]  %s8084, 256, %s17, [#allocation3], 128, 128, 8
    $region73: #{tpu_custom_call.1} parent=1 // pred_fallthru
      _
    // Predicated region
    $region74: #{tpu_custom_call.1} parent=1 // pred_check
      _
    $region75: #{tpu_custom_call.1} parent=1 // pred_check_branch
      %8091 = sbr.rel (0) target = $region77
    $region76: #{tpu_custom_call.1} parent=1 // pred_region
      _
    $region77: #{tpu_custom_call.1} parent=1 // pred_fallthru
      _
    // Predicated region
    $region78: #{tpu_custom_call.1} parent=1 // pred_check
      _
    $region79: #{tpu_custom_call.1} parent=1 // pred_check_branch
      %8093 = sbr.rel (0) target = $region81
    $region80: #{tpu_custom_call.1} parent=1 // pred_region
      %8094 = dma.done [#allocation3], 256
    $region81: #{tpu_custom_call.1} parent=1 // pred_fallthru
      _
    // Predicated region
    $region82: #{tpu_custom_call.1} parent=1 // pred_check
      _
    $region83: #{tpu_custom_call.1} parent=1 // pred_check_branch
      %8096 = sbr.rel (0) target = $region85
    $region84: #{tpu_custom_call.1} parent=1 // pred_region
      _
    $region85: #{tpu_custom_call.1} parent=1 // pred_fallthru
      _
    %8097 = vsyncpa [#allocation3], 1

</llo_original>
